<compile_context>
chip_gen: v5e
topology: v5e:2x2
jax: 0.10.0
libtpu: 0.0.40
codegen_flags: <defaults>
</compile_context>

<pallas_src>
import functools

import jax
import jax.numpy as jnp
import numpy as np
from jax.experimental import pallas as pl
from jax.experimental.pallas import tpu as pltpu


def _leaky_relu(x):
    return jnp.where(x >= 0, x, 0.1 * x)


# ----------------------------------------------------------------------------
# Fused kernel: one batch element per grid step, NHWC tile.
# ----------------------------------------------------------------------------
def _rdb_fused_kernel(x_ref, w1_ref, w2_ref, w3_ref, w4_ref, w5_ref, b_ref,
                      o_ref, s_ref, p_ref, *, H, W, C, GC, compute_dtype):
    """ResidualDenseBlock forward for one image.

    x_ref : [1, H, W, C]              raw input tile (NHWC)
    wK_ref: [9*Cin_K, GC]             conv-K weight, tap-major / channel-minor
    b_ref : [5, 1, GC]                all biases (f32)
    o_ref : [1, H, W, GC]             block output (x5*0.2 + x)
    s_ref : [H+2, W+2, C+4*GC] f32    zero-halo'd concat scratch (raw values)
    p_ref : [H, W, 9*(C+4*GC)]        im2col scratch in `compute_dtype`
    """
    w_refs = (w1_ref, w2_ref, w3_ref, w4_ref, w5_ref)
    CT = C + 4 * GC

    # Zero ONLY the 1-pixel halo ring every grid step.  The interior is fully
    # overwritten below before it is read (input write + conv1..conv4
    # outputs), so it never needs a memset.  Scratch persists across grid
    # iterations and may be partitioned across cores, so this is not gated on
    # program_id == 0.
    s_ref[0:1, :, :] = jnp.zeros((1, W + 2, CT), jnp.float32)
    s_ref[H + 1:H + 2, :, :] = jnp.zeros((1, W + 2, CT), jnp.float32)
    s_ref[:, 0:1, :] = jnp.zeros((H + 2, 1, CT), jnp.float32)
    s_ref[:, W + 1:W + 2, :] = jnp.zeros((H + 2, 1, CT), jnp.float32)

    # Raw input x -> channels [0:C] of the padded concat buffer.
    s_ref[1:H + 1, 1:W + 1, 0:C] = x_ref[0].astype(jnp.float32)

    def conv(idx, cin, apply_lrelu):
        # First `cin` channels of the padded concat buffer (raw values).
        xin = s_ref[:, :, 0:cin]                       # [H+2, W+2, cin] f32
        if apply_lrelu:
            # LeakyReLU(0.1) on the conv input; lrelu(0) == 0 so the zero
            # halo is unaffected (matches nn.Sequential(LeakyReLU, Conv2d)
            # semantics).  Kept in f32 (no bf16 VPU on v5e).
            xin = _leaky_relu(xin)
        xin = xin.astype(compute_dtype)

        # im2col: write the 9 shifted taps into the lane-contiguous slab so
        # the conv becomes ONE deep-K (K = 9*cin) MXU contraction.
        for ky in range(3):
            for kx in range(3):
                t = ky * 3 + kx
                p_ref[:, :, t * cin:(t + 1) * cin] = xin[ky:ky + H, kx:kx + W, :]

        patches = p_ref[:, :, 0:9 * cin]               # [H, W, 9*cin]
        y = jax.lax.dot_general(
            patches, w_refs[idx][...],
            dimension_numbers=(((2,), (0,)), ((), ())),
            preferred_element_type=jnp.float32)        # [H, W, GC] f32
        return y + b_ref[idx]                          # bias [1, GC] bcast

    # conv1 .. conv4: LeakyReLU(input) -> 3x3 conv -> append channels.
    for k in range(4):
        cin = C + k * GC
        y = conv(k, cin, apply_lrelu=True)
        s_ref[1:H + 1, 1:W + 1, cin:cin + GC] = y

    # conv5: no input activation; fuse `x5 * 0.2 + x`.
    y5 = conv(4, C + 4 * GC, apply_lrelu=False)
    out = y5 * 0.2 + x_ref[0].astype(jnp.float32)
    o_ref[0] = out.astype(o_ref.dtype)


# ----------------------------------------------------------------------------
# Public wrapper (NCHW in / NCHW out, like the PyTorch module)
# ----------------------------------------------------------------------------
@functools.partial(jax.jit, static_argnames=("compute_dtype",))
def residual_dense_block(x_nchw, params, *, compute_dtype=jnp.float32):
    N, C, H, W = x_nchw.shape
    GC = params["w1"].shape[-1]
    # The residual `x5.mul(0.2) + x` requires growth_channel == in_channel
    # (same constraint as the PyTorch module).
    assert C == GC, "residual add requires growth_channel == in_channel"
    CT = C + 4 * GC

    # Single layout change in / out of the fused block.
    x_nhwc = jnp.transpose(x_nchw, (0, 2, 3, 1))

    # Weights -> 2D [9*Cin, GC] (tap-major, channel-minor: matches the im2col
    # ordering built in the kernel) and cast to the MXU compute dtype here, so
    # the kernel does no per-step weight reshaping/casting.
    ws = []
    for k in range(5):
        cin = C + k * GC
        ws.append(params[f"w{k + 1}"].reshape(9 * cin, GC).astype(compute_dtype))
    b_all = jnp.stack([params[f"b{k + 1}"] for k in range(5)])
    b_all = b_all.reshape(5, 1, GC).astype(jnp.float32)

    kernel = functools.partial(_rdb_fused_kernel, H=H, W=W, C=C, GC=GC,
                               compute_dtype=compute_dtype)

    in_specs = [pl.BlockSpec((1, H, W, C), lambda n: (n, 0, 0, 0))]
    in_specs += [pl.BlockSpec(w.shape, lambda n: (0, 0)) for w in ws]
    in_specs += [pl.BlockSpec((5, 1, GC), lambda n: (0, 0, 0))]

    out_nhwc = pl.pallas_call(
        kernel,
        out_shape=jax.ShapeDtypeStruct((N, H, W, GC), x_nchw.dtype),
        grid=(N,),
        in_specs=in_specs,
        out_specs=pl.BlockSpec((1, H, W, GC), lambda n: (n, 0, 0, 0)),
        scratch_shapes=[
            pltpu.VMEM((H + 2, W + 2, CT), jnp.float32),      # concat buffer
            pltpu.VMEM((H, W, 9 * CT), compute_dtype),        # im2col slab
        ],
        compiler_params=pltpu.CompilerParams(
            dimension_semantics=("parallel",),
            vmem_limit_bytes=64 * 1024 * 1024),
    )(x_nhwc, *ws, b_all)

    return jnp.transpose(out_nhwc, (0, 3, 1, 2))


# ----------------------------------------------------------------------------
# Pure-JAX reference (for correctness check)
# ----------------------------------------------------------------------------
def _ref_conv(x_nhwc, w, b):
    y = jax.lax.conv_general_dilated(
        x_nhwc, w, window_strides=(1, 1), padding="SAME",
        dimension_numbers=("NHWC", "HWIO", "NHWC"))
    return y + b.reshape(1, 1, 1, -1)


def residual_dense_block_ref(x_nchw, p):
    x = jnp.transpose(x_nchw, (0, 2, 3, 1))
    x1 = _ref_conv(_leaky_relu(x), p["w1"], p["b1"])
    x2 = _ref_conv(_leaky_relu(jnp.concatenate([x, x1], -1)), p["w2"], p["b2"])
    x3 = _ref_conv(_leaky_relu(jnp.concatenate([x, x1, x2], -1)), p["w3"], p["b3"])
    x4 = _ref_conv(_leaky_relu(jnp.concatenate([x, x1, x2, x3], -1)), p["w4"], p["b4"])
    x5 = _ref_conv(jnp.concatenate([x, x1, x2, x3, x4], -1), p["w5"], p["b5"])
    return jnp.transpose(x5 * 0.2 + x, (0, 3, 1, 2))


# ----------------------------------------------------------------------------
# Parameter init (deterministic, synthetic), weights stored HWIO
# ----------------------------------------------------------------------------
def init_params(key, in_channel, growth_channel):
    params = {}
    cins = [in_channel + i * growth_channel for i in range(5)]
    for i, cin in enumerate(cins, start=1):
        key, kw, kb = jax.random.split(key, 3)
        scale = 1.0 / np.sqrt(cin * 9)
        params[f"w{i}"] = scale * jax.random.normal(
            kw, (3, 3, cin, growth_channel), jnp.float32)
        params[f"b{i}"] = scale * jax.random.normal(
            kb, (growth_channel,), jnp.float32)
    return params


# ----------------------------------------------------------------------------
if __name__ == "__main__":
    N, C, H, W = 2, 8, 16, 16
    GC = 8

    key = jax.random.PRNGKey(0)
    key, kx = jax.random.split(key)
    x = jax.random.normal(kx, (N, C, H, W), jnp.float32)
    params = init_params(key, C, GC)

    ref = residual_dense_block_ref(x, params)

    # f32 MXU operands: matches the XLA conv reference tightly.
    out_f32 = jax.block_until_ready(residual_dense_block(x, params))
    np.testing.assert_allclose(np.asarray(out_f32), np.asarray(ref),
                               rtol=1e-4, atol=1e-4)

    # bf16 MXU operands with f32 accumulation: the fast path on v5e/v6e/v7x
    # MXUs (looser tolerance since operands are rounded to bf16).
    out_bf16 = jax.block_until_ready(
        residual_dense_block(x, params, compute_dtype=jnp.bfloat16))
    np.testing.assert_allclose(np.asarray(out_bf16), np.asarray(ref),
                               rtol=1e-1, atol=1e-1)

    print("KERNEL_OK")
</pallas_src>

<mosaic_0001>
module attributes {stable_mosaic.version = 11 : i64} {
  func.func @_rdb_fused_kernel(%arg0: i32, %arg1: memref<1x16x16x8xf32, #tpu.memory_space<vmem>>, %arg2: memref<72x8xf32, #tpu.memory_space<vmem>>, %arg3: memref<144x8xf32, #tpu.memory_space<vmem>>, %arg4: memref<216x8xf32, #tpu.memory_space<vmem>>, %arg5: memref<288x8xf32, #tpu.memory_space<vmem>>, %arg6: memref<360x8xf32, #tpu.memory_space<vmem>>, %arg7: memref<5x1x8xf32, #tpu.memory_space<vmem>>, %arg8: memref<1x16x16x8xf32, #tpu.memory_space<vmem>>, %arg9: memref<18x18x40xf32, #tpu.memory_space<vmem>>, %arg10: memref<16x16x360xf32, #tpu.memory_space<vmem>>) attributes {dimension_semantics = [#tpu.dimension_semantics<parallel>], iteration_bounds = array<i64: 2>, scalar_prefetch = 0 : i64, scratch_operands = 2 : i64, tpu.core_type = #tpu.core_type<tc>, window_params = [{transform_indices = @transform_0, window_bounds = array<i64: 1, 16, 16, 8>}, {pipeline_mode = #tpu.pipeline_mode<synchronous>, transform_indices = @transform_1, window_bounds = array<i64: 72, 8>}, {pipeline_mode = #tpu.pipeline_mode<synchronous>, transform_indices = @transform_2, window_bounds = array<i64: 144, 8>}, {pipeline_mode = #tpu.pipeline_mode<synchronous>, transform_indices = @transform_3, window_bounds = array<i64: 216, 8>}, {pipeline_mode = #tpu.pipeline_mode<synchronous>, transform_indices = @transform_4, window_bounds = array<i64: 288, 8>}, {pipeline_mode = #tpu.pipeline_mode<synchronous>, transform_indices = @transform_5, window_bounds = array<i64: 360, 8>}, {pipeline_mode = #tpu.pipeline_mode<synchronous>, transform_indices = @transform_6, window_bounds = array<i64: 5, 1, 8>}, {transform_indices = @transform_7, window_bounds = array<i64: 1, 16, 16, 8>}]} {
    %cst = arith.constant 0.000000e+00 : f32
    %0 = vector.broadcast %cst : f32 to vector<1x18x40xf32>
    %c0 = arith.constant 0 : index
    %c0_0 = arith.constant 0 : index
    %c0_1 = arith.constant 0 : index
    %1 = vector.load %arg9[%c0, %c0_0, %c0_1] : memref<18x18x40xf32, #tpu.memory_space<vmem>>, vector<1x18x40xf32>
    tpu.vector_store %arg9[%c0, %c0_0, %c0_1], %0 {strides = array<i32>} : memref<18x18x40xf32, #tpu.memory_space<vmem>>, vector<1x18x40xf32>,
    %cst_2 = arith.constant 0.000000e+00 : f32
    %2 = vector.broadcast %cst_2 : f32 to vector<1x18x40xf32>
    %c17 = arith.constant 17 : index
    %c0_3 = arith.constant 0 : index
    %c0_4 = arith.constant 0 : index
    %3 = vector.load %arg9[%c17, %c0_3, %c0_4] : memref<18x18x40xf32, #tpu.memory_space<vmem>>, vector<1x18x40xf32>
    tpu.vector_store %arg9[%c17, %c0_3, %c0_4], %2 {strides = array<i32>} : memref<18x18x40xf32, #tpu.memory_space<vmem>>, vector<1x18x40xf32>,
    %cst_5 = arith.constant 0.000000e+00 : f32
    %4 = vector.broadcast %cst_5 : f32 to vector<18x1x40xf32>
    %c0_6 = arith.constant 0 : index
    %c0_7 = arith.constant 0 : index
    %c0_8 = arith.constant 0 : index
    %5 = vector.load %arg9[%c0_6, %c0_7, %c0_8] : memref<18x18x40xf32, #tpu.memory_space<vmem>>, vector<18x1x40xf32>
    tpu.vector_store %arg9[%c0_6, %c0_7, %c0_8], %4 {strides = array<i32>} : memref<18x18x40xf32, #tpu.memory_space<vmem>>, vector<18x1x40xf32>,
    %cst_9 = arith.constant 0.000000e+00 : f32
    %6 = vector.broadcast %cst_9 : f32 to vector<18x1x40xf32>
    %c0_10 = arith.constant 0 : index
    %c17_11 = arith.constant 17 : index
    %c0_12 = arith.constant 0 : index
    %7 = vector.load %arg9[%c0_10, %c17_11, %c0_12] : memref<18x18x40xf32, #tpu.memory_space<vmem>>, vector<18x1x40xf32>
    tpu.vector_store %arg9[%c0_10, %c17_11, %c0_12], %6 {strides = array<i32>} : memref<18x18x40xf32, #tpu.memory_space<vmem>>, vector<18x1x40xf32>,
    %c0_13 = arith.constant 0 : index
    %c0_14 = arith.constant 0 : index
    %c0_15 = arith.constant 0 : index
    %c0_16 = arith.constant 0 : index
    %8 = vector.load %arg1[%c0_13, %c0_14, %c0_15, %c0_16] : memref<1x16x16x8xf32, #tpu.memory_space<vmem>>, vector<1x16x16x8xf32>
    %9 = vector.shape_cast %8 : vector<1x16x16x8xf32> to vector<16x16x8xf32>
    %c1 = arith.constant 1 : index
    %c1_17 = arith.constant 1 : index
    %c0_18 = arith.constant 0 : index
    %10 = vector.load %arg9[%c1, %c1_17, %c0_18] : memref<18x18x40xf32, #tpu.memory_space<vmem>>, vector<16x16x8xf32>
    tpu.vector_store %arg9[%c1, %c1_17, %c0_18], %9 {strides = array<i32>} : memref<18x18x40xf32, #tpu.memory_space<vmem>>, vector<16x16x8xf32>,
    %c0_19 = arith.constant 0 : index
    %c0_20 = arith.constant 0 : index
    %c0_21 = arith.constant 0 : index
    %11 = vector.load %arg9[%c0_19, %c0_20, %c0_21] : memref<18x18x40xf32, #tpu.memory_space<vmem>>, vector<18x18x8xf32>
    %cst_22 = arith.constant 0.000000e+00 : f32
    %12 = vector.broadcast %cst_22 : f32 to vector<18x18x8xf32>
    %13 = arith.cmpf oge, %11, %12 : vector<18x18x8xf32>
    %cst_23 = arith.constant 1.000000e-01 : f32
    %14 = vector.broadcast %cst_23 : f32 to vector<18x18x8xf32>
    %15 = arith.mulf %14, %11 : vector<18x18x8xf32>
    %16 = arith.select %13, %11, %15 : vector<18x18x8xi1>, vector<18x18x8xf32>
    %17 = vector.extract_strided_slice %16 {offsets = [0, 0, 0], sizes = [16, 16, 8], strides = [1, 1, 1]} : vector<18x18x8xf32> to vector<16x16x8xf32>
    %c0_24 = arith.constant 0 : index
    %c0_25 = arith.constant 0 : index
    %c0_26 = arith.constant 0 : index
    %18 = vector.load %arg10[%c0_24, %c0_25, %c0_26] : memref<16x16x360xf32, #tpu.memory_space<vmem>>, vector<16x16x8xf32>
    tpu.vector_store %arg10[%c0_24, %c0_25, %c0_26], %17 {strides = array<i32>} : memref<16x16x360xf32, #tpu.memory_space<vmem>>, vector<16x16x8xf32>,
    %19 = vector.extract_strided_slice %16 {offsets = [0, 1, 0], sizes = [16, 16, 8], strides = [1, 1, 1]} : vector<18x18x8xf32> to vector<16x16x8xf32>
    %c0_27 = arith.constant 0 : index
    %c0_28 = arith.constant 0 : index
    %c8 = arith.constant 8 : index
    %20 = vector.load %arg10[%c0_27, %c0_28, %c8] : memref<16x16x360xf32, #tpu.memory_space<vmem>>, vector<16x16x8xf32>
    tpu.vector_store %arg10[%c0_27, %c0_28, %c8], %19 {strides = array<i32>} : memref<16x16x360xf32, #tpu.memory_space<vmem>>, vector<16x16x8xf32>,
    %21 = vector.extract_strided_slice %16 {offsets = [0, 2, 0], sizes = [16, 16, 8], strides = [1, 1, 1]} : vector<18x18x8xf32> to vector<16x16x8xf32>
    %c0_29 = arith.constant 0 : index
    %c0_30 = arith.constant 0 : index
    %c16 = arith.constant 16 : index
    %22 = vector.load %arg10[%c0_29, %c0_30, %c16] : memref<16x16x360xf32, #tpu.memory_space<vmem>>, vector<16x16x8xf32>
    tpu.vector_store %arg10[%c0_29, %c0_30, %c16], %21 {strides = array<i32>} : memref<16x16x360xf32, #tpu.memory_space<vmem>>, vector<16x16x8xf32>,
    %23 = vector.extract_strided_slice %16 {offsets = [1, 0, 0], sizes = [16, 16, 8], strides = [1, 1, 1]} : vector<18x18x8xf32> to vector<16x16x8xf32>
    %c0_31 = arith.constant 0 : index
    %c0_32 = arith.constant 0 : index
    %c24 = arith.constant 24 : index
    %24 = vector.load %arg10[%c0_31, %c0_32, %c24] : memref<16x16x360xf32, #tpu.memory_space<vmem>>, vector<16x16x8xf32>
    tpu.vector_store %arg10[%c0_31, %c0_32, %c24], %23 {strides = array<i32>} : memref<16x16x360xf32, #tpu.memory_space<vmem>>, vector<16x16x8xf32>,
    %25 = vector.extract_strided_slice %16 {offsets = [1, 1, 0], sizes = [16, 16, 8], strides = [1, 1, 1]} : vector<18x18x8xf32> to vector<16x16x8xf32>
    %c0_33 = arith.constant 0 : index
    %c0_34 = arith.constant 0 : index
    %c32 = arith.constant 32 : index
    %26 = vector.load %arg10[%c0_33, %c0_34, %c32] : memref<16x16x360xf32, #tpu.memory_space<vmem>>, vector<16x16x8xf32>
    tpu.vector_store %arg10[%c0_33, %c0_34, %c32], %25 {strides = array<i32>} : memref<16x16x360xf32, #tpu.memory_space<vmem>>, vector<16x16x8xf32>,
    %27 = vector.extract_strided_slice %16 {offsets = [1, 2, 0], sizes = [16, 16, 8], strides = [1, 1, 1]} : vector<18x18x8xf32> to vector<16x16x8xf32>
    %c0_35 = arith.constant 0 : index
    %c0_36 = arith.constant 0 : index
    %c40 = arith.constant 40 : index
    %28 = vector.load %arg10[%c0_35, %c0_36, %c40] : memref<16x16x360xf32, #tpu.memory_space<vmem>>, vector<16x16x8xf32>
    tpu.vector_store %arg10[%c0_35, %c0_36, %c40], %27 {strides = array<i32>} : memref<16x16x360xf32, #tpu.memory_space<vmem>>, vector<16x16x8xf32>,
    %29 = vector.extract_strided_slice %16 {offsets = [2, 0, 0], sizes = [16, 16, 8], strides = [1, 1, 1]} : vector<18x18x8xf32> to vector<16x16x8xf32>
    %c0_37 = arith.constant 0 : index
    %c0_38 = arith.constant 0 : index
    %c48 = arith.constant 48 : index
    %30 = vector.load %arg10[%c0_37, %c0_38, %c48] : memref<16x16x360xf32, #tpu.memory_space<vmem>>, vector<16x16x8xf32>
    tpu.vector_store %arg10[%c0_37, %c0_38, %c48], %29 {strides = array<i32>} : memref<16x16x360xf32, #tpu.memory_space<vmem>>, vector<16x16x8xf32>,
    %31 = vector.extract_strided_slice %16 {offsets = [2, 1, 0], sizes = [16, 16, 8], strides = [1, 1, 1]} : vector<18x18x8xf32> to vector<16x16x8xf32>
    %c0_39 = arith.constant 0 : index
    %c0_40 = arith.constant 0 : index
    %c56 = arith.constant 56 : index
    %32 = vector.load %arg10[%c0_39, %c0_40, %c56] : memref<16x16x360xf32, #tpu.memory_space<vmem>>, vector<16x16x8xf32>
    tpu.vector_store %arg10[%c0_39, %c0_40, %c56], %31 {strides = array<i32>} : memref<16x16x360xf32, #tpu.memory_space<vmem>>, vector<16x16x8xf32>,
    %33 = vector.extract_strided_slice %16 {offsets = [2, 2, 0], sizes = [16, 16, 8], strides = [1, 1, 1]} : vector<18x18x8xf32> to vector<16x16x8xf32>
    %c0_41 = arith.constant 0 : index
    %c0_42 = arith.constant 0 : index
    %c64 = arith.constant 64 : index
    %34 = vector.load %arg10[%c0_41, %c0_42, %c64] : memref<16x16x360xf32, #tpu.memory_space<vmem>>, vector<16x16x8xf32>
    tpu.vector_store %arg10[%c0_41, %c0_42, %c64], %33 {strides = array<i32>} : memref<16x16x360xf32, #tpu.memory_space<vmem>>, vector<16x16x8xf32>,
    %c0_43 = arith.constant 0 : index
    %c0_44 = arith.constant 0 : index
    %c0_45 = arith.constant 0 : index
    %35 = vector.load %arg10[%c0_43, %c0_44, %c0_45] : memref<16x16x360xf32, #tpu.memory_space<vmem>>, vector<16x16x72xf32>
    %c0_46 = arith.constant 0 : index
    %c0_47 = arith.constant 0 : index
    %36 = vector.load %arg2[%c0_46, %c0_47] : memref<72x8xf32, #tpu.memory_space<vmem>>, vector<72x8xf32>
    %cst_48 = arith.constant dense<0.000000e+00> : vector<16x16x8xf32>
    %37 = tpu.matmul %35, %36, %cst_48 {dimension_numbers = #tpu.dot_dimension_numbers<[2], [0], [0, 1], [1], [0, 0, 0, 1, 1, 1], [], []>} : vector<16x16x72xf32>, vector<72x8xf32>, vector<16x16x8xf32> -> vector<16x16x8xf32>
    %c0_49 = arith.constant 0 : index
    %c0_50 = arith.constant 0 : index
    %c0_51 = arith.constant 0 : index
    %38 = vector.load %arg7[%c0_49, %c0_50, %c0_51] : memref<5x1x8xf32, #tpu.memory_space<vmem>>, vector<1x1x8xf32>
    %39 = vector.shape_cast %38 : vector<1x1x8xf32> to vector<1x8xf32>
    %40 = vector.shape_cast %39 : vector<1x8xf32> to vector<1x1x8xf32>
    %41 = vector.broadcast %40 : vector<1x1x8xf32> to vector<16x16x8xf32>
    %42 = arith.addf %37, %41 : vector<16x16x8xf32>
    %c1_52 = arith.constant 1 : index
    %c1_53 = arith.constant 1 : index
    %c8_54 = arith.constant 8 : index
    %43 = vector.load %arg9[%c1_52, %c1_53, %c8_54] : memref<18x18x40xf32, #tpu.memory_space<vmem>>, vector<16x16x8xf32>
    tpu.vector_store %arg9[%c1_52, %c1_53, %c8_54], %42 {strides = array<i32>} : memref<18x18x40xf32, #tpu.memory_space<vmem>>, vector<16x16x8xf32>,
    %c0_55 = arith.constant 0 : index
    %c0_56 = arith.constant 0 : index
    %c0_57 = arith.constant 0 : index
    %44 = vector.load %arg9[%c0_55, %c0_56, %c0_57] : memref<18x18x40xf32, #tpu.memory_space<vmem>>, vector<18x18x16xf32>
    %cst_58 = arith.constant 0.000000e+00 : f32
    %45 = vector.broadcast %cst_58 : f32 to vector<18x18x16xf32>
    %46 = arith.cmpf oge, %44, %45 : vector<18x18x16xf32>
    %cst_59 = arith.constant 1.000000e-01 : f32
    %47 = vector.broadcast %cst_59 : f32 to vector<18x18x16xf32>
    %48 = arith.mulf %47, %44 : vector<18x18x16xf32>
    %49 = arith.select %46, %44, %48 : vector<18x18x16xi1>, vector<18x18x16xf32>
    %50 = vector.extract_strided_slice %49 {offsets = [0, 0, 0], sizes = [16, 16, 16], strides = [1, 1, 1]} : vector<18x18x16xf32> to vector<16x16x16xf32>
    %c0_60 = arith.constant 0 : index
    %c0_61 = arith.constant 0 : index
    %c0_62 = arith.constant 0 : index
    %51 = vector.load %arg10[%c0_60, %c0_61, %c0_62] : memref<16x16x360xf32, #tpu.memory_space<vmem>>, vector<16x16x16xf32>
    tpu.vector_store %arg10[%c0_60, %c0_61, %c0_62], %50 {strides = array<i32>} : memref<16x16x360xf32, #tpu.memory_space<vmem>>, vector<16x16x16xf32>,
    %52 = vector.extract_strided_slice %49 {offsets = [0, 1, 0], sizes = [16, 16, 16], strides = [1, 1, 1]} : vector<18x18x16xf32> to vector<16x16x16xf32>
    %c0_63 = arith.constant 0 : index
    %c0_64 = arith.constant 0 : index
    %c16_65 = arith.constant 16 : index
    %53 = vector.load %arg10[%c0_63, %c0_64, %c16_65] : memref<16x16x360xf32, #tpu.memory_space<vmem>>, vector<16x16x16xf32>
    tpu.vector_store %arg10[%c0_63, %c0_64, %c16_65], %52 {strides = array<i32>} : memref<16x16x360xf32, #tpu.memory_space<vmem>>, vector<16x16x16xf32>,
    %54 = vector.extract_strided_slice %49 {offsets = [0, 2, 0], sizes = [16, 16, 16], strides = [1, 1, 1]} : vector<18x18x16xf32> to vector<16x16x16xf32>
    %c0_66 = arith.constant 0 : index
    %c0_67 = arith.constant 0 : index
    %c32_68 = arith.constant 32 : index
    %55 = vector.load %arg10[%c0_66, %c0_67, %c32_68] : memref<16x16x360xf32, #tpu.memory_space<vmem>>, vector<16x16x16xf32>
    tpu.vector_store %arg10[%c0_66, %c0_67, %c32_68], %54 {strides = array<i32>} : memref<16x16x360xf32, #tpu.memory_space<vmem>>, vector<16x16x16xf32>,
    %56 = vector.extract_strided_slice %49 {offsets = [1, 0, 0], sizes = [16, 16, 16], strides = [1, 1, 1]} : vector<18x18x16xf32> to vector<16x16x16xf32>
    %c0_69 = arith.constant 0 : index
    %c0_70 = arith.constant 0 : index
    %c48_71 = arith.constant 48 : index
    %57 = vector.load %arg10[%c0_69, %c0_70, %c48_71] : memref<16x16x360xf32, #tpu.memory_space<vmem>>, vector<16x16x16xf32>
    tpu.vector_store %arg10[%c0_69, %c0_70, %c48_71], %56 {strides = array<i32>} : memref<16x16x360xf32, #tpu.memory_space<vmem>>, vector<16x16x16xf32>,
    %58 = vector.extract_strided_slice %49 {offsets = [1, 1, 0], sizes = [16, 16, 16], strides = [1, 1, 1]} : vector<18x18x16xf32> to vector<16x16x16xf32>
    %c0_72 = arith.constant 0 : index
    %c0_73 = arith.constant 0 : index
    %c64_74 = arith.constant 64 : index
    %59 = vector.load %arg10[%c0_72, %c0_73, %c64_74] : memref<16x16x360xf32, #tpu.memory_space<vmem>>, vector<16x16x16xf32>
    tpu.vector_store %arg10[%c0_72, %c0_73, %c64_74], %58 {strides = array<i32>} : memref<16x16x360xf32, #tpu.memory_space<vmem>>, vector<16x16x16xf32>,
    %60 = vector.extract_strided_slice %49 {offsets = [1, 2, 0], sizes = [16, 16, 16], strides = [1, 1, 1]} : vector<18x18x16xf32> to vector<16x16x16xf32>
    %c0_75 = arith.constant 0 : index
    %c0_76 = arith.constant 0 : index
    %c80 = arith.constant 80 : index
    %61 = vector.load %arg10[%c0_75, %c0_76, %c80] : memref<16x16x360xf32, #tpu.memory_space<vmem>>, vector<16x16x16xf32>
    tpu.vector_store %arg10[%c0_75, %c0_76, %c80], %60 {strides = array<i32>} : memref<16x16x360xf32, #tpu.memory_space<vmem>>, vector<16x16x16xf32>,
    %62 = vector.extract_strided_slice %49 {offsets = [2, 0, 0], sizes = [16, 16, 16], strides = [1, 1, 1]} : vector<18x18x16xf32> to vector<16x16x16xf32>
    %c0_77 = arith.constant 0 : index
    %c0_78 = arith.constant 0 : index
    %c96 = arith.constant 96 : index
    %63 = vector.load %arg10[%c0_77, %c0_78, %c96] : memref<16x16x360xf32, #tpu.memory_space<vmem>>, vector<16x16x16xf32>
    tpu.vector_store %arg10[%c0_77, %c0_78, %c96], %62 {strides = array<i32>} : memref<16x16x360xf32, #tpu.memory_space<vmem>>, vector<16x16x16xf32>,
    %64 = vector.extract_strided_slice %49 {offsets = [2, 1, 0], sizes = [16, 16, 16], strides = [1, 1, 1]} : vector<18x18x16xf32> to vector<16x16x16xf32>
    %c0_79 = arith.constant 0 : index
    %c0_80 = arith.constant 0 : index
    %c112 = arith.constant 112 : index
    %65 = vector.load %arg10[%c0_79, %c0_80, %c112] : memref<16x16x360xf32, #tpu.memory_space<vmem>>, vector<16x16x16xf32>
    tpu.vector_store %arg10[%c0_79, %c0_80, %c112], %64 {strides = array<i32>} : memref<16x16x360xf32, #tpu.memory_space<vmem>>, vector<16x16x16xf32>,
    %66 = vector.extract_strided_slice %49 {offsets = [2, 2, 0], sizes = [16, 16, 16], strides = [1, 1, 1]} : vector<18x18x16xf32> to vector<16x16x16xf32>
    %c0_81 = arith.constant 0 : index
    %c0_82 = arith.constant 0 : index
    %c128 = arith.constant 128 : index
    %67 = vector.load %arg10[%c0_81, %c0_82, %c128] : memref<16x16x360xf32, #tpu.memory_space<vmem>>, vector<16x16x16xf32>
    tpu.vector_store %arg10[%c0_81, %c0_82, %c128], %66 {strides = array<i32>} : memref<16x16x360xf32, #tpu.memory_space<vmem>>, vector<16x16x16xf32>,
    %c0_83 = arith.constant 0 : index
    %c0_84 = arith.constant 0 : index
    %c0_85 = arith.constant 0 : index
    %68 = vector.load %arg10[%c0_83, %c0_84, %c0_85] : memref<16x16x360xf32, #tpu.memory_space<vmem>>, vector<16x16x144xf32>
    %c0_86 = arith.constant 0 : index
    %c0_87 = arith.constant 0 : index
    %69 = vector.load %arg3[%c0_86, %c0_87] : memref<144x8xf32, #tpu.memory_space<vmem>>, vector<144x8xf32>
    %cst_88 = arith.constant dense<0.000000e+00> : vector<16x16x8xf32>
    %70 = tpu.matmul %68, %69, %cst_88 {dimension_numbers = #tpu.dot_dimension_numbers<[2], [0], [0, 1], [1], [0, 0, 0, 1, 1, 1], [], []>} : vector<16x16x144xf32>, vector<144x8xf32>, vector<16x16x8xf32> -> vector<16x16x8xf32>
    %c1_89 = arith.constant 1 : index
    %c0_90 = arith.constant 0 : index
    %c0_91 = arith.constant 0 : index
    %71 = vector.load %arg7[%c1_89, %c0_90, %c0_91] : memref<5x1x8xf32, #tpu.memory_space<vmem>>, vector<1x1x8xf32>
    %72 = vector.shape_cast %71 : vector<1x1x8xf32> to vector<1x8xf32>
    %73 = vector.shape_cast %72 : vector<1x8xf32> to vector<1x1x8xf32>
    %74 = vector.broadcast %73 : vector<1x1x8xf32> to vector<16x16x8xf32>
    %75 = arith.addf %70, %74 : vector<16x16x8xf32>
    %c1_92 = arith.constant 1 : index
    %c1_93 = arith.constant 1 : index
    %c16_94 = arith.constant 16 : index
    %76 = vector.load %arg9[%c1_92, %c1_93, %c16_94] : memref<18x18x40xf32, #tpu.memory_space<vmem>>, vector<16x16x8xf32>
    tpu.vector_store %arg9[%c1_92, %c1_93, %c16_94], %75 {strides = array<i32>} : memref<18x18x40xf32, #tpu.memory_space<vmem>>, vector<16x16x8xf32>,
    %c0_95 = arith.constant 0 : index
    %c0_96 = arith.constant 0 : index
    %c0_97 = arith.constant 0 : index
    %77 = vector.load %arg9[%c0_95, %c0_96, %c0_97] : memref<18x18x40xf32, #tpu.memory_space<vmem>>, vector<18x18x24xf32>
    %cst_98 = arith.constant 0.000000e+00 : f32
    %78 = vector.broadcast %cst_98 : f32 to vector<18x18x24xf32>
    %79 = arith.cmpf oge, %77, %78 : vector<18x18x24xf32>
    %cst_99 = arith.constant 1.000000e-01 : f32
    %80 = vector.broadcast %cst_99 : f32 to vector<18x18x24xf32>
    %81 = arith.mulf %80, %77 : vector<18x18x24xf32>
    %82 = arith.select %79, %77, %81 : vector<18x18x24xi1>, vector<18x18x24xf32>
    %83 = vector.extract_strided_slice %82 {offsets = [0, 0, 0], sizes = [16, 16, 24], strides = [1, 1, 1]} : vector<18x18x24xf32> to vector<16x16x24xf32>
    %c0_100 = arith.constant 0 : index
    %c0_101 = arith.constant 0 : index
    %c0_102 = arith.constant 0 : index
    %84 = vector.load %arg10[%c0_100, %c0_101, %c0_102] : memref<16x16x360xf32, #tpu.memory_space<vmem>>, vector<16x16x24xf32>
    tpu.vector_store %arg10[%c0_100, %c0_101, %c0_102], %83 {strides = array<i32>} : memref<16x16x360xf32, #tpu.memory_space<vmem>>, vector<16x16x24xf32>,
    %85 = vector.extract_strided_slice %82 {offsets = [0, 1, 0], sizes = [16, 16, 24], strides = [1, 1, 1]} : vector<18x18x24xf32> to vector<16x16x24xf32>
    %c0_103 = arith.constant 0 : index
    %c0_104 = arith.constant 0 : index
    %c24_105 = arith.constant 24 : index
    %86 = vector.load %arg10[%c0_103, %c0_104, %c24_105] : memref<16x16x360xf32, #tpu.memory_space<vmem>>, vector<16x16x24xf32>
    tpu.vector_store %arg10[%c0_103, %c0_104, %c24_105], %85 {strides = array<i32>} : memref<16x16x360xf32, #tpu.memory_space<vmem>>, vector<16x16x24xf32>,
    %87 = vector.extract_strided_slice %82 {offsets = [0, 2, 0], sizes = [16, 16, 24], strides = [1, 1, 1]} : vector<18x18x24xf32> to vector<16x16x24xf32>
    %c0_106 = arith.constant 0 : index
    %c0_107 = arith.constant 0 : index
    %c48_108 = arith.constant 48 : index
    %88 = vector.load %arg10[%c0_106, %c0_107, %c48_108] : memref<16x16x360xf32, #tpu.memory_space<vmem>>, vector<16x16x24xf32>
    tpu.vector_store %arg10[%c0_106, %c0_107, %c48_108], %87 {strides = array<i32>} : memref<16x16x360xf32, #tpu.memory_space<vmem>>, vector<16x16x24xf32>,
    %89 = vector.extract_strided_slice %82 {offsets = [1, 0, 0], sizes = [16, 16, 24], strides = [1, 1, 1]} : vector<18x18x24xf32> to vector<16x16x24xf32>
    %c0_109 = arith.constant 0 : index
    %c0_110 = arith.constant 0 : index
    %c72 = arith.constant 72 : index
    %90 = vector.load %arg10[%c0_109, %c0_110, %c72] : memref<16x16x360xf32, #tpu.memory_space<vmem>>, vector<16x16x24xf32>
    tpu.vector_store %arg10[%c0_109, %c0_110, %c72], %89 {strides = array<i32>} : memref<16x16x360xf32, #tpu.memory_space<vmem>>, vector<16x16x24xf32>,
    %91 = vector.extract_strided_slice %82 {offsets = [1, 1, 0], sizes = [16, 16, 24], strides = [1, 1, 1]} : vector<18x18x24xf32> to vector<16x16x24xf32>
    %c0_111 = arith.constant 0 : index
    %c0_112 = arith.constant 0 : index
    %c96_113 = arith.constant 96 : index
    %92 = vector.load %arg10[%c0_111, %c0_112, %c96_113] : memref<16x16x360xf32, #tpu.memory_space<vmem>>, vector<16x16x24xf32>
    tpu.vector_store %arg10[%c0_111, %c0_112, %c96_113], %91 {strides = array<i32>} : memref<16x16x360xf32, #tpu.memory_space<vmem>>, vector<16x16x24xf32>,
    %93 = vector.extract_strided_slice %82 {offsets = [1, 2, 0], sizes = [16, 16, 24], strides = [1, 1, 1]} : vector<18x18x24xf32> to vector<16x16x24xf32>
    %c0_114 = arith.constant 0 : index
    %c0_115 = arith.constant 0 : index
    %c120 = arith.constant 120 : index
    %94 = vector.load %arg10[%c0_114, %c0_115, %c120] : memref<16x16x360xf32, #tpu.memory_space<vmem>>, vector<16x16x24xf32>
    tpu.vector_store %arg10[%c0_114, %c0_115, %c120], %93 {strides = array<i32>} : memref<16x16x360xf32, #tpu.memory_space<vmem>>, vector<16x16x24xf32>,
    %95 = vector.extract_strided_slice %82 {offsets = [2, 0, 0], sizes = [16, 16, 24], strides = [1, 1, 1]} : vector<18x18x24xf32> to vector<16x16x24xf32>
    %c0_116 = arith.constant 0 : index
    %c0_117 = arith.constant 0 : index
    %c144 = arith.constant 144 : index
    %96 = vector.load %arg10[%c0_116, %c0_117, %c144] : memref<16x16x360xf32, #tpu.memory_space<vmem>>, vector<16x16x24xf32>
    tpu.vector_store %arg10[%c0_116, %c0_117, %c144], %95 {strides = array<i32>} : memref<16x16x360xf32, #tpu.memory_space<vmem>>, vector<16x16x24xf32>,
    %97 = vector.extract_strided_slice %82 {offsets = [2, 1, 0], sizes = [16, 16, 24], strides = [1, 1, 1]} : vector<18x18x24xf32> to vector<16x16x24xf32>
    %c0_118 = arith.constant 0 : index
    %c0_119 = arith.constant 0 : index
    %c168 = arith.constant 168 : index
    %98 = vector.load %arg10[%c0_118, %c0_119, %c168] : memref<16x16x360xf32, #tpu.memory_space<vmem>>, vector<16x16x24xf32>
    tpu.vector_store %arg10[%c0_118, %c0_119, %c168], %97 {strides = array<i32>} : memref<16x16x360xf32, #tpu.memory_space<vmem>>, vector<16x16x24xf32>,
    %99 = vector.extract_strided_slice %82 {offsets = [2, 2, 0], sizes = [16, 16, 24], strides = [1, 1, 1]} : vector<18x18x24xf32> to vector<16x16x24xf32>
    %c0_120 = arith.constant 0 : index
    %c0_121 = arith.constant 0 : index
    %c192 = arith.constant 192 : index
    %100 = vector.load %arg10[%c0_120, %c0_121, %c192] : memref<16x16x360xf32, #tpu.memory_space<vmem>>, vector<16x16x24xf32>
    tpu.vector_store %arg10[%c0_120, %c0_121, %c192], %99 {strides = array<i32>} : memref<16x16x360xf32, #tpu.memory_space<vmem>>, vector<16x16x24xf32>,
    %c0_122 = arith.constant 0 : index
    %c0_123 = arith.constant 0 : index
    %c0_124 = arith.constant 0 : index
    %101 = vector.load %arg10[%c0_122, %c0_123, %c0_124] : memref<16x16x360xf32, #tpu.memory_space<vmem>>, vector<16x16x216xf32>
    %c0_125 = arith.constant 0 : index
    %c0_126 = arith.constant 0 : index
    %102 = vector.load %arg4[%c0_125, %c0_126] : memref<216x8xf32, #tpu.memory_space<vmem>>, vector<216x8xf32>
    %cst_127 = arith.constant dense<0.000000e+00> : vector<16x16x8xf32>
    %103 = tpu.matmul %101, %102, %cst_127 {dimension_numbers = #tpu.dot_dimension_numbers<[2], [0], [0, 1], [1], [0, 0, 0, 1, 1, 1], [], []>} : vector<16x16x216xf32>, vector<216x8xf32>, vector<16x16x8xf32> -> vector<16x16x8xf32>
    %c2 = arith.constant 2 : index
    %c0_128 = arith.constant 0 : index
    %c0_129 = arith.constant 0 : index
    %104 = vector.load %arg7[%c2, %c0_128, %c0_129] : memref<5x1x8xf32, #tpu.memory_space<vmem>>, vector<1x1x8xf32>
    %105 = vector.shape_cast %104 : vector<1x1x8xf32> to vector<1x8xf32>
    %106 = vector.shape_cast %105 : vector<1x8xf32> to vector<1x1x8xf32>
    %107 = vector.broadcast %106 : vector<1x1x8xf32> to vector<16x16x8xf32>
    %108 = arith.addf %103, %107 : vector<16x16x8xf32>
    %c1_130 = arith.constant 1 : index
    %c1_131 = arith.constant 1 : index
    %c24_132 = arith.constant 24 : index
    %109 = vector.load %arg9[%c1_130, %c1_131, %c24_132] : memref<18x18x40xf32, #tpu.memory_space<vmem>>, vector<16x16x8xf32>
    tpu.vector_store %arg9[%c1_130, %c1_131, %c24_132], %108 {strides = array<i32>} : memref<18x18x40xf32, #tpu.memory_space<vmem>>, vector<16x16x8xf32>,
    %c0_133 = arith.constant 0 : index
    %c0_134 = arith.constant 0 : index
    %c0_135 = arith.constant 0 : index
    %110 = vector.load %arg9[%c0_133, %c0_134, %c0_135] : memref<18x18x40xf32, #tpu.memory_space<vmem>>, vector<18x18x32xf32>
    %cst_136 = arith.constant 0.000000e+00 : f32
    %111 = vector.broadcast %cst_136 : f32 to vector<18x18x32xf32>
    %112 = arith.cmpf oge, %110, %111 : vector<18x18x32xf32>
    %cst_137 = arith.constant 1.000000e-01 : f32
    %113 = vector.broadcast %cst_137 : f32 to vector<18x18x32xf32>
    %114 = arith.mulf %113, %110 : vector<18x18x32xf32>
    %115 = arith.select %112, %110, %114 : vector<18x18x32xi1>, vector<18x18x32xf32>
    %116 = vector.extract_strided_slice %115 {offsets = [0, 0, 0], sizes = [16, 16, 32], strides = [1, 1, 1]} : vector<18x18x32xf32> to vector<16x16x32xf32>
    %c0_138 = arith.constant 0 : index
    %c0_139 = arith.constant 0 : index
    %c0_140 = arith.constant 0 : index
    %117 = vector.load %arg10[%c0_138, %c0_139, %c0_140] : memref<16x16x360xf32, #tpu.memory_space<vmem>>, vector<16x16x32xf32>
    tpu.vector_store %arg10[%c0_138, %c0_139, %c0_140], %116 {strides = array<i32>} : memref<16x16x360xf32, #tpu.memory_space<vmem>>, vector<16x16x32xf32>,
    %118 = vector.extract_strided_slice %115 {offsets = [0, 1, 0], sizes = [16, 16, 32], strides = [1, 1, 1]} : vector<18x18x32xf32> to vector<16x16x32xf32>
    %c0_141 = arith.constant 0 : index
    %c0_142 = arith.constant 0 : index
    %c32_143 = arith.constant 32 : index
    %119 = vector.load %arg10[%c0_141, %c0_142, %c32_143] : memref<16x16x360xf32, #tpu.memory_space<vmem>>, vector<16x16x32xf32>
    tpu.vector_store %arg10[%c0_141, %c0_142, %c32_143], %118 {strides = array<i32>} : memref<16x16x360xf32, #tpu.memory_space<vmem>>, vector<16x16x32xf32>,
    %120 = vector.extract_strided_slice %115 {offsets = [0, 2, 0], sizes = [16, 16, 32], strides = [1, 1, 1]} : vector<18x18x32xf32> to vector<16x16x32xf32>
    %c0_144 = arith.constant 0 : index
    %c0_145 = arith.constant 0 : index
    %c64_146 = arith.constant 64 : index
    %121 = vector.load %arg10[%c0_144, %c0_145, %c64_146] : memref<16x16x360xf32, #tpu.memory_space<vmem>>, vector<16x16x32xf32>
    tpu.vector_store %arg10[%c0_144, %c0_145, %c64_146], %120 {strides = array<i32>} : memref<16x16x360xf32, #tpu.memory_space<vmem>>, vector<16x16x32xf32>,
    %122 = vector.extract_strided_slice %115 {offsets = [1, 0, 0], sizes = [16, 16, 32], strides = [1, 1, 1]} : vector<18x18x32xf32> to vector<16x16x32xf32>
    %c0_147 = arith.constant 0 : index
    %c0_148 = arith.constant 0 : index
    %c96_149 = arith.constant 96 : index
    %123 = vector.load %arg10[%c0_147, %c0_148, %c96_149] : memref<16x16x360xf32, #tpu.memory_space<vmem>>, vector<16x16x32xf32>
    tpu.vector_store %arg10[%c0_147, %c0_148, %c96_149], %122 {strides = array<i32>} : memref<16x16x360xf32, #tpu.memory_space<vmem>>, vector<16x16x32xf32>,
    %124 = vector.extract_strided_slice %115 {offsets = [1, 1, 0], sizes = [16, 16, 32], strides = [1, 1, 1]} : vector<18x18x32xf32> to vector<16x16x32xf32>
    %c0_150 = arith.constant 0 : index
    %c0_151 = arith.constant 0 : index
    %c128_152 = arith.constant 128 : index
    %125 = vector.load %arg10[%c0_150, %c0_151, %c128_152] : memref<16x16x360xf32, #tpu.memory_space<vmem>>, vector<16x16x32xf32>
    tpu.vector_store %arg10[%c0_150, %c0_151, %c128_152], %124 {strides = array<i32>} : memref<16x16x360xf32, #tpu.memory_space<vmem>>, vector<16x16x32xf32>,
    %126 = vector.extract_strided_slice %115 {offsets = [1, 2, 0], sizes = [16, 16, 32], strides = [1, 1, 1]} : vector<18x18x32xf32> to vector<16x16x32xf32>
    %c0_153 = arith.constant 0 : index
    %c0_154 = arith.constant 0 : index
    %c160 = arith.constant 160 : index
    %127 = vector.load %arg10[%c0_153, %c0_154, %c160] : memref<16x16x360xf32, #tpu.memory_space<vmem>>, vector<16x16x32xf32>
    tpu.vector_store %arg10[%c0_153, %c0_154, %c160], %126 {strides = array<i32>} : memref<16x16x360xf32, #tpu.memory_space<vmem>>, vector<16x16x32xf32>,
    %128 = vector.extract_strided_slice %115 {offsets = [2, 0, 0], sizes = [16, 16, 32], strides = [1, 1, 1]} : vector<18x18x32xf32> to vector<16x16x32xf32>
    %c0_155 = arith.constant 0 : index
    %c0_156 = arith.constant 0 : index
    %c192_157 = arith.constant 192 : index
    %129 = vector.load %arg10[%c0_155, %c0_156, %c192_157] : memref<16x16x360xf32, #tpu.memory_space<vmem>>, vector<16x16x32xf32>
    tpu.vector_store %arg10[%c0_155, %c0_156, %c192_157], %128 {strides = array<i32>} : memref<16x16x360xf32, #tpu.memory_space<vmem>>, vector<16x16x32xf32>,
    %130 = vector.extract_strided_slice %115 {offsets = [2, 1, 0], sizes = [16, 16, 32], strides = [1, 1, 1]} : vector<18x18x32xf32> to vector<16x16x32xf32>
    %c0_158 = arith.constant 0 : index
    %c0_159 = arith.constant 0 : index
    %c224 = arith.constant 224 : index
    %131 = vector.load %arg10[%c0_158, %c0_159, %c224] : memref<16x16x360xf32, #tpu.memory_space<vmem>>, vector<16x16x32xf32>
    tpu.vector_store %arg10[%c0_158, %c0_159, %c224], %130 {strides = array<i32>} : memref<16x16x360xf32, #tpu.memory_space<vmem>>, vector<16x16x32xf32>,
    %132 = vector.extract_strided_slice %115 {offsets = [2, 2, 0], sizes = [16, 16, 32], strides = [1, 1, 1]} : vector<18x18x32xf32> to vector<16x16x32xf32>
    %c0_160 = arith.constant 0 : index
    %c0_161 = arith.constant 0 : index
    %c256 = arith.constant 256 : index
    %133 = vector.load %arg10[%c0_160, %c0_161, %c256] : memref<16x16x360xf32, #tpu.memory_space<vmem>>, vector<16x16x32xf32>
    tpu.vector_store %arg10[%c0_160, %c0_161, %c256], %132 {strides = array<i32>} : memref<16x16x360xf32, #tpu.memory_space<vmem>>, vector<16x16x32xf32>,
    %c0_162 = arith.constant 0 : index
    %c0_163 = arith.constant 0 : index
    %c0_164 = arith.constant 0 : index
    %134 = vector.load %arg10[%c0_162, %c0_163, %c0_164] : memref<16x16x360xf32, #tpu.memory_space<vmem>>, vector<16x16x288xf32>
    %c0_165 = arith.constant 0 : index
    %c0_166 = arith.constant 0 : index
    %135 = vector.load %arg5[%c0_165, %c0_166] : memref<288x8xf32, #tpu.memory_space<vmem>>, vector<288x8xf32>
    %cst_167 = arith.constant dense<0.000000e+00> : vector<16x16x8xf32>
    %136 = tpu.matmul %134, %135, %cst_167 {dimension_numbers = #tpu.dot_dimension_numbers<[2], [0], [0, 1], [1], [0, 0, 0, 1, 1, 1], [], []>} : vector<16x16x288xf32>, vector<288x8xf32>, vector<16x16x8xf32> -> vector<16x16x8xf32>
    %c3 = arith.constant 3 : index
    %c0_168 = arith.constant 0 : index
    %c0_169 = arith.constant 0 : index
    %137 = vector.load %arg7[%c3, %c0_168, %c0_169] : memref<5x1x8xf32, #tpu.memory_space<vmem>>, vector<1x1x8xf32>
    %138 = vector.shape_cast %137 : vector<1x1x8xf32> to vector<1x8xf32>
    %139 = vector.shape_cast %138 : vector<1x8xf32> to vector<1x1x8xf32>
    %140 = vector.broadcast %139 : vector<1x1x8xf32> to vector<16x16x8xf32>
    %141 = arith.addf %136, %140 : vector<16x16x8xf32>
    %c1_170 = arith.constant 1 : index
    %c1_171 = arith.constant 1 : index
    %c32_172 = arith.constant 32 : index
    %142 = vector.load %arg9[%c1_170, %c1_171, %c32_172] : memref<18x18x40xf32, #tpu.memory_space<vmem>>, vector<16x16x8xf32>
    tpu.vector_store %arg9[%c1_170, %c1_171, %c32_172], %141 {strides = array<i32>} : memref<18x18x40xf32, #tpu.memory_space<vmem>>, vector<16x16x8xf32>,
    %c0_173 = arith.constant 0 : index
    %c0_174 = arith.constant 0 : index
    %c0_175 = arith.constant 0 : index
    %143 = vector.load %arg9[%c0_173, %c0_174, %c0_175] : memref<18x18x40xf32, #tpu.memory_space<vmem>>, vector<18x18x40xf32>
    %144 = vector.extract_strided_slice %143 {offsets = [0, 0, 0], sizes = [16, 16, 40], strides = [1, 1, 1]} : vector<18x18x40xf32> to vector<16x16x40xf32>
    %c0_176 = arith.constant 0 : index
    %c0_177 = arith.constant 0 : index
    %c0_178 = arith.constant 0 : index
    %145 = vector.load %arg10[%c0_176, %c0_177, %c0_178] : memref<16x16x360xf32, #tpu.memory_space<vmem>>, vector<16x16x40xf32>
    tpu.vector_store %arg10[%c0_176, %c0_177, %c0_178], %144 {strides = array<i32>} : memref<16x16x360xf32, #tpu.memory_space<vmem>>, vector<16x16x40xf32>,
    %146 = vector.extract_strided_slice %143 {offsets = [0, 1, 0], sizes = [16, 16, 40], strides = [1, 1, 1]} : vector<18x18x40xf32> to vector<16x16x40xf32>
    %c0_179 = arith.constant 0 : index
    %c0_180 = arith.constant 0 : index
    %c40_181 = arith.constant 40 : index
    %147 = vector.load %arg10[%c0_179, %c0_180, %c40_181] : memref<16x16x360xf32, #tpu.memory_space<vmem>>, vector<16x16x40xf32>
    tpu.vector_store %arg10[%c0_179, %c0_180, %c40_181], %146 {strides = array<i32>} : memref<16x16x360xf32, #tpu.memory_space<vmem>>, vector<16x16x40xf32>,
    %148 = vector.extract_strided_slice %143 {offsets = [0, 2, 0], sizes = [16, 16, 40], strides = [1, 1, 1]} : vector<18x18x40xf32> to vector<16x16x40xf32>
    %c0_182 = arith.constant 0 : index
    %c0_183 = arith.constant 0 : index
    %c80_184 = arith.constant 80 : index
    %149 = vector.load %arg10[%c0_182, %c0_183, %c80_184] : memref<16x16x360xf32, #tpu.memory_space<vmem>>, vector<16x16x40xf32>
    tpu.vector_store %arg10[%c0_182, %c0_183, %c80_184], %148 {strides = array<i32>} : memref<16x16x360xf32, #tpu.memory_space<vmem>>, vector<16x16x40xf32>,
    %150 = vector.extract_strided_slice %143 {offsets = [1, 0, 0], sizes = [16, 16, 40], strides = [1, 1, 1]} : vector<18x18x40xf32> to vector<16x16x40xf32>
    %c0_185 = arith.constant 0 : index
    %c0_186 = arith.constant 0 : index
    %c120_187 = arith.constant 120 : index
    %151 = vector.load %arg10[%c0_185, %c0_186, %c120_187] : memref<16x16x360xf32, #tpu.memory_space<vmem>>, vector<16x16x40xf32>
    tpu.vector_store %arg10[%c0_185, %c0_186, %c120_187], %150 {strides = array<i32>} : memref<16x16x360xf32, #tpu.memory_space<vmem>>, vector<16x16x40xf32>,
    %152 = vector.extract_strided_slice %143 {offsets = [1, 1, 0], sizes = [16, 16, 40], strides = [1, 1, 1]} : vector<18x18x40xf32> to vector<16x16x40xf32>
    %c0_188 = arith.constant 0 : index
    %c0_189 = arith.constant 0 : index
    %c160_190 = arith.constant 160 : index
    %153 = vector.load %arg10[%c0_188, %c0_189, %c160_190] : memref<16x16x360xf32, #tpu.memory_space<vmem>>, vector<16x16x40xf32>
    tpu.vector_store %arg10[%c0_188, %c0_189, %c160_190], %152 {strides = array<i32>} : memref<16x16x360xf32, #tpu.memory_space<vmem>>, vector<16x16x40xf32>,
    %154 = vector.extract_strided_slice %143 {offsets = [1, 2, 0], sizes = [16, 16, 40], strides = [1, 1, 1]} : vector<18x18x40xf32> to vector<16x16x40xf32>
    %c0_191 = arith.constant 0 : index
    %c0_192 = arith.constant 0 : index
    %c200 = arith.constant 200 : index
    %155 = vector.load %arg10[%c0_191, %c0_192, %c200] : memref<16x16x360xf32, #tpu.memory_space<vmem>>, vector<16x16x40xf32>
    tpu.vector_store %arg10[%c0_191, %c0_192, %c200], %154 {strides = array<i32>} : memref<16x16x360xf32, #tpu.memory_space<vmem>>, vector<16x16x40xf32>,
    %156 = vector.extract_strided_slice %143 {offsets = [2, 0, 0], sizes = [16, 16, 40], strides = [1, 1, 1]} : vector<18x18x40xf32> to vector<16x16x40xf32>
    %c0_193 = arith.constant 0 : index
    %c0_194 = arith.constant 0 : index
    %c240 = arith.constant 240 : index
    %157 = vector.load %arg10[%c0_193, %c0_194, %c240] : memref<16x16x360xf32, #tpu.memory_space<vmem>>, vector<16x16x40xf32>
    tpu.vector_store %arg10[%c0_193, %c0_194, %c240], %156 {strides = array<i32>} : memref<16x16x360xf32, #tpu.memory_space<vmem>>, vector<16x16x40xf32>,
    %158 = vector.extract_strided_slice %143 {offsets = [2, 1, 0], sizes = [16, 16, 40], strides = [1, 1, 1]} : vector<18x18x40xf32> to vector<16x16x40xf32>
    %c0_195 = arith.constant 0 : index
    %c0_196 = arith.constant 0 : index
    %c280 = arith.constant 280 : index
    %159 = vector.load %arg10[%c0_195, %c0_196, %c280] : memref<16x16x360xf32, #tpu.memory_space<vmem>>, vector<16x16x40xf32>
    tpu.vector_store %arg10[%c0_195, %c0_196, %c280], %158 {strides = array<i32>} : memref<16x16x360xf32, #tpu.memory_space<vmem>>, vector<16x16x40xf32>,
    %160 = vector.extract_strided_slice %143 {offsets = [2, 2, 0], sizes = [16, 16, 40], strides = [1, 1, 1]} : vector<18x18x40xf32> to vector<16x16x40xf32>
    %c0_197 = arith.constant 0 : index
    %c0_198 = arith.constant 0 : index
    %c320 = arith.constant 320 : index
    %161 = vector.load %arg10[%c0_197, %c0_198, %c320] : memref<16x16x360xf32, #tpu.memory_space<vmem>>, vector<16x16x40xf32>
    tpu.vector_store %arg10[%c0_197, %c0_198, %c320], %160 {strides = array<i32>} : memref<16x16x360xf32, #tpu.memory_space<vmem>>, vector<16x16x40xf32>,
    %c0_199 = arith.constant 0 : index
    %c0_200 = arith.constant 0 : index
    %c0_201 = arith.constant 0 : index
    %162 = vector.load %arg10[%c0_199, %c0_200, %c0_201] : memref<16x16x360xf32, #tpu.memory_space<vmem>>, vector<16x16x360xf32>
    %c0_202 = arith.constant 0 : index
    %c0_203 = arith.constant 0 : index
    %163 = vector.load %arg6[%c0_202, %c0_203] : memref<360x8xf32, #tpu.memory_space<vmem>>, vector<360x8xf32>
    %cst_204 = arith.constant dense<0.000000e+00> : vector<16x16x8xf32>
    %164 = tpu.matmul %162, %163, %cst_204 {dimension_numbers = #tpu.dot_dimension_numbers<[2], [0], [0, 1], [1], [0, 0, 0, 1, 1, 1], [], []>} : vector<16x16x360xf32>, vector<360x8xf32>, vector<16x16x8xf32> -> vector<16x16x8xf32>
    %c4 = arith.constant 4 : index
    %c0_205 = arith.constant 0 : index
    %c0_206 = arith.constant 0 : index
    %165 = vector.load %arg7[%c4, %c0_205, %c0_206] : memref<5x1x8xf32, #tpu.memory_space<vmem>>, vector<1x1x8xf32>
    %166 = vector.shape_cast %165 : vector<1x1x8xf32> to vector<1x8xf32>
    %167 = vector.shape_cast %166 : vector<1x8xf32> to vector<1x1x8xf32>
    %168 = vector.broadcast %167 : vector<1x1x8xf32> to vector<16x16x8xf32>
    %169 = arith.addf %164, %168 : vector<16x16x8xf32>
    %cst_207 = arith.constant 2.000000e-01 : f32
    %170 = vector.broadcast %cst_207 : f32 to vector<16x16x8xf32>
    %171 = arith.mulf %169, %170 : vector<16x16x8xf32>
    %c0_208 = arith.constant 0 : index
    %c0_209 = arith.constant 0 : index
    %c0_210 = arith.constant 0 : index
    %c0_211 = arith.constant 0 : index
    %172 = vector.load %arg1[%c0_208, %c0_209, %c0_210, %c0_211] : memref<1x16x16x8xf32, #tpu.memory_space<vmem>>, vector<1x16x16x8xf32>
    %173 = vector.shape_cast %172 : vector<1x16x16x8xf32> to vector<16x16x8xf32>
    %174 = arith.addf %171, %173 : vector<16x16x8xf32>
    %c0_212 = arith.constant 0 : index
    %c0_213 = arith.constant 0 : index
    %c0_214 = arith.constant 0 : index
    %c0_215 = arith.constant 0 : index
    %175 = vector.load %arg8[%c0_212, %c0_213, %c0_214, %c0_215] : memref<1x16x16x8xf32, #tpu.memory_space<vmem>>, vector<1x16x16x8xf32>
    %176 = vector.shape_cast %175 : vector<1x16x16x8xf32> to vector<16x16x8xf32>
    %177 = vector.shape_cast %174 : vector<16x16x8xf32> to vector<1x16x16x8xf32>
    tpu.vector_store %arg8[%c0_212, %c0_213, %c0_214, %c0_215], %177 {strides = array<i32>} : memref<1x16x16x8xf32, #tpu.memory_space<vmem>>, vector<1x16x16x8xf32>,
    return
  }
  func.func @transform_0(%arg0: i32) -> (i32, i32, i32, i32) {
    %c0_i32 = arith.constant 0 : i32
    %c0_i32_0 = arith.constant 0 : i32
    %c0_i32_1 = arith.constant 0 : i32
    %c0_i32_2 = arith.constant 0 : i32
    return %arg0, %c0_i32, %c0_i32_0, %c0_i32_1 : i32, i32, i32, i32
  }
  func.func @transform_1(%arg0: i32) -> (i32, i32) {
    %c0_i32 = arith.constant 0 : i32
    %c0_i32_0 = arith.constant 0 : i32
    %c0_i32_1 = arith.constant 0 : i32
    return %c0_i32, %c0_i32_0 : i32, i32
  }
  func.func @transform_2(%arg0: i32) -> (i32, i32) {
    %c0_i32 = arith.constant 0 : i32
    %c0_i32_0 = arith.constant 0 : i32
    %c0_i32_1 = arith.constant 0 : i32
    return %c0_i32, %c0_i32_0 : i32, i32
  }
  func.func @transform_3(%arg0: i32) -> (i32, i32) {
    %c0_i32 = arith.constant 0 : i32
    %c0_i32_0 = arith.constant 0 : i32
    %c0_i32_1 = arith.constant 0 : i32
    return %c0_i32, %c0_i32_0 : i32, i32
  }
  func.func @transform_4(%arg0: i32) -> (i32, i32) {
    %c0_i32 = arith.constant 0 : i32
    %c0_i32_0 = arith.constant 0 : i32
    %c0_i32_1 = arith.constant 0 : i32
    return %c0_i32, %c0_i32_0 : i32, i32
  }
  func.func @transform_5(%arg0: i32) -> (i32, i32) {
    %c0_i32 = arith.constant 0 : i32
    %c0_i32_0 = arith.constant 0 : i32
    %c0_i32_1 = arith.constant 0 : i32
    return %c0_i32, %c0_i32_0 : i32, i32
  }
  func.func @transform_6(%arg0: i32) -> (i32, i32, i32) {
    %c0_i32 = arith.constant 0 : i32
    %c0_i32_0 = arith.constant 0 : i32
    %c0_i32_1 = arith.constant 0 : i32
    %c0_i32_2 = arith.constant 0 : i32
    return %c0_i32, %c0_i32_0, %c0_i32_1 : i32, i32, i32
  }
  func.func @transform_7(%arg0: i32) -> (i32, i32, i32, i32) {
    %c0_i32 = arith.constant 0 : i32
    %c0_i32_0 = arith.constant 0 : i32
    %c0_i32_1 = arith.constant 0 : i32
    %c0_i32_2 = arith.constant 0 : i32
    return %arg0, %c0_i32, %c0_i32_0, %c0_i32_1 : i32, i32, i32, i32
  }
}

</mosaic_0001>

<llo_original>
// kernel: residual_dense_block.1
$region0: #{residual_dense_block.1}
  #allocation0 [shape = 'u32[]', space=smem, size = 0x4, offset = 0x4, fixed_abs, tag = 'smem constant byte address 0x4 - core index']
  #allocation1 [shape = 'u32[72,128]{1,0:T(1,128)}', space=vmem, size = 0x9000, scoped, tag = 'internal scratch']
  #allocation2 [shape = 'f32[18,18,40]{2,1,0:T(8,128)}', space=vmem, size = 0x36000, scoped, tag = 'scratch operand']
  #allocation3 [shape = 'f32[16,16,360]{2,1,0:T(8,128)}', space=vmem, size = 0x60000, scoped, tag = 'scratch operand']
  %s0 = inlined_call_operand.vmem [shape: f32[2,16,16,8], index: 0, kind: input, shape index: {}]
  %s1 = inlined_call_operand.vmem [shape: f32[72,8], index: 1, kind: input, shape index: {}]
  %s2 = inlined_call_operand.vmem [shape: f32[144,8], index: 2, kind: input, shape index: {}]
  %s3 = inlined_call_operand.vmem [shape: f32[216,8], index: 3, kind: input, shape index: {}]
  %s4 = inlined_call_operand.vmem [shape: f32[288,8], index: 4, kind: input, shape index: {}]
  %s5 = inlined_call_operand.vmem [shape: f32[360,8], index: 5, kind: input, shape index: {}]
  %s6 = inlined_call_operand.vmem [shape: f32[5,1,8], index: 6, kind: input, shape index: {}]
  %s7 = inlined_call_operand.vmem [shape: f32[2,16,16,8], index: 7, kind: output, shape index: {}]
  %s8 = sld [smem:[#allocation0]]
  $region61: #{residual_dense_block.1} parent=0
    _
  %s10 = ssub.s32 1, %s8
  %s11 = scalar_select 0, %s10, %s8
  loop: start=0, step=1, limit=4
  $region2: #{residual_dense_block.1} parent=0 // loop_pre_header
    _
  $region3: #{residual_dense_block.1} parent=0 // loop_header
    %s13 = sphi 0, %s17
    %p14 = scmp.ge.s32.totalorder %s13, 4
    %s23 = sphi 0, %s25
    %s26 = sphi 0, %s23
    %s27 = sphi 0, %s26
    %s43 = sphi 0, %s27
    %s47 = sphi 0, %s47
    %s49 = sphi 0, %s47
    %s50 = sphi 0, %s49
    %s64 = sphi 0, %s50
    %s68 = sphi 0, %s68
    %s70 = sphi 0, %s68
    %s71 = sphi 0, %s70
    %s85 = sphi 0, %s71
    %s89 = sphi 0, %s89
    %s91 = sphi 0, %s89
    %s92 = sphi 0, %s91
    %s106 = sphi 0, %s92
    %s110 = sphi 0, %s110
    %s112 = sphi 0, %s110
    %s113 = sphi 0, %s112
    %s127 = sphi 0, %s113
    %s131 = sphi 0, %s131
    %s133 = sphi 0, %s131
    %s134 = sphi 0, %s133
    %s148 = sphi 0, %s134
    %s152 = sphi 0, %s152
    %s154 = sphi 0, %s152
    %s155 = sphi 0, %s154
    %s169 = sphi 0, %s155
    %s175 = sphi 0, %s177
    %s178 = sphi 0, %s175
    %s179 = sphi 0, %s178
    %s195 = sphi 0, %s179
  $region4: #{residual_dense_block.1} parent=0 // loop_header_branch
    %16 = sbr.rel (%p14) target = $region8
  $region5: #{residual_dense_block.1} parent=0 // loop_body
    %s18 = ssub.s32 %s13, 1
    %s19 = ssub.s32 %s13, 2
    %s20 = sadd.s32 %s13, 1
    %s21 = ssub.s32 %s13, %s20
    %p22 = scmp.eq.s32.totalorder %s21, 0
    %s24 = sadd.s32 %s23, 1
    %s25 = scalar_select %p22, %s23, %s24
    %p28 = pneg %p22
    %p29 = scmp.eq.s32.totalorder %s13, 1
    %p30 = por %p28, %p29
    %p31 = scmp.ne.s32.totalorder %s23, %s26
    %p32 = scmp.eq.s32.totalorder %s13, 0
    %p33 = por %p31, %p32
    %p34 = scmp.ne.s32.totalorder %s23, %s26
    %p35 = scmp.eq.s32.totalorder %s18, 1
    %p36 = por %p34, %p35
    %p37 = scmp.ne.s32.totalorder %s26, %s27
    %p38 = scmp.eq.s32.totalorder %s18, 0
    %p39 = por %p37, %p38
    %p40 = scmp.ne.s32.totalorder %s26, %s27
    %p41 = scmp.eq.s32.totalorder %s19, 1
    %p42 = por %p40, %p41
    %p44 = scmp.ne.s32.totalorder %s27, %s43
    %p45 = scmp.eq.s32.totalorder %s19, 0
    %p46 = por %p44, %p45
    %s48 = sadd.s32 %s47, 1
    %p51 = scmp.eq.s32.totalorder %s13, 1
    %p52 = scmp.ne.s32.totalorder %s47, %s49
    %p53 = scmp.eq.s32.totalorder %s13, 0
    %p54 = por %p52, %p53
    %p55 = scmp.ne.s32.totalorder %s47, %s49
    %p56 = scmp.eq.s32.totalorder %s18, 1
    %p57 = por %p55, %p56
    %p58 = scmp.ne.s32.totalorder %s49, %s50
    %p59 = scmp.eq.s32.totalorder %s18, 0
    %p60 = por %p58, %p59
    %p61 = scmp.ne.s32.totalorder %s49, %s50
    %p62 = scmp.eq.s32.totalorder %s19, 1
    %p63 = por %p61, %p62
    %p65 = scmp.ne.s32.totalorder %s50, %s64
    %p66 = scmp.eq.s32.totalorder %s19, 0
    %p67 = por %p65, %p66
    %s69 = sadd.s32 %s68, 1
    %p72 = scmp.eq.s32.totalorder %s13, 1
    %p73 = scmp.ne.s32.totalorder %s68, %s70
    %p74 = scmp.eq.s32.totalorder %s13, 0
    %p75 = por %p73, %p74
    %p76 = scmp.ne.s32.totalorder %s68, %s70
    %p77 = scmp.eq.s32.totalorder %s18, 1
    %p78 = por %p76, %p77
    %p79 = scmp.ne.s32.totalorder %s70, %s71
    %p80 = scmp.eq.s32.totalorder %s18, 0
    %p81 = por %p79, %p80
    %p82 = scmp.ne.s32.totalorder %s70, %s71
    %p83 = scmp.eq.s32.totalorder %s19, 1
    %p84 = por %p82, %p83
    %p86 = scmp.ne.s32.totalorder %s71, %s85
    %p87 = scmp.eq.s32.totalorder %s19, 0
    %p88 = por %p86, %p87
    %s90 = sadd.s32 %s89, 1
    %p93 = scmp.eq.s32.totalorder %s13, 1
    %p94 = scmp.ne.s32.totalorder %s89, %s91
    %p95 = scmp.eq.s32.totalorder %s13, 0
    %p96 = por %p94, %p95
    %p97 = scmp.ne.s32.totalorder %s89, %s91
    %p98 = scmp.eq.s32.totalorder %s18, 1
    %p99 = por %p97, %p98
    %p100 = scmp.ne.s32.totalorder %s91, %s92
    %p101 = scmp.eq.s32.totalorder %s18, 0
    %p102 = por %p100, %p101
    %p103 = scmp.ne.s32.totalorder %s91, %s92
    %p104 = scmp.eq.s32.totalorder %s19, 1
    %p105 = por %p103, %p104
    %p107 = scmp.ne.s32.totalorder %s92, %s106
    %p108 = scmp.eq.s32.totalorder %s19, 0
    %p109 = por %p107, %p108
    %s111 = sadd.s32 %s110, 1
    %p114 = scmp.eq.s32.totalorder %s13, 1
    %p115 = scmp.ne.s32.totalorder %s110, %s112
    %p116 = scmp.eq.s32.totalorder %s13, 0
    %p117 = por %p115, %p116
    %p118 = scmp.ne.s32.totalorder %s110, %s112
    %p119 = scmp.eq.s32.totalorder %s18, 1
    %p120 = por %p118, %p119
    %p121 = scmp.ne.s32.totalorder %s112, %s113
    %p122 = scmp.eq.s32.totalorder %s18, 0
    %p123 = por %p121, %p122
    %p124 = scmp.ne.s32.totalorder %s112, %s113
    %p125 = scmp.eq.s32.totalorder %s19, 1
    %p126 = por %p124, %p125
    %p128 = scmp.ne.s32.totalorder %s113, %s127
    %p129 = scmp.eq.s32.totalorder %s19, 0
    %p130 = por %p128, %p129
    %s132 = sadd.s32 %s131, 1
    %p135 = scmp.eq.s32.totalorder %s13, 1
    %p136 = scmp.ne.s32.totalorder %s131, %s133
    %p137 = scmp.eq.s32.totalorder %s13, 0
    %p138 = por %p136, %p137
    %p139 = scmp.ne.s32.totalorder %s131, %s133
    %p140 = scmp.eq.s32.totalorder %s18, 1
    %p141 = por %p139, %p140
    %p142 = scmp.ne.s32.totalorder %s133, %s134
    %p143 = scmp.eq.s32.totalorder %s18, 0
    %p144 = por %p142, %p143
    %p145 = scmp.ne.s32.totalorder %s133, %s134
    %p146 = scmp.eq.s32.totalorder %s19, 1
    %p147 = por %p145, %p146
    %p149 = scmp.ne.s32.totalorder %s134, %s148
    %p150 = scmp.eq.s32.totalorder %s19, 0
    %p151 = por %p149, %p150
    %s153 = sadd.s32 %s152, 1
    %p156 = scmp.eq.s32.totalorder %s13, 1
    %p157 = scmp.ne.s32.totalorder %s152, %s154
    %p158 = scmp.eq.s32.totalorder %s13, 0
    %p159 = por %p157, %p158
    %p160 = scmp.ne.s32.totalorder %s152, %s154
    %p161 = scmp.eq.s32.totalorder %s18, 1
    %p162 = por %p160, %p161
    %p163 = scmp.ne.s32.totalorder %s154, %s155
    %p164 = scmp.eq.s32.totalorder %s18, 0
    %p165 = por %p163, %p164
    %p166 = scmp.ne.s32.totalorder %s154, %s155
    %p167 = scmp.eq.s32.totalorder %s19, 1
    %p168 = por %p166, %p167
    %p170 = scmp.ne.s32.totalorder %s155, %s169
    %p171 = scmp.eq.s32.totalorder %s19, 0
    %p172 = por %p170, %p171
    %s173 = ssub.s32 %s13, %s20
    %p174 = scmp.eq.s32.totalorder %s173, 0
    %s176 = sadd.s32 %s175, 1
    %s177 = scalar_select %p174, %s175, %s176
    %p180 = pneg %p174
    %p181 = scmp.eq.s32.totalorder %s13, 1
    %p182 = por %p180, %p181
    %p183 = scmp.ne.s32.totalorder %s175, %s178
    %p184 = scmp.eq.s32.totalorder %s13, 0
    %p185 = por %p183, %p184
    %p186 = scmp.ne.s32.totalorder %s175, %s178
    %p187 = scmp.eq.s32.totalorder %s18, 1
    %p188 = por %p186, %p187
    %p189 = scmp.ne.s32.totalorder %s178, %s179
    %p190 = scmp.eq.s32.totalorder %s18, 0
    %p191 = por %p189, %p190
    %p192 = scmp.ne.s32.totalorder %s178, %s179
    %p193 = scmp.eq.s32.totalorder %s19, 1
    %p194 = por %p192, %p193
    %p196 = scmp.ne.s32.totalorder %s179, %s195
    %p197 = scmp.eq.s32.totalorder %s19, 0
    %p198 = por %p196, %p197
    %p199 = scmp.le.s32.totalorder 1, %s13
    %p200 = scmp.lt.s32.totalorder %s13, 3
    %p201 = pnand %p199, %p200
    %p202 = pneg %p201
    // Predicated region
    $region9: #{residual_dense_block.1} parent=5 // pred_check
      _
    $region10: #{residual_dense_block.1} parent=5 // pred_check_branch
      %204 = sbr.rel (%p201) target = $region12
    $region11: #{residual_dense_block.1} parent=5 // pred_region
      %s205 = ssub.s32 %s13, 1
      // Predicated region
      $region13: #{residual_dense_block.1} parent=11 // pred_check
        %p206 = pneg %p60
      $region14: #{residual_dense_block.1} parent=11 // pred_check_branch
        %208 = sbr.rel (%p206) target = $region16
      $region15: #{residual_dense_block.1} parent=11 // pred_region
        _
      $region16: #{residual_dense_block.1} parent=11 // pred_fallthru
        _
      // Predicated region
      $region17: #{residual_dense_block.1} parent=11 // pred_check
        %p209 = pneg %p81
      $region18: #{residual_dense_block.1} parent=11 // pred_check_branch
        %211 = sbr.rel (%p209) target = $region20
      $region19: #{residual_dense_block.1} parent=11 // pred_region
        _
      $region20: #{residual_dense_block.1} parent=11 // pred_fallthru
        _
      // Predicated region
      $region21: #{residual_dense_block.1} parent=11 // pred_check
        %p212 = pneg %p102
      $region22: #{residual_dense_block.1} parent=11 // pred_check_branch
        %214 = sbr.rel (%p212) target = $region24
      $region23: #{residual_dense_block.1} parent=11 // pred_region
        _
      $region24: #{residual_dense_block.1} parent=11 // pred_fallthru
        _
      // Predicated region
      $region25: #{residual_dense_block.1} parent=11 // pred_check
        %p215 = pneg %p123
      $region26: #{residual_dense_block.1} parent=11 // pred_check_branch
        %217 = sbr.rel (%p215) target = $region28
      $region27: #{residual_dense_block.1} parent=11 // pred_region
        _
      $region28: #{residual_dense_block.1} parent=11 // pred_fallthru
        _
      // Predicated region
      $region29: #{residual_dense_block.1} parent=11 // pred_check
        %p218 = pneg %p144
      $region30: #{residual_dense_block.1} parent=11 // pred_check_branch
        %220 = sbr.rel (%p218) target = $region32
      $region31: #{residual_dense_block.1} parent=11 // pred_region
        _
      $region32: #{residual_dense_block.1} parent=11 // pred_fallthru
        _
      // Predicated region
      $region33: #{residual_dense_block.1} parent=11 // pred_check
        %p221 = pneg %p165
      $region34: #{residual_dense_block.1} parent=11 // pred_check_branch
        %223 = sbr.rel (%p221) target = $region36
      $region35: #{residual_dense_block.1} parent=11 // pred_region
        _
      $region36: #{residual_dense_block.1} parent=11 // pred_fallthru
        _
    $region12: #{residual_dense_block.1} parent=5 // pred_fallthru
      _
    %p224 = scmp.lt.s32.totalorder %s13, 2
    // Predicated region
    $region37: #{residual_dense_block.1} parent=5 // pred_check
      %p225 = pneg %p224
    $region38: #{residual_dense_block.1} parent=5 // pred_check_branch
      %227 = sbr.rel (%p225) target = $region40
    $region39: #{residual_dense_block.1} parent=5 // pred_region
      // Predicated region
      $region41: #{residual_dense_block.1} parent=39 // pred_check
        %p228 = pneg %p33
      $region42: #{residual_dense_block.1} parent=39 // pred_check_branch
        %230 = sbr.rel (%p228) target = $region44
      $region43: #{residual_dense_block.1} parent=39 // pred_region
        %p231 = scmp.lt.s32.totalorder %s13, 1
        %s232 = scalar_select %p231, %s13, 1
        %s233 = smul.addr %s232, 32
        %s234 = smul.addr %s233, 8
        %s235 = scalar_lea.vmem %s0, %s234
      $region44: #{residual_dense_block.1} parent=39 // pred_fallthru
        _
    $region40: #{residual_dense_block.1} parent=5 // pred_fallthru
      _
    %p236 = scmp.le.s32.totalorder 1, %s13
    %p237 = scmp.lt.s32.totalorder %s13, 3
    %p238 = pnand %p236, %p237
    %p239 = pneg %p238
    // Predicated region
    $region45: #{residual_dense_block.1} parent=5 // pred_check
      _
    $region46: #{residual_dense_block.1} parent=5 // pred_check_branch
      %241 = sbr.rel (%p238) target = $region48
    $region47: #{residual_dense_block.1} parent=5 // pred_region
      %s242 = ssub.s32 %s13, 1
      %p243 = scmp.lt.s32.totalorder %s18, 1
      %s244 = scalar_select %p243, %s18, 1
      %s245 = smul.addr %s244, 32
      %s246 = smul.addr %s245, 8
      %s247 = scalar_lea.vmem %s0, %s246
      %p248 = pneg %p39
      %p249 = pneg %p36
      %p250 = pneg %p60
      %p251 = pneg %p57
      %p252 = pneg %p81
      %p253 = pneg %p78
      %p254 = pneg %p102
      %p255 = pneg %p99
      %p256 = pneg %p123
      %p257 = pneg %p120
      %p258 = pneg %p144
      %p259 = pneg %p141
      %p260 = pneg %p165
      %p261 = pneg %p162
      %p262 = pneg %p191
      %p263 = pneg %p188
      %p264 = scmp.lt.s32.totalorder %s18, 1
      %s265 = scalar_select %p264, %s18, 1
      %s266 = smul.addr %s265, 32
      %s267 = smul.addr %s266, 8
      %s268 = scalar_lea.vmem %s7, %s267
      %p269 = scmp.lt.s32.totalorder %s18, 1
      %s270 = scalar_select %p269, %s18, 1
      %s271 = smul.addr %s270, 32
      %s272 = smul.addr %s271, 8
      %s273 = scalar_lea.vmem %s0, %s272
      %p274 = scmp.lt.s32.totalorder %s18, 1
      %s275 = scalar_select %p274, %s18, 1
      %s276 = smul.addr %s275, 32
      %s277 = smul.addr %s276, 8
      %s278 = scalar_lea.vmem %s7, %s277
      %vm279 = vcmask 326656
      %280 = vst.msk [vmem:[#allocation2] sm:$0xff] %vm279, 0.0
      %281 = vst.msk [vmem:[#allocation2 + $0x8] sm:$0xff] %vm279, 0.0
      %vm282 = vcmask 320512
      %283 = vst.msk [vmem:[#allocation2 + $0x10] sm:$0x3] %vm282, 0.0
      %s284 = scalar_lea.vmem [#allocation2], 408
      %285 = vst.msk [vmem:[%s284] sm:$0xff] %vm279, 0.0
      %286 = vst.msk [vmem:[%s284 + $0x8] sm:$0xff] %vm279, 0.0
      %287 = vst.msk [vmem:[%s284 + $0x10] sm:$0x3] %vm282, 0.0
      %vm288 = vcmask 319488
      %289 = vst.msk [vmem:[#allocation2] sm:$0x1] %vm288, 0.0
      %290 = vst.msk [vmem:[#allocation2 + $0x18] sm:$0x1] %vm288, 0.0
      %291 = vst.msk [vmem:[#allocation2 + $0x30] sm:$0x1] %vm288, 0.0
      %292 = vst.msk [vmem:[#allocation2 + $0x48] sm:$0x1] %vm288, 0.0
      %293 = vst.msk [vmem:[#allocation2 + $0x60] sm:$0x1] %vm288, 0.0
      %294 = vst.msk [vmem:[#allocation2 + $0x78] sm:$0x1] %vm288, 0.0
      %295 = vst.msk [vmem:[#allocation2 + $0x90] sm:$0x1] %vm288, 0.0
      %296 = vst.msk [vmem:[#allocation2 + $0xa8] sm:$0x1] %vm288, 0.0
      %297 = vst.msk [vmem:[#allocation2 + $0xc0] sm:$0x1] %vm288, 0.0
      %298 = vst.msk [vmem:[#allocation2 + $0xd8] sm:$0x1] %vm288, 0.0
      %299 = vst.msk [vmem:[#allocation2 + $0xf0] sm:$0x1] %vm288, 0.0
      %300 = vst.msk [vmem:[#allocation2 + $0x108] sm:$0x1] %vm288, 0.0
      %301 = vst.msk [vmem:[#allocation2 + $0x120] sm:$0x1] %vm288, 0.0
      %302 = vst.msk [vmem:[#allocation2 + $0x138] sm:$0x1] %vm288, 0.0
      %303 = vst.msk [vmem:[#allocation2 + $0x150] sm:$0x1] %vm288, 0.0
      %304 = vst.msk [vmem:[#allocation2 + $0x168] sm:$0x1] %vm288, 0.0
      %305 = vst.msk [vmem:[#allocation2 + $0x180] sm:$0x1] %vm288, 0.0
      %306 = vst.msk [vmem:[#allocation2 + $0x198] sm:$0x1] %vm288, 0.0
      %307 = vst.msk [vmem:[#allocation2 + $0x11] sm:$0x1] %vm288, 0.0
      %308 = vst.msk [vmem:[#allocation2 + $0x29] sm:$0x1] %vm288, 0.0
      %309 = vst.msk [vmem:[#allocation2 + $0x41] sm:$0x1] %vm288, 0.0
      %310 = vst.msk [vmem:[#allocation2 + $0x59] sm:$0x1] %vm288, 0.0
      %311 = vst.msk [vmem:[#allocation2 + $0x71] sm:$0x1] %vm288, 0.0
      %312 = vst.msk [vmem:[#allocation2 + $0x89] sm:$0x1] %vm288, 0.0
      %313 = vst.msk [vmem:[#allocation2 + $0xa1] sm:$0x1] %vm288, 0.0
      %314 = vst.msk [vmem:[#allocation2 + $0xb9] sm:$0x1] %vm288, 0.0
      %315 = vst.msk [vmem:[#allocation2 + $0xd1] sm:$0x1] %vm288, 0.0
      %316 = vst.msk [vmem:[#allocation2 + $0xe9] sm:$0x1] %vm288, 0.0
      %317 = vst.msk [vmem:[#allocation2 + $0x101] sm:$0x1] %vm288, 0.0
      %318 = vst.msk [vmem:[#allocation2 + $0x119] sm:$0x1] %vm288, 0.0
      %319 = vst.msk [vmem:[#allocation2 + $0x131] sm:$0x1] %vm288, 0.0
      %320 = vst.msk [vmem:[#allocation2 + $0x149] sm:$0x1] %vm288, 0.0
      %321 = vst.msk [vmem:[#allocation2 + $0x161] sm:$0x1] %vm288, 0.0
      %322 = vst.msk [vmem:[#allocation2 + $0x179] sm:$0x1] %vm288, 0.0
      %323 = vst.msk [vmem:[#allocation2 + $0x191] sm:$0x1] %vm288, 0.0
      %324 = vst.msk [vmem:[#allocation2 + $0x1a9] sm:$0x1] %vm288, 0.0
      %v325 = vld [vmem:[%s273] sm:$0xff]
      %v326 = vld [vmem:[%s273 + $0x8] sm:$0xff]
      %v327 = vld [vmem:[%s273 + $0x10] sm:$0xff]
      %v328 = vld [vmem:[%s273 + $0x18] sm:$0xff]
      %v329 = vld [vmem:[%s273 + $0x20] sm:$0xff]
      %v330 = vld [vmem:[%s273 + $0x28] sm:$0xff]
      %v331 = vld [vmem:[%s273 + $0x30] sm:$0xff]
      %v332 = vld [vmem:[%s273 + $0x38] sm:$0xff]
      %v333 = vld [vmem:[%s273 + $0x40] sm:$0xff]
      %v334 = vld [vmem:[%s273 + $0x48] sm:$0xff]
      %v335 = vld [vmem:[%s273 + $0x50] sm:$0xff]
      %v336 = vld [vmem:[%s273 + $0x58] sm:$0xff]
      %v337 = vld [vmem:[%s273 + $0x60] sm:$0xff]
      %v338 = vld [vmem:[%s273 + $0x68] sm:$0xff]
      %v339 = vld [vmem:[%s273 + $0x70] sm:$0xff]
      %v340 = vld [vmem:[%s273 + $0x78] sm:$0xff]
      %v341 = vld [vmem:[%s273 + $0x80] sm:$0xff]
      %v342 = vld [vmem:[%s273 + $0x88] sm:$0xff]
      %v343 = vld [vmem:[%s273 + $0x90] sm:$0xff]
      %v344 = vld [vmem:[%s273 + $0x98] sm:$0xff]
      %v345 = vld [vmem:[%s273 + $0xa0] sm:$0xff]
      %v346 = vld [vmem:[%s273 + $0xa8] sm:$0xff]
      %v347 = vld [vmem:[%s273 + $0xb0] sm:$0xff]
      %v348 = vld [vmem:[%s273 + $0xb8] sm:$0xff]
      %v349 = vld [vmem:[%s273 + $0xc0] sm:$0xff]
      %v350 = vld [vmem:[%s273 + $0xc8] sm:$0xff]
      %v351 = vld [vmem:[%s273 + $0xd0] sm:$0xff]
      %v352 = vld [vmem:[%s273 + $0xd8] sm:$0xff]
      %v353 = vld [vmem:[%s273 + $0xe0] sm:$0xff]
      %v354 = vld [vmem:[%s273 + $0xe8] sm:$0xff]
      %v355 = vld [vmem:[%s273 + $0xf0] sm:$0xff]
      %v356 = vld [vmem:[%s273 + $0xf8] sm:$0xff]
      %s357 = scalar_lea.vmem [#allocation2], 24
      %vm358 = vcmask 64512
      %359 = vst.msk [vmem:[%s357 + $0x1] sm:$0xff] %vm358, %v325
      %360 = vst.msk [vmem:[%s357 + $0x9] sm:$0xff] %vm358, %v326
      %361 = vst.msk [vmem:[%s357 + $0x19] sm:$0xff] %vm358, %v327
      %362 = vst.msk [vmem:[%s357 + $0x21] sm:$0xff] %vm358, %v328
      %363 = vst.msk [vmem:[%s357 + $0x31] sm:$0xff] %vm358, %v329
      %364 = vst.msk [vmem:[%s357 + $0x39] sm:$0xff] %vm358, %v330
      %365 = vst.msk [vmem:[%s357 + $0x49] sm:$0xff] %vm358, %v331
      %366 = vst.msk [vmem:[%s357 + $0x51] sm:$0xff] %vm358, %v332
      %367 = vst.msk [vmem:[%s357 + $0x61] sm:$0xff] %vm358, %v333
      %368 = vst.msk [vmem:[%s357 + $0x69] sm:$0xff] %vm358, %v334
      %369 = vst.msk [vmem:[%s357 + $0x79] sm:$0xff] %vm358, %v335
      %370 = vst.msk [vmem:[%s357 + $0x81] sm:$0xff] %vm358, %v336
      %371 = vst.msk [vmem:[%s357 + $0x91] sm:$0xff] %vm358, %v337
      %372 = vst.msk [vmem:[%s357 + $0x99] sm:$0xff] %vm358, %v338
      %373 = vst.msk [vmem:[%s357 + $0xa9] sm:$0xff] %vm358, %v339
      %374 = vst.msk [vmem:[%s357 + $0xb1] sm:$0xff] %vm358, %v340
      %375 = vst.msk [vmem:[%s357 + $0xc1] sm:$0xff] %vm358, %v341
      %376 = vst.msk [vmem:[%s357 + $0xc9] sm:$0xff] %vm358, %v342
      %377 = vst.msk [vmem:[%s357 + $0xd9] sm:$0xff] %vm358, %v343
      %378 = vst.msk [vmem:[%s357 + $0xe1] sm:$0xff] %vm358, %v344
      %379 = vst.msk [vmem:[%s357 + $0xf1] sm:$0xff] %vm358, %v345
      %380 = vst.msk [vmem:[%s357 + $0xf9] sm:$0xff] %vm358, %v346
      %381 = vst.msk [vmem:[%s357 + $0x109] sm:$0xff] %vm358, %v347
      %382 = vst.msk [vmem:[%s357 + $0x111] sm:$0xff] %vm358, %v348
      %383 = vst.msk [vmem:[%s357 + $0x121] sm:$0xff] %vm358, %v349
      %384 = vst.msk [vmem:[%s357 + $0x129] sm:$0xff] %vm358, %v350
      %385 = vst.msk [vmem:[%s357 + $0x139] sm:$0xff] %vm358, %v351
      %386 = vst.msk [vmem:[%s357 + $0x141] sm:$0xff] %vm358, %v352
      %387 = vst.msk [vmem:[%s357 + $0x151] sm:$0xff] %vm358, %v353
      %388 = vst.msk [vmem:[%s357 + $0x159] sm:$0xff] %vm358, %v354
      %389 = vst.msk [vmem:[%s357 + $0x169] sm:$0xff] %vm358, %v355
      %390 = vst.msk [vmem:[%s357 + $0x171] sm:$0xff] %vm358, %v356
      %v391 = vld [vmem:[#allocation2] sm:$0xff]
      %v392 = vld [vmem:[#allocation2 + $0x8] sm:$0xff]
      %v393 = vld [vmem:[#allocation2 + $0x10] sm:$0x3]
      %v394 = vld [vmem:[#allocation2 + $0x18] sm:$0xff]
      %v395 = vld [vmem:[#allocation2 + $0x20] sm:$0xff]
      %v396 = vld [vmem:[#allocation2 + $0x28] sm:$0x3]
      %v397 = vld [vmem:[#allocation2 + $0x30] sm:$0xff]
      %v398 = vld [vmem:[#allocation2 + $0x38] sm:$0xff]
      %v399 = vld [vmem:[#allocation2 + $0x40] sm:$0x3]
      %v400 = vld [vmem:[#allocation2 + $0x48] sm:$0xff]
      %v401 = vld [vmem:[#allocation2 + $0x50] sm:$0xff]
      %v402 = vld [vmem:[#allocation2 + $0x58] sm:$0x3]
      %v403 = vld [vmem:[#allocation2 + $0x60] sm:$0xff]
      %v404 = vld [vmem:[#allocation2 + $0x68] sm:$0xff]
      %v405 = vld [vmem:[#allocation2 + $0x70] sm:$0x3]
      %v406 = vld [vmem:[#allocation2 + $0x78] sm:$0xff]
      %v407 = vld [vmem:[#allocation2 + $0x80] sm:$0xff]
      %v408 = vld [vmem:[#allocation2 + $0x88] sm:$0x3]
      %v409 = vld [vmem:[#allocation2 + $0x90] sm:$0xff]
      %v410 = vld [vmem:[#allocation2 + $0x98] sm:$0xff]
      %v411 = vld [vmem:[#allocation2 + $0xa0] sm:$0x3]
      %v412 = vld [vmem:[#allocation2 + $0xa8] sm:$0xff]
      %v413 = vld [vmem:[#allocation2 + $0xb0] sm:$0xff]
      %v414 = vld [vmem:[#allocation2 + $0xb8] sm:$0x3]
      %v415 = vld [vmem:[#allocation2 + $0xc0] sm:$0xff]
      %v416 = vld [vmem:[#allocation2 + $0xc8] sm:$0xff]
      %v417 = vld [vmem:[#allocation2 + $0xd0] sm:$0x3]
      %v418 = vld [vmem:[#allocation2 + $0xd8] sm:$0xff]
      %v419 = vld [vmem:[#allocation2 + $0xe0] sm:$0xff]
      %v420 = vld [vmem:[#allocation2 + $0xe8] sm:$0x3]
      %v421 = vld [vmem:[#allocation2 + $0xf0] sm:$0xff]
      %v422 = vld [vmem:[#allocation2 + $0xf8] sm:$0xff]
      %v423 = vld [vmem:[#allocation2 + $0x100] sm:$0x3]
      %v424 = vld [vmem:[#allocation2 + $0x108] sm:$0xff]
      %v425 = vld [vmem:[#allocation2 + $0x110] sm:$0xff]
      %v426 = vld [vmem:[#allocation2 + $0x118] sm:$0x3]
      %v427 = vld [vmem:[#allocation2 + $0x120] sm:$0xff]
      %v428 = vld [vmem:[#allocation2 + $0x128] sm:$0xff]
      %v429 = vld [vmem:[#allocation2 + $0x130] sm:$0x3]
      %v430 = vld [vmem:[#allocation2 + $0x138] sm:$0xff]
      %v431 = vld [vmem:[#allocation2 + $0x140] sm:$0xff]
      %v432 = vld [vmem:[#allocation2 + $0x148] sm:$0x3]
      %v433 = vld [vmem:[#allocation2 + $0x150] sm:$0xff]
      %v434 = vld [vmem:[#allocation2 + $0x158] sm:$0xff]
      %v435 = vld [vmem:[#allocation2 + $0x160] sm:$0x3]
      %v436 = vld [vmem:[#allocation2 + $0x168] sm:$0xff]
      %v437 = vld [vmem:[#allocation2 + $0x170] sm:$0xff]
      %v438 = vld [vmem:[#allocation2 + $0x178] sm:$0x3]
      %v439 = vld [vmem:[#allocation2 + $0x180] sm:$0xff]
      %v440 = vld [vmem:[#allocation2 + $0x188] sm:$0xff]
      %v441 = vld [vmem:[#allocation2 + $0x190] sm:$0x3]
      %v442 = vld [vmem:[#allocation2 + $0x198] sm:$0xff]
      %v443 = vld [vmem:[#allocation2 + $0x1a0] sm:$0xff]
      %v444 = vld [vmem:[#allocation2 + $0x1a8] sm:$0x3]
      %vm445 = vcmp.ge.f32.partialorder %v391, 0.0
      %vm446 = vcmp.ge.f32.partialorder %v392, 0.0
      %vm447 = vcmp.ge.f32.partialorder %v393, 0.0
      %vm448 = vcmp.ge.f32.partialorder %v394, 0.0
      %vm449 = vcmp.ge.f32.partialorder %v395, 0.0
      %vm450 = vcmp.ge.f32.partialorder %v396, 0.0
      %vm451 = vcmp.ge.f32.partialorder %v397, 0.0
      %vm452 = vcmp.ge.f32.partialorder %v398, 0.0
      %vm453 = vcmp.ge.f32.partialorder %v399, 0.0
      %vm454 = vcmp.ge.f32.partialorder %v400, 0.0
      %vm455 = vcmp.ge.f32.partialorder %v401, 0.0
      %vm456 = vcmp.ge.f32.partialorder %v402, 0.0
      %vm457 = vcmp.ge.f32.partialorder %v403, 0.0
      %vm458 = vcmp.ge.f32.partialorder %v404, 0.0
      %vm459 = vcmp.ge.f32.partialorder %v405, 0.0
      %vm460 = vcmp.ge.f32.partialorder %v406, 0.0
      %vm461 = vcmp.ge.f32.partialorder %v407, 0.0
      %vm462 = vcmp.ge.f32.partialorder %v408, 0.0
      %vm463 = vcmp.ge.f32.partialorder %v409, 0.0
      %vm464 = vcmp.ge.f32.partialorder %v410, 0.0
      %vm465 = vcmp.ge.f32.partialorder %v411, 0.0
      %vm466 = vcmp.ge.f32.partialorder %v412, 0.0
      %vm467 = vcmp.ge.f32.partialorder %v413, 0.0
      %vm468 = vcmp.ge.f32.partialorder %v414, 0.0
      %vm469 = vcmp.ge.f32.partialorder %v415, 0.0
      %vm470 = vcmp.ge.f32.partialorder %v416, 0.0
      %vm471 = vcmp.ge.f32.partialorder %v417, 0.0
      %vm472 = vcmp.ge.f32.partialorder %v418, 0.0
      %vm473 = vcmp.ge.f32.partialorder %v419, 0.0
      %vm474 = vcmp.ge.f32.partialorder %v420, 0.0
      %vm475 = vcmp.ge.f32.partialorder %v421, 0.0
      %vm476 = vcmp.ge.f32.partialorder %v422, 0.0
      %vm477 = vcmp.ge.f32.partialorder %v423, 0.0
      %vm478 = vcmp.ge.f32.partialorder %v424, 0.0
      %vm479 = vcmp.ge.f32.partialorder %v425, 0.0
      %vm480 = vcmp.ge.f32.partialorder %v426, 0.0
      %vm481 = vcmp.ge.f32.partialorder %v427, 0.0
      %vm482 = vcmp.ge.f32.partialorder %v428, 0.0
      %vm483 = vcmp.ge.f32.partialorder %v429, 0.0
      %vm484 = vcmp.ge.f32.partialorder %v430, 0.0
      %vm485 = vcmp.ge.f32.partialorder %v431, 0.0
      %vm486 = vcmp.ge.f32.partialorder %v432, 0.0
      %vm487 = vcmp.ge.f32.partialorder %v433, 0.0
      %vm488 = vcmp.ge.f32.partialorder %v434, 0.0
      %vm489 = vcmp.ge.f32.partialorder %v435, 0.0
      %vm490 = vcmp.ge.f32.partialorder %v436, 0.0
      %vm491 = vcmp.ge.f32.partialorder %v437, 0.0
      %vm492 = vcmp.ge.f32.partialorder %v438, 0.0
      %vm493 = vcmp.ge.f32.partialorder %v439, 0.0
      %vm494 = vcmp.ge.f32.partialorder %v440, 0.0
      %vm495 = vcmp.ge.f32.partialorder %v441, 0.0
      %vm496 = vcmp.ge.f32.partialorder %v442, 0.0
      %vm497 = vcmp.ge.f32.partialorder %v443, 0.0
      %vm498 = vcmp.ge.f32.partialorder %v444, 0.0
      %v499 = vmul.f32 %v391, 0.1
      %v500 = vmul.f32 %v392, 0.1
      %v501 = vmul.f32 %v393, 0.1
      %v502 = vmul.f32 %v394, 0.1
      %v503 = vmul.f32 %v395, 0.1
      %v504 = vmul.f32 %v396, 0.1
      %v505 = vmul.f32 %v397, 0.1
      %v506 = vmul.f32 %v398, 0.1
      %v507 = vmul.f32 %v399, 0.1
      %v508 = vmul.f32 %v400, 0.1
      %v509 = vmul.f32 %v401, 0.1
      %v510 = vmul.f32 %v402, 0.1
      %v511 = vmul.f32 %v403, 0.1
      %v512 = vmul.f32 %v404, 0.1
      %v513 = vmul.f32 %v405, 0.1
      %v514 = vmul.f32 %v406, 0.1
      %v515 = vmul.f32 %v407, 0.1
      %v516 = vmul.f32 %v408, 0.1
      %v517 = vmul.f32 %v409, 0.1
      %v518 = vmul.f32 %v410, 0.1
      %v519 = vmul.f32 %v411, 0.1
      %v520 = vmul.f32 %v412, 0.1
      %v521 = vmul.f32 %v413, 0.1
      %v522 = vmul.f32 %v414, 0.1
      %v523 = vmul.f32 %v415, 0.1
      %v524 = vmul.f32 %v416, 0.1
      %v525 = vmul.f32 %v417, 0.1
      %v526 = vmul.f32 %v418, 0.1
      %v527 = vmul.f32 %v419, 0.1
      %v528 = vmul.f32 %v420, 0.1
      %v529 = vmul.f32 %v421, 0.1
      %v530 = vmul.f32 %v422, 0.1
      %v531 = vmul.f32 %v423, 0.1
      %v532 = vmul.f32 %v424, 0.1
      %v533 = vmul.f32 %v425, 0.1
      %v534 = vmul.f32 %v426, 0.1
      %v535 = vmul.f32 %v427, 0.1
      %v536 = vmul.f32 %v428, 0.1
      %v537 = vmul.f32 %v429, 0.1
      %v538 = vmul.f32 %v430, 0.1
      %v539 = vmul.f32 %v431, 0.1
      %v540 = vmul.f32 %v432, 0.1
      %v541 = vmul.f32 %v433, 0.1
      %v542 = vmul.f32 %v434, 0.1
      %v543 = vmul.f32 %v435, 0.1
      %v544 = vmul.f32 %v436, 0.1
      %v545 = vmul.f32 %v437, 0.1
      %v546 = vmul.f32 %v438, 0.1
      %v547 = vmul.f32 %v439, 0.1
      %v548 = vmul.f32 %v440, 0.1
      %v549 = vmul.f32 %v441, 0.1
      %v550 = vmul.f32 %v442, 0.1
      %v551 = vmul.f32 %v443, 0.1
      %v552 = vmul.f32 %v444, 0.1
      %v553 = vsel %vm445, %v391, %v499
      %v554 = vsel %vm446, %v392, %v500
      %v555 = vsel %vm447, %v393, %v501
      %v556 = vsel %vm448, %v394, %v502
      %v557 = vsel %vm449, %v395, %v503
      %v558 = vsel %vm450, %v396, %v504
      %v559 = vsel %vm451, %v397, %v505
      %v560 = vsel %vm452, %v398, %v506
      %v561 = vsel %vm453, %v399, %v507
      %v562 = vsel %vm454, %v400, %v508
      %v563 = vsel %vm455, %v401, %v509
      %v564 = vsel %vm456, %v402, %v510
      %v565 = vsel %vm457, %v403, %v511
      %v566 = vsel %vm458, %v404, %v512
      %v567 = vsel %vm459, %v405, %v513
      %v568 = vsel %vm460, %v406, %v514
      %v569 = vsel %vm461, %v407, %v515
      %v570 = vsel %vm462, %v408, %v516
      %v571 = vsel %vm463, %v409, %v517
      %v572 = vsel %vm464, %v410, %v518
      %v573 = vsel %vm465, %v411, %v519
      %v574 = vsel %vm466, %v412, %v520
      %v575 = vsel %vm467, %v413, %v521
      %v576 = vsel %vm468, %v414, %v522
      %v577 = vsel %vm469, %v415, %v523
      %v578 = vsel %vm470, %v416, %v524
      %v579 = vsel %vm471, %v417, %v525
      %v580 = vsel %vm472, %v418, %v526
      %v581 = vsel %vm473, %v419, %v527
      %v582 = vsel %vm474, %v420, %v528
      %v583 = vsel %vm475, %v421, %v529
      %v584 = vsel %vm476, %v422, %v530
      %v585 = vsel %vm477, %v423, %v531
      %v586 = vsel %vm478, %v424, %v532
      %v587 = vsel %vm479, %v425, %v533
      %v588 = vsel %vm480, %v426, %v534
      %v589 = vsel %vm481, %v427, %v535
      %v590 = vsel %vm482, %v428, %v536
      %v591 = vsel %vm483, %v429, %v537
      %v592 = vsel %vm484, %v430, %v538
      %v593 = vsel %vm485, %v431, %v539
      %v594 = vsel %vm486, %v432, %v540
      %v595 = vsel %vm487, %v433, %v541
      %v596 = vsel %vm488, %v434, %v542
      %v597 = vsel %vm489, %v435, %v543
      %v598 = vsel %vm490, %v436, %v544
      %v599 = vsel %vm491, %v437, %v545
      %v600 = vsel %vm492, %v438, %v546
      %v601 = vsel %vm493, %v439, %v547
      %v602 = vsel %vm494, %v440, %v548
      %v603 = vsel %vm495, %v441, %v549
      %v604 = vsel %vm496, %v442, %v550
      %v605 = vsel %vm497, %v443, %v551
      %v606 = vsel %vm498, %v444, %v552
      %607 = vst.msk [vmem:[#allocation3] sm:$0xff] %vm358, %v553
      %608 = vst.msk [vmem:[#allocation3 + $0x18] sm:$0xff] %vm358, %v554
      %609 = vst.msk [vmem:[#allocation3 + $0x30] sm:$0xff] %vm358, %v556
      %610 = vst.msk [vmem:[#allocation3 + $0x48] sm:$0xff] %vm358, %v557
      %611 = vst.msk [vmem:[#allocation3 + $0x60] sm:$0xff] %vm358, %v559
      %612 = vst.msk [vmem:[#allocation3 + $0x78] sm:$0xff] %vm358, %v560
      %613 = vst.msk [vmem:[#allocation3 + $0x90] sm:$0xff] %vm358, %v562
      %614 = vst.msk [vmem:[#allocation3 + $0xa8] sm:$0xff] %vm358, %v563
      %615 = vst.msk [vmem:[#allocation3 + $0xc0] sm:$0xff] %vm358, %v565
      %616 = vst.msk [vmem:[#allocation3 + $0xd8] sm:$0xff] %vm358, %v566
      %617 = vst.msk [vmem:[#allocation3 + $0xf0] sm:$0xff] %vm358, %v568
      %618 = vst.msk [vmem:[#allocation3 + $0x108] sm:$0xff] %vm358, %v569
      %619 = vst.msk [vmem:[#allocation3 + $0x120] sm:$0xff] %vm358, %v571
      %620 = vst.msk [vmem:[#allocation3 + $0x138] sm:$0xff] %vm358, %v572
      %621 = vst.msk [vmem:[#allocation3 + $0x150] sm:$0xff] %vm358, %v574
      %622 = vst.msk [vmem:[#allocation3 + $0x168] sm:$0xff] %vm358, %v575
      %623 = vst.msk [vmem:[#allocation3 + $0x180] sm:$0xff] %vm358, %v577
      %624 = vst.msk [vmem:[#allocation3 + $0x198] sm:$0xff] %vm358, %v578
      %625 = vst.msk [vmem:[#allocation3 + $0x1b0] sm:$0xff] %vm358, %v580
      %626 = vst.msk [vmem:[#allocation3 + $0x1c8] sm:$0xff] %vm358, %v581
      %627 = vst.msk [vmem:[#allocation3 + $0x1e0] sm:$0xff] %vm358, %v583
      %628 = vst.msk [vmem:[#allocation3 + $0x1f8] sm:$0xff] %vm358, %v584
      %629 = vst.msk [vmem:[#allocation3 + $0x210] sm:$0xff] %vm358, %v586
      %630 = vst.msk [vmem:[#allocation3 + $0x228] sm:$0xff] %vm358, %v587
      %631 = vst.msk [vmem:[#allocation3 + $0x240] sm:$0xff] %vm358, %v589
      %632 = vst.msk [vmem:[#allocation3 + $0x258] sm:$0xff] %vm358, %v590
      %633 = vst.msk [vmem:[#allocation3 + $0x270] sm:$0xff] %vm358, %v592
      %634 = vst.msk [vmem:[#allocation3 + $0x288] sm:$0xff] %vm358, %v593
      %635 = vst.msk [vmem:[#allocation3 + $0x2a0] sm:$0xff] %vm358, %v595
      %636 = vst.msk [vmem:[#allocation3 + $0x2b8] sm:$0xff] %vm358, %v596
      %637 = vst.msk [vmem:[#allocation3 + $0x2d0] sm:$0xff] %vm358, %v598
      %638 = vst.msk [vmem:[#allocation3 + $0x2e8] sm:$0xff] %vm358, %v599
      %vm687 = vcmask 1046528
      %v688 = vrot.slane %v553, 1
      %v689 = vrot.slane %v554, 1
      %v690 = vsel %vm687, %v688, %v689
      %v691 = vrot.slane %v555, 1
      %v692 = vsel %vm687, %v689, %v691
      %v693 = vrot.slane %v556, 1
      %v694 = vrot.slane %v557, 1
      %v695 = vsel %vm687, %v693, %v694
      %v696 = vrot.slane %v558, 1
      %v697 = vsel %vm687, %v694, %v696
      %v698 = vrot.slane %v559, 1
      %v699 = vrot.slane %v560, 1
      %v700 = vsel %vm687, %v698, %v699
      %v701 = vrot.slane %v561, 1
      %v702 = vsel %vm687, %v699, %v701
      %v703 = vrot.slane %v562, 1
      %v704 = vrot.slane %v563, 1
      %v705 = vsel %vm687, %v703, %v704
      %v706 = vrot.slane %v564, 1
      %v707 = vsel %vm687, %v704, %v706
      %v708 = vrot.slane %v565, 1
      %v709 = vrot.slane %v566, 1
      %v710 = vsel %vm687, %v708, %v709
      %v711 = vrot.slane %v567, 1
      %v712 = vsel %vm687, %v709, %v711
      %v713 = vrot.slane %v568, 1
      %v714 = vrot.slane %v569, 1
      %v715 = vsel %vm687, %v713, %v714
      %v716 = vrot.slane %v570, 1
      %v717 = vsel %vm687, %v714, %v716
      %v718 = vrot.slane %v571, 1
      %v719 = vrot.slane %v572, 1
      %v720 = vsel %vm687, %v718, %v719
      %v721 = vrot.slane %v573, 1
      %v722 = vsel %vm687, %v719, %v721
      %v723 = vrot.slane %v574, 1
      %v724 = vrot.slane %v575, 1
      %v725 = vsel %vm687, %v723, %v724
      %v726 = vrot.slane %v576, 1
      %v727 = vsel %vm687, %v724, %v726
      %v728 = vrot.slane %v577, 1
      %v729 = vrot.slane %v578, 1
      %v730 = vsel %vm687, %v728, %v729
      %v731 = vrot.slane %v579, 1
      %v732 = vsel %vm687, %v729, %v731
      %v733 = vrot.slane %v580, 1
      %v734 = vrot.slane %v581, 1
      %v735 = vsel %vm687, %v733, %v734
      %v736 = vrot.slane %v582, 1
      %v737 = vsel %vm687, %v734, %v736
      %v738 = vrot.slane %v583, 1
      %v739 = vrot.slane %v584, 1
      %v740 = vsel %vm687, %v738, %v739
      %v741 = vrot.slane %v585, 1
      %v742 = vsel %vm687, %v739, %v741
      %v743 = vrot.slane %v586, 1
      %v744 = vrot.slane %v587, 1
      %v745 = vsel %vm687, %v743, %v744
      %v746 = vrot.slane %v588, 1
      %v747 = vsel %vm687, %v744, %v746
      %v748 = vrot.slane %v589, 1
      %v749 = vrot.slane %v590, 1
      %v750 = vsel %vm687, %v748, %v749
      %v751 = vrot.slane %v591, 1
      %v752 = vsel %vm687, %v749, %v751
      %v753 = vrot.slane %v592, 1
      %v754 = vrot.slane %v593, 1
      %v755 = vsel %vm687, %v753, %v754
      %v756 = vrot.slane %v594, 1
      %v757 = vsel %vm687, %v754, %v756
      %v758 = vrot.slane %v595, 1
      %v759 = vrot.slane %v596, 1
      %v760 = vsel %vm687, %v758, %v759
      %v761 = vrot.slane %v597, 1
      %v762 = vsel %vm687, %v759, %v761
      %v763 = vrot.slane %v598, 1
      %v764 = vrot.slane %v599, 1
      %v765 = vsel %vm687, %v763, %v764
      %v766 = vrot.slane %v600, 1
      %v767 = vsel %vm687, %v764, %v766
      %768 = vrot.lane.b32.xlu0 %v690, 8
      %v769 = vpop.permute.xlu0 %768
      %770 = vrot.lane.b32.xlu0 %v692, 8
      %v771 = vpop.permute.xlu0 %770
      %772 = vrot.lane.b32.xlu0 %v695, 8
      %v773 = vpop.permute.xlu0 %772
      %774 = vrot.lane.b32.xlu0 %v697, 8
      %v775 = vpop.permute.xlu0 %774
      %776 = vrot.lane.b32.xlu0 %v700, 8
      %v777 = vpop.permute.xlu0 %776
      %778 = vrot.lane.b32.xlu0 %v702, 8
      %v779 = vpop.permute.xlu0 %778
      %780 = vrot.lane.b32.xlu0 %v705, 8
      %v781 = vpop.permute.xlu0 %780
      %782 = vrot.lane.b32.xlu0 %v707, 8
      %v783 = vpop.permute.xlu0 %782
      %784 = vrot.lane.b32.xlu0 %v710, 8
      %v785 = vpop.permute.xlu0 %784
      %786 = vrot.lane.b32.xlu0 %v712, 8
      %v787 = vpop.permute.xlu0 %786
      %788 = vrot.lane.b32.xlu0 %v715, 8
      %v789 = vpop.permute.xlu0 %788
      %790 = vrot.lane.b32.xlu0 %v717, 8
      %v791 = vpop.permute.xlu0 %790
      %792 = vrot.lane.b32.xlu0 %v720, 8
      %v793 = vpop.permute.xlu0 %792
      %794 = vrot.lane.b32.xlu0 %v722, 8
      %v795 = vpop.permute.xlu0 %794
      %796 = vrot.lane.b32.xlu0 %v725, 8
      %v797 = vpop.permute.xlu0 %796
      %798 = vrot.lane.b32.xlu0 %v727, 8
      %v799 = vpop.permute.xlu0 %798
      %800 = vrot.lane.b32.xlu0 %v730, 8
      %v801 = vpop.permute.xlu0 %800
      %802 = vrot.lane.b32.xlu0 %v732, 8
      %v803 = vpop.permute.xlu0 %802
      %804 = vrot.lane.b32.xlu0 %v735, 8
      %v805 = vpop.permute.xlu0 %804
      %806 = vrot.lane.b32.xlu0 %v737, 8
      %v807 = vpop.permute.xlu0 %806
      %808 = vrot.lane.b32.xlu0 %v740, 8
      %v809 = vpop.permute.xlu0 %808
      %810 = vrot.lane.b32.xlu0 %v742, 8
      %v811 = vpop.permute.xlu0 %810
      %812 = vrot.lane.b32.xlu0 %v745, 8
      %v813 = vpop.permute.xlu0 %812
      %814 = vrot.lane.b32.xlu0 %v747, 8
      %v815 = vpop.permute.xlu0 %814
      %816 = vrot.lane.b32.xlu0 %v750, 8
      %v817 = vpop.permute.xlu0 %816
      %818 = vrot.lane.b32.xlu0 %v752, 8
      %v819 = vpop.permute.xlu0 %818
      %820 = vrot.lane.b32.xlu0 %v755, 8
      %v821 = vpop.permute.xlu0 %820
      %822 = vrot.lane.b32.xlu0 %v757, 8
      %v823 = vpop.permute.xlu0 %822
      %824 = vrot.lane.b32.xlu0 %v760, 8
      %v825 = vpop.permute.xlu0 %824
      %826 = vrot.lane.b32.xlu0 %v762, 8
      %v827 = vpop.permute.xlu0 %826
      %828 = vrot.lane.b32.xlu0 %v765, 8
      %v829 = vpop.permute.xlu0 %828
      %830 = vrot.lane.b32.xlu0 %v767, 8
      %v831 = vpop.permute.xlu0 %830
      %vm864 = vcmask 130112
      %865 = vst.msk [vmem:[#allocation3] sm:$0xff] %vm864, %v769
      %866 = vst.msk [vmem:[#allocation3 + $0x18] sm:$0xff] %vm864, %v771
      %867 = vst.msk [vmem:[#allocation3 + $0x30] sm:$0xff] %vm864, %v773
      %868 = vst.msk [vmem:[#allocation3 + $0x48] sm:$0xff] %vm864, %v775
      %869 = vst.msk [vmem:[#allocation3 + $0x60] sm:$0xff] %vm864, %v777
      %870 = vst.msk [vmem:[#allocation3 + $0x78] sm:$0xff] %vm864, %v779
      %871 = vst.msk [vmem:[#allocation3 + $0x90] sm:$0xff] %vm864, %v781
      %872 = vst.msk [vmem:[#allocation3 + $0xa8] sm:$0xff] %vm864, %v783
      %873 = vst.msk [vmem:[#allocation3 + $0xc0] sm:$0xff] %vm864, %v785
      %874 = vst.msk [vmem:[#allocation3 + $0xd8] sm:$0xff] %vm864, %v787
      %875 = vst.msk [vmem:[#allocation3 + $0xf0] sm:$0xff] %vm864, %v789
      %876 = vst.msk [vmem:[#allocation3 + $0x108] sm:$0xff] %vm864, %v791
      %877 = vst.msk [vmem:[#allocation3 + $0x120] sm:$0xff] %vm864, %v793
      %878 = vst.msk [vmem:[#allocation3 + $0x138] sm:$0xff] %vm864, %v795
      %879 = vst.msk [vmem:[#allocation3 + $0x150] sm:$0xff] %vm864, %v797
      %880 = vst.msk [vmem:[#allocation3 + $0x168] sm:$0xff] %vm864, %v799
      %881 = vst.msk [vmem:[#allocation3 + $0x180] sm:$0xff] %vm864, %v801
      %882 = vst.msk [vmem:[#allocation3 + $0x198] sm:$0xff] %vm864, %v803
      %883 = vst.msk [vmem:[#allocation3 + $0x1b0] sm:$0xff] %vm864, %v805
      %884 = vst.msk [vmem:[#allocation3 + $0x1c8] sm:$0xff] %vm864, %v807
      %885 = vst.msk [vmem:[#allocation3 + $0x1e0] sm:$0xff] %vm864, %v809
      %886 = vst.msk [vmem:[#allocation3 + $0x1f8] sm:$0xff] %vm864, %v811
      %887 = vst.msk [vmem:[#allocation3 + $0x210] sm:$0xff] %vm864, %v813
      %888 = vst.msk [vmem:[#allocation3 + $0x228] sm:$0xff] %vm864, %v815
      %889 = vst.msk [vmem:[#allocation3 + $0x240] sm:$0xff] %vm864, %v817
      %890 = vst.msk [vmem:[#allocation3 + $0x258] sm:$0xff] %vm864, %v819
      %891 = vst.msk [vmem:[#allocation3 + $0x270] sm:$0xff] %vm864, %v821
      %892 = vst.msk [vmem:[#allocation3 + $0x288] sm:$0xff] %vm864, %v823
      %893 = vst.msk [vmem:[#allocation3 + $0x2a0] sm:$0xff] %vm864, %v825
      %894 = vst.msk [vmem:[#allocation3 + $0x2b8] sm:$0xff] %vm864, %v827
      %895 = vst.msk [vmem:[#allocation3 + $0x2d0] sm:$0xff] %vm864, %v829
      %896 = vst.msk [vmem:[#allocation3 + $0x2e8] sm:$0xff] %vm864, %v831
      %vm897 = vcmask 1045504
      %v898 = vrot.slane %v553, 2
      %v899 = vrot.slane %v554, 2
      %v900 = vsel %vm897, %v898, %v899
      %v901 = vrot.slane %v555, 2
      %v902 = vsel %vm897, %v899, %v901
      %v903 = vrot.slane %v556, 2
      %v904 = vrot.slane %v557, 2
      %v905 = vsel %vm897, %v903, %v904
      %v906 = vrot.slane %v558, 2
      %v907 = vsel %vm897, %v904, %v906
      %v908 = vrot.slane %v559, 2
      %v909 = vrot.slane %v560, 2
      %v910 = vsel %vm897, %v908, %v909
      %v911 = vrot.slane %v561, 2
      %v912 = vsel %vm897, %v909, %v911
      %v913 = vrot.slane %v562, 2
      %v914 = vrot.slane %v563, 2
      %v915 = vsel %vm897, %v913, %v914
      %v916 = vrot.slane %v564, 2
      %v917 = vsel %vm897, %v914, %v916
      %v918 = vrot.slane %v565, 2
      %v919 = vrot.slane %v566, 2
      %v920 = vsel %vm897, %v918, %v919
      %v921 = vrot.slane %v567, 2
      %v922 = vsel %vm897, %v919, %v921
      %v923 = vrot.slane %v568, 2
      %v924 = vrot.slane %v569, 2
      %v925 = vsel %vm897, %v923, %v924
      %v926 = vrot.slane %v570, 2
      %v927 = vsel %vm897, %v924, %v926
      %v928 = vrot.slane %v571, 2
      %v929 = vrot.slane %v572, 2
      %v930 = vsel %vm897, %v928, %v929
      %v931 = vrot.slane %v573, 2
      %v932 = vsel %vm897, %v929, %v931
      %v933 = vrot.slane %v574, 2
      %v934 = vrot.slane %v575, 2
      %v935 = vsel %vm897, %v933, %v934
      %v936 = vrot.slane %v576, 2
      %v937 = vsel %vm897, %v934, %v936
      %v938 = vrot.slane %v577, 2
      %v939 = vrot.slane %v578, 2
      %v940 = vsel %vm897, %v938, %v939
      %v941 = vrot.slane %v579, 2
      %v942 = vsel %vm897, %v939, %v941
      %v943 = vrot.slane %v580, 2
      %v944 = vrot.slane %v581, 2
      %v945 = vsel %vm897, %v943, %v944
      %v946 = vrot.slane %v582, 2
      %v947 = vsel %vm897, %v944, %v946
      %v948 = vrot.slane %v583, 2
      %v949 = vrot.slane %v584, 2
      %v950 = vsel %vm897, %v948, %v949
      %v951 = vrot.slane %v585, 2
      %v952 = vsel %vm897, %v949, %v951
      %v953 = vrot.slane %v586, 2
      %v954 = vrot.slane %v587, 2
      %v955 = vsel %vm897, %v953, %v954
      %v956 = vrot.slane %v588, 2
      %v957 = vsel %vm897, %v954, %v956
      %v958 = vrot.slane %v589, 2
      %v959 = vrot.slane %v590, 2
      %v960 = vsel %vm897, %v958, %v959
      %v961 = vrot.slane %v591, 2
      %v962 = vsel %vm897, %v959, %v961
      %v963 = vrot.slane %v592, 2
      %v964 = vrot.slane %v593, 2
      %v965 = vsel %vm897, %v963, %v964
      %v966 = vrot.slane %v594, 2
      %v967 = vsel %vm897, %v964, %v966
      %v968 = vrot.slane %v595, 2
      %v969 = vrot.slane %v596, 2
      %v970 = vsel %vm897, %v968, %v969
      %v971 = vrot.slane %v597, 2
      %v972 = vsel %vm897, %v969, %v971
      %v973 = vrot.slane %v598, 2
      %v974 = vrot.slane %v599, 2
      %v975 = vsel %vm897, %v973, %v974
      %v976 = vrot.slane %v600, 2
      %v977 = vsel %vm897, %v974, %v976
      %978 = vrot.lane.b32.xlu0 %v900, 16
      %v979 = vpop.permute.xlu0 %978
      %980 = vrot.lane.b32.xlu0 %v902, 16
      %v981 = vpop.permute.xlu0 %980
      %982 = vrot.lane.b32.xlu0 %v905, 16
      %v983 = vpop.permute.xlu0 %982
      %984 = vrot.lane.b32.xlu0 %v907, 16
      %v985 = vpop.permute.xlu0 %984
      %986 = vrot.lane.b32.xlu0 %v910, 16
      %v987 = vpop.permute.xlu0 %986
      %988 = vrot.lane.b32.xlu0 %v912, 16
      %v989 = vpop.permute.xlu0 %988
      %990 = vrot.lane.b32.xlu0 %v915, 16
      %v991 = vpop.permute.xlu0 %990
      %992 = vrot.lane.b32.xlu0 %v917, 16
      %v993 = vpop.permute.xlu0 %992
      %994 = vrot.lane.b32.xlu0 %v920, 16
      %v995 = vpop.permute.xlu0 %994
      %996 = vrot.lane.b32.xlu0 %v922, 16
      %v997 = vpop.permute.xlu0 %996
      %998 = vrot.lane.b32.xlu0 %v925, 16
      %v999 = vpop.permute.xlu0 %998
      %1000 = vrot.lane.b32.xlu0 %v927, 16
      %v1001 = vpop.permute.xlu0 %1000
      %1002 = vrot.lane.b32.xlu0 %v930, 16
      %v1003 = vpop.permute.xlu0 %1002
      %1004 = vrot.lane.b32.xlu0 %v932, 16
      %v1005 = vpop.permute.xlu0 %1004
      %1006 = vrot.lane.b32.xlu0 %v935, 16
      %v1007 = vpop.permute.xlu0 %1006
      %1008 = vrot.lane.b32.xlu0 %v937, 16
      %v1009 = vpop.permute.xlu0 %1008
      %1010 = vrot.lane.b32.xlu0 %v940, 16
      %v1011 = vpop.permute.xlu0 %1010
      %1012 = vrot.lane.b32.xlu0 %v942, 16
      %v1013 = vpop.permute.xlu0 %1012
      %1014 = vrot.lane.b32.xlu0 %v945, 16
      %v1015 = vpop.permute.xlu0 %1014
      %1016 = vrot.lane.b32.xlu0 %v947, 16
      %v1017 = vpop.permute.xlu0 %1016
      %1018 = vrot.lane.b32.xlu0 %v950, 16
      %v1019 = vpop.permute.xlu0 %1018
      %1020 = vrot.lane.b32.xlu0 %v952, 16
      %v1021 = vpop.permute.xlu0 %1020
      %1022 = vrot.lane.b32.xlu0 %v955, 16
      %v1023 = vpop.permute.xlu0 %1022
      %1024 = vrot.lane.b32.xlu0 %v957, 16
      %v1025 = vpop.permute.xlu0 %1024
      %1026 = vrot.lane.b32.xlu0 %v960, 16
      %v1027 = vpop.permute.xlu0 %1026
      %1028 = vrot.lane.b32.xlu0 %v962, 16
      %v1029 = vpop.permute.xlu0 %1028
      %1030 = vrot.lane.b32.xlu0 %v965, 16
      %v1031 = vpop.permute.xlu0 %1030
      %1032 = vrot.lane.b32.xlu0 %v967, 16
      %v1033 = vpop.permute.xlu0 %1032
      %1034 = vrot.lane.b32.xlu0 %v970, 16
      %v1035 = vpop.permute.xlu0 %1034
      %1036 = vrot.lane.b32.xlu0 %v972, 16
      %v1037 = vpop.permute.xlu0 %1036
      %1038 = vrot.lane.b32.xlu0 %v975, 16
      %v1039 = vpop.permute.xlu0 %1038
      %1040 = vrot.lane.b32.xlu0 %v977, 16
      %v1041 = vpop.permute.xlu0 %1040
      %vm1074 = vcmask 195712
      %1075 = vst.msk [vmem:[#allocation3] sm:$0xff] %vm1074, %v979
      %1076 = vst.msk [vmem:[#allocation3 + $0x18] sm:$0xff] %vm1074, %v981
      %1077 = vst.msk [vmem:[#allocation3 + $0x30] sm:$0xff] %vm1074, %v983
      %1078 = vst.msk [vmem:[#allocation3 + $0x48] sm:$0xff] %vm1074, %v985
      %1079 = vst.msk [vmem:[#allocation3 + $0x60] sm:$0xff] %vm1074, %v987
      %1080 = vst.msk [vmem:[#allocation3 + $0x78] sm:$0xff] %vm1074, %v989
      %1081 = vst.msk [vmem:[#allocation3 + $0x90] sm:$0xff] %vm1074, %v991
      %1082 = vst.msk [vmem:[#allocation3 + $0xa8] sm:$0xff] %vm1074, %v993
      %1083 = vst.msk [vmem:[#allocation3 + $0xc0] sm:$0xff] %vm1074, %v995
      %1084 = vst.msk [vmem:[#allocation3 + $0xd8] sm:$0xff] %vm1074, %v997
      %1085 = vst.msk [vmem:[#allocation3 + $0xf0] sm:$0xff] %vm1074, %v999
      %1086 = vst.msk [vmem:[#allocation3 + $0x108] sm:$0xff] %vm1074, %v1001
      %1087 = vst.msk [vmem:[#allocation3 + $0x120] sm:$0xff] %vm1074, %v1003
      %1088 = vst.msk [vmem:[#allocation3 + $0x138] sm:$0xff] %vm1074, %v1005
      %1089 = vst.msk [vmem:[#allocation3 + $0x150] sm:$0xff] %vm1074, %v1007
      %1090 = vst.msk [vmem:[#allocation3 + $0x168] sm:$0xff] %vm1074, %v1009
      %1091 = vst.msk [vmem:[#allocation3 + $0x180] sm:$0xff] %vm1074, %v1011
      %1092 = vst.msk [vmem:[#allocation3 + $0x198] sm:$0xff] %vm1074, %v1013
      %1093 = vst.msk [vmem:[#allocation3 + $0x1b0] sm:$0xff] %vm1074, %v1015
      %1094 = vst.msk [vmem:[#allocation3 + $0x1c8] sm:$0xff] %vm1074, %v1017
      %1095 = vst.msk [vmem:[#allocation3 + $0x1e0] sm:$0xff] %vm1074, %v1019
      %1096 = vst.msk [vmem:[#allocation3 + $0x1f8] sm:$0xff] %vm1074, %v1021
      %1097 = vst.msk [vmem:[#allocation3 + $0x210] sm:$0xff] %vm1074, %v1023
      %1098 = vst.msk [vmem:[#allocation3 + $0x228] sm:$0xff] %vm1074, %v1025
      %1099 = vst.msk [vmem:[#allocation3 + $0x240] sm:$0xff] %vm1074, %v1027
      %1100 = vst.msk [vmem:[#allocation3 + $0x258] sm:$0xff] %vm1074, %v1029
      %1101 = vst.msk [vmem:[#allocation3 + $0x270] sm:$0xff] %vm1074, %v1031
      %1102 = vst.msk [vmem:[#allocation3 + $0x288] sm:$0xff] %vm1074, %v1033
      %1103 = vst.msk [vmem:[#allocation3 + $0x2a0] sm:$0xff] %vm1074, %v1035
      %1104 = vst.msk [vmem:[#allocation3 + $0x2b8] sm:$0xff] %vm1074, %v1037
      %1105 = vst.msk [vmem:[#allocation3 + $0x2d0] sm:$0xff] %vm1074, %v1039
      %1106 = vst.msk [vmem:[#allocation3 + $0x2e8] sm:$0xff] %vm1074, %v1041
      %1109 = vrot.lane.b32.xlu0 %v556, 24
      %v1110 = vpop.permute.xlu0 %1109
      %1111 = vrot.lane.b32.xlu0 %v557, 24
      %v1112 = vpop.permute.xlu0 %1111
      %1113 = vrot.lane.b32.xlu0 %v559, 24
      %v1114 = vpop.permute.xlu0 %1113
      %1115 = vrot.lane.b32.xlu0 %v560, 24
      %v1116 = vpop.permute.xlu0 %1115
      %1117 = vrot.lane.b32.xlu0 %v562, 24
      %v1118 = vpop.permute.xlu0 %1117
      %1119 = vrot.lane.b32.xlu0 %v563, 24
      %v1120 = vpop.permute.xlu0 %1119
      %1121 = vrot.lane.b32.xlu0 %v565, 24
      %v1122 = vpop.permute.xlu0 %1121
      %1123 = vrot.lane.b32.xlu0 %v566, 24
      %v1124 = vpop.permute.xlu0 %1123
      %1125 = vrot.lane.b32.xlu0 %v568, 24
      %v1126 = vpop.permute.xlu0 %1125
      %1127 = vrot.lane.b32.xlu0 %v569, 24
      %v1128 = vpop.permute.xlu0 %1127
      %1129 = vrot.lane.b32.xlu0 %v571, 24
      %v1130 = vpop.permute.xlu0 %1129
      %1131 = vrot.lane.b32.xlu0 %v572, 24
      %v1132 = vpop.permute.xlu0 %1131
      %1133 = vrot.lane.b32.xlu0 %v574, 24
      %v1134 = vpop.permute.xlu0 %1133
      %1135 = vrot.lane.b32.xlu0 %v575, 24
      %v1136 = vpop.permute.xlu0 %1135
      %1137 = vrot.lane.b32.xlu0 %v577, 24
      %v1138 = vpop.permute.xlu0 %1137
      %1139 = vrot.lane.b32.xlu0 %v578, 24
      %v1140 = vpop.permute.xlu0 %1139
      %1141 = vrot.lane.b32.xlu0 %v580, 24
      %v1142 = vpop.permute.xlu0 %1141
      %1143 = vrot.lane.b32.xlu0 %v581, 24
      %v1144 = vpop.permute.xlu0 %1143
      %1145 = vrot.lane.b32.xlu0 %v583, 24
      %v1146 = vpop.permute.xlu0 %1145
      %1147 = vrot.lane.b32.xlu0 %v584, 24
      %v1148 = vpop.permute.xlu0 %1147
      %1149 = vrot.lane.b32.xlu0 %v586, 24
      %v1150 = vpop.permute.xlu0 %1149
      %1151 = vrot.lane.b32.xlu0 %v587, 24
      %v1152 = vpop.permute.xlu0 %1151
      %1153 = vrot.lane.b32.xlu0 %v589, 24
      %v1154 = vpop.permute.xlu0 %1153
      %1155 = vrot.lane.b32.xlu0 %v590, 24
      %v1156 = vpop.permute.xlu0 %1155
      %1157 = vrot.lane.b32.xlu0 %v592, 24
      %v1158 = vpop.permute.xlu0 %1157
      %1159 = vrot.lane.b32.xlu0 %v593, 24
      %v1160 = vpop.permute.xlu0 %1159
      %1161 = vrot.lane.b32.xlu0 %v595, 24
      %v1162 = vpop.permute.xlu0 %1161
      %1163 = vrot.lane.b32.xlu0 %v596, 24
      %v1164 = vpop.permute.xlu0 %1163
      %1165 = vrot.lane.b32.xlu0 %v598, 24
      %v1166 = vpop.permute.xlu0 %1165
      %1167 = vrot.lane.b32.xlu0 %v599, 24
      %v1168 = vpop.permute.xlu0 %1167
      %1169 = vrot.lane.b32.xlu0 %v601, 24
      %v1170 = vpop.permute.xlu0 %1169
      %1171 = vrot.lane.b32.xlu0 %v602, 24
      %v1172 = vpop.permute.xlu0 %1171
      %vm1205 = vcmask 261312
      %1206 = vst.msk [vmem:[#allocation3] sm:$0xff] %vm1205, %v1110
      %1207 = vst.msk [vmem:[#allocation3 + $0x18] sm:$0xff] %vm1205, %v1112
      %1208 = vst.msk [vmem:[#allocation3 + $0x30] sm:$0xff] %vm1205, %v1114
      %1209 = vst.msk [vmem:[#allocation3 + $0x48] sm:$0xff] %vm1205, %v1116
      %1210 = vst.msk [vmem:[#allocation3 + $0x60] sm:$0xff] %vm1205, %v1118
      %1211 = vst.msk [vmem:[#allocation3 + $0x78] sm:$0xff] %vm1205, %v1120
      %1212 = vst.msk [vmem:[#allocation3 + $0x90] sm:$0xff] %vm1205, %v1122
      %1213 = vst.msk [vmem:[#allocation3 + $0xa8] sm:$0xff] %vm1205, %v1124
      %1214 = vst.msk [vmem:[#allocation3 + $0xc0] sm:$0xff] %vm1205, %v1126
      %1215 = vst.msk [vmem:[#allocation3 + $0xd8] sm:$0xff] %vm1205, %v1128
      %1216 = vst.msk [vmem:[#allocation3 + $0xf0] sm:$0xff] %vm1205, %v1130
      %1217 = vst.msk [vmem:[#allocation3 + $0x108] sm:$0xff] %vm1205, %v1132
      %1218 = vst.msk [vmem:[#allocation3 + $0x120] sm:$0xff] %vm1205, %v1134
      %1219 = vst.msk [vmem:[#allocation3 + $0x138] sm:$0xff] %vm1205, %v1136
      %1220 = vst.msk [vmem:[#allocation3 + $0x150] sm:$0xff] %vm1205, %v1138
      %1221 = vst.msk [vmem:[#allocation3 + $0x168] sm:$0xff] %vm1205, %v1140
      %1222 = vst.msk [vmem:[#allocation3 + $0x180] sm:$0xff] %vm1205, %v1142
      %1223 = vst.msk [vmem:[#allocation3 + $0x198] sm:$0xff] %vm1205, %v1144
      %1224 = vst.msk [vmem:[#allocation3 + $0x1b0] sm:$0xff] %vm1205, %v1146
      %1225 = vst.msk [vmem:[#allocation3 + $0x1c8] sm:$0xff] %vm1205, %v1148
      %1226 = vst.msk [vmem:[#allocation3 + $0x1e0] sm:$0xff] %vm1205, %v1150
      %1227 = vst.msk [vmem:[#allocation3 + $0x1f8] sm:$0xff] %vm1205, %v1152
      %1228 = vst.msk [vmem:[#allocation3 + $0x210] sm:$0xff] %vm1205, %v1154
      %1229 = vst.msk [vmem:[#allocation3 + $0x228] sm:$0xff] %vm1205, %v1156
      %1230 = vst.msk [vmem:[#allocation3 + $0x240] sm:$0xff] %vm1205, %v1158
      %1231 = vst.msk [vmem:[#allocation3 + $0x258] sm:$0xff] %vm1205, %v1160
      %1232 = vst.msk [vmem:[#allocation3 + $0x270] sm:$0xff] %vm1205, %v1162
      %1233 = vst.msk [vmem:[#allocation3 + $0x288] sm:$0xff] %vm1205, %v1164
      %1234 = vst.msk [vmem:[#allocation3 + $0x2a0] sm:$0xff] %vm1205, %v1166
      %1235 = vst.msk [vmem:[#allocation3 + $0x2b8] sm:$0xff] %vm1205, %v1168
      %1236 = vst.msk [vmem:[#allocation3 + $0x2d0] sm:$0xff] %vm1205, %v1170
      %1237 = vst.msk [vmem:[#allocation3 + $0x2e8] sm:$0xff] %vm1205, %v1172
      %v1239 = vrot.slane %v601, 1
      %v1240 = vrot.slane %v602, 1
      %v1241 = vsel %vm687, %v1239, %v1240
      %v1242 = vrot.slane %v603, 1
      %v1243 = vsel %vm687, %v1240, %v1242
      %1244 = vrot.lane.b32.xlu0 %v695, 32
      %v1245 = vpop.permute.xlu0 %1244
      %1246 = vrot.lane.b32.xlu0 %v697, 32
      %v1247 = vpop.permute.xlu0 %1246
      %1248 = vrot.lane.b32.xlu0 %v700, 32
      %v1249 = vpop.permute.xlu0 %1248
      %1250 = vrot.lane.b32.xlu0 %v702, 32
      %v1251 = vpop.permute.xlu0 %1250
      %1252 = vrot.lane.b32.xlu0 %v705, 32
      %v1253 = vpop.permute.xlu0 %1252
      %1254 = vrot.lane.b32.xlu0 %v707, 32
      %v1255 = vpop.permute.xlu0 %1254
      %1256 = vrot.lane.b32.xlu0 %v710, 32
      %v1257 = vpop.permute.xlu0 %1256
      %1258 = vrot.lane.b32.xlu0 %v712, 32
      %v1259 = vpop.permute.xlu0 %1258
      %1260 = vrot.lane.b32.xlu0 %v715, 32
      %v1261 = vpop.permute.xlu0 %1260
      %1262 = vrot.lane.b32.xlu0 %v717, 32
      %v1263 = vpop.permute.xlu0 %1262
      %1264 = vrot.lane.b32.xlu0 %v720, 32
      %v1265 = vpop.permute.xlu0 %1264
      %1266 = vrot.lane.b32.xlu0 %v722, 32
      %v1267 = vpop.permute.xlu0 %1266
      %1268 = vrot.lane.b32.xlu0 %v725, 32
      %v1269 = vpop.permute.xlu0 %1268
      %1270 = vrot.lane.b32.xlu0 %v727, 32
      %v1271 = vpop.permute.xlu0 %1270
      %1272 = vrot.lane.b32.xlu0 %v730, 32
      %v1273 = vpop.permute.xlu0 %1272
      %1274 = vrot.lane.b32.xlu0 %v732, 32
      %v1275 = vpop.permute.xlu0 %1274
      %1276 = vrot.lane.b32.xlu0 %v735, 32
      %v1277 = vpop.permute.xlu0 %1276
      %1278 = vrot.lane.b32.xlu0 %v737, 32
      %v1279 = vpop.permute.xlu0 %1278
      %1280 = vrot.lane.b32.xlu0 %v740, 32
      %v1281 = vpop.permute.xlu0 %1280
      %1282 = vrot.lane.b32.xlu0 %v742, 32
      %v1283 = vpop.permute.xlu0 %1282
      %1284 = vrot.lane.b32.xlu0 %v745, 32
      %v1285 = vpop.permute.xlu0 %1284
      %1286 = vrot.lane.b32.xlu0 %v747, 32
      %v1287 = vpop.permute.xlu0 %1286
      %1288 = vrot.lane.b32.xlu0 %v750, 32
      %v1289 = vpop.permute.xlu0 %1288
      %1290 = vrot.lane.b32.xlu0 %v752, 32
      %v1291 = vpop.permute.xlu0 %1290
      %1292 = vrot.lane.b32.xlu0 %v755, 32
      %v1293 = vpop.permute.xlu0 %1292
      %1294 = vrot.lane.b32.xlu0 %v757, 32
      %v1295 = vpop.permute.xlu0 %1294
      %1296 = vrot.lane.b32.xlu0 %v760, 32
      %v1297 = vpop.permute.xlu0 %1296
      %1298 = vrot.lane.b32.xlu0 %v762, 32
      %v1299 = vpop.permute.xlu0 %1298
      %1300 = vrot.lane.b32.xlu0 %v765, 32
      %v1301 = vpop.permute.xlu0 %1300
      %1302 = vrot.lane.b32.xlu0 %v767, 32
      %v1303 = vpop.permute.xlu0 %1302
      %1304 = vrot.lane.b32.xlu0 %v1241, 32
      %v1305 = vpop.permute.xlu0 %1304
      %1306 = vrot.lane.b32.xlu0 %v1243, 32
      %v1307 = vpop.permute.xlu0 %1306
      %vm1340 = vcmask 326912
      %1341 = vst.msk [vmem:[#allocation3] sm:$0xff] %vm1340, %v1245
      %1342 = vst.msk [vmem:[#allocation3 + $0x18] sm:$0xff] %vm1340, %v1247
      %1343 = vst.msk [vmem:[#allocation3 + $0x30] sm:$0xff] %vm1340, %v1249
      %1344 = vst.msk [vmem:[#allocation3 + $0x48] sm:$0xff] %vm1340, %v1251
      %1345 = vst.msk [vmem:[#allocation3 + $0x60] sm:$0xff] %vm1340, %v1253
      %1346 = vst.msk [vmem:[#allocation3 + $0x78] sm:$0xff] %vm1340, %v1255
      %1347 = vst.msk [vmem:[#allocation3 + $0x90] sm:$0xff] %vm1340, %v1257
      %1348 = vst.msk [vmem:[#allocation3 + $0xa8] sm:$0xff] %vm1340, %v1259
      %1349 = vst.msk [vmem:[#allocation3 + $0xc0] sm:$0xff] %vm1340, %v1261
      %1350 = vst.msk [vmem:[#allocation3 + $0xd8] sm:$0xff] %vm1340, %v1263
      %1351 = vst.msk [vmem:[#allocation3 + $0xf0] sm:$0xff] %vm1340, %v1265
      %1352 = vst.msk [vmem:[#allocation3 + $0x108] sm:$0xff] %vm1340, %v1267
      %1353 = vst.msk [vmem:[#allocation3 + $0x120] sm:$0xff] %vm1340, %v1269
      %1354 = vst.msk [vmem:[#allocation3 + $0x138] sm:$0xff] %vm1340, %v1271
      %1355 = vst.msk [vmem:[#allocation3 + $0x150] sm:$0xff] %vm1340, %v1273
      %1356 = vst.msk [vmem:[#allocation3 + $0x168] sm:$0xff] %vm1340, %v1275
      %1357 = vst.msk [vmem:[#allocation3 + $0x180] sm:$0xff] %vm1340, %v1277
      %1358 = vst.msk [vmem:[#allocation3 + $0x198] sm:$0xff] %vm1340, %v1279
      %1359 = vst.msk [vmem:[#allocation3 + $0x1b0] sm:$0xff] %vm1340, %v1281
      %1360 = vst.msk [vmem:[#allocation3 + $0x1c8] sm:$0xff] %vm1340, %v1283
      %1361 = vst.msk [vmem:[#allocation3 + $0x1e0] sm:$0xff] %vm1340, %v1285
      %1362 = vst.msk [vmem:[#allocation3 + $0x1f8] sm:$0xff] %vm1340, %v1287
      %1363 = vst.msk [vmem:[#allocation3 + $0x210] sm:$0xff] %vm1340, %v1289
      %1364 = vst.msk [vmem:[#allocation3 + $0x228] sm:$0xff] %vm1340, %v1291
      %1365 = vst.msk [vmem:[#allocation3 + $0x240] sm:$0xff] %vm1340, %v1293
      %1366 = vst.msk [vmem:[#allocation3 + $0x258] sm:$0xff] %vm1340, %v1295
      %1367 = vst.msk [vmem:[#allocation3 + $0x270] sm:$0xff] %vm1340, %v1297
      %1368 = vst.msk [vmem:[#allocation3 + $0x288] sm:$0xff] %vm1340, %v1299
      %1369 = vst.msk [vmem:[#allocation3 + $0x2a0] sm:$0xff] %vm1340, %v1301
      %1370 = vst.msk [vmem:[#allocation3 + $0x2b8] sm:$0xff] %vm1340, %v1303
      %1371 = vst.msk [vmem:[#allocation3 + $0x2d0] sm:$0xff] %vm1340, %v1305
      %1372 = vst.msk [vmem:[#allocation3 + $0x2e8] sm:$0xff] %vm1340, %v1307
      %v1373 = vrot.slane %v601, 2
      %v1374 = vrot.slane %v602, 2
      %v1375 = vsel %vm897, %v1373, %v1374
      %v1376 = vrot.slane %v603, 2
      %v1377 = vsel %vm897, %v1374, %v1376
      %1378 = vrot.lane.b32.xlu0 %v905, 40
      %v1379 = vpop.permute.xlu0 %1378
      %1380 = vrot.lane.b32.xlu0 %v907, 40
      %v1381 = vpop.permute.xlu0 %1380
      %1382 = vrot.lane.b32.xlu0 %v910, 40
      %v1383 = vpop.permute.xlu0 %1382
      %1384 = vrot.lane.b32.xlu0 %v912, 40
      %v1385 = vpop.permute.xlu0 %1384
      %1386 = vrot.lane.b32.xlu0 %v915, 40
      %v1387 = vpop.permute.xlu0 %1386
      %1388 = vrot.lane.b32.xlu0 %v917, 40
      %v1389 = vpop.permute.xlu0 %1388
      %1390 = vrot.lane.b32.xlu0 %v920, 40
      %v1391 = vpop.permute.xlu0 %1390
      %1392 = vrot.lane.b32.xlu0 %v922, 40
      %v1393 = vpop.permute.xlu0 %1392
      %1394 = vrot.lane.b32.xlu0 %v925, 40
      %v1395 = vpop.permute.xlu0 %1394
      %1396 = vrot.lane.b32.xlu0 %v927, 40
      %v1397 = vpop.permute.xlu0 %1396
      %1398 = vrot.lane.b32.xlu0 %v930, 40
      %v1399 = vpop.permute.xlu0 %1398
      %1400 = vrot.lane.b32.xlu0 %v932, 40
      %v1401 = vpop.permute.xlu0 %1400
      %1402 = vrot.lane.b32.xlu0 %v935, 40
      %v1403 = vpop.permute.xlu0 %1402
      %1404 = vrot.lane.b32.xlu0 %v937, 40
      %v1405 = vpop.permute.xlu0 %1404
      %1406 = vrot.lane.b32.xlu0 %v940, 40
      %v1407 = vpop.permute.xlu0 %1406
      %1408 = vrot.lane.b32.xlu0 %v942, 40
      %v1409 = vpop.permute.xlu0 %1408
      %1410 = vrot.lane.b32.xlu0 %v945, 40
      %v1411 = vpop.permute.xlu0 %1410
      %1412 = vrot.lane.b32.xlu0 %v947, 40
      %v1413 = vpop.permute.xlu0 %1412
      %1414 = vrot.lane.b32.xlu0 %v950, 40
      %v1415 = vpop.permute.xlu0 %1414
      %1416 = vrot.lane.b32.xlu0 %v952, 40
      %v1417 = vpop.permute.xlu0 %1416
      %1418 = vrot.lane.b32.xlu0 %v955, 40
      %v1419 = vpop.permute.xlu0 %1418
      %1420 = vrot.lane.b32.xlu0 %v957, 40
      %v1421 = vpop.permute.xlu0 %1420
      %1422 = vrot.lane.b32.xlu0 %v960, 40
      %v1423 = vpop.permute.xlu0 %1422
      %1424 = vrot.lane.b32.xlu0 %v962, 40
      %v1425 = vpop.permute.xlu0 %1424
      %1426 = vrot.lane.b32.xlu0 %v965, 40
      %v1427 = vpop.permute.xlu0 %1426
      %1428 = vrot.lane.b32.xlu0 %v967, 40
      %v1429 = vpop.permute.xlu0 %1428
      %1430 = vrot.lane.b32.xlu0 %v970, 40
      %v1431 = vpop.permute.xlu0 %1430
      %1432 = vrot.lane.b32.xlu0 %v972, 40
      %v1433 = vpop.permute.xlu0 %1432
      %1434 = vrot.lane.b32.xlu0 %v975, 40
      %v1435 = vpop.permute.xlu0 %1434
      %1436 = vrot.lane.b32.xlu0 %v977, 40
      %v1437 = vpop.permute.xlu0 %1436
      %1438 = vrot.lane.b32.xlu0 %v1375, 40
      %v1439 = vpop.permute.xlu0 %1438
      %1440 = vrot.lane.b32.xlu0 %v1377, 40
      %v1441 = vpop.permute.xlu0 %1440
      %vm1474 = vcmask 392512
      %1475 = vst.msk [vmem:[#allocation3] sm:$0xff] %vm1474, %v1379
      %1476 = vst.msk [vmem:[#allocation3 + $0x18] sm:$0xff] %vm1474, %v1381
      %1477 = vst.msk [vmem:[#allocation3 + $0x30] sm:$0xff] %vm1474, %v1383
      %1478 = vst.msk [vmem:[#allocation3 + $0x48] sm:$0xff] %vm1474, %v1385
      %1479 = vst.msk [vmem:[#allocation3 + $0x60] sm:$0xff] %vm1474, %v1387
      %1480 = vst.msk [vmem:[#allocation3 + $0x78] sm:$0xff] %vm1474, %v1389
      %1481 = vst.msk [vmem:[#allocation3 + $0x90] sm:$0xff] %vm1474, %v1391
      %1482 = vst.msk [vmem:[#allocation3 + $0xa8] sm:$0xff] %vm1474, %v1393
      %1483 = vst.msk [vmem:[#allocation3 + $0xc0] sm:$0xff] %vm1474, %v1395
      %1484 = vst.msk [vmem:[#allocation3 + $0xd8] sm:$0xff] %vm1474, %v1397
      %1485 = vst.msk [vmem:[#allocation3 + $0xf0] sm:$0xff] %vm1474, %v1399
      %1486 = vst.msk [vmem:[#allocation3 + $0x108] sm:$0xff] %vm1474, %v1401
      %1487 = vst.msk [vmem:[#allocation3 + $0x120] sm:$0xff] %vm1474, %v1403
      %1488 = vst.msk [vmem:[#allocation3 + $0x138] sm:$0xff] %vm1474, %v1405
      %1489 = vst.msk [vmem:[#allocation3 + $0x150] sm:$0xff] %vm1474, %v1407
      %1490 = vst.msk [vmem:[#allocation3 + $0x168] sm:$0xff] %vm1474, %v1409
      %1491 = vst.msk [vmem:[#allocation3 + $0x180] sm:$0xff] %vm1474, %v1411
      %1492 = vst.msk [vmem:[#allocation3 + $0x198] sm:$0xff] %vm1474, %v1413
      %1493 = vst.msk [vmem:[#allocation3 + $0x1b0] sm:$0xff] %vm1474, %v1415
      %1494 = vst.msk [vmem:[#allocation3 + $0x1c8] sm:$0xff] %vm1474, %v1417
      %1495 = vst.msk [vmem:[#allocation3 + $0x1e0] sm:$0xff] %vm1474, %v1419
      %1496 = vst.msk [vmem:[#allocation3 + $0x1f8] sm:$0xff] %vm1474, %v1421
      %1497 = vst.msk [vmem:[#allocation3 + $0x210] sm:$0xff] %vm1474, %v1423
      %1498 = vst.msk [vmem:[#allocation3 + $0x228] sm:$0xff] %vm1474, %v1425
      %1499 = vst.msk [vmem:[#allocation3 + $0x240] sm:$0xff] %vm1474, %v1427
      %1500 = vst.msk [vmem:[#allocation3 + $0x258] sm:$0xff] %vm1474, %v1429
      %1501 = vst.msk [vmem:[#allocation3 + $0x270] sm:$0xff] %vm1474, %v1431
      %1502 = vst.msk [vmem:[#allocation3 + $0x288] sm:$0xff] %vm1474, %v1433
      %1503 = vst.msk [vmem:[#allocation3 + $0x2a0] sm:$0xff] %vm1474, %v1435
      %1504 = vst.msk [vmem:[#allocation3 + $0x2b8] sm:$0xff] %vm1474, %v1437
      %1505 = vst.msk [vmem:[#allocation3 + $0x2d0] sm:$0xff] %vm1474, %v1439
      %1506 = vst.msk [vmem:[#allocation3 + $0x2e8] sm:$0xff] %vm1474, %v1441
      %1509 = vrot.lane.b32.xlu0 %v559, 48
      %v1510 = vpop.permute.xlu0 %1509
      %1511 = vrot.lane.b32.xlu0 %v560, 48
      %v1512 = vpop.permute.xlu0 %1511
      %1513 = vrot.lane.b32.xlu0 %v562, 48
      %v1514 = vpop.permute.xlu0 %1513
      %1515 = vrot.lane.b32.xlu0 %v563, 48
      %v1516 = vpop.permute.xlu0 %1515
      %1517 = vrot.lane.b32.xlu0 %v565, 48
      %v1518 = vpop.permute.xlu0 %1517
      %1519 = vrot.lane.b32.xlu0 %v566, 48
      %v1520 = vpop.permute.xlu0 %1519
      %1521 = vrot.lane.b32.xlu0 %v568, 48
      %v1522 = vpop.permute.xlu0 %1521
      %1523 = vrot.lane.b32.xlu0 %v569, 48
      %v1524 = vpop.permute.xlu0 %1523
      %1525 = vrot.lane.b32.xlu0 %v571, 48
      %v1526 = vpop.permute.xlu0 %1525
      %1527 = vrot.lane.b32.xlu0 %v572, 48
      %v1528 = vpop.permute.xlu0 %1527
      %1529 = vrot.lane.b32.xlu0 %v574, 48
      %v1530 = vpop.permute.xlu0 %1529
      %1531 = vrot.lane.b32.xlu0 %v575, 48
      %v1532 = vpop.permute.xlu0 %1531
      %1533 = vrot.lane.b32.xlu0 %v577, 48
      %v1534 = vpop.permute.xlu0 %1533
      %1535 = vrot.lane.b32.xlu0 %v578, 48
      %v1536 = vpop.permute.xlu0 %1535
      %1537 = vrot.lane.b32.xlu0 %v580, 48
      %v1538 = vpop.permute.xlu0 %1537
      %1539 = vrot.lane.b32.xlu0 %v581, 48
      %v1540 = vpop.permute.xlu0 %1539
      %1541 = vrot.lane.b32.xlu0 %v583, 48
      %v1542 = vpop.permute.xlu0 %1541
      %1543 = vrot.lane.b32.xlu0 %v584, 48
      %v1544 = vpop.permute.xlu0 %1543
      %1545 = vrot.lane.b32.xlu0 %v586, 48
      %v1546 = vpop.permute.xlu0 %1545
      %1547 = vrot.lane.b32.xlu0 %v587, 48
      %v1548 = vpop.permute.xlu0 %1547
      %1549 = vrot.lane.b32.xlu0 %v589, 48
      %v1550 = vpop.permute.xlu0 %1549
      %1551 = vrot.lane.b32.xlu0 %v590, 48
      %v1552 = vpop.permute.xlu0 %1551
      %1553 = vrot.lane.b32.xlu0 %v592, 48
      %v1554 = vpop.permute.xlu0 %1553
      %1555 = vrot.lane.b32.xlu0 %v593, 48
      %v1556 = vpop.permute.xlu0 %1555
      %1557 = vrot.lane.b32.xlu0 %v595, 48
      %v1558 = vpop.permute.xlu0 %1557
      %1559 = vrot.lane.b32.xlu0 %v596, 48
      %v1560 = vpop.permute.xlu0 %1559
      %1561 = vrot.lane.b32.xlu0 %v598, 48
      %v1562 = vpop.permute.xlu0 %1561
      %1563 = vrot.lane.b32.xlu0 %v599, 48
      %v1564 = vpop.permute.xlu0 %1563
      %1565 = vrot.lane.b32.xlu0 %v601, 48
      %v1566 = vpop.permute.xlu0 %1565
      %1567 = vrot.lane.b32.xlu0 %v602, 48
      %v1568 = vpop.permute.xlu0 %1567
      %1569 = vrot.lane.b32.xlu0 %v604, 48
      %v1570 = vpop.permute.xlu0 %1569
      %1571 = vrot.lane.b32.xlu0 %v605, 48
      %v1572 = vpop.permute.xlu0 %1571
      %vm1605 = vcmask 458112
      %1606 = vst.msk [vmem:[#allocation3] sm:$0xff] %vm1605, %v1510
      %1607 = vst.msk [vmem:[#allocation3 + $0x18] sm:$0xff] %vm1605, %v1512
      %1608 = vst.msk [vmem:[#allocation3 + $0x30] sm:$0xff] %vm1605, %v1514
      %1609 = vst.msk [vmem:[#allocation3 + $0x48] sm:$0xff] %vm1605, %v1516
      %1610 = vst.msk [vmem:[#allocation3 + $0x60] sm:$0xff] %vm1605, %v1518
      %1611 = vst.msk [vmem:[#allocation3 + $0x78] sm:$0xff] %vm1605, %v1520
      %1612 = vst.msk [vmem:[#allocation3 + $0x90] sm:$0xff] %vm1605, %v1522
      %1613 = vst.msk [vmem:[#allocation3 + $0xa8] sm:$0xff] %vm1605, %v1524
      %1614 = vst.msk [vmem:[#allocation3 + $0xc0] sm:$0xff] %vm1605, %v1526
      %1615 = vst.msk [vmem:[#allocation3 + $0xd8] sm:$0xff] %vm1605, %v1528
      %1616 = vst.msk [vmem:[#allocation3 + $0xf0] sm:$0xff] %vm1605, %v1530
      %1617 = vst.msk [vmem:[#allocation3 + $0x108] sm:$0xff] %vm1605, %v1532
      %1618 = vst.msk [vmem:[#allocation3 + $0x120] sm:$0xff] %vm1605, %v1534
      %1619 = vst.msk [vmem:[#allocation3 + $0x138] sm:$0xff] %vm1605, %v1536
      %1620 = vst.msk [vmem:[#allocation3 + $0x150] sm:$0xff] %vm1605, %v1538
      %1621 = vst.msk [vmem:[#allocation3 + $0x168] sm:$0xff] %vm1605, %v1540
      %1622 = vst.msk [vmem:[#allocation3 + $0x180] sm:$0xff] %vm1605, %v1542
      %1623 = vst.msk [vmem:[#allocation3 + $0x198] sm:$0xff] %vm1605, %v1544
      %1624 = vst.msk [vmem:[#allocation3 + $0x1b0] sm:$0xff] %vm1605, %v1546
      %1625 = vst.msk [vmem:[#allocation3 + $0x1c8] sm:$0xff] %vm1605, %v1548
      %1626 = vst.msk [vmem:[#allocation3 + $0x1e0] sm:$0xff] %vm1605, %v1550
      %1627 = vst.msk [vmem:[#allocation3 + $0x1f8] sm:$0xff] %vm1605, %v1552
      %1628 = vst.msk [vmem:[#allocation3 + $0x210] sm:$0xff] %vm1605, %v1554
      %1629 = vst.msk [vmem:[#allocation3 + $0x228] sm:$0xff] %vm1605, %v1556
      %1630 = vst.msk [vmem:[#allocation3 + $0x240] sm:$0xff] %vm1605, %v1558
      %1631 = vst.msk [vmem:[#allocation3 + $0x258] sm:$0xff] %vm1605, %v1560
      %1632 = vst.msk [vmem:[#allocation3 + $0x270] sm:$0xff] %vm1605, %v1562
      %1633 = vst.msk [vmem:[#allocation3 + $0x288] sm:$0xff] %vm1605, %v1564
      %1634 = vst.msk [vmem:[#allocation3 + $0x2a0] sm:$0xff] %vm1605, %v1566
      %1635 = vst.msk [vmem:[#allocation3 + $0x2b8] sm:$0xff] %vm1605, %v1568
      %1636 = vst.msk [vmem:[#allocation3 + $0x2d0] sm:$0xff] %vm1605, %v1570
      %1637 = vst.msk [vmem:[#allocation3 + $0x2e8] sm:$0xff] %vm1605, %v1572
      %v1639 = vrot.slane %v604, 1
      %v1640 = vrot.slane %v605, 1
      %v1641 = vsel %vm687, %v1639, %v1640
      %v1642 = vrot.slane %v606, 1
      %v1643 = vsel %vm687, %v1640, %v1642
      %1644 = vrot.lane.b32.xlu0 %v700, 56
      %v1645 = vpop.permute.xlu0 %1644
      %1646 = vrot.lane.b32.xlu0 %v702, 56
      %v1647 = vpop.permute.xlu0 %1646
      %1648 = vrot.lane.b32.xlu0 %v705, 56
      %v1649 = vpop.permute.xlu0 %1648
      %1650 = vrot.lane.b32.xlu0 %v707, 56
      %v1651 = vpop.permute.xlu0 %1650
      %1652 = vrot.lane.b32.xlu0 %v710, 56
      %v1653 = vpop.permute.xlu0 %1652
      %1654 = vrot.lane.b32.xlu0 %v712, 56
      %v1655 = vpop.permute.xlu0 %1654
      %1656 = vrot.lane.b32.xlu0 %v715, 56
      %v1657 = vpop.permute.xlu0 %1656
      %1658 = vrot.lane.b32.xlu0 %v717, 56
      %v1659 = vpop.permute.xlu0 %1658
      %1660 = vrot.lane.b32.xlu0 %v720, 56
      %v1661 = vpop.permute.xlu0 %1660
      %1662 = vrot.lane.b32.xlu0 %v722, 56
      %v1663 = vpop.permute.xlu0 %1662
      %1664 = vrot.lane.b32.xlu0 %v725, 56
      %v1665 = vpop.permute.xlu0 %1664
      %1666 = vrot.lane.b32.xlu0 %v727, 56
      %v1667 = vpop.permute.xlu0 %1666
      %1668 = vrot.lane.b32.xlu0 %v730, 56
      %v1669 = vpop.permute.xlu0 %1668
      %1670 = vrot.lane.b32.xlu0 %v732, 56
      %v1671 = vpop.permute.xlu0 %1670
      %1672 = vrot.lane.b32.xlu0 %v735, 56
      %v1673 = vpop.permute.xlu0 %1672
      %1674 = vrot.lane.b32.xlu0 %v737, 56
      %v1675 = vpop.permute.xlu0 %1674
      %1676 = vrot.lane.b32.xlu0 %v740, 56
      %v1677 = vpop.permute.xlu0 %1676
      %1678 = vrot.lane.b32.xlu0 %v742, 56
      %v1679 = vpop.permute.xlu0 %1678
      %1680 = vrot.lane.b32.xlu0 %v745, 56
      %v1681 = vpop.permute.xlu0 %1680
      %1682 = vrot.lane.b32.xlu0 %v747, 56
      %v1683 = vpop.permute.xlu0 %1682
      %1684 = vrot.lane.b32.xlu0 %v750, 56
      %v1685 = vpop.permute.xlu0 %1684
      %1686 = vrot.lane.b32.xlu0 %v752, 56
      %v1687 = vpop.permute.xlu0 %1686
      %1688 = vrot.lane.b32.xlu0 %v755, 56
      %v1689 = vpop.permute.xlu0 %1688
      %1690 = vrot.lane.b32.xlu0 %v757, 56
      %v1691 = vpop.permute.xlu0 %1690
      %1692 = vrot.lane.b32.xlu0 %v760, 56
      %v1693 = vpop.permute.xlu0 %1692
      %1694 = vrot.lane.b32.xlu0 %v762, 56
      %v1695 = vpop.permute.xlu0 %1694
      %1696 = vrot.lane.b32.xlu0 %v765, 56
      %v1697 = vpop.permute.xlu0 %1696
      %1698 = vrot.lane.b32.xlu0 %v767, 56
      %v1699 = vpop.permute.xlu0 %1698
      %1700 = vrot.lane.b32.xlu0 %v1241, 56
      %v1701 = vpop.permute.xlu0 %1700
      %1702 = vrot.lane.b32.xlu0 %v1243, 56
      %v1703 = vpop.permute.xlu0 %1702
      %1704 = vrot.lane.b32.xlu0 %v1641, 56
      %v1705 = vpop.permute.xlu0 %1704
      %1706 = vrot.lane.b32.xlu0 %v1643, 56
      %v1707 = vpop.permute.xlu0 %1706
      %vm1740 = vcmask 523712
      %1741 = vst.msk [vmem:[#allocation3] sm:$0xff] %vm1740, %v1645
      %1742 = vst.msk [vmem:[#allocation3 + $0x18] sm:$0xff] %vm1740, %v1647
      %1743 = vst.msk [vmem:[#allocation3 + $0x30] sm:$0xff] %vm1740, %v1649
      %1744 = vst.msk [vmem:[#allocation3 + $0x48] sm:$0xff] %vm1740, %v1651
      %1745 = vst.msk [vmem:[#allocation3 + $0x60] sm:$0xff] %vm1740, %v1653
      %1746 = vst.msk [vmem:[#allocation3 + $0x78] sm:$0xff] %vm1740, %v1655
      %1747 = vst.msk [vmem:[#allocation3 + $0x90] sm:$0xff] %vm1740, %v1657
      %1748 = vst.msk [vmem:[#allocation3 + $0xa8] sm:$0xff] %vm1740, %v1659
      %1749 = vst.msk [vmem:[#allocation3 + $0xc0] sm:$0xff] %vm1740, %v1661
      %1750 = vst.msk [vmem:[#allocation3 + $0xd8] sm:$0xff] %vm1740, %v1663
      %1751 = vst.msk [vmem:[#allocation3 + $0xf0] sm:$0xff] %vm1740, %v1665
      %1752 = vst.msk [vmem:[#allocation3 + $0x108] sm:$0xff] %vm1740, %v1667
      %1753 = vst.msk [vmem:[#allocation3 + $0x120] sm:$0xff] %vm1740, %v1669
      %1754 = vst.msk [vmem:[#allocation3 + $0x138] sm:$0xff] %vm1740, %v1671
      %1755 = vst.msk [vmem:[#allocation3 + $0x150] sm:$0xff] %vm1740, %v1673
      %1756 = vst.msk [vmem:[#allocation3 + $0x168] sm:$0xff] %vm1740, %v1675
      %1757 = vst.msk [vmem:[#allocation3 + $0x180] sm:$0xff] %vm1740, %v1677
      %1758 = vst.msk [vmem:[#allocation3 + $0x198] sm:$0xff] %vm1740, %v1679
      %1759 = vst.msk [vmem:[#allocation3 + $0x1b0] sm:$0xff] %vm1740, %v1681
      %1760 = vst.msk [vmem:[#allocation3 + $0x1c8] sm:$0xff] %vm1740, %v1683
      %1761 = vst.msk [vmem:[#allocation3 + $0x1e0] sm:$0xff] %vm1740, %v1685
      %1762 = vst.msk [vmem:[#allocation3 + $0x1f8] sm:$0xff] %vm1740, %v1687
      %1763 = vst.msk [vmem:[#allocation3 + $0x210] sm:$0xff] %vm1740, %v1689
      %1764 = vst.msk [vmem:[#allocation3 + $0x228] sm:$0xff] %vm1740, %v1691
      %1765 = vst.msk [vmem:[#allocation3 + $0x240] sm:$0xff] %vm1740, %v1693
      %1766 = vst.msk [vmem:[#allocation3 + $0x258] sm:$0xff] %vm1740, %v1695
      %1767 = vst.msk [vmem:[#allocation3 + $0x270] sm:$0xff] %vm1740, %v1697
      %1768 = vst.msk [vmem:[#allocation3 + $0x288] sm:$0xff] %vm1740, %v1699
      %1769 = vst.msk [vmem:[#allocation3 + $0x2a0] sm:$0xff] %vm1740, %v1701
      %1770 = vst.msk [vmem:[#allocation3 + $0x2b8] sm:$0xff] %vm1740, %v1703
      %1771 = vst.msk [vmem:[#allocation3 + $0x2d0] sm:$0xff] %vm1740, %v1705
      %1772 = vst.msk [vmem:[#allocation3 + $0x2e8] sm:$0xff] %vm1740, %v1707
      %v1773 = vrot.slane %v604, 2
      %v1774 = vrot.slane %v605, 2
      %v1775 = vsel %vm897, %v1773, %v1774
      %v1776 = vrot.slane %v606, 2
      %v1777 = vsel %vm897, %v1774, %v1776
      %1778 = vrot.lane.b32.xlu0 %v910, 64
      %v1779 = vpop.permute.xlu0 %1778
      %1780 = vrot.lane.b32.xlu0 %v912, 64
      %v1781 = vpop.permute.xlu0 %1780
      %1782 = vrot.lane.b32.xlu0 %v915, 64
      %v1783 = vpop.permute.xlu0 %1782
      %1784 = vrot.lane.b32.xlu0 %v917, 64
      %v1785 = vpop.permute.xlu0 %1784
      %1786 = vrot.lane.b32.xlu0 %v920, 64
      %v1787 = vpop.permute.xlu0 %1786
      %1788 = vrot.lane.b32.xlu0 %v922, 64
      %v1789 = vpop.permute.xlu0 %1788
      %1790 = vrot.lane.b32.xlu0 %v925, 64
      %v1791 = vpop.permute.xlu0 %1790
      %1792 = vrot.lane.b32.xlu0 %v927, 64
      %v1793 = vpop.permute.xlu0 %1792
      %1794 = vrot.lane.b32.xlu0 %v930, 64
      %v1795 = vpop.permute.xlu0 %1794
      %1796 = vrot.lane.b32.xlu0 %v932, 64
      %v1797 = vpop.permute.xlu0 %1796
      %1798 = vrot.lane.b32.xlu0 %v935, 64
      %v1799 = vpop.permute.xlu0 %1798
      %1800 = vrot.lane.b32.xlu0 %v937, 64
      %v1801 = vpop.permute.xlu0 %1800
      %1802 = vrot.lane.b32.xlu0 %v940, 64
      %v1803 = vpop.permute.xlu0 %1802
      %1804 = vrot.lane.b32.xlu0 %v942, 64
      %v1805 = vpop.permute.xlu0 %1804
      %1806 = vrot.lane.b32.xlu0 %v945, 64
      %v1807 = vpop.permute.xlu0 %1806
      %1808 = vrot.lane.b32.xlu0 %v947, 64
      %v1809 = vpop.permute.xlu0 %1808
      %1810 = vrot.lane.b32.xlu0 %v950, 64
      %v1811 = vpop.permute.xlu0 %1810
      %1812 = vrot.lane.b32.xlu0 %v952, 64
      %v1813 = vpop.permute.xlu0 %1812
      %1814 = vrot.lane.b32.xlu0 %v955, 64
      %v1815 = vpop.permute.xlu0 %1814
      %1816 = vrot.lane.b32.xlu0 %v957, 64
      %v1817 = vpop.permute.xlu0 %1816
      %1818 = vrot.lane.b32.xlu0 %v960, 64
      %v1819 = vpop.permute.xlu0 %1818
      %1820 = vrot.lane.b32.xlu0 %v962, 64
      %v1821 = vpop.permute.xlu0 %1820
      %1822 = vrot.lane.b32.xlu0 %v965, 64
      %v1823 = vpop.permute.xlu0 %1822
      %1824 = vrot.lane.b32.xlu0 %v967, 64
      %v1825 = vpop.permute.xlu0 %1824
      %1826 = vrot.lane.b32.xlu0 %v970, 64
      %v1827 = vpop.permute.xlu0 %1826
      %1828 = vrot.lane.b32.xlu0 %v972, 64
      %v1829 = vpop.permute.xlu0 %1828
      %1830 = vrot.lane.b32.xlu0 %v975, 64
      %v1831 = vpop.permute.xlu0 %1830
      %1832 = vrot.lane.b32.xlu0 %v977, 64
      %v1833 = vpop.permute.xlu0 %1832
      %1834 = vrot.lane.b32.xlu0 %v1375, 64
      %v1835 = vpop.permute.xlu0 %1834
      %1836 = vrot.lane.b32.xlu0 %v1377, 64
      %v1837 = vpop.permute.xlu0 %1836
      %1838 = vrot.lane.b32.xlu0 %v1775, 64
      %v1839 = vpop.permute.xlu0 %1838
      %1840 = vrot.lane.b32.xlu0 %v1777, 64
      %v1841 = vpop.permute.xlu0 %1840
      %vm1874 = vcmask 589312
      %1875 = vst.msk [vmem:[#allocation3] sm:$0xff] %vm1874, %v1779
      %1876 = vst.msk [vmem:[#allocation3 + $0x18] sm:$0xff] %vm1874, %v1781
      %1877 = vst.msk [vmem:[#allocation3 + $0x30] sm:$0xff] %vm1874, %v1783
      %1878 = vst.msk [vmem:[#allocation3 + $0x48] sm:$0xff] %vm1874, %v1785
      %1879 = vst.msk [vmem:[#allocation3 + $0x60] sm:$0xff] %vm1874, %v1787
      %1880 = vst.msk [vmem:[#allocation3 + $0x78] sm:$0xff] %vm1874, %v1789
      %1881 = vst.msk [vmem:[#allocation3 + $0x90] sm:$0xff] %vm1874, %v1791
      %1882 = vst.msk [vmem:[#allocation3 + $0xa8] sm:$0xff] %vm1874, %v1793
      %1883 = vst.msk [vmem:[#allocation3 + $0xc0] sm:$0xff] %vm1874, %v1795
      %1884 = vst.msk [vmem:[#allocation3 + $0xd8] sm:$0xff] %vm1874, %v1797
      %1885 = vst.msk [vmem:[#allocation3 + $0xf0] sm:$0xff] %vm1874, %v1799
      %1886 = vst.msk [vmem:[#allocation3 + $0x108] sm:$0xff] %vm1874, %v1801
      %1887 = vst.msk [vmem:[#allocation3 + $0x120] sm:$0xff] %vm1874, %v1803
      %1888 = vst.msk [vmem:[#allocation3 + $0x138] sm:$0xff] %vm1874, %v1805
      %1889 = vst.msk [vmem:[#allocation3 + $0x150] sm:$0xff] %vm1874, %v1807
      %1890 = vst.msk [vmem:[#allocation3 + $0x168] sm:$0xff] %vm1874, %v1809
      %1891 = vst.msk [vmem:[#allocation3 + $0x180] sm:$0xff] %vm1874, %v1811
      %1892 = vst.msk [vmem:[#allocation3 + $0x198] sm:$0xff] %vm1874, %v1813
      %1893 = vst.msk [vmem:[#allocation3 + $0x1b0] sm:$0xff] %vm1874, %v1815
      %1894 = vst.msk [vmem:[#allocation3 + $0x1c8] sm:$0xff] %vm1874, %v1817
      %1895 = vst.msk [vmem:[#allocation3 + $0x1e0] sm:$0xff] %vm1874, %v1819
      %1896 = vst.msk [vmem:[#allocation3 + $0x1f8] sm:$0xff] %vm1874, %v1821
      %1897 = vst.msk [vmem:[#allocation3 + $0x210] sm:$0xff] %vm1874, %v1823
      %1898 = vst.msk [vmem:[#allocation3 + $0x228] sm:$0xff] %vm1874, %v1825
      %1899 = vst.msk [vmem:[#allocation3 + $0x240] sm:$0xff] %vm1874, %v1827
      %1900 = vst.msk [vmem:[#allocation3 + $0x258] sm:$0xff] %vm1874, %v1829
      %1901 = vst.msk [vmem:[#allocation3 + $0x270] sm:$0xff] %vm1874, %v1831
      %1902 = vst.msk [vmem:[#allocation3 + $0x288] sm:$0xff] %vm1874, %v1833
      %1903 = vst.msk [vmem:[#allocation3 + $0x2a0] sm:$0xff] %vm1874, %v1835
      %1904 = vst.msk [vmem:[#allocation3 + $0x2b8] sm:$0xff] %vm1874, %v1837
      %1905 = vst.msk [vmem:[#allocation3 + $0x2d0] sm:$0xff] %vm1874, %v1839
      %1906 = vst.msk [vmem:[#allocation3 + $0x2e8] sm:$0xff] %vm1874, %v1841
      %v1907 = vld [vmem:[#allocation3] sm:$0xff]
      %v1908 = vld [vmem:[#allocation3 + $0x18] sm:$0xff]
      %v1909 = vld [vmem:[#allocation3 + $0x30] sm:$0xff]
      %v1910 = vld [vmem:[#allocation3 + $0x48] sm:$0xff]
      %v1911 = vld [vmem:[#allocation3 + $0x60] sm:$0xff]
      %v1912 = vld [vmem:[#allocation3 + $0x78] sm:$0xff]
      %v1913 = vld [vmem:[#allocation3 + $0x90] sm:$0xff]
      %v1914 = vld [vmem:[#allocation3 + $0xa8] sm:$0xff]
      %v1915 = vld [vmem:[#allocation3 + $0xc0] sm:$0xff]
      %v1916 = vld [vmem:[#allocation3 + $0xd8] sm:$0xff]
      %v1917 = vld [vmem:[#allocation3 + $0xf0] sm:$0xff]
      %v1918 = vld [vmem:[#allocation3 + $0x108] sm:$0xff]
      %v1919 = vld [vmem:[#allocation3 + $0x120] sm:$0xff]
      %v1920 = vld [vmem:[#allocation3 + $0x138] sm:$0xff]
      %v1921 = vld [vmem:[#allocation3 + $0x150] sm:$0xff]
      %v1922 = vld [vmem:[#allocation3 + $0x168] sm:$0xff]
      %v1923 = vld [vmem:[#allocation3 + $0x180] sm:$0xff]
      %v1924 = vld [vmem:[#allocation3 + $0x198] sm:$0xff]
      %v1925 = vld [vmem:[#allocation3 + $0x1b0] sm:$0xff]
      %v1926 = vld [vmem:[#allocation3 + $0x1c8] sm:$0xff]
      %v1927 = vld [vmem:[#allocation3 + $0x1e0] sm:$0xff]
      %v1928 = vld [vmem:[#allocation3 + $0x1f8] sm:$0xff]
      %v1929 = vld [vmem:[#allocation3 + $0x210] sm:$0xff]
      %v1930 = vld [vmem:[#allocation3 + $0x228] sm:$0xff]
      %v1931 = vld [vmem:[#allocation3 + $0x240] sm:$0xff]
      %v1932 = vld [vmem:[#allocation3 + $0x258] sm:$0xff]
      %v1933 = vld [vmem:[#allocation3 + $0x270] sm:$0xff]
      %v1934 = vld [vmem:[#allocation3 + $0x288] sm:$0xff]
      %v1935 = vld [vmem:[#allocation3 + $0x2a0] sm:$0xff]
      %v1936 = vld [vmem:[#allocation3 + $0x2b8] sm:$0xff]
      %v1937 = vld [vmem:[#allocation3 + $0x2d0] sm:$0xff]
      %v1938 = vld [vmem:[#allocation3 + $0x2e8] sm:$0xff]
      %v1939 = vld [vmem:[%s1] sm:$0xff]
      %v1940 = vld [vmem:[%s1 + $0x8] sm:$0xff]
      %v1941 = vld [vmem:[%s1 + $0x10] sm:$0xff]
      %v1942 = vld [vmem:[%s1 + $0x18] sm:$0xff]
      %v1943 = vld [vmem:[%s1 + $0x20] sm:$0xff]
      %v1944 = vld [vmem:[%s1 + $0x28] sm:$0xff]
      %v1945 = vld [vmem:[%s1 + $0x30] sm:$0xff]
      %v1946 = vld [vmem:[%s1 + $0x38] sm:$0xff]
      %v1947 = vld [vmem:[%s1 + $0x40] sm:$0xff]
      %v1948 = vld [vmem:[%s6] sm:$0x1]
      %v1950 = vperm.slane %v1948, 0
      %vm1952 = vcmask 588800
      %v1954 = vsel %vm1952, %v1907, 0
      %v1957 = vsel %vm1952, %v1908, 0
      %v1960 = vsel %vm1952, %v1909, 0
      %v1963 = vsel %vm1952, %v1910, 0
      %v1966 = vsel %vm1952, %v1911, 0
      %v1969 = vsel %vm1952, %v1912, 0
      %v1972 = vsel %vm1952, %v1913, 0
      %v1975 = vsel %vm1952, %v1914, 0
      %v1978 = vsel %vm1952, %v1915, 0
      %v1981 = vsel %vm1952, %v1916, 0
      %v1984 = vsel %vm1952, %v1917, 0
      %v1987 = vsel %vm1952, %v1918, 0
      %v1990 = vsel %vm1952, %v1919, 0
      %v1993 = vsel %vm1952, %v1920, 0
      %v1996 = vsel %vm1952, %v1921, 0
      %v1999 = vsel %vm1952, %v1922, 0
      %v2002 = vsel %vm1952, %v1923, 0
      %v2005 = vsel %vm1952, %v1924, 0
      %v2008 = vsel %vm1952, %v1925, 0
      %v2011 = vsel %vm1952, %v1926, 0
      %v2014 = vsel %vm1952, %v1927, 0
      %v2017 = vsel %vm1952, %v1928, 0
      %v2020 = vsel %vm1952, %v1929, 0
      %v2023 = vsel %vm1952, %v1930, 0
      %v2026 = vsel %vm1952, %v1931, 0
      %v2029 = vsel %vm1952, %v1932, 0
      %v2032 = vsel %vm1952, %v1933, 0
      %v2035 = vsel %vm1952, %v1934, 0
      %v2038 = vsel %vm1952, %v1935, 0
      %v2041 = vsel %vm1952, %v1936, 0
      %v2044 = vsel %vm1952, %v1937, 0
      %v2047 = vsel %vm1952, %v1938, 0
      %2049 = vmatpush.msra.mxu0 0.0
      %2050 = vmatpush.msra.mxu0 0.0
      %2051 = vmatpush.msra.mxu0 0.0
      %2052 = vmatpush.msra.mxu0 0.0
      %2053 = vmatpush.msra.mxu0 0.0
      %2054 = vmatpush.msra.mxu0 0.0
      %2055 = vmatpush.msra.mxu0 0.0
      %2056 = vmatpush.msra.mxu0 %v1947
      %2057 = vmatpush.msra.mxu0 %v1946
      %2058 = vmatpush.msra.mxu0 %v1945
      %2059 = vmatpush.msra.mxu0 %v1944
      %2060 = vmatpush.msra.mxu0 %v1943
      %2061 = vmatpush.msra.mxu0 %v1942
      %2062 = vmatpush.msra.mxu0 %v1941
      %2063 = vmatpush.msra.mxu0 %v1940
      %2064 = vmatpush.msra.mxu0 %v1939
      %2065 = vmatmul.f32.gmra.mxu0 %v1954
      %v2066 = vpop.f32.mrf.mxu0
      %v2067 = vadd.f32 %v1950, %v2066
      %2068 = vmatmul.f32.gmra.mxu0 %v1957
      %v2069 = vpop.f32.mrf.mxu0
      %v2070 = vadd.f32 %v1950, %v2069
      %2071 = vmatmul.f32.gmra.mxu0 %v1960
      %v2072 = vpop.f32.mrf.mxu0
      %v2073 = vadd.f32 %v1950, %v2072
      %2074 = vmatmul.f32.gmra.mxu0 %v1963
      %v2075 = vpop.f32.mrf.mxu0
      %v2076 = vadd.f32 %v1950, %v2075
      %2077 = vmatmul.f32.gmra.mxu0 %v1966
      %v2078 = vpop.f32.mrf.mxu0
      %v2079 = vadd.f32 %v1950, %v2078
      %2080 = vmatmul.f32.gmra.mxu0 %v1969
      %v2081 = vpop.f32.mrf.mxu0
      %v2082 = vadd.f32 %v1950, %v2081
      %2083 = vmatmul.f32.gmra.mxu0 %v1972
      %v2084 = vpop.f32.mrf.mxu0
      %v2085 = vadd.f32 %v1950, %v2084
      %2086 = vmatmul.f32.gmra.mxu0 %v1975
      %v2087 = vpop.f32.mrf.mxu0
      %v2088 = vadd.f32 %v1950, %v2087
      %2089 = vmatmul.f32.gmra.mxu0 %v1978
      %v2090 = vpop.f32.mrf.mxu0
      %v2091 = vadd.f32 %v1950, %v2090
      %2092 = vmatmul.f32.gmra.mxu0 %v1981
      %v2093 = vpop.f32.mrf.mxu0
      %v2094 = vadd.f32 %v1950, %v2093
      %2095 = vmatmul.f32.gmra.mxu0 %v1984
      %v2096 = vpop.f32.mrf.mxu0
      %v2097 = vadd.f32 %v1950, %v2096
      %2098 = vmatmul.f32.gmra.mxu0 %v1987
      %v2099 = vpop.f32.mrf.mxu0
      %v2100 = vadd.f32 %v1950, %v2099
      %2101 = vmatmul.f32.gmra.mxu0 %v1990
      %v2102 = vpop.f32.mrf.mxu0
      %v2103 = vadd.f32 %v1950, %v2102
      %2104 = vmatmul.f32.gmra.mxu0 %v1993
      %v2105 = vpop.f32.mrf.mxu0
      %v2106 = vadd.f32 %v1950, %v2105
      %2107 = vmatmul.f32.gmra.mxu0 %v1996
      %v2108 = vpop.f32.mrf.mxu0
      %v2109 = vadd.f32 %v1950, %v2108
      %2110 = vmatmul.f32.gmra.mxu0 %v1999
      %v2111 = vpop.f32.mrf.mxu0
      %v2112 = vadd.f32 %v1950, %v2111
      %2113 = vmatmul.f32.gmra.mxu0 %v2002
      %v2114 = vpop.f32.mrf.mxu0
      %v2115 = vadd.f32 %v1950, %v2114
      %2116 = vmatmul.f32.gmra.mxu0 %v2005
      %v2117 = vpop.f32.mrf.mxu0
      %v2118 = vadd.f32 %v1950, %v2117
      %2119 = vmatmul.f32.gmra.mxu0 %v2008
      %v2120 = vpop.f32.mrf.mxu0
      %v2121 = vadd.f32 %v1950, %v2120
      %2122 = vmatmul.f32.gmra.mxu0 %v2011
      %v2123 = vpop.f32.mrf.mxu0
      %v2124 = vadd.f32 %v1950, %v2123
      %2125 = vmatmul.f32.gmra.mxu0 %v2014
      %v2126 = vpop.f32.mrf.mxu0
      %v2127 = vadd.f32 %v1950, %v2126
      %2128 = vmatmul.f32.gmra.mxu0 %v2017
      %v2129 = vpop.f32.mrf.mxu0
      %v2130 = vadd.f32 %v1950, %v2129
      %2131 = vmatmul.f32.gmra.mxu0 %v2020
      %v2132 = vpop.f32.mrf.mxu0
      %v2133 = vadd.f32 %v1950, %v2132
      %2134 = vmatmul.f32.gmra.mxu0 %v2023
      %v2135 = vpop.f32.mrf.mxu0
      %v2136 = vadd.f32 %v1950, %v2135
      %2137 = vmatmul.f32.gmra.mxu0 %v2026
      %v2138 = vpop.f32.mrf.mxu0
      %v2139 = vadd.f32 %v1950, %v2138
      %2140 = vmatmul.f32.gmra.mxu0 %v2029
      %v2141 = vpop.f32.mrf.mxu0
      %v2142 = vadd.f32 %v1950, %v2141
      %2143 = vmatmul.f32.gmra.mxu0 %v2032
      %v2144 = vpop.f32.mrf.mxu0
      %v2145 = vadd.f32 %v1950, %v2144
      %2146 = vmatmul.f32.gmra.mxu0 %v2035
      %v2147 = vpop.f32.mrf.mxu0
      %v2148 = vadd.f32 %v1950, %v2147
      %2149 = vmatmul.f32.gmra.mxu0 %v2038
      %v2150 = vpop.f32.mrf.mxu0
      %v2151 = vadd.f32 %v1950, %v2150
      %2152 = vmatmul.f32.gmra.mxu0 %v2041
      %v2153 = vpop.f32.mrf.mxu0
      %v2154 = vadd.f32 %v1950, %v2153
      %2155 = vmatmul.f32.gmra.mxu0 %v2044
      %v2156 = vpop.f32.mrf.mxu0
      %v2157 = vadd.f32 %v1950, %v2156
      %2158 = vmatmul.f32.gmra.mxu0 %v2047
      %v2159 = vpop.f32.mrf.mxu0
      %v2160 = vadd.f32 %v1950, %v2159
      %2161 = vdwg.mxu0
      %2194 = vrot.lane.b32.xlu0 %v2067, 8
      %v2195 = vpop.permute.xlu0 %2194
      %2196 = vrot.lane.b32.xlu0 %v2070, 8
      %v2197 = vpop.permute.xlu0 %2196
      %2198 = vrot.lane.b32.xlu0 %v2073, 8
      %v2199 = vpop.permute.xlu0 %2198
      %2200 = vrot.lane.b32.xlu0 %v2076, 8
      %v2201 = vpop.permute.xlu0 %2200
      %2202 = vrot.lane.b32.xlu0 %v2079, 8
      %v2203 = vpop.permute.xlu0 %2202
      %2204 = vrot.lane.b32.xlu0 %v2082, 8
      %v2205 = vpop.permute.xlu0 %2204
      %2206 = vrot.lane.b32.xlu0 %v2085, 8
      %v2207 = vpop.permute.xlu0 %2206
      %2208 = vrot.lane.b32.xlu0 %v2088, 8
      %v2209 = vpop.permute.xlu0 %2208
      %2210 = vrot.lane.b32.xlu0 %v2091, 8
      %v2211 = vpop.permute.xlu0 %2210
      %2212 = vrot.lane.b32.xlu0 %v2094, 8
      %v2213 = vpop.permute.xlu0 %2212
      %2214 = vrot.lane.b32.xlu0 %v2097, 8
      %v2215 = vpop.permute.xlu0 %2214
      %2216 = vrot.lane.b32.xlu0 %v2100, 8
      %v2217 = vpop.permute.xlu0 %2216
      %2218 = vrot.lane.b32.xlu0 %v2103, 8
      %v2219 = vpop.permute.xlu0 %2218
      %2220 = vrot.lane.b32.xlu0 %v2106, 8
      %v2221 = vpop.permute.xlu0 %2220
      %2222 = vrot.lane.b32.xlu0 %v2109, 8
      %v2223 = vpop.permute.xlu0 %2222
      %2224 = vrot.lane.b32.xlu0 %v2112, 8
      %v2225 = vpop.permute.xlu0 %2224
      %2226 = vrot.lane.b32.xlu0 %v2115, 8
      %v2227 = vpop.permute.xlu0 %2226
      %2228 = vrot.lane.b32.xlu0 %v2118, 8
      %v2229 = vpop.permute.xlu0 %2228
      %2230 = vrot.lane.b32.xlu0 %v2121, 8
      %v2231 = vpop.permute.xlu0 %2230
      %2232 = vrot.lane.b32.xlu0 %v2124, 8
      %v2233 = vpop.permute.xlu0 %2232
      %2234 = vrot.lane.b32.xlu0 %v2127, 8
      %v2235 = vpop.permute.xlu0 %2234
      %2236 = vrot.lane.b32.xlu0 %v2130, 8
      %v2237 = vpop.permute.xlu0 %2236
      %2238 = vrot.lane.b32.xlu0 %v2133, 8
      %v2239 = vpop.permute.xlu0 %2238
      %2240 = vrot.lane.b32.xlu0 %v2136, 8
      %v2241 = vpop.permute.xlu0 %2240
      %2242 = vrot.lane.b32.xlu0 %v2139, 8
      %v2243 = vpop.permute.xlu0 %2242
      %2244 = vrot.lane.b32.xlu0 %v2142, 8
      %v2245 = vpop.permute.xlu0 %2244
      %2246 = vrot.lane.b32.xlu0 %v2145, 8
      %v2247 = vpop.permute.xlu0 %2246
      %2248 = vrot.lane.b32.xlu0 %v2148, 8
      %v2249 = vpop.permute.xlu0 %2248
      %2250 = vrot.lane.b32.xlu0 %v2151, 8
      %v2251 = vpop.permute.xlu0 %2250
      %2252 = vrot.lane.b32.xlu0 %v2154, 8
      %v2253 = vpop.permute.xlu0 %2252
      %2254 = vrot.lane.b32.xlu0 %v2157, 8
      %v2255 = vpop.permute.xlu0 %2254
      %2256 = vrot.lane.b32.xlu0 %v2160, 8
      %v2257 = vpop.permute.xlu0 %2256
      %2290 = vst.msk [vmem:[%s357 + $0x1] sm:$0xff] %vm864, %v2195
      %2291 = vst.msk [vmem:[%s357 + $0x9] sm:$0xff] %vm864, %v2197
      %2292 = vst.msk [vmem:[%s357 + $0x19] sm:$0xff] %vm864, %v2199
      %2293 = vst.msk [vmem:[%s357 + $0x21] sm:$0xff] %vm864, %v2201
      %2294 = vst.msk [vmem:[%s357 + $0x31] sm:$0xff] %vm864, %v2203
      %2295 = vst.msk [vmem:[%s357 + $0x39] sm:$0xff] %vm864, %v2205
      %2296 = vst.msk [vmem:[%s357 + $0x49] sm:$0xff] %vm864, %v2207
      %2297 = vst.msk [vmem:[%s357 + $0x51] sm:$0xff] %vm864, %v2209
      %2298 = vst.msk [vmem:[%s357 + $0x61] sm:$0xff] %vm864, %v2211
      %2299 = vst.msk [vmem:[%s357 + $0x69] sm:$0xff] %vm864, %v2213
      %2300 = vst.msk [vmem:[%s357 + $0x79] sm:$0xff] %vm864, %v2215
      %2301 = vst.msk [vmem:[%s357 + $0x81] sm:$0xff] %vm864, %v2217
      %2302 = vst.msk [vmem:[%s357 + $0x91] sm:$0xff] %vm864, %v2219
      %2303 = vst.msk [vmem:[%s357 + $0x99] sm:$0xff] %vm864, %v2221
      %2304 = vst.msk [vmem:[%s357 + $0xa9] sm:$0xff] %vm864, %v2223
      %2305 = vst.msk [vmem:[%s357 + $0xb1] sm:$0xff] %vm864, %v2225
      %2306 = vst.msk [vmem:[%s357 + $0xc1] sm:$0xff] %vm864, %v2227
      %2307 = vst.msk [vmem:[%s357 + $0xc9] sm:$0xff] %vm864, %v2229
      %2308 = vst.msk [vmem:[%s357 + $0xd9] sm:$0xff] %vm864, %v2231
      %2309 = vst.msk [vmem:[%s357 + $0xe1] sm:$0xff] %vm864, %v2233
      %2310 = vst.msk [vmem:[%s357 + $0xf1] sm:$0xff] %vm864, %v2235
      %2311 = vst.msk [vmem:[%s357 + $0xf9] sm:$0xff] %vm864, %v2237
      %2312 = vst.msk [vmem:[%s357 + $0x109] sm:$0xff] %vm864, %v2239
      %2313 = vst.msk [vmem:[%s357 + $0x111] sm:$0xff] %vm864, %v2241
      %2314 = vst.msk [vmem:[%s357 + $0x121] sm:$0xff] %vm864, %v2243
      %2315 = vst.msk [vmem:[%s357 + $0x129] sm:$0xff] %vm864, %v2245
      %2316 = vst.msk [vmem:[%s357 + $0x139] sm:$0xff] %vm864, %v2247
      %2317 = vst.msk [vmem:[%s357 + $0x141] sm:$0xff] %vm864, %v2249
      %2318 = vst.msk [vmem:[%s357 + $0x151] sm:$0xff] %vm864, %v2251
      %2319 = vst.msk [vmem:[%s357 + $0x159] sm:$0xff] %vm864, %v2253
      %2320 = vst.msk [vmem:[%s357 + $0x169] sm:$0xff] %vm864, %v2255
      %2321 = vst.msk [vmem:[%s357 + $0x171] sm:$0xff] %vm864, %v2257
      %v2322 = vld [vmem:[#allocation2] sm:$0xff]
      %v2323 = vld [vmem:[#allocation2 + $0x8] sm:$0xff]
      %v2324 = vld [vmem:[#allocation2 + $0x10] sm:$0x3]
      %v2325 = vld [vmem:[#allocation2 + $0x18] sm:$0xff]
      %v2326 = vld [vmem:[#allocation2 + $0x20] sm:$0xff]
      %v2327 = vld [vmem:[#allocation2 + $0x28] sm:$0x3]
      %v2328 = vld [vmem:[#allocation2 + $0x30] sm:$0xff]
      %v2329 = vld [vmem:[#allocation2 + $0x38] sm:$0xff]
      %v2330 = vld [vmem:[#allocation2 + $0x40] sm:$0x3]
      %v2331 = vld [vmem:[#allocation2 + $0x48] sm:$0xff]
      %v2332 = vld [vmem:[#allocation2 + $0x50] sm:$0xff]
      %v2333 = vld [vmem:[#allocation2 + $0x58] sm:$0x3]
      %v2334 = vld [vmem:[#allocation2 + $0x60] sm:$0xff]
      %v2335 = vld [vmem:[#allocation2 + $0x68] sm:$0xff]
      %v2336 = vld [vmem:[#allocation2 + $0x70] sm:$0x3]
      %v2337 = vld [vmem:[#allocation2 + $0x78] sm:$0xff]
      %v2338 = vld [vmem:[#allocation2 + $0x80] sm:$0xff]
      %v2339 = vld [vmem:[#allocation2 + $0x88] sm:$0x3]
      %v2340 = vld [vmem:[#allocation2 + $0x90] sm:$0xff]
      %v2341 = vld [vmem:[#allocation2 + $0x98] sm:$0xff]
      %v2342 = vld [vmem:[#allocation2 + $0xa0] sm:$0x3]
      %v2343 = vld [vmem:[#allocation2 + $0xa8] sm:$0xff]
      %v2344 = vld [vmem:[#allocation2 + $0xb0] sm:$0xff]
      %v2345 = vld [vmem:[#allocation2 + $0xb8] sm:$0x3]
      %v2346 = vld [vmem:[#allocation2 + $0xc0] sm:$0xff]
      %v2347 = vld [vmem:[#allocation2 + $0xc8] sm:$0xff]
      %v2348 = vld [vmem:[#allocation2 + $0xd0] sm:$0x3]
      %v2349 = vld [vmem:[#allocation2 + $0xd8] sm:$0xff]
      %v2350 = vld [vmem:[#allocation2 + $0xe0] sm:$0xff]
      %v2351 = vld [vmem:[#allocation2 + $0xe8] sm:$0x3]
      %v2352 = vld [vmem:[#allocation2 + $0xf0] sm:$0xff]
      %v2353 = vld [vmem:[#allocation2 + $0xf8] sm:$0xff]
      %v2354 = vld [vmem:[#allocation2 + $0x100] sm:$0x3]
      %v2355 = vld [vmem:[#allocation2 + $0x108] sm:$0xff]
      %v2356 = vld [vmem:[#allocation2 + $0x110] sm:$0xff]
      %v2357 = vld [vmem:[#allocation2 + $0x118] sm:$0x3]
      %v2358 = vld [vmem:[#allocation2 + $0x120] sm:$0xff]
      %v2359 = vld [vmem:[#allocation2 + $0x128] sm:$0xff]
      %v2360 = vld [vmem:[#allocation2 + $0x130] sm:$0x3]
      %v2361 = vld [vmem:[#allocation2 + $0x138] sm:$0xff]
      %v2362 = vld [vmem:[#allocation2 + $0x140] sm:$0xff]
      %v2363 = vld [vmem:[#allocation2 + $0x148] sm:$0x3]
      %v2364 = vld [vmem:[#allocation2 + $0x150] sm:$0xff]
      %v2365 = vld [vmem:[#allocation2 + $0x158] sm:$0xff]
      %v2366 = vld [vmem:[#allocation2 + $0x160] sm:$0x3]
      %v2367 = vld [vmem:[#allocation2 + $0x168] sm:$0xff]
      %v2368 = vld [vmem:[#allocation2 + $0x170] sm:$0xff]
      %v2369 = vld [vmem:[#allocation2 + $0x178] sm:$0x3]
      %v2370 = vld [vmem:[#allocation2 + $0x180] sm:$0xff]
      %v2371 = vld [vmem:[#allocation2 + $0x188] sm:$0xff]
      %v2372 = vld [vmem:[#allocation2 + $0x190] sm:$0x3]
      %v2373 = vld [vmem:[#allocation2 + $0x198] sm:$0xff]
      %v2374 = vld [vmem:[#allocation2 + $0x1a0] sm:$0xff]
      %v2375 = vld [vmem:[#allocation2 + $0x1a8] sm:$0x3]
      %vm2376 = vcmp.ge.f32.partialorder %v2322, 0.0
      %vm2377 = vcmp.ge.f32.partialorder %v2323, 0.0
      %vm2378 = vcmp.ge.f32.partialorder %v2324, 0.0
      %vm2379 = vcmp.ge.f32.partialorder %v2325, 0.0
      %vm2380 = vcmp.ge.f32.partialorder %v2326, 0.0
      %vm2381 = vcmp.ge.f32.partialorder %v2327, 0.0
      %vm2382 = vcmp.ge.f32.partialorder %v2328, 0.0
      %vm2383 = vcmp.ge.f32.partialorder %v2329, 0.0
      %vm2384 = vcmp.ge.f32.partialorder %v2330, 0.0
      %vm2385 = vcmp.ge.f32.partialorder %v2331, 0.0
      %vm2386 = vcmp.ge.f32.partialorder %v2332, 0.0
      %vm2387 = vcmp.ge.f32.partialorder %v2333, 0.0
      %vm2388 = vcmp.ge.f32.partialorder %v2334, 0.0
      %vm2389 = vcmp.ge.f32.partialorder %v2335, 0.0
      %vm2390 = vcmp.ge.f32.partialorder %v2336, 0.0
      %vm2391 = vcmp.ge.f32.partialorder %v2337, 0.0
      %vm2392 = vcmp.ge.f32.partialorder %v2338, 0.0
      %vm2393 = vcmp.ge.f32.partialorder %v2339, 0.0
      %vm2394 = vcmp.ge.f32.partialorder %v2340, 0.0
      %vm2395 = vcmp.ge.f32.partialorder %v2341, 0.0
      %vm2396 = vcmp.ge.f32.partialorder %v2342, 0.0
      %vm2397 = vcmp.ge.f32.partialorder %v2343, 0.0
      %vm2398 = vcmp.ge.f32.partialorder %v2344, 0.0
      %vm2399 = vcmp.ge.f32.partialorder %v2345, 0.0
      %vm2400 = vcmp.ge.f32.partialorder %v2346, 0.0
      %vm2401 = vcmp.ge.f32.partialorder %v2347, 0.0
      %vm2402 = vcmp.ge.f32.partialorder %v2348, 0.0
      %vm2403 = vcmp.ge.f32.partialorder %v2349, 0.0
      %vm2404 = vcmp.ge.f32.partialorder %v2350, 0.0
      %vm2405 = vcmp.ge.f32.partialorder %v2351, 0.0
      %vm2406 = vcmp.ge.f32.partialorder %v2352, 0.0
      %vm2407 = vcmp.ge.f32.partialorder %v2353, 0.0
      %vm2408 = vcmp.ge.f32.partialorder %v2354, 0.0
      %vm2409 = vcmp.ge.f32.partialorder %v2355, 0.0
      %vm2410 = vcmp.ge.f32.partialorder %v2356, 0.0
      %vm2411 = vcmp.ge.f32.partialorder %v2357, 0.0
      %vm2412 = vcmp.ge.f32.partialorder %v2358, 0.0
      %vm2413 = vcmp.ge.f32.partialorder %v2359, 0.0
      %vm2414 = vcmp.ge.f32.partialorder %v2360, 0.0
      %vm2415 = vcmp.ge.f32.partialorder %v2361, 0.0
      %vm2416 = vcmp.ge.f32.partialorder %v2362, 0.0
      %vm2417 = vcmp.ge.f32.partialorder %v2363, 0.0
      %vm2418 = vcmp.ge.f32.partialorder %v2364, 0.0
      %vm2419 = vcmp.ge.f32.partialorder %v2365, 0.0
      %vm2420 = vcmp.ge.f32.partialorder %v2366, 0.0
      %vm2421 = vcmp.ge.f32.partialorder %v2367, 0.0
      %vm2422 = vcmp.ge.f32.partialorder %v2368, 0.0
      %vm2423 = vcmp.ge.f32.partialorder %v2369, 0.0
      %vm2424 = vcmp.ge.f32.partialorder %v2370, 0.0
      %vm2425 = vcmp.ge.f32.partialorder %v2371, 0.0
      %vm2426 = vcmp.ge.f32.partialorder %v2372, 0.0
      %vm2427 = vcmp.ge.f32.partialorder %v2373, 0.0
      %vm2428 = vcmp.ge.f32.partialorder %v2374, 0.0
      %vm2429 = vcmp.ge.f32.partialorder %v2375, 0.0
      %v2430 = vmul.f32 %v2322, 0.1
      %v2431 = vmul.f32 %v2323, 0.1
      %v2432 = vmul.f32 %v2324, 0.1
      %v2433 = vmul.f32 %v2325, 0.1
      %v2434 = vmul.f32 %v2326, 0.1
      %v2435 = vmul.f32 %v2327, 0.1
      %v2436 = vmul.f32 %v2328, 0.1
      %v2437 = vmul.f32 %v2329, 0.1
      %v2438 = vmul.f32 %v2330, 0.1
      %v2439 = vmul.f32 %v2331, 0.1
      %v2440 = vmul.f32 %v2332, 0.1
      %v2441 = vmul.f32 %v2333, 0.1
      %v2442 = vmul.f32 %v2334, 0.1
      %v2443 = vmul.f32 %v2335, 0.1
      %v2444 = vmul.f32 %v2336, 0.1
      %v2445 = vmul.f32 %v2337, 0.1
      %v2446 = vmul.f32 %v2338, 0.1
      %v2447 = vmul.f32 %v2339, 0.1
      %v2448 = vmul.f32 %v2340, 0.1
      %v2449 = vmul.f32 %v2341, 0.1
      %v2450 = vmul.f32 %v2342, 0.1
      %v2451 = vmul.f32 %v2343, 0.1
      %v2452 = vmul.f32 %v2344, 0.1
      %v2453 = vmul.f32 %v2345, 0.1
      %v2454 = vmul.f32 %v2346, 0.1
      %v2455 = vmul.f32 %v2347, 0.1
      %v2456 = vmul.f32 %v2348, 0.1
      %v2457 = vmul.f32 %v2349, 0.1
      %v2458 = vmul.f32 %v2350, 0.1
      %v2459 = vmul.f32 %v2351, 0.1
      %v2460 = vmul.f32 %v2352, 0.1
      %v2461 = vmul.f32 %v2353, 0.1
      %v2462 = vmul.f32 %v2354, 0.1
      %v2463 = vmul.f32 %v2355, 0.1
      %v2464 = vmul.f32 %v2356, 0.1
      %v2465 = vmul.f32 %v2357, 0.1
      %v2466 = vmul.f32 %v2358, 0.1
      %v2467 = vmul.f32 %v2359, 0.1
      %v2468 = vmul.f32 %v2360, 0.1
      %v2469 = vmul.f32 %v2361, 0.1
      %v2470 = vmul.f32 %v2362, 0.1
      %v2471 = vmul.f32 %v2363, 0.1
      %v2472 = vmul.f32 %v2364, 0.1
      %v2473 = vmul.f32 %v2365, 0.1
      %v2474 = vmul.f32 %v2366, 0.1
      %v2475 = vmul.f32 %v2367, 0.1
      %v2476 = vmul.f32 %v2368, 0.1
      %v2477 = vmul.f32 %v2369, 0.1
      %v2478 = vmul.f32 %v2370, 0.1
      %v2479 = vmul.f32 %v2371, 0.1
      %v2480 = vmul.f32 %v2372, 0.1
      %v2481 = vmul.f32 %v2373, 0.1
      %v2482 = vmul.f32 %v2374, 0.1
      %v2483 = vmul.f32 %v2375, 0.1
      %v2484 = vsel %vm2376, %v2322, %v2430
      %v2485 = vsel %vm2377, %v2323, %v2431
      %v2486 = vsel %vm2378, %v2324, %v2432
      %v2487 = vsel %vm2379, %v2325, %v2433
      %v2488 = vsel %vm2380, %v2326, %v2434
      %v2489 = vsel %vm2381, %v2327, %v2435
      %v2490 = vsel %vm2382, %v2328, %v2436
      %v2491 = vsel %vm2383, %v2329, %v2437
      %v2492 = vsel %vm2384, %v2330, %v2438
      %v2493 = vsel %vm2385, %v2331, %v2439
      %v2494 = vsel %vm2386, %v2332, %v2440
      %v2495 = vsel %vm2387, %v2333, %v2441
      %v2496 = vsel %vm2388, %v2334, %v2442
      %v2497 = vsel %vm2389, %v2335, %v2443
      %v2498 = vsel %vm2390, %v2336, %v2444
      %v2499 = vsel %vm2391, %v2337, %v2445
      %v2500 = vsel %vm2392, %v2338, %v2446
      %v2501 = vsel %vm2393, %v2339, %v2447
      %v2502 = vsel %vm2394, %v2340, %v2448
      %v2503 = vsel %vm2395, %v2341, %v2449
      %v2504 = vsel %vm2396, %v2342, %v2450
      %v2505 = vsel %vm2397, %v2343, %v2451
      %v2506 = vsel %vm2398, %v2344, %v2452
      %v2507 = vsel %vm2399, %v2345, %v2453
      %v2508 = vsel %vm2400, %v2346, %v2454
      %v2509 = vsel %vm2401, %v2347, %v2455
      %v2510 = vsel %vm2402, %v2348, %v2456
      %v2511 = vsel %vm2403, %v2349, %v2457
      %v2512 = vsel %vm2404, %v2350, %v2458
      %v2513 = vsel %vm2405, %v2351, %v2459
      %v2514 = vsel %vm2406, %v2352, %v2460
      %v2515 = vsel %vm2407, %v2353, %v2461
      %v2516 = vsel %vm2408, %v2354, %v2462
      %v2517 = vsel %vm2409, %v2355, %v2463
      %v2518 = vsel %vm2410, %v2356, %v2464
      %v2519 = vsel %vm2411, %v2357, %v2465
      %v2520 = vsel %vm2412, %v2358, %v2466
      %v2521 = vsel %vm2413, %v2359, %v2467
      %v2522 = vsel %vm2414, %v2360, %v2468
      %v2523 = vsel %vm2415, %v2361, %v2469
      %v2524 = vsel %vm2416, %v2362, %v2470
      %v2525 = vsel %vm2417, %v2363, %v2471
      %v2526 = vsel %vm2418, %v2364, %v2472
      %v2527 = vsel %vm2419, %v2365, %v2473
      %v2528 = vsel %vm2420, %v2366, %v2474
      %v2529 = vsel %vm2421, %v2367, %v2475
      %v2530 = vsel %vm2422, %v2368, %v2476
      %v2531 = vsel %vm2423, %v2369, %v2477
      %v2532 = vsel %vm2424, %v2370, %v2478
      %v2533 = vsel %vm2425, %v2371, %v2479
      %v2534 = vsel %vm2426, %v2372, %v2480
      %v2535 = vsel %vm2427, %v2373, %v2481
      %v2536 = vsel %vm2428, %v2374, %v2482
      %v2537 = vsel %vm2429, %v2375, %v2483
      %vm2538 = vcmask 130048
      %2539 = vst.msk [vmem:[#allocation3] sm:$0xff] %vm2538, %v2484
      %2540 = vst.msk [vmem:[#allocation3 + $0x18] sm:$0xff] %vm2538, %v2485
      %2541 = vst.msk [vmem:[#allocation3 + $0x30] sm:$0xff] %vm2538, %v2487
      %2542 = vst.msk [vmem:[#allocation3 + $0x48] sm:$0xff] %vm2538, %v2488
      %2543 = vst.msk [vmem:[#allocation3 + $0x60] sm:$0xff] %vm2538, %v2490
      %2544 = vst.msk [vmem:[#allocation3 + $0x78] sm:$0xff] %vm2538, %v2491
      %2545 = vst.msk [vmem:[#allocation3 + $0x90] sm:$0xff] %vm2538, %v2493
      %2546 = vst.msk [vmem:[#allocation3 + $0xa8] sm:$0xff] %vm2538, %v2494
      %2547 = vst.msk [vmem:[#allocation3 + $0xc0] sm:$0xff] %vm2538, %v2496
      %2548 = vst.msk [vmem:[#allocation3 + $0xd8] sm:$0xff] %vm2538, %v2497
      %2549 = vst.msk [vmem:[#allocation3 + $0xf0] sm:$0xff] %vm2538, %v2499
      %2550 = vst.msk [vmem:[#allocation3 + $0x108] sm:$0xff] %vm2538, %v2500
      %2551 = vst.msk [vmem:[#allocation3 + $0x120] sm:$0xff] %vm2538, %v2502
      %2552 = vst.msk [vmem:[#allocation3 + $0x138] sm:$0xff] %vm2538, %v2503
      %2553 = vst.msk [vmem:[#allocation3 + $0x150] sm:$0xff] %vm2538, %v2505
      %2554 = vst.msk [vmem:[#allocation3 + $0x168] sm:$0xff] %vm2538, %v2506
      %2555 = vst.msk [vmem:[#allocation3 + $0x180] sm:$0xff] %vm2538, %v2508
      %2556 = vst.msk [vmem:[#allocation3 + $0x198] sm:$0xff] %vm2538, %v2509
      %2557 = vst.msk [vmem:[#allocation3 + $0x1b0] sm:$0xff] %vm2538, %v2511
      %2558 = vst.msk [vmem:[#allocation3 + $0x1c8] sm:$0xff] %vm2538, %v2512
      %2559 = vst.msk [vmem:[#allocation3 + $0x1e0] sm:$0xff] %vm2538, %v2514
      %2560 = vst.msk [vmem:[#allocation3 + $0x1f8] sm:$0xff] %vm2538, %v2515
      %2561 = vst.msk [vmem:[#allocation3 + $0x210] sm:$0xff] %vm2538, %v2517
      %2562 = vst.msk [vmem:[#allocation3 + $0x228] sm:$0xff] %vm2538, %v2518
      %2563 = vst.msk [vmem:[#allocation3 + $0x240] sm:$0xff] %vm2538, %v2520
      %2564 = vst.msk [vmem:[#allocation3 + $0x258] sm:$0xff] %vm2538, %v2521
      %2565 = vst.msk [vmem:[#allocation3 + $0x270] sm:$0xff] %vm2538, %v2523
      %2566 = vst.msk [vmem:[#allocation3 + $0x288] sm:$0xff] %vm2538, %v2524
      %2567 = vst.msk [vmem:[#allocation3 + $0x2a0] sm:$0xff] %vm2538, %v2526
      %2568 = vst.msk [vmem:[#allocation3 + $0x2b8] sm:$0xff] %vm2538, %v2527
      %2569 = vst.msk [vmem:[#allocation3 + $0x2d0] sm:$0xff] %vm2538, %v2529
      %2570 = vst.msk [vmem:[#allocation3 + $0x2e8] sm:$0xff] %vm2538, %v2530
      %v2619 = vrot.slane %v2484, 1
      %v2620 = vrot.slane %v2485, 1
      %v2621 = vsel %vm687, %v2619, %v2620
      %v2622 = vrot.slane %v2486, 1
      %v2623 = vsel %vm687, %v2620, %v2622
      %v2624 = vrot.slane %v2487, 1
      %v2625 = vrot.slane %v2488, 1
      %v2626 = vsel %vm687, %v2624, %v2625
      %v2627 = vrot.slane %v2489, 1
      %v2628 = vsel %vm687, %v2625, %v2627
      %v2629 = vrot.slane %v2490, 1
      %v2630 = vrot.slane %v2491, 1
      %v2631 = vsel %vm687, %v2629, %v2630
      %v2632 = vrot.slane %v2492, 1
      %v2633 = vsel %vm687, %v2630, %v2632
      %v2634 = vrot.slane %v2493, 1
      %v2635 = vrot.slane %v2494, 1
      %v2636 = vsel %vm687, %v2634, %v2635
      %v2637 = vrot.slane %v2495, 1
      %v2638 = vsel %vm687, %v2635, %v2637
      %v2639 = vrot.slane %v2496, 1
      %v2640 = vrot.slane %v2497, 1
      %v2641 = vsel %vm687, %v2639, %v2640
      %v2642 = vrot.slane %v2498, 1
      %v2643 = vsel %vm687, %v2640, %v2642
      %v2644 = vrot.slane %v2499, 1
      %v2645 = vrot.slane %v2500, 1
      %v2646 = vsel %vm687, %v2644, %v2645
      %v2647 = vrot.slane %v2501, 1
      %v2648 = vsel %vm687, %v2645, %v2647
      %v2649 = vrot.slane %v2502, 1
      %v2650 = vrot.slane %v2503, 1
      %v2651 = vsel %vm687, %v2649, %v2650
      %v2652 = vrot.slane %v2504, 1
      %v2653 = vsel %vm687, %v2650, %v2652
      %v2654 = vrot.slane %v2505, 1
      %v2655 = vrot.slane %v2506, 1
      %v2656 = vsel %vm687, %v2654, %v2655
      %v2657 = vrot.slane %v2507, 1
      %v2658 = vsel %vm687, %v2655, %v2657
      %v2659 = vrot.slane %v2508, 1
      %v2660 = vrot.slane %v2509, 1
      %v2661 = vsel %vm687, %v2659, %v2660
      %v2662 = vrot.slane %v2510, 1
      %v2663 = vsel %vm687, %v2660, %v2662
      %v2664 = vrot.slane %v2511, 1
      %v2665 = vrot.slane %v2512, 1
      %v2666 = vsel %vm687, %v2664, %v2665
      %v2667 = vrot.slane %v2513, 1
      %v2668 = vsel %vm687, %v2665, %v2667
      %v2669 = vrot.slane %v2514, 1
      %v2670 = vrot.slane %v2515, 1
      %v2671 = vsel %vm687, %v2669, %v2670
      %v2672 = vrot.slane %v2516, 1
      %v2673 = vsel %vm687, %v2670, %v2672
      %v2674 = vrot.slane %v2517, 1
      %v2675 = vrot.slane %v2518, 1
      %v2676 = vsel %vm687, %v2674, %v2675
      %v2677 = vrot.slane %v2519, 1
      %v2678 = vsel %vm687, %v2675, %v2677
      %v2679 = vrot.slane %v2520, 1
      %v2680 = vrot.slane %v2521, 1
      %v2681 = vsel %vm687, %v2679, %v2680
      %v2682 = vrot.slane %v2522, 1
      %v2683 = vsel %vm687, %v2680, %v2682
      %v2684 = vrot.slane %v2523, 1
      %v2685 = vrot.slane %v2524, 1
      %v2686 = vsel %vm687, %v2684, %v2685
      %v2687 = vrot.slane %v2525, 1
      %v2688 = vsel %vm687, %v2685, %v2687
      %v2689 = vrot.slane %v2526, 1
      %v2690 = vrot.slane %v2527, 1
      %v2691 = vsel %vm687, %v2689, %v2690
      %v2692 = vrot.slane %v2528, 1
      %v2693 = vsel %vm687, %v2690, %v2692
      %v2694 = vrot.slane %v2529, 1
      %v2695 = vrot.slane %v2530, 1
      %v2696 = vsel %vm687, %v2694, %v2695
      %v2697 = vrot.slane %v2531, 1
      %v2698 = vsel %vm687, %v2695, %v2697
      %2699 = vrot.lane.b32.xlu0 %v2621, 16
      %v2700 = vpop.permute.xlu0 %2699
      %2701 = vrot.lane.b32.xlu0 %v2623, 16
      %v2702 = vpop.permute.xlu0 %2701
      %2703 = vrot.lane.b32.xlu0 %v2626, 16
      %v2704 = vpop.permute.xlu0 %2703
      %2705 = vrot.lane.b32.xlu0 %v2628, 16
      %v2706 = vpop.permute.xlu0 %2705
      %2707 = vrot.lane.b32.xlu0 %v2631, 16
      %v2708 = vpop.permute.xlu0 %2707
      %2709 = vrot.lane.b32.xlu0 %v2633, 16
      %v2710 = vpop.permute.xlu0 %2709
      %2711 = vrot.lane.b32.xlu0 %v2636, 16
      %v2712 = vpop.permute.xlu0 %2711
      %2713 = vrot.lane.b32.xlu0 %v2638, 16
      %v2714 = vpop.permute.xlu0 %2713
      %2715 = vrot.lane.b32.xlu0 %v2641, 16
      %v2716 = vpop.permute.xlu0 %2715
      %2717 = vrot.lane.b32.xlu0 %v2643, 16
      %v2718 = vpop.permute.xlu0 %2717
      %2719 = vrot.lane.b32.xlu0 %v2646, 16
      %v2720 = vpop.permute.xlu0 %2719
      %2721 = vrot.lane.b32.xlu0 %v2648, 16
      %v2722 = vpop.permute.xlu0 %2721
      %2723 = vrot.lane.b32.xlu0 %v2651, 16
      %v2724 = vpop.permute.xlu0 %2723
      %2725 = vrot.lane.b32.xlu0 %v2653, 16
      %v2726 = vpop.permute.xlu0 %2725
      %2727 = vrot.lane.b32.xlu0 %v2656, 16
      %v2728 = vpop.permute.xlu0 %2727
      %2729 = vrot.lane.b32.xlu0 %v2658, 16
      %v2730 = vpop.permute.xlu0 %2729
      %2731 = vrot.lane.b32.xlu0 %v2661, 16
      %v2732 = vpop.permute.xlu0 %2731
      %2733 = vrot.lane.b32.xlu0 %v2663, 16
      %v2734 = vpop.permute.xlu0 %2733
      %2735 = vrot.lane.b32.xlu0 %v2666, 16
      %v2736 = vpop.permute.xlu0 %2735
      %2737 = vrot.lane.b32.xlu0 %v2668, 16
      %v2738 = vpop.permute.xlu0 %2737
      %2739 = vrot.lane.b32.xlu0 %v2671, 16
      %v2740 = vpop.permute.xlu0 %2739
      %2741 = vrot.lane.b32.xlu0 %v2673, 16
      %v2742 = vpop.permute.xlu0 %2741
      %2743 = vrot.lane.b32.xlu0 %v2676, 16
      %v2744 = vpop.permute.xlu0 %2743
      %2745 = vrot.lane.b32.xlu0 %v2678, 16
      %v2746 = vpop.permute.xlu0 %2745
      %2747 = vrot.lane.b32.xlu0 %v2681, 16
      %v2748 = vpop.permute.xlu0 %2747
      %2749 = vrot.lane.b32.xlu0 %v2683, 16
      %v2750 = vpop.permute.xlu0 %2749
      %2751 = vrot.lane.b32.xlu0 %v2686, 16
      %v2752 = vpop.permute.xlu0 %2751
      %2753 = vrot.lane.b32.xlu0 %v2688, 16
      %v2754 = vpop.permute.xlu0 %2753
      %2755 = vrot.lane.b32.xlu0 %v2691, 16
      %v2756 = vpop.permute.xlu0 %2755
      %2757 = vrot.lane.b32.xlu0 %v2693, 16
      %v2758 = vpop.permute.xlu0 %2757
      %2759 = vrot.lane.b32.xlu0 %v2696, 16
      %v2760 = vpop.permute.xlu0 %2759
      %2761 = vrot.lane.b32.xlu0 %v2698, 16
      %v2762 = vpop.permute.xlu0 %2761
      %vm2795 = vcmask 261248
      %2796 = vst.msk [vmem:[#allocation3] sm:$0xff] %vm2795, %v2700
      %2797 = vst.msk [vmem:[#allocation3 + $0x18] sm:$0xff] %vm2795, %v2702
      %2798 = vst.msk [vmem:[#allocation3 + $0x30] sm:$0xff] %vm2795, %v2704
      %2799 = vst.msk [vmem:[#allocation3 + $0x48] sm:$0xff] %vm2795, %v2706
      %2800 = vst.msk [vmem:[#allocation3 + $0x60] sm:$0xff] %vm2795, %v2708
      %2801 = vst.msk [vmem:[#allocation3 + $0x78] sm:$0xff] %vm2795, %v2710
      %2802 = vst.msk [vmem:[#allocation3 + $0x90] sm:$0xff] %vm2795, %v2712
      %2803 = vst.msk [vmem:[#allocation3 + $0xa8] sm:$0xff] %vm2795, %v2714
      %2804 = vst.msk [vmem:[#allocation3 + $0xc0] sm:$0xff] %vm2795, %v2716
      %2805 = vst.msk [vmem:[#allocation3 + $0xd8] sm:$0xff] %vm2795, %v2718
      %2806 = vst.msk [vmem:[#allocation3 + $0xf0] sm:$0xff] %vm2795, %v2720
      %2807 = vst.msk [vmem:[#allocation3 + $0x108] sm:$0xff] %vm2795, %v2722
      %2808 = vst.msk [vmem:[#allocation3 + $0x120] sm:$0xff] %vm2795, %v2724
      %2809 = vst.msk [vmem:[#allocation3 + $0x138] sm:$0xff] %vm2795, %v2726
      %2810 = vst.msk [vmem:[#allocation3 + $0x150] sm:$0xff] %vm2795, %v2728
      %2811 = vst.msk [vmem:[#allocation3 + $0x168] sm:$0xff] %vm2795, %v2730
      %2812 = vst.msk [vmem:[#allocation3 + $0x180] sm:$0xff] %vm2795, %v2732
      %2813 = vst.msk [vmem:[#allocation3 + $0x198] sm:$0xff] %vm2795, %v2734
      %2814 = vst.msk [vmem:[#allocation3 + $0x1b0] sm:$0xff] %vm2795, %v2736
      %2815 = vst.msk [vmem:[#allocation3 + $0x1c8] sm:$0xff] %vm2795, %v2738
      %2816 = vst.msk [vmem:[#allocation3 + $0x1e0] sm:$0xff] %vm2795, %v2740
      %2817 = vst.msk [vmem:[#allocation3 + $0x1f8] sm:$0xff] %vm2795, %v2742
      %2818 = vst.msk [vmem:[#allocation3 + $0x210] sm:$0xff] %vm2795, %v2744
      %2819 = vst.msk [vmem:[#allocation3 + $0x228] sm:$0xff] %vm2795, %v2746
      %2820 = vst.msk [vmem:[#allocation3 + $0x240] sm:$0xff] %vm2795, %v2748
      %2821 = vst.msk [vmem:[#allocation3 + $0x258] sm:$0xff] %vm2795, %v2750
      %2822 = vst.msk [vmem:[#allocation3 + $0x270] sm:$0xff] %vm2795, %v2752
      %2823 = vst.msk [vmem:[#allocation3 + $0x288] sm:$0xff] %vm2795, %v2754
      %2824 = vst.msk [vmem:[#allocation3 + $0x2a0] sm:$0xff] %vm2795, %v2756
      %2825 = vst.msk [vmem:[#allocation3 + $0x2b8] sm:$0xff] %vm2795, %v2758
      %2826 = vst.msk [vmem:[#allocation3 + $0x2d0] sm:$0xff] %vm2795, %v2760
      %2827 = vst.msk [vmem:[#allocation3 + $0x2e8] sm:$0xff] %vm2795, %v2762
      %v2828 = vrot.slane %v2484, 2
      %v2829 = vrot.slane %v2485, 2
      %v2830 = vsel %vm897, %v2828, %v2829
      %v2831 = vrot.slane %v2486, 2
      %v2832 = vsel %vm897, %v2829, %v2831
      %v2833 = vrot.slane %v2487, 2
      %v2834 = vrot.slane %v2488, 2
      %v2835 = vsel %vm897, %v2833, %v2834
      %v2836 = vrot.slane %v2489, 2
      %v2837 = vsel %vm897, %v2834, %v2836
      %v2838 = vrot.slane %v2490, 2
      %v2839 = vrot.slane %v2491, 2
      %v2840 = vsel %vm897, %v2838, %v2839
      %v2841 = vrot.slane %v2492, 2
      %v2842 = vsel %vm897, %v2839, %v2841
      %v2843 = vrot.slane %v2493, 2
      %v2844 = vrot.slane %v2494, 2
      %v2845 = vsel %vm897, %v2843, %v2844
      %v2846 = vrot.slane %v2495, 2
      %v2847 = vsel %vm897, %v2844, %v2846
      %v2848 = vrot.slane %v2496, 2
      %v2849 = vrot.slane %v2497, 2
      %v2850 = vsel %vm897, %v2848, %v2849
      %v2851 = vrot.slane %v2498, 2
      %v2852 = vsel %vm897, %v2849, %v2851
      %v2853 = vrot.slane %v2499, 2
      %v2854 = vrot.slane %v2500, 2
      %v2855 = vsel %vm897, %v2853, %v2854
      %v2856 = vrot.slane %v2501, 2
      %v2857 = vsel %vm897, %v2854, %v2856
      %v2858 = vrot.slane %v2502, 2
      %v2859 = vrot.slane %v2503, 2
      %v2860 = vsel %vm897, %v2858, %v2859
      %v2861 = vrot.slane %v2504, 2
      %v2862 = vsel %vm897, %v2859, %v2861
      %v2863 = vrot.slane %v2505, 2
      %v2864 = vrot.slane %v2506, 2
      %v2865 = vsel %vm897, %v2863, %v2864
      %v2866 = vrot.slane %v2507, 2
      %v2867 = vsel %vm897, %v2864, %v2866
      %v2868 = vrot.slane %v2508, 2
      %v2869 = vrot.slane %v2509, 2
      %v2870 = vsel %vm897, %v2868, %v2869
      %v2871 = vrot.slane %v2510, 2
      %v2872 = vsel %vm897, %v2869, %v2871
      %v2873 = vrot.slane %v2511, 2
      %v2874 = vrot.slane %v2512, 2
      %v2875 = vsel %vm897, %v2873, %v2874
      %v2876 = vrot.slane %v2513, 2
      %v2877 = vsel %vm897, %v2874, %v2876
      %v2878 = vrot.slane %v2514, 2
      %v2879 = vrot.slane %v2515, 2
      %v2880 = vsel %vm897, %v2878, %v2879
      %v2881 = vrot.slane %v2516, 2
      %v2882 = vsel %vm897, %v2879, %v2881
      %v2883 = vrot.slane %v2517, 2
      %v2884 = vrot.slane %v2518, 2
      %v2885 = vsel %vm897, %v2883, %v2884
      %v2886 = vrot.slane %v2519, 2
      %v2887 = vsel %vm897, %v2884, %v2886
      %v2888 = vrot.slane %v2520, 2
      %v2889 = vrot.slane %v2521, 2
      %v2890 = vsel %vm897, %v2888, %v2889
      %v2891 = vrot.slane %v2522, 2
      %v2892 = vsel %vm897, %v2889, %v2891
      %v2893 = vrot.slane %v2523, 2
      %v2894 = vrot.slane %v2524, 2
      %v2895 = vsel %vm897, %v2893, %v2894
      %v2896 = vrot.slane %v2525, 2
      %v2897 = vsel %vm897, %v2894, %v2896
      %v2898 = vrot.slane %v2526, 2
      %v2899 = vrot.slane %v2527, 2
      %v2900 = vsel %vm897, %v2898, %v2899
      %v2901 = vrot.slane %v2528, 2
      %v2902 = vsel %vm897, %v2899, %v2901
      %v2903 = vrot.slane %v2529, 2
      %v2904 = vrot.slane %v2530, 2
      %v2905 = vsel %vm897, %v2903, %v2904
      %v2906 = vrot.slane %v2531, 2
      %v2907 = vsel %vm897, %v2904, %v2906
      %2908 = vrot.lane.b32.xlu0 %v2830, 32
      %v2909 = vpop.permute.xlu0 %2908
      %2910 = vrot.lane.b32.xlu0 %v2832, 32
      %v2911 = vpop.permute.xlu0 %2910
      %2912 = vrot.lane.b32.xlu0 %v2835, 32
      %v2913 = vpop.permute.xlu0 %2912
      %2914 = vrot.lane.b32.xlu0 %v2837, 32
      %v2915 = vpop.permute.xlu0 %2914
      %2916 = vrot.lane.b32.xlu0 %v2840, 32
      %v2917 = vpop.permute.xlu0 %2916
      %2918 = vrot.lane.b32.xlu0 %v2842, 32
      %v2919 = vpop.permute.xlu0 %2918
      %2920 = vrot.lane.b32.xlu0 %v2845, 32
      %v2921 = vpop.permute.xlu0 %2920
      %2922 = vrot.lane.b32.xlu0 %v2847, 32
      %v2923 = vpop.permute.xlu0 %2922
      %2924 = vrot.lane.b32.xlu0 %v2850, 32
      %v2925 = vpop.permute.xlu0 %2924
      %2926 = vrot.lane.b32.xlu0 %v2852, 32
      %v2927 = vpop.permute.xlu0 %2926
      %2928 = vrot.lane.b32.xlu0 %v2855, 32
      %v2929 = vpop.permute.xlu0 %2928
      %2930 = vrot.lane.b32.xlu0 %v2857, 32
      %v2931 = vpop.permute.xlu0 %2930
      %2932 = vrot.lane.b32.xlu0 %v2860, 32
      %v2933 = vpop.permute.xlu0 %2932
      %2934 = vrot.lane.b32.xlu0 %v2862, 32
      %v2935 = vpop.permute.xlu0 %2934
      %2936 = vrot.lane.b32.xlu0 %v2865, 32
      %v2937 = vpop.permute.xlu0 %2936
      %2938 = vrot.lane.b32.xlu0 %v2867, 32
      %v2939 = vpop.permute.xlu0 %2938
      %2940 = vrot.lane.b32.xlu0 %v2870, 32
      %v2941 = vpop.permute.xlu0 %2940
      %2942 = vrot.lane.b32.xlu0 %v2872, 32
      %v2943 = vpop.permute.xlu0 %2942
      %2944 = vrot.lane.b32.xlu0 %v2875, 32
      %v2945 = vpop.permute.xlu0 %2944
      %2946 = vrot.lane.b32.xlu0 %v2877, 32
      %v2947 = vpop.permute.xlu0 %2946
      %2948 = vrot.lane.b32.xlu0 %v2880, 32
      %v2949 = vpop.permute.xlu0 %2948
      %2950 = vrot.lane.b32.xlu0 %v2882, 32
      %v2951 = vpop.permute.xlu0 %2950
      %2952 = vrot.lane.b32.xlu0 %v2885, 32
      %v2953 = vpop.permute.xlu0 %2952
      %2954 = vrot.lane.b32.xlu0 %v2887, 32
      %v2955 = vpop.permute.xlu0 %2954
      %2956 = vrot.lane.b32.xlu0 %v2890, 32
      %v2957 = vpop.permute.xlu0 %2956
      %2958 = vrot.lane.b32.xlu0 %v2892, 32
      %v2959 = vpop.permute.xlu0 %2958
      %2960 = vrot.lane.b32.xlu0 %v2895, 32
      %v2961 = vpop.permute.xlu0 %2960
      %2962 = vrot.lane.b32.xlu0 %v2897, 32
      %v2963 = vpop.permute.xlu0 %2962
      %2964 = vrot.lane.b32.xlu0 %v2900, 32
      %v2965 = vpop.permute.xlu0 %2964
      %2966 = vrot.lane.b32.xlu0 %v2902, 32
      %v2967 = vpop.permute.xlu0 %2966
      %2968 = vrot.lane.b32.xlu0 %v2905, 32
      %v2969 = vpop.permute.xlu0 %2968
      %2970 = vrot.lane.b32.xlu0 %v2907, 32
      %v2971 = vpop.permute.xlu0 %2970
      %vm3004 = vcmask 392448
      %3005 = vst.msk [vmem:[#allocation3] sm:$0xff] %vm3004, %v2909
      %3006 = vst.msk [vmem:[#allocation3 + $0x18] sm:$0xff] %vm3004, %v2911
      %3007 = vst.msk [vmem:[#allocation3 + $0x30] sm:$0xff] %vm3004, %v2913
      %3008 = vst.msk [vmem:[#allocation3 + $0x48] sm:$0xff] %vm3004, %v2915
      %3009 = vst.msk [vmem:[#allocation3 + $0x60] sm:$0xff] %vm3004, %v2917
      %3010 = vst.msk [vmem:[#allocation3 + $0x78] sm:$0xff] %vm3004, %v2919
      %3011 = vst.msk [vmem:[#allocation3 + $0x90] sm:$0xff] %vm3004, %v2921
      %3012 = vst.msk [vmem:[#allocation3 + $0xa8] sm:$0xff] %vm3004, %v2923
      %3013 = vst.msk [vmem:[#allocation3 + $0xc0] sm:$0xff] %vm3004, %v2925
      %3014 = vst.msk [vmem:[#allocation3 + $0xd8] sm:$0xff] %vm3004, %v2927
      %3015 = vst.msk [vmem:[#allocation3 + $0xf0] sm:$0xff] %vm3004, %v2929
      %3016 = vst.msk [vmem:[#allocation3 + $0x108] sm:$0xff] %vm3004, %v2931
      %3017 = vst.msk [vmem:[#allocation3 + $0x120] sm:$0xff] %vm3004, %v2933
      %3018 = vst.msk [vmem:[#allocation3 + $0x138] sm:$0xff] %vm3004, %v2935
      %3019 = vst.msk [vmem:[#allocation3 + $0x150] sm:$0xff] %vm3004, %v2937
      %3020 = vst.msk [vmem:[#allocation3 + $0x168] sm:$0xff] %vm3004, %v2939
      %3021 = vst.msk [vmem:[#allocation3 + $0x180] sm:$0xff] %vm3004, %v2941
      %3022 = vst.msk [vmem:[#allocation3 + $0x198] sm:$0xff] %vm3004, %v2943
      %3023 = vst.msk [vmem:[#allocation3 + $0x1b0] sm:$0xff] %vm3004, %v2945
      %3024 = vst.msk [vmem:[#allocation3 + $0x1c8] sm:$0xff] %vm3004, %v2947
      %3025 = vst.msk [vmem:[#allocation3 + $0x1e0] sm:$0xff] %vm3004, %v2949
      %3026 = vst.msk [vmem:[#allocation3 + $0x1f8] sm:$0xff] %vm3004, %v2951
      %3027 = vst.msk [vmem:[#allocation3 + $0x210] sm:$0xff] %vm3004, %v2953
      %3028 = vst.msk [vmem:[#allocation3 + $0x228] sm:$0xff] %vm3004, %v2955
      %3029 = vst.msk [vmem:[#allocation3 + $0x240] sm:$0xff] %vm3004, %v2957
      %3030 = vst.msk [vmem:[#allocation3 + $0x258] sm:$0xff] %vm3004, %v2959
      %3031 = vst.msk [vmem:[#allocation3 + $0x270] sm:$0xff] %vm3004, %v2961
      %3032 = vst.msk [vmem:[#allocation3 + $0x288] sm:$0xff] %vm3004, %v2963
      %3033 = vst.msk [vmem:[#allocation3 + $0x2a0] sm:$0xff] %vm3004, %v2965
      %3034 = vst.msk [vmem:[#allocation3 + $0x2b8] sm:$0xff] %vm3004, %v2967
      %3035 = vst.msk [vmem:[#allocation3 + $0x2d0] sm:$0xff] %vm3004, %v2969
      %3036 = vst.msk [vmem:[#allocation3 + $0x2e8] sm:$0xff] %vm3004, %v2971
      %3039 = vrot.lane.b32.xlu0 %v2487, 48
      %v3040 = vpop.permute.xlu0 %3039
      %3041 = vrot.lane.b32.xlu0 %v2488, 48
      %v3042 = vpop.permute.xlu0 %3041
      %3043 = vrot.lane.b32.xlu0 %v2490, 48
      %v3044 = vpop.permute.xlu0 %3043
      %3045 = vrot.lane.b32.xlu0 %v2491, 48
      %v3046 = vpop.permute.xlu0 %3045
      %3047 = vrot.lane.b32.xlu0 %v2493, 48
      %v3048 = vpop.permute.xlu0 %3047
      %3049 = vrot.lane.b32.xlu0 %v2494, 48
      %v3050 = vpop.permute.xlu0 %3049
      %3051 = vrot.lane.b32.xlu0 %v2496, 48
      %v3052 = vpop.permute.xlu0 %3051
      %3053 = vrot.lane.b32.xlu0 %v2497, 48
      %v3054 = vpop.permute.xlu0 %3053
      %3055 = vrot.lane.b32.xlu0 %v2499, 48
      %v3056 = vpop.permute.xlu0 %3055
      %3057 = vrot.lane.b32.xlu0 %v2500, 48
      %v3058 = vpop.permute.xlu0 %3057
      %3059 = vrot.lane.b32.xlu0 %v2502, 48
      %v3060 = vpop.permute.xlu0 %3059
      %3061 = vrot.lane.b32.xlu0 %v2503, 48
      %v3062 = vpop.permute.xlu0 %3061
      %3063 = vrot.lane.b32.xlu0 %v2505, 48
      %v3064 = vpop.permute.xlu0 %3063
      %3065 = vrot.lane.b32.xlu0 %v2506, 48
      %v3066 = vpop.permute.xlu0 %3065
      %3067 = vrot.lane.b32.xlu0 %v2508, 48
      %v3068 = vpop.permute.xlu0 %3067
      %3069 = vrot.lane.b32.xlu0 %v2509, 48
      %v3070 = vpop.permute.xlu0 %3069
      %3071 = vrot.lane.b32.xlu0 %v2511, 48
      %v3072 = vpop.permute.xlu0 %3071
      %3073 = vrot.lane.b32.xlu0 %v2512, 48
      %v3074 = vpop.permute.xlu0 %3073
      %3075 = vrot.lane.b32.xlu0 %v2514, 48
      %v3076 = vpop.permute.xlu0 %3075
      %3077 = vrot.lane.b32.xlu0 %v2515, 48
      %v3078 = vpop.permute.xlu0 %3077
      %3079 = vrot.lane.b32.xlu0 %v2517, 48
      %v3080 = vpop.permute.xlu0 %3079
      %3081 = vrot.lane.b32.xlu0 %v2518, 48
      %v3082 = vpop.permute.xlu0 %3081
      %3083 = vrot.lane.b32.xlu0 %v2520, 48
      %v3084 = vpop.permute.xlu0 %3083
      %3085 = vrot.lane.b32.xlu0 %v2521, 48
      %v3086 = vpop.permute.xlu0 %3085
      %3087 = vrot.lane.b32.xlu0 %v2523, 48
      %v3088 = vpop.permute.xlu0 %3087
      %3089 = vrot.lane.b32.xlu0 %v2524, 48
      %v3090 = vpop.permute.xlu0 %3089
      %3091 = vrot.lane.b32.xlu0 %v2526, 48
      %v3092 = vpop.permute.xlu0 %3091
      %3093 = vrot.lane.b32.xlu0 %v2527, 48
      %v3094 = vpop.permute.xlu0 %3093
      %3095 = vrot.lane.b32.xlu0 %v2529, 48
      %v3096 = vpop.permute.xlu0 %3095
      %3097 = vrot.lane.b32.xlu0 %v2530, 48
      %v3098 = vpop.permute.xlu0 %3097
      %3099 = vrot.lane.b32.xlu0 %v2532, 48
      %v3100 = vpop.permute.xlu0 %3099
      %3101 = vrot.lane.b32.xlu0 %v2533, 48
      %v3102 = vpop.permute.xlu0 %3101
      %vm3135 = vcmask 523648
      %3136 = vst.msk [vmem:[#allocation3] sm:$0xff] %vm3135, %v3040
      %3137 = vst.msk [vmem:[#allocation3 + $0x18] sm:$0xff] %vm3135, %v3042
      %3138 = vst.msk [vmem:[#allocation3 + $0x30] sm:$0xff] %vm3135, %v3044
      %3139 = vst.msk [vmem:[#allocation3 + $0x48] sm:$0xff] %vm3135, %v3046
      %3140 = vst.msk [vmem:[#allocation3 + $0x60] sm:$0xff] %vm3135, %v3048
      %3141 = vst.msk [vmem:[#allocation3 + $0x78] sm:$0xff] %vm3135, %v3050
      %3142 = vst.msk [vmem:[#allocation3 + $0x90] sm:$0xff] %vm3135, %v3052
      %3143 = vst.msk [vmem:[#allocation3 + $0xa8] sm:$0xff] %vm3135, %v3054
      %3144 = vst.msk [vmem:[#allocation3 + $0xc0] sm:$0xff] %vm3135, %v3056
      %3145 = vst.msk [vmem:[#allocation3 + $0xd8] sm:$0xff] %vm3135, %v3058
      %3146 = vst.msk [vmem:[#allocation3 + $0xf0] sm:$0xff] %vm3135, %v3060
      %3147 = vst.msk [vmem:[#allocation3 + $0x108] sm:$0xff] %vm3135, %v3062
      %3148 = vst.msk [vmem:[#allocation3 + $0x120] sm:$0xff] %vm3135, %v3064
      %3149 = vst.msk [vmem:[#allocation3 + $0x138] sm:$0xff] %vm3135, %v3066
      %3150 = vst.msk [vmem:[#allocation3 + $0x150] sm:$0xff] %vm3135, %v3068
      %3151 = vst.msk [vmem:[#allocation3 + $0x168] sm:$0xff] %vm3135, %v3070
      %3152 = vst.msk [vmem:[#allocation3 + $0x180] sm:$0xff] %vm3135, %v3072
      %3153 = vst.msk [vmem:[#allocation3 + $0x198] sm:$0xff] %vm3135, %v3074
      %3154 = vst.msk [vmem:[#allocation3 + $0x1b0] sm:$0xff] %vm3135, %v3076
      %3155 = vst.msk [vmem:[#allocation3 + $0x1c8] sm:$0xff] %vm3135, %v3078
      %3156 = vst.msk [vmem:[#allocation3 + $0x1e0] sm:$0xff] %vm3135, %v3080
      %3157 = vst.msk [vmem:[#allocation3 + $0x1f8] sm:$0xff] %vm3135, %v3082
      %3158 = vst.msk [vmem:[#allocation3 + $0x210] sm:$0xff] %vm3135, %v3084
      %3159 = vst.msk [vmem:[#allocation3 + $0x228] sm:$0xff] %vm3135, %v3086
      %3160 = vst.msk [vmem:[#allocation3 + $0x240] sm:$0xff] %vm3135, %v3088
      %3161 = vst.msk [vmem:[#allocation3 + $0x258] sm:$0xff] %vm3135, %v3090
      %3162 = vst.msk [vmem:[#allocation3 + $0x270] sm:$0xff] %vm3135, %v3092
      %3163 = vst.msk [vmem:[#allocation3 + $0x288] sm:$0xff] %vm3135, %v3094
      %3164 = vst.msk [vmem:[#allocation3 + $0x2a0] sm:$0xff] %vm3135, %v3096
      %3165 = vst.msk [vmem:[#allocation3 + $0x2b8] sm:$0xff] %vm3135, %v3098
      %3166 = vst.msk [vmem:[#allocation3 + $0x2d0] sm:$0xff] %vm3135, %v3100
      %3167 = vst.msk [vmem:[#allocation3 + $0x2e8] sm:$0xff] %vm3135, %v3102
      %v3169 = vrot.slane %v2532, 1
      %v3170 = vrot.slane %v2533, 1
      %v3171 = vsel %vm687, %v3169, %v3170
      %v3172 = vrot.slane %v2534, 1
      %v3173 = vsel %vm687, %v3170, %v3172
      %3174 = vrot.lane.b32.xlu0 %v2626, 64
      %v3175 = vpop.permute.xlu0 %3174
      %3176 = vrot.lane.b32.xlu0 %v2628, 64
      %v3177 = vpop.permute.xlu0 %3176
      %3178 = vrot.lane.b32.xlu0 %v2631, 64
      %v3179 = vpop.permute.xlu0 %3178
      %3180 = vrot.lane.b32.xlu0 %v2633, 64
      %v3181 = vpop.permute.xlu0 %3180
      %3182 = vrot.lane.b32.xlu0 %v2636, 64
      %v3183 = vpop.permute.xlu0 %3182
      %3184 = vrot.lane.b32.xlu0 %v2638, 64
      %v3185 = vpop.permute.xlu0 %3184
      %3186 = vrot.lane.b32.xlu0 %v2641, 64
      %v3187 = vpop.permute.xlu0 %3186
      %3188 = vrot.lane.b32.xlu0 %v2643, 64
      %v3189 = vpop.permute.xlu0 %3188
      %3190 = vrot.lane.b32.xlu0 %v2646, 64
      %v3191 = vpop.permute.xlu0 %3190
      %3192 = vrot.lane.b32.xlu0 %v2648, 64
      %v3193 = vpop.permute.xlu0 %3192
      %3194 = vrot.lane.b32.xlu0 %v2651, 64
      %v3195 = vpop.permute.xlu0 %3194
      %3196 = vrot.lane.b32.xlu0 %v2653, 64
      %v3197 = vpop.permute.xlu0 %3196
      %3198 = vrot.lane.b32.xlu0 %v2656, 64
      %v3199 = vpop.permute.xlu0 %3198
      %3200 = vrot.lane.b32.xlu0 %v2658, 64
      %v3201 = vpop.permute.xlu0 %3200
      %3202 = vrot.lane.b32.xlu0 %v2661, 64
      %v3203 = vpop.permute.xlu0 %3202
      %3204 = vrot.lane.b32.xlu0 %v2663, 64
      %v3205 = vpop.permute.xlu0 %3204
      %3206 = vrot.lane.b32.xlu0 %v2666, 64
      %v3207 = vpop.permute.xlu0 %3206
      %3208 = vrot.lane.b32.xlu0 %v2668, 64
      %v3209 = vpop.permute.xlu0 %3208
      %3210 = vrot.lane.b32.xlu0 %v2671, 64
      %v3211 = vpop.permute.xlu0 %3210
      %3212 = vrot.lane.b32.xlu0 %v2673, 64
      %v3213 = vpop.permute.xlu0 %3212
      %3214 = vrot.lane.b32.xlu0 %v2676, 64
      %v3215 = vpop.permute.xlu0 %3214
      %3216 = vrot.lane.b32.xlu0 %v2678, 64
      %v3217 = vpop.permute.xlu0 %3216
      %3218 = vrot.lane.b32.xlu0 %v2681, 64
      %v3219 = vpop.permute.xlu0 %3218
      %3220 = vrot.lane.b32.xlu0 %v2683, 64
      %v3221 = vpop.permute.xlu0 %3220
      %3222 = vrot.lane.b32.xlu0 %v2686, 64
      %v3223 = vpop.permute.xlu0 %3222
      %3224 = vrot.lane.b32.xlu0 %v2688, 64
      %v3225 = vpop.permute.xlu0 %3224
      %3226 = vrot.lane.b32.xlu0 %v2691, 64
      %v3227 = vpop.permute.xlu0 %3226
      %3228 = vrot.lane.b32.xlu0 %v2693, 64
      %v3229 = vpop.permute.xlu0 %3228
      %3230 = vrot.lane.b32.xlu0 %v2696, 64
      %v3231 = vpop.permute.xlu0 %3230
      %3232 = vrot.lane.b32.xlu0 %v2698, 64
      %v3233 = vpop.permute.xlu0 %3232
      %3234 = vrot.lane.b32.xlu0 %v3171, 64
      %v3235 = vpop.permute.xlu0 %3234
      %3236 = vrot.lane.b32.xlu0 %v3173, 64
      %v3237 = vpop.permute.xlu0 %3236
      %vm3270 = vcmask 654848
      %3271 = vst.msk [vmem:[#allocation3] sm:$0xff] %vm3270, %v3175
      %3272 = vst.msk [vmem:[#allocation3 + $0x18] sm:$0xff] %vm3270, %v3177
      %3273 = vst.msk [vmem:[#allocation3 + $0x30] sm:$0xff] %vm3270, %v3179
      %3274 = vst.msk [vmem:[#allocation3 + $0x48] sm:$0xff] %vm3270, %v3181
      %3275 = vst.msk [vmem:[#allocation3 + $0x60] sm:$0xff] %vm3270, %v3183
      %3276 = vst.msk [vmem:[#allocation3 + $0x78] sm:$0xff] %vm3270, %v3185
      %3277 = vst.msk [vmem:[#allocation3 + $0x90] sm:$0xff] %vm3270, %v3187
      %3278 = vst.msk [vmem:[#allocation3 + $0xa8] sm:$0xff] %vm3270, %v3189
      %3279 = vst.msk [vmem:[#allocation3 + $0xc0] sm:$0xff] %vm3270, %v3191
      %3280 = vst.msk [vmem:[#allocation3 + $0xd8] sm:$0xff] %vm3270, %v3193
      %3281 = vst.msk [vmem:[#allocation3 + $0xf0] sm:$0xff] %vm3270, %v3195
      %3282 = vst.msk [vmem:[#allocation3 + $0x108] sm:$0xff] %vm3270, %v3197
      %3283 = vst.msk [vmem:[#allocation3 + $0x120] sm:$0xff] %vm3270, %v3199
      %3284 = vst.msk [vmem:[#allocation3 + $0x138] sm:$0xff] %vm3270, %v3201
      %3285 = vst.msk [vmem:[#allocation3 + $0x150] sm:$0xff] %vm3270, %v3203
      %3286 = vst.msk [vmem:[#allocation3 + $0x168] sm:$0xff] %vm3270, %v3205
      %3287 = vst.msk [vmem:[#allocation3 + $0x180] sm:$0xff] %vm3270, %v3207
      %3288 = vst.msk [vmem:[#allocation3 + $0x198] sm:$0xff] %vm3270, %v3209
      %3289 = vst.msk [vmem:[#allocation3 + $0x1b0] sm:$0xff] %vm3270, %v3211
      %3290 = vst.msk [vmem:[#allocation3 + $0x1c8] sm:$0xff] %vm3270, %v3213
      %3291 = vst.msk [vmem:[#allocation3 + $0x1e0] sm:$0xff] %vm3270, %v3215
      %3292 = vst.msk [vmem:[#allocation3 + $0x1f8] sm:$0xff] %vm3270, %v3217
      %3293 = vst.msk [vmem:[#allocation3 + $0x210] sm:$0xff] %vm3270, %v3219
      %3294 = vst.msk [vmem:[#allocation3 + $0x228] sm:$0xff] %vm3270, %v3221
      %3295 = vst.msk [vmem:[#allocation3 + $0x240] sm:$0xff] %vm3270, %v3223
      %3296 = vst.msk [vmem:[#allocation3 + $0x258] sm:$0xff] %vm3270, %v3225
      %3297 = vst.msk [vmem:[#allocation3 + $0x270] sm:$0xff] %vm3270, %v3227
      %3298 = vst.msk [vmem:[#allocation3 + $0x288] sm:$0xff] %vm3270, %v3229
      %3299 = vst.msk [vmem:[#allocation3 + $0x2a0] sm:$0xff] %vm3270, %v3231
      %3300 = vst.msk [vmem:[#allocation3 + $0x2b8] sm:$0xff] %vm3270, %v3233
      %3301 = vst.msk [vmem:[#allocation3 + $0x2d0] sm:$0xff] %vm3270, %v3235
      %3302 = vst.msk [vmem:[#allocation3 + $0x2e8] sm:$0xff] %vm3270, %v3237
      %v3303 = vrot.slane %v2532, 2
      %v3304 = vrot.slane %v2533, 2
      %v3305 = vsel %vm897, %v3303, %v3304
      %v3306 = vrot.slane %v2534, 2
      %v3307 = vsel %vm897, %v3304, %v3306
      %3308 = vrot.lane.b32.xlu0 %v2835, 80
      %v3309 = vpop.permute.xlu0 %3308
      %3310 = vrot.lane.b32.xlu0 %v2837, 80
      %v3311 = vpop.permute.xlu0 %3310
      %3312 = vrot.lane.b32.xlu0 %v2840, 80
      %v3313 = vpop.permute.xlu0 %3312
      %3314 = vrot.lane.b32.xlu0 %v2842, 80
      %v3315 = vpop.permute.xlu0 %3314
      %3316 = vrot.lane.b32.xlu0 %v2845, 80
      %v3317 = vpop.permute.xlu0 %3316
      %3318 = vrot.lane.b32.xlu0 %v2847, 80
      %v3319 = vpop.permute.xlu0 %3318
      %3320 = vrot.lane.b32.xlu0 %v2850, 80
      %v3321 = vpop.permute.xlu0 %3320
      %3322 = vrot.lane.b32.xlu0 %v2852, 80
      %v3323 = vpop.permute.xlu0 %3322
      %3324 = vrot.lane.b32.xlu0 %v2855, 80
      %v3325 = vpop.permute.xlu0 %3324
      %3326 = vrot.lane.b32.xlu0 %v2857, 80
      %v3327 = vpop.permute.xlu0 %3326
      %3328 = vrot.lane.b32.xlu0 %v2860, 80
      %v3329 = vpop.permute.xlu0 %3328
      %3330 = vrot.lane.b32.xlu0 %v2862, 80
      %v3331 = vpop.permute.xlu0 %3330
      %3332 = vrot.lane.b32.xlu0 %v2865, 80
      %v3333 = vpop.permute.xlu0 %3332
      %3334 = vrot.lane.b32.xlu0 %v2867, 80
      %v3335 = vpop.permute.xlu0 %3334
      %3336 = vrot.lane.b32.xlu0 %v2870, 80
      %v3337 = vpop.permute.xlu0 %3336
      %3338 = vrot.lane.b32.xlu0 %v2872, 80
      %v3339 = vpop.permute.xlu0 %3338
      %3340 = vrot.lane.b32.xlu0 %v2875, 80
      %v3341 = vpop.permute.xlu0 %3340
      %3342 = vrot.lane.b32.xlu0 %v2877, 80
      %v3343 = vpop.permute.xlu0 %3342
      %3344 = vrot.lane.b32.xlu0 %v2880, 80
      %v3345 = vpop.permute.xlu0 %3344
      %3346 = vrot.lane.b32.xlu0 %v2882, 80
      %v3347 = vpop.permute.xlu0 %3346
      %3348 = vrot.lane.b32.xlu0 %v2885, 80
      %v3349 = vpop.permute.xlu0 %3348
      %3350 = vrot.lane.b32.xlu0 %v2887, 80
      %v3351 = vpop.permute.xlu0 %3350
      %3352 = vrot.lane.b32.xlu0 %v2890, 80
      %v3353 = vpop.permute.xlu0 %3352
      %3354 = vrot.lane.b32.xlu0 %v2892, 80
      %v3355 = vpop.permute.xlu0 %3354
      %3356 = vrot.lane.b32.xlu0 %v2895, 80
      %v3357 = vpop.permute.xlu0 %3356
      %3358 = vrot.lane.b32.xlu0 %v2897, 80
      %v3359 = vpop.permute.xlu0 %3358
      %3360 = vrot.lane.b32.xlu0 %v2900, 80
      %v3361 = vpop.permute.xlu0 %3360
      %3362 = vrot.lane.b32.xlu0 %v2902, 80
      %v3363 = vpop.permute.xlu0 %3362
      %3364 = vrot.lane.b32.xlu0 %v2905, 80
      %v3365 = vpop.permute.xlu0 %3364
      %3366 = vrot.lane.b32.xlu0 %v2907, 80
      %v3367 = vpop.permute.xlu0 %3366
      %3368 = vrot.lane.b32.xlu0 %v3305, 80
      %v3369 = vpop.permute.xlu0 %3368
      %3370 = vrot.lane.b32.xlu0 %v3307, 80
      %v3371 = vpop.permute.xlu0 %3370
      %vm3404 = vcmask 786048
      %3405 = vst.msk [vmem:[#allocation3] sm:$0xff] %vm3404, %v3309
      %3406 = vst.msk [vmem:[#allocation3 + $0x18] sm:$0xff] %vm3404, %v3311
      %3407 = vst.msk [vmem:[#allocation3 + $0x30] sm:$0xff] %vm3404, %v3313
      %3408 = vst.msk [vmem:[#allocation3 + $0x48] sm:$0xff] %vm3404, %v3315
      %3409 = vst.msk [vmem:[#allocation3 + $0x60] sm:$0xff] %vm3404, %v3317
      %3410 = vst.msk [vmem:[#allocation3 + $0x78] sm:$0xff] %vm3404, %v3319
      %3411 = vst.msk [vmem:[#allocation3 + $0x90] sm:$0xff] %vm3404, %v3321
      %3412 = vst.msk [vmem:[#allocation3 + $0xa8] sm:$0xff] %vm3404, %v3323
      %3413 = vst.msk [vmem:[#allocation3 + $0xc0] sm:$0xff] %vm3404, %v3325
      %3414 = vst.msk [vmem:[#allocation3 + $0xd8] sm:$0xff] %vm3404, %v3327
      %3415 = vst.msk [vmem:[#allocation3 + $0xf0] sm:$0xff] %vm3404, %v3329
      %3416 = vst.msk [vmem:[#allocation3 + $0x108] sm:$0xff] %vm3404, %v3331
      %3417 = vst.msk [vmem:[#allocation3 + $0x120] sm:$0xff] %vm3404, %v3333
      %3418 = vst.msk [vmem:[#allocation3 + $0x138] sm:$0xff] %vm3404, %v3335
      %3419 = vst.msk [vmem:[#allocation3 + $0x150] sm:$0xff] %vm3404, %v3337
      %3420 = vst.msk [vmem:[#allocation3 + $0x168] sm:$0xff] %vm3404, %v3339
      %3421 = vst.msk [vmem:[#allocation3 + $0x180] sm:$0xff] %vm3404, %v3341
      %3422 = vst.msk [vmem:[#allocation3 + $0x198] sm:$0xff] %vm3404, %v3343
      %3423 = vst.msk [vmem:[#allocation3 + $0x1b0] sm:$0xff] %vm3404, %v3345
      %3424 = vst.msk [vmem:[#allocation3 + $0x1c8] sm:$0xff] %vm3404, %v3347
      %3425 = vst.msk [vmem:[#allocation3 + $0x1e0] sm:$0xff] %vm3404, %v3349
      %3426 = vst.msk [vmem:[#allocation3 + $0x1f8] sm:$0xff] %vm3404, %v3351
      %3427 = vst.msk [vmem:[#allocation3 + $0x210] sm:$0xff] %vm3404, %v3353
      %3428 = vst.msk [vmem:[#allocation3 + $0x228] sm:$0xff] %vm3404, %v3355
      %3429 = vst.msk [vmem:[#allocation3 + $0x240] sm:$0xff] %vm3404, %v3357
      %3430 = vst.msk [vmem:[#allocation3 + $0x258] sm:$0xff] %vm3404, %v3359
      %3431 = vst.msk [vmem:[#allocation3 + $0x270] sm:$0xff] %vm3404, %v3361
      %3432 = vst.msk [vmem:[#allocation3 + $0x288] sm:$0xff] %vm3404, %v3363
      %3433 = vst.msk [vmem:[#allocation3 + $0x2a0] sm:$0xff] %vm3404, %v3365
      %3434 = vst.msk [vmem:[#allocation3 + $0x2b8] sm:$0xff] %vm3404, %v3367
      %3435 = vst.msk [vmem:[#allocation3 + $0x2d0] sm:$0xff] %vm3404, %v3369
      %3436 = vst.msk [vmem:[#allocation3 + $0x2e8] sm:$0xff] %vm3404, %v3371
      %3439 = vrot.lane.b32.xlu0 %v2490, 96
      %v3440 = vpop.permute.xlu0 %3439
      %3441 = vrot.lane.b32.xlu0 %v2491, 96
      %v3442 = vpop.permute.xlu0 %3441
      %3443 = vrot.lane.b32.xlu0 %v2493, 96
      %v3444 = vpop.permute.xlu0 %3443
      %3445 = vrot.lane.b32.xlu0 %v2494, 96
      %v3446 = vpop.permute.xlu0 %3445
      %3447 = vrot.lane.b32.xlu0 %v2496, 96
      %v3448 = vpop.permute.xlu0 %3447
      %3449 = vrot.lane.b32.xlu0 %v2497, 96
      %v3450 = vpop.permute.xlu0 %3449
      %3451 = vrot.lane.b32.xlu0 %v2499, 96
      %v3452 = vpop.permute.xlu0 %3451
      %3453 = vrot.lane.b32.xlu0 %v2500, 96
      %v3454 = vpop.permute.xlu0 %3453
      %3455 = vrot.lane.b32.xlu0 %v2502, 96
      %v3456 = vpop.permute.xlu0 %3455
      %3457 = vrot.lane.b32.xlu0 %v2503, 96
      %v3458 = vpop.permute.xlu0 %3457
      %3459 = vrot.lane.b32.xlu0 %v2505, 96
      %v3460 = vpop.permute.xlu0 %3459
      %3461 = vrot.lane.b32.xlu0 %v2506, 96
      %v3462 = vpop.permute.xlu0 %3461
      %3463 = vrot.lane.b32.xlu0 %v2508, 96
      %v3464 = vpop.permute.xlu0 %3463
      %3465 = vrot.lane.b32.xlu0 %v2509, 96
      %v3466 = vpop.permute.xlu0 %3465
      %3467 = vrot.lane.b32.xlu0 %v2511, 96
      %v3468 = vpop.permute.xlu0 %3467
      %3469 = vrot.lane.b32.xlu0 %v2512, 96
      %v3470 = vpop.permute.xlu0 %3469
      %3471 = vrot.lane.b32.xlu0 %v2514, 96
      %v3472 = vpop.permute.xlu0 %3471
      %3473 = vrot.lane.b32.xlu0 %v2515, 96
      %v3474 = vpop.permute.xlu0 %3473
      %3475 = vrot.lane.b32.xlu0 %v2517, 96
      %v3476 = vpop.permute.xlu0 %3475
      %3477 = vrot.lane.b32.xlu0 %v2518, 96
      %v3478 = vpop.permute.xlu0 %3477
      %3479 = vrot.lane.b32.xlu0 %v2520, 96
      %v3480 = vpop.permute.xlu0 %3479
      %3481 = vrot.lane.b32.xlu0 %v2521, 96
      %v3482 = vpop.permute.xlu0 %3481
      %3483 = vrot.lane.b32.xlu0 %v2523, 96
      %v3484 = vpop.permute.xlu0 %3483
      %3485 = vrot.lane.b32.xlu0 %v2524, 96
      %v3486 = vpop.permute.xlu0 %3485
      %3487 = vrot.lane.b32.xlu0 %v2526, 96
      %v3488 = vpop.permute.xlu0 %3487
      %3489 = vrot.lane.b32.xlu0 %v2527, 96
      %v3490 = vpop.permute.xlu0 %3489
      %3491 = vrot.lane.b32.xlu0 %v2529, 96
      %v3492 = vpop.permute.xlu0 %3491
      %3493 = vrot.lane.b32.xlu0 %v2530, 96
      %v3494 = vpop.permute.xlu0 %3493
      %3495 = vrot.lane.b32.xlu0 %v2532, 96
      %v3496 = vpop.permute.xlu0 %3495
      %3497 = vrot.lane.b32.xlu0 %v2533, 96
      %v3498 = vpop.permute.xlu0 %3497
      %3499 = vrot.lane.b32.xlu0 %v2535, 96
      %v3500 = vpop.permute.xlu0 %3499
      %3501 = vrot.lane.b32.xlu0 %v2536, 96
      %v3502 = vpop.permute.xlu0 %3501
      %vm3535 = vcmask 917248
      %3536 = vst.msk [vmem:[#allocation3] sm:$0xff] %vm3535, %v3440
      %3537 = vst.msk [vmem:[#allocation3 + $0x18] sm:$0xff] %vm3535, %v3442
      %3538 = vst.msk [vmem:[#allocation3 + $0x30] sm:$0xff] %vm3535, %v3444
      %3539 = vst.msk [vmem:[#allocation3 + $0x48] sm:$0xff] %vm3535, %v3446
      %3540 = vst.msk [vmem:[#allocation3 + $0x60] sm:$0xff] %vm3535, %v3448
      %3541 = vst.msk [vmem:[#allocation3 + $0x78] sm:$0xff] %vm3535, %v3450
      %3542 = vst.msk [vmem:[#allocation3 + $0x90] sm:$0xff] %vm3535, %v3452
      %3543 = vst.msk [vmem:[#allocation3 + $0xa8] sm:$0xff] %vm3535, %v3454
      %3544 = vst.msk [vmem:[#allocation3 + $0xc0] sm:$0xff] %vm3535, %v3456
      %3545 = vst.msk [vmem:[#allocation3 + $0xd8] sm:$0xff] %vm3535, %v3458
      %3546 = vst.msk [vmem:[#allocation3 + $0xf0] sm:$0xff] %vm3535, %v3460
      %3547 = vst.msk [vmem:[#allocation3 + $0x108] sm:$0xff] %vm3535, %v3462
      %3548 = vst.msk [vmem:[#allocation3 + $0x120] sm:$0xff] %vm3535, %v3464
      %3549 = vst.msk [vmem:[#allocation3 + $0x138] sm:$0xff] %vm3535, %v3466
      %3550 = vst.msk [vmem:[#allocation3 + $0x150] sm:$0xff] %vm3535, %v3468
      %3551 = vst.msk [vmem:[#allocation3 + $0x168] sm:$0xff] %vm3535, %v3470
      %3552 = vst.msk [vmem:[#allocation3 + $0x180] sm:$0xff] %vm3535, %v3472
      %3553 = vst.msk [vmem:[#allocation3 + $0x198] sm:$0xff] %vm3535, %v3474
      %3554 = vst.msk [vmem:[#allocation3 + $0x1b0] sm:$0xff] %vm3535, %v3476
      %3555 = vst.msk [vmem:[#allocation3 + $0x1c8] sm:$0xff] %vm3535, %v3478
      %3556 = vst.msk [vmem:[#allocation3 + $0x1e0] sm:$0xff] %vm3535, %v3480
      %3557 = vst.msk [vmem:[#allocation3 + $0x1f8] sm:$0xff] %vm3535, %v3482
      %3558 = vst.msk [vmem:[#allocation3 + $0x210] sm:$0xff] %vm3535, %v3484
      %3559 = vst.msk [vmem:[#allocation3 + $0x228] sm:$0xff] %vm3535, %v3486
      %3560 = vst.msk [vmem:[#allocation3 + $0x240] sm:$0xff] %vm3535, %v3488
      %3561 = vst.msk [vmem:[#allocation3 + $0x258] sm:$0xff] %vm3535, %v3490
      %3562 = vst.msk [vmem:[#allocation3 + $0x270] sm:$0xff] %vm3535, %v3492
      %3563 = vst.msk [vmem:[#allocation3 + $0x288] sm:$0xff] %vm3535, %v3494
      %3564 = vst.msk [vmem:[#allocation3 + $0x2a0] sm:$0xff] %vm3535, %v3496
      %3565 = vst.msk [vmem:[#allocation3 + $0x2b8] sm:$0xff] %vm3535, %v3498
      %3566 = vst.msk [vmem:[#allocation3 + $0x2d0] sm:$0xff] %vm3535, %v3500
      %3567 = vst.msk [vmem:[#allocation3 + $0x2e8] sm:$0xff] %vm3535, %v3502
      %v3569 = vrot.slane %v2535, 1
      %v3570 = vrot.slane %v2536, 1
      %v3571 = vsel %vm687, %v3569, %v3570
      %v3572 = vrot.slane %v2537, 1
      %v3573 = vsel %vm687, %v3570, %v3572
      %3574 = vrot.lane.b32.xlu0 %v2631, 112
      %v3575 = vpop.permute.xlu0 %3574
      %3576 = vrot.lane.b32.xlu0 %v2633, 112
      %v3577 = vpop.permute.xlu0 %3576
      %3578 = vrot.lane.b32.xlu0 %v2636, 112
      %v3579 = vpop.permute.xlu0 %3578
      %3580 = vrot.lane.b32.xlu0 %v2638, 112
      %v3581 = vpop.permute.xlu0 %3580
      %3582 = vrot.lane.b32.xlu0 %v2641, 112
      %v3583 = vpop.permute.xlu0 %3582
      %3584 = vrot.lane.b32.xlu0 %v2643, 112
      %v3585 = vpop.permute.xlu0 %3584
      %3586 = vrot.lane.b32.xlu0 %v2646, 112
      %v3587 = vpop.permute.xlu0 %3586
      %3588 = vrot.lane.b32.xlu0 %v2648, 112
      %v3589 = vpop.permute.xlu0 %3588
      %3590 = vrot.lane.b32.xlu0 %v2651, 112
      %v3591 = vpop.permute.xlu0 %3590
      %3592 = vrot.lane.b32.xlu0 %v2653, 112
      %v3593 = vpop.permute.xlu0 %3592
      %3594 = vrot.lane.b32.xlu0 %v2656, 112
      %v3595 = vpop.permute.xlu0 %3594
      %3596 = vrot.lane.b32.xlu0 %v2658, 112
      %v3597 = vpop.permute.xlu0 %3596
      %3598 = vrot.lane.b32.xlu0 %v2661, 112
      %v3599 = vpop.permute.xlu0 %3598
      %3600 = vrot.lane.b32.xlu0 %v2663, 112
      %v3601 = vpop.permute.xlu0 %3600
      %3602 = vrot.lane.b32.xlu0 %v2666, 112
      %v3603 = vpop.permute.xlu0 %3602
      %3604 = vrot.lane.b32.xlu0 %v2668, 112
      %v3605 = vpop.permute.xlu0 %3604
      %3606 = vrot.lane.b32.xlu0 %v2671, 112
      %v3607 = vpop.permute.xlu0 %3606
      %3608 = vrot.lane.b32.xlu0 %v2673, 112
      %v3609 = vpop.permute.xlu0 %3608
      %3610 = vrot.lane.b32.xlu0 %v2676, 112
      %v3611 = vpop.permute.xlu0 %3610
      %3612 = vrot.lane.b32.xlu0 %v2678, 112
      %v3613 = vpop.permute.xlu0 %3612
      %3614 = vrot.lane.b32.xlu0 %v2681, 112
      %v3615 = vpop.permute.xlu0 %3614
      %3616 = vrot.lane.b32.xlu0 %v2683, 112
      %v3617 = vpop.permute.xlu0 %3616
      %3618 = vrot.lane.b32.xlu0 %v2686, 112
      %v3619 = vpop.permute.xlu0 %3618
      %3620 = vrot.lane.b32.xlu0 %v2688, 112
      %v3621 = vpop.permute.xlu0 %3620
      %3622 = vrot.lane.b32.xlu0 %v2691, 112
      %v3623 = vpop.permute.xlu0 %3622
      %3624 = vrot.lane.b32.xlu0 %v2693, 112
      %v3625 = vpop.permute.xlu0 %3624
      %3626 = vrot.lane.b32.xlu0 %v2696, 112
      %v3627 = vpop.permute.xlu0 %3626
      %3628 = vrot.lane.b32.xlu0 %v2698, 112
      %v3629 = vpop.permute.xlu0 %3628
      %3630 = vrot.lane.b32.xlu0 %v3171, 112
      %v3631 = vpop.permute.xlu0 %3630
      %3632 = vrot.lane.b32.xlu0 %v3173, 112
      %v3633 = vpop.permute.xlu0 %3632
      %3634 = vrot.lane.b32.xlu0 %v3571, 112
      %v3635 = vpop.permute.xlu0 %3634
      %3636 = vrot.lane.b32.xlu0 %v3573, 112
      %v3637 = vpop.permute.xlu0 %3636
      %vm3670 = vcmask 1048448
      %3671 = vst.msk [vmem:[#allocation3] sm:$0xff] %vm3670, %v3575
      %3672 = vst.msk [vmem:[#allocation3 + $0x18] sm:$0xff] %vm3670, %v3577
      %3673 = vst.msk [vmem:[#allocation3 + $0x30] sm:$0xff] %vm3670, %v3579
      %3674 = vst.msk [vmem:[#allocation3 + $0x48] sm:$0xff] %vm3670, %v3581
      %3675 = vst.msk [vmem:[#allocation3 + $0x60] sm:$0xff] %vm3670, %v3583
      %3676 = vst.msk [vmem:[#allocation3 + $0x78] sm:$0xff] %vm3670, %v3585
      %3677 = vst.msk [vmem:[#allocation3 + $0x90] sm:$0xff] %vm3670, %v3587
      %3678 = vst.msk [vmem:[#allocation3 + $0xa8] sm:$0xff] %vm3670, %v3589
      %3679 = vst.msk [vmem:[#allocation3 + $0xc0] sm:$0xff] %vm3670, %v3591
      %3680 = vst.msk [vmem:[#allocation3 + $0xd8] sm:$0xff] %vm3670, %v3593
      %3681 = vst.msk [vmem:[#allocation3 + $0xf0] sm:$0xff] %vm3670, %v3595
      %3682 = vst.msk [vmem:[#allocation3 + $0x108] sm:$0xff] %vm3670, %v3597
      %3683 = vst.msk [vmem:[#allocation3 + $0x120] sm:$0xff] %vm3670, %v3599
      %3684 = vst.msk [vmem:[#allocation3 + $0x138] sm:$0xff] %vm3670, %v3601
      %3685 = vst.msk [vmem:[#allocation3 + $0x150] sm:$0xff] %vm3670, %v3603
      %3686 = vst.msk [vmem:[#allocation3 + $0x168] sm:$0xff] %vm3670, %v3605
      %3687 = vst.msk [vmem:[#allocation3 + $0x180] sm:$0xff] %vm3670, %v3607
      %3688 = vst.msk [vmem:[#allocation3 + $0x198] sm:$0xff] %vm3670, %v3609
      %3689 = vst.msk [vmem:[#allocation3 + $0x1b0] sm:$0xff] %vm3670, %v3611
      %3690 = vst.msk [vmem:[#allocation3 + $0x1c8] sm:$0xff] %vm3670, %v3613
      %3691 = vst.msk [vmem:[#allocation3 + $0x1e0] sm:$0xff] %vm3670, %v3615
      %3692 = vst.msk [vmem:[#allocation3 + $0x1f8] sm:$0xff] %vm3670, %v3617
      %3693 = vst.msk [vmem:[#allocation3 + $0x210] sm:$0xff] %vm3670, %v3619
      %3694 = vst.msk [vmem:[#allocation3 + $0x228] sm:$0xff] %vm3670, %v3621
      %3695 = vst.msk [vmem:[#allocation3 + $0x240] sm:$0xff] %vm3670, %v3623
      %3696 = vst.msk [vmem:[#allocation3 + $0x258] sm:$0xff] %vm3670, %v3625
      %3697 = vst.msk [vmem:[#allocation3 + $0x270] sm:$0xff] %vm3670, %v3627
      %3698 = vst.msk [vmem:[#allocation3 + $0x288] sm:$0xff] %vm3670, %v3629
      %3699 = vst.msk [vmem:[#allocation3 + $0x2a0] sm:$0xff] %vm3670, %v3631
      %3700 = vst.msk [vmem:[#allocation3 + $0x2b8] sm:$0xff] %vm3670, %v3633
      %3701 = vst.msk [vmem:[#allocation3 + $0x2d0] sm:$0xff] %vm3670, %v3635
      %3702 = vst.msk [vmem:[#allocation3 + $0x2e8] sm:$0xff] %vm3670, %v3637
      %v3703 = vrot.slane %v2535, 2
      %v3704 = vrot.slane %v2536, 2
      %v3705 = vsel %vm897, %v3703, %v3704
      %v3706 = vrot.slane %v2537, 2
      %v3707 = vsel %vm897, %v3704, %v3706
      %3740 = vst.msk [vmem:[#allocation3 + $0x8] sm:$0xff] %vm2538, %v2840
      %3741 = vst.msk [vmem:[#allocation3 + $0x20] sm:$0xff] %vm2538, %v2842
      %3742 = vst.msk [vmem:[#allocation3 + $0x38] sm:$0xff] %vm2538, %v2845
      %3743 = vst.msk [vmem:[#allocation3 + $0x50] sm:$0xff] %vm2538, %v2847
      %3744 = vst.msk [vmem:[#allocation3 + $0x68] sm:$0xff] %vm2538, %v2850
      %3745 = vst.msk [vmem:[#allocation3 + $0x80] sm:$0xff] %vm2538, %v2852
      %3746 = vst.msk [vmem:[#allocation3 + $0x98] sm:$0xff] %vm2538, %v2855
      %3747 = vst.msk [vmem:[#allocation3 + $0xb0] sm:$0xff] %vm2538, %v2857
      %3748 = vst.msk [vmem:[#allocation3 + $0xc8] sm:$0xff] %vm2538, %v2860
      %3749 = vst.msk [vmem:[#allocation3 + $0xe0] sm:$0xff] %vm2538, %v2862
      %3750 = vst.msk [vmem:[#allocation3 + $0xf8] sm:$0xff] %vm2538, %v2865
      %3751 = vst.msk [vmem:[#allocation3 + $0x110] sm:$0xff] %vm2538, %v2867
      %3752 = vst.msk [vmem:[#allocation3 + $0x128] sm:$0xff] %vm2538, %v2870
      %3753 = vst.msk [vmem:[#allocation3 + $0x140] sm:$0xff] %vm2538, %v2872
      %3754 = vst.msk [vmem:[#allocation3 + $0x158] sm:$0xff] %vm2538, %v2875
      %3755 = vst.msk [vmem:[#allocation3 + $0x170] sm:$0xff] %vm2538, %v2877
      %3756 = vst.msk [vmem:[#allocation3 + $0x188] sm:$0xff] %vm2538, %v2880
      %3757 = vst.msk [vmem:[#allocation3 + $0x1a0] sm:$0xff] %vm2538, %v2882
      %3758 = vst.msk [vmem:[#allocation3 + $0x1b8] sm:$0xff] %vm2538, %v2885
      %3759 = vst.msk [vmem:[#allocation3 + $0x1d0] sm:$0xff] %vm2538, %v2887
      %3760 = vst.msk [vmem:[#allocation3 + $0x1e8] sm:$0xff] %vm2538, %v2890
      %3761 = vst.msk [vmem:[#allocation3 + $0x200] sm:$0xff] %vm2538, %v2892
      %3762 = vst.msk [vmem:[#allocation3 + $0x218] sm:$0xff] %vm2538, %v2895
      %3763 = vst.msk [vmem:[#allocation3 + $0x230] sm:$0xff] %vm2538, %v2897
      %3764 = vst.msk [vmem:[#allocation3 + $0x248] sm:$0xff] %vm2538, %v2900
      %3765 = vst.msk [vmem:[#allocation3 + $0x260] sm:$0xff] %vm2538, %v2902
      %3766 = vst.msk [vmem:[#allocation3 + $0x278] sm:$0xff] %vm2538, %v2905
      %3767 = vst.msk [vmem:[#allocation3 + $0x290] sm:$0xff] %vm2538, %v2907
      %3768 = vst.msk [vmem:[#allocation3 + $0x2a8] sm:$0xff] %vm2538, %v3305
      %3769 = vst.msk [vmem:[#allocation3 + $0x2c0] sm:$0xff] %vm2538, %v3307
      %3770 = vst.msk [vmem:[#allocation3 + $0x2d8] sm:$0xff] %vm2538, %v3705
      %3771 = vst.msk [vmem:[#allocation3 + $0x2f0] sm:$0xff] %vm2538, %v3707
      %v3772 = vld [vmem:[#allocation3] sm:$0xff]
      %v3773 = vld [vmem:[#allocation3 + $0x8] sm:$0xff]
      %v3774 = vld [vmem:[#allocation3 + $0x18] sm:$0xff]
      %v3775 = vld [vmem:[#allocation3 + $0x20] sm:$0xff]
      %v3776 = vld [vmem:[#allocation3 + $0x30] sm:$0xff]
      %v3777 = vld [vmem:[#allocation3 + $0x38] sm:$0xff]
      %v3778 = vld [vmem:[#allocation3 + $0x48] sm:$0xff]
      %v3779 = vld [vmem:[#allocation3 + $0x50] sm:$0xff]
      %v3780 = vld [vmem:[#allocation3 + $0x60] sm:$0xff]
      %v3781 = vld [vmem:[#allocation3 + $0x68] sm:$0xff]
      %v3782 = vld [vmem:[#allocation3 + $0x78] sm:$0xff]
      %v3783 = vld [vmem:[#allocation3 + $0x80] sm:$0xff]
      %v3784 = vld [vmem:[#allocation3 + $0x90] sm:$0xff]
      %v3785 = vld [vmem:[#allocation3 + $0x98] sm:$0xff]
      %v3786 = vld [vmem:[#allocation3 + $0xa8] sm:$0xff]
      %v3787 = vld [vmem:[#allocation3 + $0xb0] sm:$0xff]
      %v3788 = vld [vmem:[#allocation3 + $0xc0] sm:$0xff]
      %v3789 = vld [vmem:[#allocation3 + $0xc8] sm:$0xff]
      %v3790 = vld [vmem:[#allocation3 + $0xd8] sm:$0xff]
      %v3791 = vld [vmem:[#allocation3 + $0xe0] sm:$0xff]
      %v3792 = vld [vmem:[#allocation3 + $0xf0] sm:$0xff]
      %v3793 = vld [vmem:[#allocation3 + $0xf8] sm:$0xff]
      %v3794 = vld [vmem:[#allocation3 + $0x108] sm:$0xff]
      %v3795 = vld [vmem:[#allocation3 + $0x110] sm:$0xff]
      %v3796 = vld [vmem:[#allocation3 + $0x120] sm:$0xff]
      %v3797 = vld [vmem:[#allocation3 + $0x128] sm:$0xff]
      %v3798 = vld [vmem:[#allocation3 + $0x138] sm:$0xff]
      %v3799 = vld [vmem:[#allocation3 + $0x140] sm:$0xff]
      %v3800 = vld [vmem:[#allocation3 + $0x150] sm:$0xff]
      %v3801 = vld [vmem:[#allocation3 + $0x158] sm:$0xff]
      %v3802 = vld [vmem:[#allocation3 + $0x168] sm:$0xff]
      %v3803 = vld [vmem:[#allocation3 + $0x170] sm:$0xff]
      %v3804 = vld [vmem:[#allocation3 + $0x180] sm:$0xff]
      %v3805 = vld [vmem:[#allocation3 + $0x188] sm:$0xff]
      %v3806 = vld [vmem:[#allocation3 + $0x198] sm:$0xff]
      %v3807 = vld [vmem:[#allocation3 + $0x1a0] sm:$0xff]
      %v3808 = vld [vmem:[#allocation3 + $0x1b0] sm:$0xff]
      %v3809 = vld [vmem:[#allocation3 + $0x1b8] sm:$0xff]
      %v3810 = vld [vmem:[#allocation3 + $0x1c8] sm:$0xff]
      %v3811 = vld [vmem:[#allocation3 + $0x1d0] sm:$0xff]
      %v3812 = vld [vmem:[#allocation3 + $0x1e0] sm:$0xff]
      %v3813 = vld [vmem:[#allocation3 + $0x1e8] sm:$0xff]
      %v3814 = vld [vmem:[#allocation3 + $0x1f8] sm:$0xff]
      %v3815 = vld [vmem:[#allocation3 + $0x200] sm:$0xff]
      %v3816 = vld [vmem:[#allocation3 + $0x210] sm:$0xff]
      %v3817 = vld [vmem:[#allocation3 + $0x218] sm:$0xff]
      %v3818 = vld [vmem:[#allocation3 + $0x228] sm:$0xff]
      %v3819 = vld [vmem:[#allocation3 + $0x230] sm:$0xff]
      %v3820 = vld [vmem:[#allocation3 + $0x240] sm:$0xff]
      %v3821 = vld [vmem:[#allocation3 + $0x248] sm:$0xff]
      %v3822 = vld [vmem:[#allocation3 + $0x258] sm:$0xff]
      %v3823 = vld [vmem:[#allocation3 + $0x260] sm:$0xff]
      %v3824 = vld [vmem:[#allocation3 + $0x270] sm:$0xff]
      %v3825 = vld [vmem:[#allocation3 + $0x278] sm:$0xff]
      %v3826 = vld [vmem:[#allocation3 + $0x288] sm:$0xff]
      %v3827 = vld [vmem:[#allocation3 + $0x290] sm:$0xff]
      %v3828 = vld [vmem:[#allocation3 + $0x2a0] sm:$0xff]
      %v3829 = vld [vmem:[#allocation3 + $0x2a8] sm:$0xff]
      %v3830 = vld [vmem:[#allocation3 + $0x2b8] sm:$0xff]
      %v3831 = vld [vmem:[#allocation3 + $0x2c0] sm:$0xff]
      %v3832 = vld [vmem:[#allocation3 + $0x2d0] sm:$0xff]
      %v3833 = vld [vmem:[#allocation3 + $0x2d8] sm:$0xff]
      %v3834 = vld [vmem:[#allocation3 + $0x2e8] sm:$0xff]
      %v3835 = vld [vmem:[#allocation3 + $0x2f0] sm:$0xff]
      %v3836 = vld [vmem:[%s2] sm:$0xff]
      %v3837 = vld [vmem:[%s2 + $0x8] sm:$0xff]
      %v3838 = vld [vmem:[%s2 + $0x10] sm:$0xff]
      %v3839 = vld [vmem:[%s2 + $0x18] sm:$0xff]
      %v3840 = vld [vmem:[%s2 + $0x20] sm:$0xff]
      %v3841 = vld [vmem:[%s2 + $0x28] sm:$0xff]
      %v3842 = vld [vmem:[%s2 + $0x30] sm:$0xff]
      %v3843 = vld [vmem:[%s2 + $0x38] sm:$0xff]
      %v3844 = vld [vmem:[%s2 + $0x40] sm:$0xff]
      %v3845 = vld [vmem:[%s2 + $0x48] sm:$0xff]
      %v3846 = vld [vmem:[%s2 + $0x50] sm:$0xff]
      %v3847 = vld [vmem:[%s2 + $0x58] sm:$0xff]
      %v3848 = vld [vmem:[%s2 + $0x60] sm:$0xff]
      %v3849 = vld [vmem:[%s2 + $0x68] sm:$0xff]
      %v3850 = vld [vmem:[%s2 + $0x70] sm:$0xff]
      %v3851 = vld [vmem:[%s2 + $0x78] sm:$0xff]
      %v3852 = vld [vmem:[%s2 + $0x80] sm:$0xff]
      %v3853 = vld [vmem:[%s2 + $0x88] sm:$0xff]
      %s3854 = scalar_lea.vmem %s6, 1
      %v3855 = vld [vmem:[%s3854] sm:$0x1]
      %v3857 = vperm.slane %v3855, 0
      %v3860 = vsel %vm2538, %v3773, 0
      %v3863 = vsel %vm2538, %v3775, 0
      %v3866 = vsel %vm2538, %v3777, 0
      %v3869 = vsel %vm2538, %v3779, 0
      %v3872 = vsel %vm2538, %v3781, 0
      %v3875 = vsel %vm2538, %v3783, 0
      %v3878 = vsel %vm2538, %v3785, 0
      %v3881 = vsel %vm2538, %v3787, 0
      %v3884 = vsel %vm2538, %v3789, 0
      %v3887 = vsel %vm2538, %v3791, 0
      %v3890 = vsel %vm2538, %v3793, 0
      %v3893 = vsel %vm2538, %v3795, 0
      %v3896 = vsel %vm2538, %v3797, 0
      %v3899 = vsel %vm2538, %v3799, 0
      %v3902 = vsel %vm2538, %v3801, 0
      %v3905 = vsel %vm2538, %v3803, 0
      %v3908 = vsel %vm2538, %v3805, 0
      %v3911 = vsel %vm2538, %v3807, 0
      %v3914 = vsel %vm2538, %v3809, 0
      %v3917 = vsel %vm2538, %v3811, 0
      %v3920 = vsel %vm2538, %v3813, 0
      %v3923 = vsel %vm2538, %v3815, 0
      %v3926 = vsel %vm2538, %v3817, 0
      %v3929 = vsel %vm2538, %v3819, 0
      %v3932 = vsel %vm2538, %v3821, 0
      %v3935 = vsel %vm2538, %v3823, 0
      %v3938 = vsel %vm2538, %v3825, 0
      %v3941 = vsel %vm2538, %v3827, 0
      %v3944 = vsel %vm2538, %v3829, 0
      %v3947 = vsel %vm2538, %v3831, 0
      %v3950 = vsel %vm2538, %v3833, 0
      %v3953 = vsel %vm2538, %v3835, 0
      %3955 = vmatpush.msra.mxu0 %v3851
      %3956 = vmatpush.msra.mxu0 %v3850
      %3957 = vmatpush.msra.mxu0 %v3849
      %3958 = vmatpush.msra.mxu0 %v3848
      %3959 = vmatpush.msra.mxu0 %v3847
      %3960 = vmatpush.msra.mxu0 %v3846
      %3961 = vmatpush.msra.mxu0 %v3845
      %3962 = vmatpush.msra.mxu0 %v3844
      %3963 = vmatpush.msra.mxu0 %v3843
      %3964 = vmatpush.msra.mxu0 %v3842
      %3965 = vmatpush.msra.mxu0 %v3841
      %3966 = vmatpush.msra.mxu0 %v3840
      %3967 = vmatpush.msra.mxu0 %v3839
      %3968 = vmatpush.msra.mxu0 %v3838
      %3969 = vmatpush.msra.mxu0 %v3837
      %3970 = vmatpush.msra.mxu0 %v3836
      %3971 = vmatmul.f32.gmra.mxu0 %v3772
      %v3972 = vpop.f32.mrf.mxu0
      %v3973 = vadd.f32 %v3857, %v3972
      %3974 = vmatmul.f32.gmra.mxu0 %v3774
      %v3975 = vpop.f32.mrf.mxu0
      %v3976 = vadd.f32 %v3857, %v3975
      %3977 = vmatmul.f32.gmra.mxu0 %v3776
      %v3978 = vpop.f32.mrf.mxu0
      %v3979 = vadd.f32 %v3857, %v3978
      %3980 = vmatmul.f32.gmra.mxu0 %v3778
      %v3981 = vpop.f32.mrf.mxu0
      %v3982 = vadd.f32 %v3857, %v3981
      %3983 = vmatmul.f32.gmra.mxu0 %v3780
      %v3984 = vpop.f32.mrf.mxu0
      %v3985 = vadd.f32 %v3857, %v3984
      %3986 = vmatmul.f32.gmra.mxu0 %v3782
      %v3987 = vpop.f32.mrf.mxu0
      %v3988 = vadd.f32 %v3857, %v3987
      %3989 = vmatmul.f32.gmra.mxu0 %v3784
      %v3990 = vpop.f32.mrf.mxu0
      %v3991 = vadd.f32 %v3857, %v3990
      %3992 = vmatmul.f32.gmra.mxu0 %v3786
      %v3993 = vpop.f32.mrf.mxu0
      %v3994 = vadd.f32 %v3857, %v3993
      %3995 = vmatmul.f32.gmra.mxu0 %v3788
      %v3996 = vpop.f32.mrf.mxu0
      %v3997 = vadd.f32 %v3857, %v3996
      %3998 = vmatmul.f32.gmra.mxu0 %v3790
      %v3999 = vpop.f32.mrf.mxu0
      %v4000 = vadd.f32 %v3857, %v3999
      %4001 = vmatmul.f32.gmra.mxu0 %v3792
      %v4002 = vpop.f32.mrf.mxu0
      %v4003 = vadd.f32 %v3857, %v4002
      %4004 = vmatmul.f32.gmra.mxu0 %v3794
      %v4005 = vpop.f32.mrf.mxu0
      %v4006 = vadd.f32 %v3857, %v4005
      %4007 = vmatmul.f32.gmra.mxu0 %v3796
      %v4008 = vpop.f32.mrf.mxu0
      %v4009 = vadd.f32 %v3857, %v4008
      %4010 = vmatmul.f32.gmra.mxu0 %v3798
      %v4011 = vpop.f32.mrf.mxu0
      %v4012 = vadd.f32 %v3857, %v4011
      %4013 = vmatmul.f32.gmra.mxu0 %v3800
      %v4014 = vpop.f32.mrf.mxu0
      %v4015 = vadd.f32 %v3857, %v4014
      %4016 = vmatmul.f32.gmra.mxu0 %v3802
      %v4017 = vpop.f32.mrf.mxu0
      %v4018 = vadd.f32 %v3857, %v4017
      %4019 = vmatmul.f32.gmra.mxu0 %v3804
      %v4020 = vpop.f32.mrf.mxu0
      %v4021 = vadd.f32 %v3857, %v4020
      %4022 = vmatmul.f32.gmra.mxu0 %v3806
      %v4023 = vpop.f32.mrf.mxu0
      %v4024 = vadd.f32 %v3857, %v4023
      %4025 = vmatmul.f32.gmra.mxu0 %v3808
      %v4026 = vpop.f32.mrf.mxu0
      %v4027 = vadd.f32 %v3857, %v4026
      %4028 = vmatmul.f32.gmra.mxu0 %v3810
      %v4029 = vpop.f32.mrf.mxu0
      %v4030 = vadd.f32 %v3857, %v4029
      %4031 = vmatmul.f32.gmra.mxu0 %v3812
      %v4032 = vpop.f32.mrf.mxu0
      %v4033 = vadd.f32 %v3857, %v4032
      %4034 = vmatmul.f32.gmra.mxu0 %v3814
      %v4035 = vpop.f32.mrf.mxu0
      %v4036 = vadd.f32 %v3857, %v4035
      %4037 = vmatmul.f32.gmra.mxu0 %v3816
      %v4038 = vpop.f32.mrf.mxu0
      %v4039 = vadd.f32 %v3857, %v4038
      %4040 = vmatmul.f32.gmra.mxu0 %v3818
      %v4041 = vpop.f32.mrf.mxu0
      %v4042 = vadd.f32 %v3857, %v4041
      %4043 = vmatmul.f32.gmra.mxu0 %v3820
      %v4044 = vpop.f32.mrf.mxu0
      %v4045 = vadd.f32 %v3857, %v4044
      %4046 = vmatmul.f32.gmra.mxu0 %v3822
      %v4047 = vpop.f32.mrf.mxu0
      %v4048 = vadd.f32 %v3857, %v4047
      %4049 = vmatmul.f32.gmra.mxu0 %v3824
      %v4050 = vpop.f32.mrf.mxu0
      %v4051 = vadd.f32 %v3857, %v4050
      %4052 = vmatmul.f32.gmra.mxu0 %v3826
      %v4053 = vpop.f32.mrf.mxu0
      %v4054 = vadd.f32 %v3857, %v4053
      %4055 = vmatmul.f32.gmra.mxu0 %v3828
      %v4056 = vpop.f32.mrf.mxu0
      %v4057 = vadd.f32 %v3857, %v4056
      %4058 = vmatmul.f32.gmra.mxu0 %v3830
      %v4059 = vpop.f32.mrf.mxu0
      %v4060 = vadd.f32 %v3857, %v4059
      %4061 = vmatmul.f32.gmra.mxu0 %v3832
      %v4062 = vpop.f32.mrf.mxu0
      %v4063 = vadd.f32 %v3857, %v4062
      %4064 = vmatmul.f32.gmra.mxu0 %v3834
      %v4065 = vpop.f32.mrf.mxu0
      %v4066 = vadd.f32 %v3857, %v4065
      %4067 = vdwg.mxu0
      %4068 = vmatpush.msra.mxu0 0.0
      %4069 = vmatpush.msra.mxu0 0.0
      %4070 = vmatpush.msra.mxu0 0.0
      %4071 = vmatpush.msra.mxu0 0.0
      %4072 = vmatpush.msra.mxu0 0.0
      %4073 = vmatpush.msra.mxu0 0.0
      %4074 = vmatpush.msra.mxu0 0.0
      %4075 = vmatpush.msra.mxu0 0.0
      %4076 = vmatpush.msra.mxu0 0.0
      %4077 = vmatpush.msra.mxu0 0.0
      %4078 = vmatpush.msra.mxu0 0.0
      %4079 = vmatpush.msra.mxu0 0.0
      %4080 = vmatpush.msra.mxu0 0.0
      %4081 = vmatpush.msra.mxu0 0.0
      %4082 = vmatpush.msra.mxu0 %v3853
      %4083 = vmatpush.msra.mxu0 %v3852
      %4084 = vmatmul.f32.gmra.mxu0 %v3860
      %v4085 = vpop.f32.mrf.mxu0
      %v4086 = vadd.f32 %v3973, %v4085
      %4087 = vmatmul.f32.gmra.mxu0 %v3863
      %v4088 = vpop.f32.mrf.mxu0
      %v4089 = vadd.f32 %v3976, %v4088
      %4090 = vmatmul.f32.gmra.mxu0 %v3866
      %v4091 = vpop.f32.mrf.mxu0
      %v4092 = vadd.f32 %v3979, %v4091
      %4093 = vmatmul.f32.gmra.mxu0 %v3869
      %v4094 = vpop.f32.mrf.mxu0
      %v4095 = vadd.f32 %v3982, %v4094
      %4096 = vmatmul.f32.gmra.mxu0 %v3872
      %v4097 = vpop.f32.mrf.mxu0
      %v4098 = vadd.f32 %v3985, %v4097
      %4099 = vmatmul.f32.gmra.mxu0 %v3875
      %v4100 = vpop.f32.mrf.mxu0
      %v4101 = vadd.f32 %v3988, %v4100
      %4102 = vmatmul.f32.gmra.mxu0 %v3878
      %v4103 = vpop.f32.mrf.mxu0
      %v4104 = vadd.f32 %v3991, %v4103
      %4105 = vmatmul.f32.gmra.mxu0 %v3881
      %v4106 = vpop.f32.mrf.mxu0
      %v4107 = vadd.f32 %v3994, %v4106
      %4108 = vmatmul.f32.gmra.mxu0 %v3884
      %v4109 = vpop.f32.mrf.mxu0
      %v4110 = vadd.f32 %v3997, %v4109
      %4111 = vmatmul.f32.gmra.mxu0 %v3887
      %v4112 = vpop.f32.mrf.mxu0
      %v4113 = vadd.f32 %v4000, %v4112
      %4114 = vmatmul.f32.gmra.mxu0 %v3890
      %v4115 = vpop.f32.mrf.mxu0
      %v4116 = vadd.f32 %v4003, %v4115
      %4117 = vmatmul.f32.gmra.mxu0 %v3893
      %v4118 = vpop.f32.mrf.mxu0
      %v4119 = vadd.f32 %v4006, %v4118
      %4120 = vmatmul.f32.gmra.mxu0 %v3896
      %v4121 = vpop.f32.mrf.mxu0
      %v4122 = vadd.f32 %v4009, %v4121
      %4123 = vmatmul.f32.gmra.mxu0 %v3899
      %v4124 = vpop.f32.mrf.mxu0
      %v4125 = vadd.f32 %v4012, %v4124
      %4126 = vmatmul.f32.gmra.mxu0 %v3902
      %v4127 = vpop.f32.mrf.mxu0
      %v4128 = vadd.f32 %v4015, %v4127
      %4129 = vmatmul.f32.gmra.mxu0 %v3905
      %v4130 = vpop.f32.mrf.mxu0
      %v4131 = vadd.f32 %v4018, %v4130
      %4132 = vmatmul.f32.gmra.mxu0 %v3908
      %v4133 = vpop.f32.mrf.mxu0
      %v4134 = vadd.f32 %v4021, %v4133
      %4135 = vmatmul.f32.gmra.mxu0 %v3911
      %v4136 = vpop.f32.mrf.mxu0
      %v4137 = vadd.f32 %v4024, %v4136
      %4138 = vmatmul.f32.gmra.mxu0 %v3914
      %v4139 = vpop.f32.mrf.mxu0
      %v4140 = vadd.f32 %v4027, %v4139
      %4141 = vmatmul.f32.gmra.mxu0 %v3917
      %v4142 = vpop.f32.mrf.mxu0
      %v4143 = vadd.f32 %v4030, %v4142
      %4144 = vmatmul.f32.gmra.mxu0 %v3920
      %v4145 = vpop.f32.mrf.mxu0
      %v4146 = vadd.f32 %v4033, %v4145
      %4147 = vmatmul.f32.gmra.mxu0 %v3923
      %v4148 = vpop.f32.mrf.mxu0
      %v4149 = vadd.f32 %v4036, %v4148
      %4150 = vmatmul.f32.gmra.mxu0 %v3926
      %v4151 = vpop.f32.mrf.mxu0
      %v4152 = vadd.f32 %v4039, %v4151
      %4153 = vmatmul.f32.gmra.mxu0 %v3929
      %v4154 = vpop.f32.mrf.mxu0
      %v4155 = vadd.f32 %v4042, %v4154
      %4156 = vmatmul.f32.gmra.mxu0 %v3932
      %v4157 = vpop.f32.mrf.mxu0
      %v4158 = vadd.f32 %v4045, %v4157
      %4159 = vmatmul.f32.gmra.mxu0 %v3935
      %v4160 = vpop.f32.mrf.mxu0
      %v4161 = vadd.f32 %v4048, %v4160
      %4162 = vmatmul.f32.gmra.mxu0 %v3938
      %v4163 = vpop.f32.mrf.mxu0
      %v4164 = vadd.f32 %v4051, %v4163
      %4165 = vmatmul.f32.gmra.mxu0 %v3941
      %v4166 = vpop.f32.mrf.mxu0
      %v4167 = vadd.f32 %v4054, %v4166
      %4168 = vmatmul.f32.gmra.mxu0 %v3944
      %v4169 = vpop.f32.mrf.mxu0
      %v4170 = vadd.f32 %v4057, %v4169
      %4171 = vmatmul.f32.gmra.mxu0 %v3947
      %v4172 = vpop.f32.mrf.mxu0
      %v4173 = vadd.f32 %v4060, %v4172
      %4174 = vmatmul.f32.gmra.mxu0 %v3950
      %v4175 = vpop.f32.mrf.mxu0
      %v4176 = vadd.f32 %v4063, %v4175
      %4177 = vmatmul.f32.gmra.mxu0 %v3953
      %v4178 = vpop.f32.mrf.mxu0
      %v4179 = vadd.f32 %v4066, %v4178
      %4180 = vdwg.mxu0
      %4213 = vrot.lane.b32.xlu0 %v4086, 16
      %v4214 = vpop.permute.xlu0 %4213
      %4215 = vrot.lane.b32.xlu0 %v4089, 16
      %v4216 = vpop.permute.xlu0 %4215
      %4217 = vrot.lane.b32.xlu0 %v4092, 16
      %v4218 = vpop.permute.xlu0 %4217
      %4219 = vrot.lane.b32.xlu0 %v4095, 16
      %v4220 = vpop.permute.xlu0 %4219
      %4221 = vrot.lane.b32.xlu0 %v4098, 16
      %v4222 = vpop.permute.xlu0 %4221
      %4223 = vrot.lane.b32.xlu0 %v4101, 16
      %v4224 = vpop.permute.xlu0 %4223
      %4225 = vrot.lane.b32.xlu0 %v4104, 16
      %v4226 = vpop.permute.xlu0 %4225
      %4227 = vrot.lane.b32.xlu0 %v4107, 16
      %v4228 = vpop.permute.xlu0 %4227
      %4229 = vrot.lane.b32.xlu0 %v4110, 16
      %v4230 = vpop.permute.xlu0 %4229
      %4231 = vrot.lane.b32.xlu0 %v4113, 16
      %v4232 = vpop.permute.xlu0 %4231
      %4233 = vrot.lane.b32.xlu0 %v4116, 16
      %v4234 = vpop.permute.xlu0 %4233
      %4235 = vrot.lane.b32.xlu0 %v4119, 16
      %v4236 = vpop.permute.xlu0 %4235
      %4237 = vrot.lane.b32.xlu0 %v4122, 16
      %v4238 = vpop.permute.xlu0 %4237
      %4239 = vrot.lane.b32.xlu0 %v4125, 16
      %v4240 = vpop.permute.xlu0 %4239
      %4241 = vrot.lane.b32.xlu0 %v4128, 16
      %v4242 = vpop.permute.xlu0 %4241
      %4243 = vrot.lane.b32.xlu0 %v4131, 16
      %v4244 = vpop.permute.xlu0 %4243
      %4245 = vrot.lane.b32.xlu0 %v4134, 16
      %v4246 = vpop.permute.xlu0 %4245
      %4247 = vrot.lane.b32.xlu0 %v4137, 16
      %v4248 = vpop.permute.xlu0 %4247
      %4249 = vrot.lane.b32.xlu0 %v4140, 16
      %v4250 = vpop.permute.xlu0 %4249
      %4251 = vrot.lane.b32.xlu0 %v4143, 16
      %v4252 = vpop.permute.xlu0 %4251
      %4253 = vrot.lane.b32.xlu0 %v4146, 16
      %v4254 = vpop.permute.xlu0 %4253
      %4255 = vrot.lane.b32.xlu0 %v4149, 16
      %v4256 = vpop.permute.xlu0 %4255
      %4257 = vrot.lane.b32.xlu0 %v4152, 16
      %v4258 = vpop.permute.xlu0 %4257
      %4259 = vrot.lane.b32.xlu0 %v4155, 16
      %v4260 = vpop.permute.xlu0 %4259
      %4261 = vrot.lane.b32.xlu0 %v4158, 16
      %v4262 = vpop.permute.xlu0 %4261
      %4263 = vrot.lane.b32.xlu0 %v4161, 16
      %v4264 = vpop.permute.xlu0 %4263
      %4265 = vrot.lane.b32.xlu0 %v4164, 16
      %v4266 = vpop.permute.xlu0 %4265
      %4267 = vrot.lane.b32.xlu0 %v4167, 16
      %v4268 = vpop.permute.xlu0 %4267
      %4269 = vrot.lane.b32.xlu0 %v4170, 16
      %v4270 = vpop.permute.xlu0 %4269
      %4271 = vrot.lane.b32.xlu0 %v4173, 16
      %v4272 = vpop.permute.xlu0 %4271
      %4273 = vrot.lane.b32.xlu0 %v4176, 16
      %v4274 = vpop.permute.xlu0 %4273
      %4275 = vrot.lane.b32.xlu0 %v4179, 16
      %v4276 = vpop.permute.xlu0 %4275
      %4309 = vst.msk [vmem:[%s357 + $0x1] sm:$0xff] %vm1074, %v4214
      %4310 = vst.msk [vmem:[%s357 + $0x9] sm:$0xff] %vm1074, %v4216
      %4311 = vst.msk [vmem:[%s357 + $0x19] sm:$0xff] %vm1074, %v4218
      %4312 = vst.msk [vmem:[%s357 + $0x21] sm:$0xff] %vm1074, %v4220
      %4313 = vst.msk [vmem:[%s357 + $0x31] sm:$0xff] %vm1074, %v4222
      %4314 = vst.msk [vmem:[%s357 + $0x39] sm:$0xff] %vm1074, %v4224
      %4315 = vst.msk [vmem:[%s357 + $0x49] sm:$0xff] %vm1074, %v4226
      %4316 = vst.msk [vmem:[%s357 + $0x51] sm:$0xff] %vm1074, %v4228
      %4317 = vst.msk [vmem:[%s357 + $0x61] sm:$0xff] %vm1074, %v4230
      %4318 = vst.msk [vmem:[%s357 + $0x69] sm:$0xff] %vm1074, %v4232
      %4319 = vst.msk [vmem:[%s357 + $0x79] sm:$0xff] %vm1074, %v4234
      %4320 = vst.msk [vmem:[%s357 + $0x81] sm:$0xff] %vm1074, %v4236
      %4321 = vst.msk [vmem:[%s357 + $0x91] sm:$0xff] %vm1074, %v4238
      %4322 = vst.msk [vmem:[%s357 + $0x99] sm:$0xff] %vm1074, %v4240
      %4323 = vst.msk [vmem:[%s357 + $0xa9] sm:$0xff] %vm1074, %v4242
      %4324 = vst.msk [vmem:[%s357 + $0xb1] sm:$0xff] %vm1074, %v4244
      %4325 = vst.msk [vmem:[%s357 + $0xc1] sm:$0xff] %vm1074, %v4246
      %4326 = vst.msk [vmem:[%s357 + $0xc9] sm:$0xff] %vm1074, %v4248
      %4327 = vst.msk [vmem:[%s357 + $0xd9] sm:$0xff] %vm1074, %v4250
      %4328 = vst.msk [vmem:[%s357 + $0xe1] sm:$0xff] %vm1074, %v4252
      %4329 = vst.msk [vmem:[%s357 + $0xf1] sm:$0xff] %vm1074, %v4254
      %4330 = vst.msk [vmem:[%s357 + $0xf9] sm:$0xff] %vm1074, %v4256
      %4331 = vst.msk [vmem:[%s357 + $0x109] sm:$0xff] %vm1074, %v4258
      %4332 = vst.msk [vmem:[%s357 + $0x111] sm:$0xff] %vm1074, %v4260
      %4333 = vst.msk [vmem:[%s357 + $0x121] sm:$0xff] %vm1074, %v4262
      %4334 = vst.msk [vmem:[%s357 + $0x129] sm:$0xff] %vm1074, %v4264
      %4335 = vst.msk [vmem:[%s357 + $0x139] sm:$0xff] %vm1074, %v4266
      %4336 = vst.msk [vmem:[%s357 + $0x141] sm:$0xff] %vm1074, %v4268
      %4337 = vst.msk [vmem:[%s357 + $0x151] sm:$0xff] %vm1074, %v4270
      %4338 = vst.msk [vmem:[%s357 + $0x159] sm:$0xff] %vm1074, %v4272
      %4339 = vst.msk [vmem:[%s357 + $0x169] sm:$0xff] %vm1074, %v4274
      %4340 = vst.msk [vmem:[%s357 + $0x171] sm:$0xff] %vm1074, %v4276
      %v4341 = vld [vmem:[#allocation2] sm:$0xff]
      %v4342 = vld [vmem:[#allocation2 + $0x8] sm:$0xff]
      %v4343 = vld [vmem:[#allocation2 + $0x10] sm:$0x3]
      %v4344 = vld [vmem:[#allocation2 + $0x18] sm:$0xff]
      %v4345 = vld [vmem:[#allocation2 + $0x20] sm:$0xff]
      %v4346 = vld [vmem:[#allocation2 + $0x28] sm:$0x3]
      %v4347 = vld [vmem:[#allocation2 + $0x30] sm:$0xff]
      %v4348 = vld [vmem:[#allocation2 + $0x38] sm:$0xff]
      %v4349 = vld [vmem:[#allocation2 + $0x40] sm:$0x3]
      %v4350 = vld [vmem:[#allocation2 + $0x48] sm:$0xff]
      %v4351 = vld [vmem:[#allocation2 + $0x50] sm:$0xff]
      %v4352 = vld [vmem:[#allocation2 + $0x58] sm:$0x3]
      %v4353 = vld [vmem:[#allocation2 + $0x60] sm:$0xff]
      %v4354 = vld [vmem:[#allocation2 + $0x68] sm:$0xff]
      %v4355 = vld [vmem:[#allocation2 + $0x70] sm:$0x3]
      %v4356 = vld [vmem:[#allocation2 + $0x78] sm:$0xff]
      %v4357 = vld [vmem:[#allocation2 + $0x80] sm:$0xff]
      %v4358 = vld [vmem:[#allocation2 + $0x88] sm:$0x3]
      %v4359 = vld [vmem:[#allocation2 + $0x90] sm:$0xff]
      %v4360 = vld [vmem:[#allocation2 + $0x98] sm:$0xff]
      %v4361 = vld [vmem:[#allocation2 + $0xa0] sm:$0x3]
      %v4362 = vld [vmem:[#allocation2 + $0xa8] sm:$0xff]
      %v4363 = vld [vmem:[#allocation2 + $0xb0] sm:$0xff]
      %v4364 = vld [vmem:[#allocation2 + $0xb8] sm:$0x3]
      %v4365 = vld [vmem:[#allocation2 + $0xc0] sm:$0xff]
      %v4366 = vld [vmem:[#allocation2 + $0xc8] sm:$0xff]
      %v4367 = vld [vmem:[#allocation2 + $0xd0] sm:$0x3]
      %v4368 = vld [vmem:[#allocation2 + $0xd8] sm:$0xff]
      %v4369 = vld [vmem:[#allocation2 + $0xe0] sm:$0xff]
      %v4370 = vld [vmem:[#allocation2 + $0xe8] sm:$0x3]
      %v4371 = vld [vmem:[#allocation2 + $0xf0] sm:$0xff]
      %v4372 = vld [vmem:[#allocation2 + $0xf8] sm:$0xff]
      %v4373 = vld [vmem:[#allocation2 + $0x100] sm:$0x3]
      %v4374 = vld [vmem:[#allocation2 + $0x108] sm:$0xff]
      %v4375 = vld [vmem:[#allocation2 + $0x110] sm:$0xff]
      %v4376 = vld [vmem:[#allocation2 + $0x118] sm:$0x3]
      %v4377 = vld [vmem:[#allocation2 + $0x120] sm:$0xff]
      %v4378 = vld [vmem:[#allocation2 + $0x128] sm:$0xff]
      %v4379 = vld [vmem:[#allocation2 + $0x130] sm:$0x3]
      %v4380 = vld [vmem:[#allocation2 + $0x138] sm:$0xff]
      %v4381 = vld [vmem:[#allocation2 + $0x140] sm:$0xff]
      %v4382 = vld [vmem:[#allocation2 + $0x148] sm:$0x3]
      %v4383 = vld [vmem:[#allocation2 + $0x150] sm:$0xff]
      %v4384 = vld [vmem:[#allocation2 + $0x158] sm:$0xff]
      %v4385 = vld [vmem:[#allocation2 + $0x160] sm:$0x3]
      %v4386 = vld [vmem:[#allocation2 + $0x168] sm:$0xff]
      %v4387 = vld [vmem:[#allocation2 + $0x170] sm:$0xff]
      %v4388 = vld [vmem:[#allocation2 + $0x178] sm:$0x3]
      %v4389 = vld [vmem:[#allocation2 + $0x180] sm:$0xff]
      %v4390 = vld [vmem:[#allocation2 + $0x188] sm:$0xff]
      %v4391 = vld [vmem:[#allocation2 + $0x190] sm:$0x3]
      %v4392 = vld [vmem:[#allocation2 + $0x198] sm:$0xff]
      %v4393 = vld [vmem:[#allocation2 + $0x1a0] sm:$0xff]
      %v4394 = vld [vmem:[#allocation2 + $0x1a8] sm:$0x3]
      %vm4395 = vcmp.ge.f32.partialorder %v4341, 0.0
      %vm4396 = vcmp.ge.f32.partialorder %v4342, 0.0
      %vm4397 = vcmp.ge.f32.partialorder %v4343, 0.0
      %vm4398 = vcmp.ge.f32.partialorder %v4344, 0.0
      %vm4399 = vcmp.ge.f32.partialorder %v4345, 0.0
      %vm4400 = vcmp.ge.f32.partialorder %v4346, 0.0
      %vm4401 = vcmp.ge.f32.partialorder %v4347, 0.0
      %vm4402 = vcmp.ge.f32.partialorder %v4348, 0.0
      %vm4403 = vcmp.ge.f32.partialorder %v4349, 0.0
      %vm4404 = vcmp.ge.f32.partialorder %v4350, 0.0
      %vm4405 = vcmp.ge.f32.partialorder %v4351, 0.0
      %vm4406 = vcmp.ge.f32.partialorder %v4352, 0.0
      %vm4407 = vcmp.ge.f32.partialorder %v4353, 0.0
      %vm4408 = vcmp.ge.f32.partialorder %v4354, 0.0
      %vm4409 = vcmp.ge.f32.partialorder %v4355, 0.0
      %vm4410 = vcmp.ge.f32.partialorder %v4356, 0.0
      %vm4411 = vcmp.ge.f32.partialorder %v4357, 0.0
      %vm4412 = vcmp.ge.f32.partialorder %v4358, 0.0
      %vm4413 = vcmp.ge.f32.partialorder %v4359, 0.0
      %vm4414 = vcmp.ge.f32.partialorder %v4360, 0.0
      %vm4415 = vcmp.ge.f32.partialorder %v4361, 0.0
      %vm4416 = vcmp.ge.f32.partialorder %v4362, 0.0
      %vm4417 = vcmp.ge.f32.partialorder %v4363, 0.0
      %vm4418 = vcmp.ge.f32.partialorder %v4364, 0.0
      %vm4419 = vcmp.ge.f32.partialorder %v4365, 0.0
      %vm4420 = vcmp.ge.f32.partialorder %v4366, 0.0
      %vm4421 = vcmp.ge.f32.partialorder %v4367, 0.0
      %vm4422 = vcmp.ge.f32.partialorder %v4368, 0.0
      %vm4423 = vcmp.ge.f32.partialorder %v4369, 0.0
      %vm4424 = vcmp.ge.f32.partialorder %v4370, 0.0
      %vm4425 = vcmp.ge.f32.partialorder %v4371, 0.0
      %vm4426 = vcmp.ge.f32.partialorder %v4372, 0.0
      %vm4427 = vcmp.ge.f32.partialorder %v4373, 0.0
      %vm4428 = vcmp.ge.f32.partialorder %v4374, 0.0
      %vm4429 = vcmp.ge.f32.partialorder %v4375, 0.0
      %vm4430 = vcmp.ge.f32.partialorder %v4376, 0.0
      %vm4431 = vcmp.ge.f32.partialorder %v4377, 0.0
      %vm4432 = vcmp.ge.f32.partialorder %v4378, 0.0
      %vm4433 = vcmp.ge.f32.partialorder %v4379, 0.0
      %vm4434 = vcmp.ge.f32.partialorder %v4380, 0.0
      %vm4435 = vcmp.ge.f32.partialorder %v4381, 0.0
      %vm4436 = vcmp.ge.f32.partialorder %v4382, 0.0
      %vm4437 = vcmp.ge.f32.partialorder %v4383, 0.0
      %vm4438 = vcmp.ge.f32.partialorder %v4384, 0.0
      %vm4439 = vcmp.ge.f32.partialorder %v4385, 0.0
      %vm4440 = vcmp.ge.f32.partialorder %v4386, 0.0
      %vm4441 = vcmp.ge.f32.partialorder %v4387, 0.0
      %vm4442 = vcmp.ge.f32.partialorder %v4388, 0.0
      %vm4443 = vcmp.ge.f32.partialorder %v4389, 0.0
      %vm4444 = vcmp.ge.f32.partialorder %v4390, 0.0
      %vm4445 = vcmp.ge.f32.partialorder %v4391, 0.0
      %vm4446 = vcmp.ge.f32.partialorder %v4392, 0.0
      %vm4447 = vcmp.ge.f32.partialorder %v4393, 0.0
      %vm4448 = vcmp.ge.f32.partialorder %v4394, 0.0
      %v4449 = vmul.f32 %v4341, 0.1
      %v4450 = vmul.f32 %v4342, 0.1
      %v4451 = vmul.f32 %v4343, 0.1
      %v4452 = vmul.f32 %v4344, 0.1
      %v4453 = vmul.f32 %v4345, 0.1
      %v4454 = vmul.f32 %v4346, 0.1
      %v4455 = vmul.f32 %v4347, 0.1
      %v4456 = vmul.f32 %v4348, 0.1
      %v4457 = vmul.f32 %v4349, 0.1
      %v4458 = vmul.f32 %v4350, 0.1
      %v4459 = vmul.f32 %v4351, 0.1
      %v4460 = vmul.f32 %v4352, 0.1
      %v4461 = vmul.f32 %v4353, 0.1
      %v4462 = vmul.f32 %v4354, 0.1
      %v4463 = vmul.f32 %v4355, 0.1
      %v4464 = vmul.f32 %v4356, 0.1
      %v4465 = vmul.f32 %v4357, 0.1
      %v4466 = vmul.f32 %v4358, 0.1
      %v4467 = vmul.f32 %v4359, 0.1
      %v4468 = vmul.f32 %v4360, 0.1
      %v4469 = vmul.f32 %v4361, 0.1
      %v4470 = vmul.f32 %v4362, 0.1
      %v4471 = vmul.f32 %v4363, 0.1
      %v4472 = vmul.f32 %v4364, 0.1
      %v4473 = vmul.f32 %v4365, 0.1
      %v4474 = vmul.f32 %v4366, 0.1
      %v4475 = vmul.f32 %v4367, 0.1
      %v4476 = vmul.f32 %v4368, 0.1
      %v4477 = vmul.f32 %v4369, 0.1
      %v4478 = vmul.f32 %v4370, 0.1
      %v4479 = vmul.f32 %v4371, 0.1
      %v4480 = vmul.f32 %v4372, 0.1
      %v4481 = vmul.f32 %v4373, 0.1
      %v4482 = vmul.f32 %v4374, 0.1
      %v4483 = vmul.f32 %v4375, 0.1
      %v4484 = vmul.f32 %v4376, 0.1
      %v4485 = vmul.f32 %v4377, 0.1
      %v4486 = vmul.f32 %v4378, 0.1
      %v4487 = vmul.f32 %v4379, 0.1
      %v4488 = vmul.f32 %v4380, 0.1
      %v4489 = vmul.f32 %v4381, 0.1
      %v4490 = vmul.f32 %v4382, 0.1
      %v4491 = vmul.f32 %v4383, 0.1
      %v4492 = vmul.f32 %v4384, 0.1
      %v4493 = vmul.f32 %v4385, 0.1
      %v4494 = vmul.f32 %v4386, 0.1
      %v4495 = vmul.f32 %v4387, 0.1
      %v4496 = vmul.f32 %v4388, 0.1
      %v4497 = vmul.f32 %v4389, 0.1
      %v4498 = vmul.f32 %v4390, 0.1
      %v4499 = vmul.f32 %v4391, 0.1
      %v4500 = vmul.f32 %v4392, 0.1
      %v4501 = vmul.f32 %v4393, 0.1
      %v4502 = vmul.f32 %v4394, 0.1
      %v4503 = vsel %vm4395, %v4341, %v4449
      %v4504 = vsel %vm4396, %v4342, %v4450
      %v4505 = vsel %vm4397, %v4343, %v4451
      %v4506 = vsel %vm4398, %v4344, %v4452
      %v4507 = vsel %vm4399, %v4345, %v4453
      %v4508 = vsel %vm4400, %v4346, %v4454
      %v4509 = vsel %vm4401, %v4347, %v4455
      %v4510 = vsel %vm4402, %v4348, %v4456
      %v4511 = vsel %vm4403, %v4349, %v4457
      %v4512 = vsel %vm4404, %v4350, %v4458
      %v4513 = vsel %vm4405, %v4351, %v4459
      %v4514 = vsel %vm4406, %v4352, %v4460
      %v4515 = vsel %vm4407, %v4353, %v4461
      %v4516 = vsel %vm4408, %v4354, %v4462
      %v4517 = vsel %vm4409, %v4355, %v4463
      %v4518 = vsel %vm4410, %v4356, %v4464
      %v4519 = vsel %vm4411, %v4357, %v4465
      %v4520 = vsel %vm4412, %v4358, %v4466
      %v4521 = vsel %vm4413, %v4359, %v4467
      %v4522 = vsel %vm4414, %v4360, %v4468
      %v4523 = vsel %vm4415, %v4361, %v4469
      %v4524 = vsel %vm4416, %v4362, %v4470
      %v4525 = vsel %vm4417, %v4363, %v4471
      %v4526 = vsel %vm4418, %v4364, %v4472
      %v4527 = vsel %vm4419, %v4365, %v4473
      %v4528 = vsel %vm4420, %v4366, %v4474
      %v4529 = vsel %vm4421, %v4367, %v4475
      %v4530 = vsel %vm4422, %v4368, %v4476
      %v4531 = vsel %vm4423, %v4369, %v4477
      %v4532 = vsel %vm4424, %v4370, %v4478
      %v4533 = vsel %vm4425, %v4371, %v4479
      %v4534 = vsel %vm4426, %v4372, %v4480
      %v4535 = vsel %vm4427, %v4373, %v4481
      %v4536 = vsel %vm4428, %v4374, %v4482
      %v4537 = vsel %vm4429, %v4375, %v4483
      %v4538 = vsel %vm4430, %v4376, %v4484
      %v4539 = vsel %vm4431, %v4377, %v4485
      %v4540 = vsel %vm4432, %v4378, %v4486
      %v4541 = vsel %vm4433, %v4379, %v4487
      %v4542 = vsel %vm4434, %v4380, %v4488
      %v4543 = vsel %vm4435, %v4381, %v4489
      %v4544 = vsel %vm4436, %v4382, %v4490
      %v4545 = vsel %vm4437, %v4383, %v4491
      %v4546 = vsel %vm4438, %v4384, %v4492
      %v4547 = vsel %vm4439, %v4385, %v4493
      %v4548 = vsel %vm4440, %v4386, %v4494
      %v4549 = vsel %vm4441, %v4387, %v4495
      %v4550 = vsel %vm4442, %v4388, %v4496
      %v4551 = vsel %vm4443, %v4389, %v4497
      %v4552 = vsel %vm4444, %v4390, %v4498
      %v4553 = vsel %vm4445, %v4391, %v4499
      %v4554 = vsel %vm4446, %v4392, %v4500
      %v4555 = vsel %vm4447, %v4393, %v4501
      %v4556 = vsel %vm4448, %v4394, %v4502
      %vm4557 = vcmask 195584
      %4558 = vst.msk [vmem:[#allocation3] sm:$0xff] %vm4557, %v4503
      %4559 = vst.msk [vmem:[#allocation3 + $0x18] sm:$0xff] %vm4557, %v4504
      %4560 = vst.msk [vmem:[#allocation3 + $0x30] sm:$0xff] %vm4557, %v4506
      %4561 = vst.msk [vmem:[#allocation3 + $0x48] sm:$0xff] %vm4557, %v4507
      %4562 = vst.msk [vmem:[#allocation3 + $0x60] sm:$0xff] %vm4557, %v4509
      %4563 = vst.msk [vmem:[#allocation3 + $0x78] sm:$0xff] %vm4557, %v4510
      %4564 = vst.msk [vmem:[#allocation3 + $0x90] sm:$0xff] %vm4557, %v4512
      %4565 = vst.msk [vmem:[#allocation3 + $0xa8] sm:$0xff] %vm4557, %v4513
      %4566 = vst.msk [vmem:[#allocation3 + $0xc0] sm:$0xff] %vm4557, %v4515
      %4567 = vst.msk [vmem:[#allocation3 + $0xd8] sm:$0xff] %vm4557, %v4516
      %4568 = vst.msk [vmem:[#allocation3 + $0xf0] sm:$0xff] %vm4557, %v4518
      %4569 = vst.msk [vmem:[#allocation3 + $0x108] sm:$0xff] %vm4557, %v4519
      %4570 = vst.msk [vmem:[#allocation3 + $0x120] sm:$0xff] %vm4557, %v4521
      %4571 = vst.msk [vmem:[#allocation3 + $0x138] sm:$0xff] %vm4557, %v4522
      %4572 = vst.msk [vmem:[#allocation3 + $0x150] sm:$0xff] %vm4557, %v4524
      %4573 = vst.msk [vmem:[#allocation3 + $0x168] sm:$0xff] %vm4557, %v4525
      %4574 = vst.msk [vmem:[#allocation3 + $0x180] sm:$0xff] %vm4557, %v4527
      %4575 = vst.msk [vmem:[#allocation3 + $0x198] sm:$0xff] %vm4557, %v4528
      %4576 = vst.msk [vmem:[#allocation3 + $0x1b0] sm:$0xff] %vm4557, %v4530
      %4577 = vst.msk [vmem:[#allocation3 + $0x1c8] sm:$0xff] %vm4557, %v4531
      %4578 = vst.msk [vmem:[#allocation3 + $0x1e0] sm:$0xff] %vm4557, %v4533
      %4579 = vst.msk [vmem:[#allocation3 + $0x1f8] sm:$0xff] %vm4557, %v4534
      %4580 = vst.msk [vmem:[#allocation3 + $0x210] sm:$0xff] %vm4557, %v4536
      %4581 = vst.msk [vmem:[#allocation3 + $0x228] sm:$0xff] %vm4557, %v4537
      %4582 = vst.msk [vmem:[#allocation3 + $0x240] sm:$0xff] %vm4557, %v4539
      %4583 = vst.msk [vmem:[#allocation3 + $0x258] sm:$0xff] %vm4557, %v4540
      %4584 = vst.msk [vmem:[#allocation3 + $0x270] sm:$0xff] %vm4557, %v4542
      %4585 = vst.msk [vmem:[#allocation3 + $0x288] sm:$0xff] %vm4557, %v4543
      %4586 = vst.msk [vmem:[#allocation3 + $0x2a0] sm:$0xff] %vm4557, %v4545
      %4587 = vst.msk [vmem:[#allocation3 + $0x2b8] sm:$0xff] %vm4557, %v4546
      %4588 = vst.msk [vmem:[#allocation3 + $0x2d0] sm:$0xff] %vm4557, %v4548
      %4589 = vst.msk [vmem:[#allocation3 + $0x2e8] sm:$0xff] %vm4557, %v4549
      %v4638 = vrot.slane %v4503, 1
      %v4639 = vrot.slane %v4504, 1
      %v4640 = vsel %vm687, %v4638, %v4639
      %v4641 = vrot.slane %v4505, 1
      %v4642 = vsel %vm687, %v4639, %v4641
      %v4643 = vrot.slane %v4506, 1
      %v4644 = vrot.slane %v4507, 1
      %v4645 = vsel %vm687, %v4643, %v4644
      %v4646 = vrot.slane %v4508, 1
      %v4647 = vsel %vm687, %v4644, %v4646
      %v4648 = vrot.slane %v4509, 1
      %v4649 = vrot.slane %v4510, 1
      %v4650 = vsel %vm687, %v4648, %v4649
      %v4651 = vrot.slane %v4511, 1
      %v4652 = vsel %vm687, %v4649, %v4651
      %v4653 = vrot.slane %v4512, 1
      %v4654 = vrot.slane %v4513, 1
      %v4655 = vsel %vm687, %v4653, %v4654
      %v4656 = vrot.slane %v4514, 1
      %v4657 = vsel %vm687, %v4654, %v4656
      %v4658 = vrot.slane %v4515, 1
      %v4659 = vrot.slane %v4516, 1
      %v4660 = vsel %vm687, %v4658, %v4659
      %v4661 = vrot.slane %v4517, 1
      %v4662 = vsel %vm687, %v4659, %v4661
      %v4663 = vrot.slane %v4518, 1
      %v4664 = vrot.slane %v4519, 1
      %v4665 = vsel %vm687, %v4663, %v4664
      %v4666 = vrot.slane %v4520, 1
      %v4667 = vsel %vm687, %v4664, %v4666
      %v4668 = vrot.slane %v4521, 1
      %v4669 = vrot.slane %v4522, 1
      %v4670 = vsel %vm687, %v4668, %v4669
      %v4671 = vrot.slane %v4523, 1
      %v4672 = vsel %vm687, %v4669, %v4671
      %v4673 = vrot.slane %v4524, 1
      %v4674 = vrot.slane %v4525, 1
      %v4675 = vsel %vm687, %v4673, %v4674
      %v4676 = vrot.slane %v4526, 1
      %v4677 = vsel %vm687, %v4674, %v4676
      %v4678 = vrot.slane %v4527, 1
      %v4679 = vrot.slane %v4528, 1
      %v4680 = vsel %vm687, %v4678, %v4679
      %v4681 = vrot.slane %v4529, 1
      %v4682 = vsel %vm687, %v4679, %v4681
      %v4683 = vrot.slane %v4530, 1
      %v4684 = vrot.slane %v4531, 1
      %v4685 = vsel %vm687, %v4683, %v4684
      %v4686 = vrot.slane %v4532, 1
      %v4687 = vsel %vm687, %v4684, %v4686
      %v4688 = vrot.slane %v4533, 1
      %v4689 = vrot.slane %v4534, 1
      %v4690 = vsel %vm687, %v4688, %v4689
      %v4691 = vrot.slane %v4535, 1
      %v4692 = vsel %vm687, %v4689, %v4691
      %v4693 = vrot.slane %v4536, 1
      %v4694 = vrot.slane %v4537, 1
      %v4695 = vsel %vm687, %v4693, %v4694
      %v4696 = vrot.slane %v4538, 1
      %v4697 = vsel %vm687, %v4694, %v4696
      %v4698 = vrot.slane %v4539, 1
      %v4699 = vrot.slane %v4540, 1
      %v4700 = vsel %vm687, %v4698, %v4699
      %v4701 = vrot.slane %v4541, 1
      %v4702 = vsel %vm687, %v4699, %v4701
      %v4703 = vrot.slane %v4542, 1
      %v4704 = vrot.slane %v4543, 1
      %v4705 = vsel %vm687, %v4703, %v4704
      %v4706 = vrot.slane %v4544, 1
      %v4707 = vsel %vm687, %v4704, %v4706
      %v4708 = vrot.slane %v4545, 1
      %v4709 = vrot.slane %v4546, 1
      %v4710 = vsel %vm687, %v4708, %v4709
      %v4711 = vrot.slane %v4547, 1
      %v4712 = vsel %vm687, %v4709, %v4711
      %v4713 = vrot.slane %v4548, 1
      %v4714 = vrot.slane %v4549, 1
      %v4715 = vsel %vm687, %v4713, %v4714
      %v4716 = vrot.slane %v4550, 1
      %v4717 = vsel %vm687, %v4714, %v4716
      %4718 = vrot.lane.b32.xlu0 %v4640, 24
      %v4719 = vpop.permute.xlu0 %4718
      %4720 = vrot.lane.b32.xlu0 %v4642, 24
      %v4721 = vpop.permute.xlu0 %4720
      %4722 = vrot.lane.b32.xlu0 %v4645, 24
      %v4723 = vpop.permute.xlu0 %4722
      %4724 = vrot.lane.b32.xlu0 %v4647, 24
      %v4725 = vpop.permute.xlu0 %4724
      %4726 = vrot.lane.b32.xlu0 %v4650, 24
      %v4727 = vpop.permute.xlu0 %4726
      %4728 = vrot.lane.b32.xlu0 %v4652, 24
      %v4729 = vpop.permute.xlu0 %4728
      %4730 = vrot.lane.b32.xlu0 %v4655, 24
      %v4731 = vpop.permute.xlu0 %4730
      %4732 = vrot.lane.b32.xlu0 %v4657, 24
      %v4733 = vpop.permute.xlu0 %4732
      %4734 = vrot.lane.b32.xlu0 %v4660, 24
      %v4735 = vpop.permute.xlu0 %4734
      %4736 = vrot.lane.b32.xlu0 %v4662, 24
      %v4737 = vpop.permute.xlu0 %4736
      %4738 = vrot.lane.b32.xlu0 %v4665, 24
      %v4739 = vpop.permute.xlu0 %4738
      %4740 = vrot.lane.b32.xlu0 %v4667, 24
      %v4741 = vpop.permute.xlu0 %4740
      %4742 = vrot.lane.b32.xlu0 %v4670, 24
      %v4743 = vpop.permute.xlu0 %4742
      %4744 = vrot.lane.b32.xlu0 %v4672, 24
      %v4745 = vpop.permute.xlu0 %4744
      %4746 = vrot.lane.b32.xlu0 %v4675, 24
      %v4747 = vpop.permute.xlu0 %4746
      %4748 = vrot.lane.b32.xlu0 %v4677, 24
      %v4749 = vpop.permute.xlu0 %4748
      %4750 = vrot.lane.b32.xlu0 %v4680, 24
      %v4751 = vpop.permute.xlu0 %4750
      %4752 = vrot.lane.b32.xlu0 %v4682, 24
      %v4753 = vpop.permute.xlu0 %4752
      %4754 = vrot.lane.b32.xlu0 %v4685, 24
      %v4755 = vpop.permute.xlu0 %4754
      %4756 = vrot.lane.b32.xlu0 %v4687, 24
      %v4757 = vpop.permute.xlu0 %4756
      %4758 = vrot.lane.b32.xlu0 %v4690, 24
      %v4759 = vpop.permute.xlu0 %4758
      %4760 = vrot.lane.b32.xlu0 %v4692, 24
      %v4761 = vpop.permute.xlu0 %4760
      %4762 = vrot.lane.b32.xlu0 %v4695, 24
      %v4763 = vpop.permute.xlu0 %4762
      %4764 = vrot.lane.b32.xlu0 %v4697, 24
      %v4765 = vpop.permute.xlu0 %4764
      %4766 = vrot.lane.b32.xlu0 %v4700, 24
      %v4767 = vpop.permute.xlu0 %4766
      %4768 = vrot.lane.b32.xlu0 %v4702, 24
      %v4769 = vpop.permute.xlu0 %4768
      %4770 = vrot.lane.b32.xlu0 %v4705, 24
      %v4771 = vpop.permute.xlu0 %4770
      %4772 = vrot.lane.b32.xlu0 %v4707, 24
      %v4773 = vpop.permute.xlu0 %4772
      %4774 = vrot.lane.b32.xlu0 %v4710, 24
      %v4775 = vpop.permute.xlu0 %4774
      %4776 = vrot.lane.b32.xlu0 %v4712, 24
      %v4777 = vpop.permute.xlu0 %4776
      %4778 = vrot.lane.b32.xlu0 %v4715, 24
      %v4779 = vpop.permute.xlu0 %4778
      %4780 = vrot.lane.b32.xlu0 %v4717, 24
      %v4781 = vpop.permute.xlu0 %4780
      %vm4814 = vcmask 392384
      %4815 = vst.msk [vmem:[#allocation3] sm:$0xff] %vm4814, %v4719
      %4816 = vst.msk [vmem:[#allocation3 + $0x18] sm:$0xff] %vm4814, %v4721
      %4817 = vst.msk [vmem:[#allocation3 + $0x30] sm:$0xff] %vm4814, %v4723
      %4818 = vst.msk [vmem:[#allocation3 + $0x48] sm:$0xff] %vm4814, %v4725
      %4819 = vst.msk [vmem:[#allocation3 + $0x60] sm:$0xff] %vm4814, %v4727
      %4820 = vst.msk [vmem:[#allocation3 + $0x78] sm:$0xff] %vm4814, %v4729
      %4821 = vst.msk [vmem:[#allocation3 + $0x90] sm:$0xff] %vm4814, %v4731
      %4822 = vst.msk [vmem:[#allocation3 + $0xa8] sm:$0xff] %vm4814, %v4733
      %4823 = vst.msk [vmem:[#allocation3 + $0xc0] sm:$0xff] %vm4814, %v4735
      %4824 = vst.msk [vmem:[#allocation3 + $0xd8] sm:$0xff] %vm4814, %v4737
      %4825 = vst.msk [vmem:[#allocation3 + $0xf0] sm:$0xff] %vm4814, %v4739
      %4826 = vst.msk [vmem:[#allocation3 + $0x108] sm:$0xff] %vm4814, %v4741
      %4827 = vst.msk [vmem:[#allocation3 + $0x120] sm:$0xff] %vm4814, %v4743
      %4828 = vst.msk [vmem:[#allocation3 + $0x138] sm:$0xff] %vm4814, %v4745
      %4829 = vst.msk [vmem:[#allocation3 + $0x150] sm:$0xff] %vm4814, %v4747
      %4830 = vst.msk [vmem:[#allocation3 + $0x168] sm:$0xff] %vm4814, %v4749
      %4831 = vst.msk [vmem:[#allocation3 + $0x180] sm:$0xff] %vm4814, %v4751
      %4832 = vst.msk [vmem:[#allocation3 + $0x198] sm:$0xff] %vm4814, %v4753
      %4833 = vst.msk [vmem:[#allocation3 + $0x1b0] sm:$0xff] %vm4814, %v4755
      %4834 = vst.msk [vmem:[#allocation3 + $0x1c8] sm:$0xff] %vm4814, %v4757
      %4835 = vst.msk [vmem:[#allocation3 + $0x1e0] sm:$0xff] %vm4814, %v4759
      %4836 = vst.msk [vmem:[#allocation3 + $0x1f8] sm:$0xff] %vm4814, %v4761
      %4837 = vst.msk [vmem:[#allocation3 + $0x210] sm:$0xff] %vm4814, %v4763
      %4838 = vst.msk [vmem:[#allocation3 + $0x228] sm:$0xff] %vm4814, %v4765
      %4839 = vst.msk [vmem:[#allocation3 + $0x240] sm:$0xff] %vm4814, %v4767
      %4840 = vst.msk [vmem:[#allocation3 + $0x258] sm:$0xff] %vm4814, %v4769
      %4841 = vst.msk [vmem:[#allocation3 + $0x270] sm:$0xff] %vm4814, %v4771
      %4842 = vst.msk [vmem:[#allocation3 + $0x288] sm:$0xff] %vm4814, %v4773
      %4843 = vst.msk [vmem:[#allocation3 + $0x2a0] sm:$0xff] %vm4814, %v4775
      %4844 = vst.msk [vmem:[#allocation3 + $0x2b8] sm:$0xff] %vm4814, %v4777
      %4845 = vst.msk [vmem:[#allocation3 + $0x2d0] sm:$0xff] %vm4814, %v4779
      %4846 = vst.msk [vmem:[#allocation3 + $0x2e8] sm:$0xff] %vm4814, %v4781
      %v4847 = vrot.slane %v4503, 2
      %v4848 = vrot.slane %v4504, 2
      %v4849 = vsel %vm897, %v4847, %v4848
      %v4850 = vrot.slane %v4505, 2
      %v4851 = vsel %vm897, %v4848, %v4850
      %v4852 = vrot.slane %v4506, 2
      %v4853 = vrot.slane %v4507, 2
      %v4854 = vsel %vm897, %v4852, %v4853
      %v4855 = vrot.slane %v4508, 2
      %v4856 = vsel %vm897, %v4853, %v4855
      %v4857 = vrot.slane %v4509, 2
      %v4858 = vrot.slane %v4510, 2
      %v4859 = vsel %vm897, %v4857, %v4858
      %v4860 = vrot.slane %v4511, 2
      %v4861 = vsel %vm897, %v4858, %v4860
      %v4862 = vrot.slane %v4512, 2
      %v4863 = vrot.slane %v4513, 2
      %v4864 = vsel %vm897, %v4862, %v4863
      %v4865 = vrot.slane %v4514, 2
      %v4866 = vsel %vm897, %v4863, %v4865
      %v4867 = vrot.slane %v4515, 2
      %v4868 = vrot.slane %v4516, 2
      %v4869 = vsel %vm897, %v4867, %v4868
      %v4870 = vrot.slane %v4517, 2
      %v4871 = vsel %vm897, %v4868, %v4870
      %v4872 = vrot.slane %v4518, 2
      %v4873 = vrot.slane %v4519, 2
      %v4874 = vsel %vm897, %v4872, %v4873
      %v4875 = vrot.slane %v4520, 2
      %v4876 = vsel %vm897, %v4873, %v4875
      %v4877 = vrot.slane %v4521, 2
      %v4878 = vrot.slane %v4522, 2
      %v4879 = vsel %vm897, %v4877, %v4878
      %v4880 = vrot.slane %v4523, 2
      %v4881 = vsel %vm897, %v4878, %v4880
      %v4882 = vrot.slane %v4524, 2
      %v4883 = vrot.slane %v4525, 2
      %v4884 = vsel %vm897, %v4882, %v4883
      %v4885 = vrot.slane %v4526, 2
      %v4886 = vsel %vm897, %v4883, %v4885
      %v4887 = vrot.slane %v4527, 2
      %v4888 = vrot.slane %v4528, 2
      %v4889 = vsel %vm897, %v4887, %v4888
      %v4890 = vrot.slane %v4529, 2
      %v4891 = vsel %vm897, %v4888, %v4890
      %v4892 = vrot.slane %v4530, 2
      %v4893 = vrot.slane %v4531, 2
      %v4894 = vsel %vm897, %v4892, %v4893
      %v4895 = vrot.slane %v4532, 2
      %v4896 = vsel %vm897, %v4893, %v4895
      %v4897 = vrot.slane %v4533, 2
      %v4898 = vrot.slane %v4534, 2
      %v4899 = vsel %vm897, %v4897, %v4898
      %v4900 = vrot.slane %v4535, 2
      %v4901 = vsel %vm897, %v4898, %v4900
      %v4902 = vrot.slane %v4536, 2
      %v4903 = vrot.slane %v4537, 2
      %v4904 = vsel %vm897, %v4902, %v4903
      %v4905 = vrot.slane %v4538, 2
      %v4906 = vsel %vm897, %v4903, %v4905
      %v4907 = vrot.slane %v4539, 2
      %v4908 = vrot.slane %v4540, 2
      %v4909 = vsel %vm897, %v4907, %v4908
      %v4910 = vrot.slane %v4541, 2
      %v4911 = vsel %vm897, %v4908, %v4910
      %v4912 = vrot.slane %v4542, 2
      %v4913 = vrot.slane %v4543, 2
      %v4914 = vsel %vm897, %v4912, %v4913
      %v4915 = vrot.slane %v4544, 2
      %v4916 = vsel %vm897, %v4913, %v4915
      %v4917 = vrot.slane %v4545, 2
      %v4918 = vrot.slane %v4546, 2
      %v4919 = vsel %vm897, %v4917, %v4918
      %v4920 = vrot.slane %v4547, 2
      %v4921 = vsel %vm897, %v4918, %v4920
      %v4922 = vrot.slane %v4548, 2
      %v4923 = vrot.slane %v4549, 2
      %v4924 = vsel %vm897, %v4922, %v4923
      %v4925 = vrot.slane %v4550, 2
      %v4926 = vsel %vm897, %v4923, %v4925
      %4927 = vrot.lane.b32.xlu0 %v4849, 48
      %v4928 = vpop.permute.xlu0 %4927
      %4929 = vrot.lane.b32.xlu0 %v4851, 48
      %v4930 = vpop.permute.xlu0 %4929
      %4931 = vrot.lane.b32.xlu0 %v4854, 48
      %v4932 = vpop.permute.xlu0 %4931
      %4933 = vrot.lane.b32.xlu0 %v4856, 48
      %v4934 = vpop.permute.xlu0 %4933
      %4935 = vrot.lane.b32.xlu0 %v4859, 48
      %v4936 = vpop.permute.xlu0 %4935
      %4937 = vrot.lane.b32.xlu0 %v4861, 48
      %v4938 = vpop.permute.xlu0 %4937
      %4939 = vrot.lane.b32.xlu0 %v4864, 48
      %v4940 = vpop.permute.xlu0 %4939
      %4941 = vrot.lane.b32.xlu0 %v4866, 48
      %v4942 = vpop.permute.xlu0 %4941
      %4943 = vrot.lane.b32.xlu0 %v4869, 48
      %v4944 = vpop.permute.xlu0 %4943
      %4945 = vrot.lane.b32.xlu0 %v4871, 48
      %v4946 = vpop.permute.xlu0 %4945
      %4947 = vrot.lane.b32.xlu0 %v4874, 48
      %v4948 = vpop.permute.xlu0 %4947
      %4949 = vrot.lane.b32.xlu0 %v4876, 48
      %v4950 = vpop.permute.xlu0 %4949
      %4951 = vrot.lane.b32.xlu0 %v4879, 48
      %v4952 = vpop.permute.xlu0 %4951
      %4953 = vrot.lane.b32.xlu0 %v4881, 48
      %v4954 = vpop.permute.xlu0 %4953
      %4955 = vrot.lane.b32.xlu0 %v4884, 48
      %v4956 = vpop.permute.xlu0 %4955
      %4957 = vrot.lane.b32.xlu0 %v4886, 48
      %v4958 = vpop.permute.xlu0 %4957
      %4959 = vrot.lane.b32.xlu0 %v4889, 48
      %v4960 = vpop.permute.xlu0 %4959
      %4961 = vrot.lane.b32.xlu0 %v4891, 48
      %v4962 = vpop.permute.xlu0 %4961
      %4963 = vrot.lane.b32.xlu0 %v4894, 48
      %v4964 = vpop.permute.xlu0 %4963
      %4965 = vrot.lane.b32.xlu0 %v4896, 48
      %v4966 = vpop.permute.xlu0 %4965
      %4967 = vrot.lane.b32.xlu0 %v4899, 48
      %v4968 = vpop.permute.xlu0 %4967
      %4969 = vrot.lane.b32.xlu0 %v4901, 48
      %v4970 = vpop.permute.xlu0 %4969
      %4971 = vrot.lane.b32.xlu0 %v4904, 48
      %v4972 = vpop.permute.xlu0 %4971
      %4973 = vrot.lane.b32.xlu0 %v4906, 48
      %v4974 = vpop.permute.xlu0 %4973
      %4975 = vrot.lane.b32.xlu0 %v4909, 48
      %v4976 = vpop.permute.xlu0 %4975
      %4977 = vrot.lane.b32.xlu0 %v4911, 48
      %v4978 = vpop.permute.xlu0 %4977
      %4979 = vrot.lane.b32.xlu0 %v4914, 48
      %v4980 = vpop.permute.xlu0 %4979
      %4981 = vrot.lane.b32.xlu0 %v4916, 48
      %v4982 = vpop.permute.xlu0 %4981
      %4983 = vrot.lane.b32.xlu0 %v4919, 48
      %v4984 = vpop.permute.xlu0 %4983
      %4985 = vrot.lane.b32.xlu0 %v4921, 48
      %v4986 = vpop.permute.xlu0 %4985
      %4987 = vrot.lane.b32.xlu0 %v4924, 48
      %v4988 = vpop.permute.xlu0 %4987
      %4989 = vrot.lane.b32.xlu0 %v4926, 48
      %v4990 = vpop.permute.xlu0 %4989
      %vm5023 = vcmask 589184
      %5024 = vst.msk [vmem:[#allocation3] sm:$0xff] %vm5023, %v4928
      %5025 = vst.msk [vmem:[#allocation3 + $0x18] sm:$0xff] %vm5023, %v4930
      %5026 = vst.msk [vmem:[#allocation3 + $0x30] sm:$0xff] %vm5023, %v4932
      %5027 = vst.msk [vmem:[#allocation3 + $0x48] sm:$0xff] %vm5023, %v4934
      %5028 = vst.msk [vmem:[#allocation3 + $0x60] sm:$0xff] %vm5023, %v4936
      %5029 = vst.msk [vmem:[#allocation3 + $0x78] sm:$0xff] %vm5023, %v4938
      %5030 = vst.msk [vmem:[#allocation3 + $0x90] sm:$0xff] %vm5023, %v4940
      %5031 = vst.msk [vmem:[#allocation3 + $0xa8] sm:$0xff] %vm5023, %v4942
      %5032 = vst.msk [vmem:[#allocation3 + $0xc0] sm:$0xff] %vm5023, %v4944
      %5033 = vst.msk [vmem:[#allocation3 + $0xd8] sm:$0xff] %vm5023, %v4946
      %5034 = vst.msk [vmem:[#allocation3 + $0xf0] sm:$0xff] %vm5023, %v4948
      %5035 = vst.msk [vmem:[#allocation3 + $0x108] sm:$0xff] %vm5023, %v4950
      %5036 = vst.msk [vmem:[#allocation3 + $0x120] sm:$0xff] %vm5023, %v4952
      %5037 = vst.msk [vmem:[#allocation3 + $0x138] sm:$0xff] %vm5023, %v4954
      %5038 = vst.msk [vmem:[#allocation3 + $0x150] sm:$0xff] %vm5023, %v4956
      %5039 = vst.msk [vmem:[#allocation3 + $0x168] sm:$0xff] %vm5023, %v4958
      %5040 = vst.msk [vmem:[#allocation3 + $0x180] sm:$0xff] %vm5023, %v4960
      %5041 = vst.msk [vmem:[#allocation3 + $0x198] sm:$0xff] %vm5023, %v4962
      %5042 = vst.msk [vmem:[#allocation3 + $0x1b0] sm:$0xff] %vm5023, %v4964
      %5043 = vst.msk [vmem:[#allocation3 + $0x1c8] sm:$0xff] %vm5023, %v4966
      %5044 = vst.msk [vmem:[#allocation3 + $0x1e0] sm:$0xff] %vm5023, %v4968
      %5045 = vst.msk [vmem:[#allocation3 + $0x1f8] sm:$0xff] %vm5023, %v4970
      %5046 = vst.msk [vmem:[#allocation3 + $0x210] sm:$0xff] %vm5023, %v4972
      %5047 = vst.msk [vmem:[#allocation3 + $0x228] sm:$0xff] %vm5023, %v4974
      %5048 = vst.msk [vmem:[#allocation3 + $0x240] sm:$0xff] %vm5023, %v4976
      %5049 = vst.msk [vmem:[#allocation3 + $0x258] sm:$0xff] %vm5023, %v4978
      %5050 = vst.msk [vmem:[#allocation3 + $0x270] sm:$0xff] %vm5023, %v4980
      %5051 = vst.msk [vmem:[#allocation3 + $0x288] sm:$0xff] %vm5023, %v4982
      %5052 = vst.msk [vmem:[#allocation3 + $0x2a0] sm:$0xff] %vm5023, %v4984
      %5053 = vst.msk [vmem:[#allocation3 + $0x2b8] sm:$0xff] %vm5023, %v4986
      %5054 = vst.msk [vmem:[#allocation3 + $0x2d0] sm:$0xff] %vm5023, %v4988
      %5055 = vst.msk [vmem:[#allocation3 + $0x2e8] sm:$0xff] %vm5023, %v4990
      %5058 = vrot.lane.b32.xlu0 %v4506, 72
      %v5059 = vpop.permute.xlu0 %5058
      %5060 = vrot.lane.b32.xlu0 %v4507, 72
      %v5061 = vpop.permute.xlu0 %5060
      %5062 = vrot.lane.b32.xlu0 %v4509, 72
      %v5063 = vpop.permute.xlu0 %5062
      %5064 = vrot.lane.b32.xlu0 %v4510, 72
      %v5065 = vpop.permute.xlu0 %5064
      %5066 = vrot.lane.b32.xlu0 %v4512, 72
      %v5067 = vpop.permute.xlu0 %5066
      %5068 = vrot.lane.b32.xlu0 %v4513, 72
      %v5069 = vpop.permute.xlu0 %5068
      %5070 = vrot.lane.b32.xlu0 %v4515, 72
      %v5071 = vpop.permute.xlu0 %5070
      %5072 = vrot.lane.b32.xlu0 %v4516, 72
      %v5073 = vpop.permute.xlu0 %5072
      %5074 = vrot.lane.b32.xlu0 %v4518, 72
      %v5075 = vpop.permute.xlu0 %5074
      %5076 = vrot.lane.b32.xlu0 %v4519, 72
      %v5077 = vpop.permute.xlu0 %5076
      %5078 = vrot.lane.b32.xlu0 %v4521, 72
      %v5079 = vpop.permute.xlu0 %5078
      %5080 = vrot.lane.b32.xlu0 %v4522, 72
      %v5081 = vpop.permute.xlu0 %5080
      %5082 = vrot.lane.b32.xlu0 %v4524, 72
      %v5083 = vpop.permute.xlu0 %5082
      %5084 = vrot.lane.b32.xlu0 %v4525, 72
      %v5085 = vpop.permute.xlu0 %5084
      %5086 = vrot.lane.b32.xlu0 %v4527, 72
      %v5087 = vpop.permute.xlu0 %5086
      %5088 = vrot.lane.b32.xlu0 %v4528, 72
      %v5089 = vpop.permute.xlu0 %5088
      %5090 = vrot.lane.b32.xlu0 %v4530, 72
      %v5091 = vpop.permute.xlu0 %5090
      %5092 = vrot.lane.b32.xlu0 %v4531, 72
      %v5093 = vpop.permute.xlu0 %5092
      %5094 = vrot.lane.b32.xlu0 %v4533, 72
      %v5095 = vpop.permute.xlu0 %5094
      %5096 = vrot.lane.b32.xlu0 %v4534, 72
      %v5097 = vpop.permute.xlu0 %5096
      %5098 = vrot.lane.b32.xlu0 %v4536, 72
      %v5099 = vpop.permute.xlu0 %5098
      %5100 = vrot.lane.b32.xlu0 %v4537, 72
      %v5101 = vpop.permute.xlu0 %5100
      %5102 = vrot.lane.b32.xlu0 %v4539, 72
      %v5103 = vpop.permute.xlu0 %5102
      %5104 = vrot.lane.b32.xlu0 %v4540, 72
      %v5105 = vpop.permute.xlu0 %5104
      %5106 = vrot.lane.b32.xlu0 %v4542, 72
      %v5107 = vpop.permute.xlu0 %5106
      %5108 = vrot.lane.b32.xlu0 %v4543, 72
      %v5109 = vpop.permute.xlu0 %5108
      %5110 = vrot.lane.b32.xlu0 %v4545, 72
      %v5111 = vpop.permute.xlu0 %5110
      %5112 = vrot.lane.b32.xlu0 %v4546, 72
      %v5113 = vpop.permute.xlu0 %5112
      %5114 = vrot.lane.b32.xlu0 %v4548, 72
      %v5115 = vpop.permute.xlu0 %5114
      %5116 = vrot.lane.b32.xlu0 %v4549, 72
      %v5117 = vpop.permute.xlu0 %5116
      %5118 = vrot.lane.b32.xlu0 %v4551, 72
      %v5119 = vpop.permute.xlu0 %5118
      %5120 = vrot.lane.b32.xlu0 %v4552, 72
      %v5121 = vpop.permute.xlu0 %5120
      %vm5154 = vcmask 785984
      %5155 = vst.msk [vmem:[#allocation3] sm:$0xff] %vm5154, %v5059
      %5156 = vst.msk [vmem:[#allocation3 + $0x18] sm:$0xff] %vm5154, %v5061
      %5157 = vst.msk [vmem:[#allocation3 + $0x30] sm:$0xff] %vm5154, %v5063
      %5158 = vst.msk [vmem:[#allocation3 + $0x48] sm:$0xff] %vm5154, %v5065
      %5159 = vst.msk [vmem:[#allocation3 + $0x60] sm:$0xff] %vm5154, %v5067
      %5160 = vst.msk [vmem:[#allocation3 + $0x78] sm:$0xff] %vm5154, %v5069
      %5161 = vst.msk [vmem:[#allocation3 + $0x90] sm:$0xff] %vm5154, %v5071
      %5162 = vst.msk [vmem:[#allocation3 + $0xa8] sm:$0xff] %vm5154, %v5073
      %5163 = vst.msk [vmem:[#allocation3 + $0xc0] sm:$0xff] %vm5154, %v5075
      %5164 = vst.msk [vmem:[#allocation3 + $0xd8] sm:$0xff] %vm5154, %v5077
      %5165 = vst.msk [vmem:[#allocation3 + $0xf0] sm:$0xff] %vm5154, %v5079
      %5166 = vst.msk [vmem:[#allocation3 + $0x108] sm:$0xff] %vm5154, %v5081
      %5167 = vst.msk [vmem:[#allocation3 + $0x120] sm:$0xff] %vm5154, %v5083
      %5168 = vst.msk [vmem:[#allocation3 + $0x138] sm:$0xff] %vm5154, %v5085
      %5169 = vst.msk [vmem:[#allocation3 + $0x150] sm:$0xff] %vm5154, %v5087
      %5170 = vst.msk [vmem:[#allocation3 + $0x168] sm:$0xff] %vm5154, %v5089
      %5171 = vst.msk [vmem:[#allocation3 + $0x180] sm:$0xff] %vm5154, %v5091
      %5172 = vst.msk [vmem:[#allocation3 + $0x198] sm:$0xff] %vm5154, %v5093
      %5173 = vst.msk [vmem:[#allocation3 + $0x1b0] sm:$0xff] %vm5154, %v5095
      %5174 = vst.msk [vmem:[#allocation3 + $0x1c8] sm:$0xff] %vm5154, %v5097
      %5175 = vst.msk [vmem:[#allocation3 + $0x1e0] sm:$0xff] %vm5154, %v5099
      %5176 = vst.msk [vmem:[#allocation3 + $0x1f8] sm:$0xff] %vm5154, %v5101
      %5177 = vst.msk [vmem:[#allocation3 + $0x210] sm:$0xff] %vm5154, %v5103
      %5178 = vst.msk [vmem:[#allocation3 + $0x228] sm:$0xff] %vm5154, %v5105
      %5179 = vst.msk [vmem:[#allocation3 + $0x240] sm:$0xff] %vm5154, %v5107
      %5180 = vst.msk [vmem:[#allocation3 + $0x258] sm:$0xff] %vm5154, %v5109
      %5181 = vst.msk [vmem:[#allocation3 + $0x270] sm:$0xff] %vm5154, %v5111
      %5182 = vst.msk [vmem:[#allocation3 + $0x288] sm:$0xff] %vm5154, %v5113
      %5183 = vst.msk [vmem:[#allocation3 + $0x2a0] sm:$0xff] %vm5154, %v5115
      %5184 = vst.msk [vmem:[#allocation3 + $0x2b8] sm:$0xff] %vm5154, %v5117
      %5185 = vst.msk [vmem:[#allocation3 + $0x2d0] sm:$0xff] %vm5154, %v5119
      %5186 = vst.msk [vmem:[#allocation3 + $0x2e8] sm:$0xff] %vm5154, %v5121
      %v5188 = vrot.slane %v4551, 1
      %v5189 = vrot.slane %v4552, 1
      %v5190 = vsel %vm687, %v5188, %v5189
      %v5191 = vrot.slane %v4553, 1
      %v5192 = vsel %vm687, %v5189, %v5191
      %5193 = vrot.lane.b32.xlu0 %v4645, 96
      %v5194 = vpop.permute.xlu0 %5193
      %5195 = vrot.lane.b32.xlu0 %v4647, 96
      %v5196 = vpop.permute.xlu0 %5195
      %5197 = vrot.lane.b32.xlu0 %v4650, 96
      %v5198 = vpop.permute.xlu0 %5197
      %5199 = vrot.lane.b32.xlu0 %v4652, 96
      %v5200 = vpop.permute.xlu0 %5199
      %5201 = vrot.lane.b32.xlu0 %v4655, 96
      %v5202 = vpop.permute.xlu0 %5201
      %5203 = vrot.lane.b32.xlu0 %v4657, 96
      %v5204 = vpop.permute.xlu0 %5203
      %5205 = vrot.lane.b32.xlu0 %v4660, 96
      %v5206 = vpop.permute.xlu0 %5205
      %5207 = vrot.lane.b32.xlu0 %v4662, 96
      %v5208 = vpop.permute.xlu0 %5207
      %5209 = vrot.lane.b32.xlu0 %v4665, 96
      %v5210 = vpop.permute.xlu0 %5209
      %5211 = vrot.lane.b32.xlu0 %v4667, 96
      %v5212 = vpop.permute.xlu0 %5211
      %5213 = vrot.lane.b32.xlu0 %v4670, 96
      %v5214 = vpop.permute.xlu0 %5213
      %5215 = vrot.lane.b32.xlu0 %v4672, 96
      %v5216 = vpop.permute.xlu0 %5215
      %5217 = vrot.lane.b32.xlu0 %v4675, 96
      %v5218 = vpop.permute.xlu0 %5217
      %5219 = vrot.lane.b32.xlu0 %v4677, 96
      %v5220 = vpop.permute.xlu0 %5219
      %5221 = vrot.lane.b32.xlu0 %v4680, 96
      %v5222 = vpop.permute.xlu0 %5221
      %5223 = vrot.lane.b32.xlu0 %v4682, 96
      %v5224 = vpop.permute.xlu0 %5223
      %5225 = vrot.lane.b32.xlu0 %v4685, 96
      %v5226 = vpop.permute.xlu0 %5225
      %5227 = vrot.lane.b32.xlu0 %v4687, 96
      %v5228 = vpop.permute.xlu0 %5227
      %5229 = vrot.lane.b32.xlu0 %v4690, 96
      %v5230 = vpop.permute.xlu0 %5229
      %5231 = vrot.lane.b32.xlu0 %v4692, 96
      %v5232 = vpop.permute.xlu0 %5231
      %5233 = vrot.lane.b32.xlu0 %v4695, 96
      %v5234 = vpop.permute.xlu0 %5233
      %5235 = vrot.lane.b32.xlu0 %v4697, 96
      %v5236 = vpop.permute.xlu0 %5235
      %5237 = vrot.lane.b32.xlu0 %v4700, 96
      %v5238 = vpop.permute.xlu0 %5237
      %5239 = vrot.lane.b32.xlu0 %v4702, 96
      %v5240 = vpop.permute.xlu0 %5239
      %5241 = vrot.lane.b32.xlu0 %v4705, 96
      %v5242 = vpop.permute.xlu0 %5241
      %5243 = vrot.lane.b32.xlu0 %v4707, 96
      %v5244 = vpop.permute.xlu0 %5243
      %5245 = vrot.lane.b32.xlu0 %v4710, 96
      %v5246 = vpop.permute.xlu0 %5245
      %5247 = vrot.lane.b32.xlu0 %v4712, 96
      %v5248 = vpop.permute.xlu0 %5247
      %5249 = vrot.lane.b32.xlu0 %v4715, 96
      %v5250 = vpop.permute.xlu0 %5249
      %5251 = vrot.lane.b32.xlu0 %v4717, 96
      %v5252 = vpop.permute.xlu0 %5251
      %5253 = vrot.lane.b32.xlu0 %v5190, 96
      %v5254 = vpop.permute.xlu0 %5253
      %5255 = vrot.lane.b32.xlu0 %v5192, 96
      %v5256 = vpop.permute.xlu0 %5255
      %vm5289 = vcmask 982784
      %5290 = vst.msk [vmem:[#allocation3] sm:$0xff] %vm5289, %v5194
      %5291 = vst.msk [vmem:[#allocation3 + $0x18] sm:$0xff] %vm5289, %v5196
      %5292 = vst.msk [vmem:[#allocation3 + $0x30] sm:$0xff] %vm5289, %v5198
      %5293 = vst.msk [vmem:[#allocation3 + $0x48] sm:$0xff] %vm5289, %v5200
      %5294 = vst.msk [vmem:[#allocation3 + $0x60] sm:$0xff] %vm5289, %v5202
      %5295 = vst.msk [vmem:[#allocation3 + $0x78] sm:$0xff] %vm5289, %v5204
      %5296 = vst.msk [vmem:[#allocation3 + $0x90] sm:$0xff] %vm5289, %v5206
      %5297 = vst.msk [vmem:[#allocation3 + $0xa8] sm:$0xff] %vm5289, %v5208
      %5298 = vst.msk [vmem:[#allocation3 + $0xc0] sm:$0xff] %vm5289, %v5210
      %5299 = vst.msk [vmem:[#allocation3 + $0xd8] sm:$0xff] %vm5289, %v5212
      %5300 = vst.msk [vmem:[#allocation3 + $0xf0] sm:$0xff] %vm5289, %v5214
      %5301 = vst.msk [vmem:[#allocation3 + $0x108] sm:$0xff] %vm5289, %v5216
      %5302 = vst.msk [vmem:[#allocation3 + $0x120] sm:$0xff] %vm5289, %v5218
      %5303 = vst.msk [vmem:[#allocation3 + $0x138] sm:$0xff] %vm5289, %v5220
      %5304 = vst.msk [vmem:[#allocation3 + $0x150] sm:$0xff] %vm5289, %v5222
      %5305 = vst.msk [vmem:[#allocation3 + $0x168] sm:$0xff] %vm5289, %v5224
      %5306 = vst.msk [vmem:[#allocation3 + $0x180] sm:$0xff] %vm5289, %v5226
      %5307 = vst.msk [vmem:[#allocation3 + $0x198] sm:$0xff] %vm5289, %v5228
      %5308 = vst.msk [vmem:[#allocation3 + $0x1b0] sm:$0xff] %vm5289, %v5230
      %5309 = vst.msk [vmem:[#allocation3 + $0x1c8] sm:$0xff] %vm5289, %v5232
      %5310 = vst.msk [vmem:[#allocation3 + $0x1e0] sm:$0xff] %vm5289, %v5234
      %5311 = vst.msk [vmem:[#allocation3 + $0x1f8] sm:$0xff] %vm5289, %v5236
      %5312 = vst.msk [vmem:[#allocation3 + $0x210] sm:$0xff] %vm5289, %v5238
      %5313 = vst.msk [vmem:[#allocation3 + $0x228] sm:$0xff] %vm5289, %v5240
      %5314 = vst.msk [vmem:[#allocation3 + $0x240] sm:$0xff] %vm5289, %v5242
      %5315 = vst.msk [vmem:[#allocation3 + $0x258] sm:$0xff] %vm5289, %v5244
      %5316 = vst.msk [vmem:[#allocation3 + $0x270] sm:$0xff] %vm5289, %v5246
      %5317 = vst.msk [vmem:[#allocation3 + $0x288] sm:$0xff] %vm5289, %v5248
      %5318 = vst.msk [vmem:[#allocation3 + $0x2a0] sm:$0xff] %vm5289, %v5250
      %5319 = vst.msk [vmem:[#allocation3 + $0x2b8] sm:$0xff] %vm5289, %v5252
      %5320 = vst.msk [vmem:[#allocation3 + $0x2d0] sm:$0xff] %vm5289, %v5254
      %5321 = vst.msk [vmem:[#allocation3 + $0x2e8] sm:$0xff] %vm5289, %v5256
      %v5322 = vrot.slane %v4551, 2
      %v5323 = vrot.slane %v4552, 2
      %v5324 = vsel %vm897, %v5322, %v5323
      %v5325 = vrot.slane %v4553, 2
      %v5326 = vsel %vm897, %v5323, %v5325
      %5327 = vrot.lane.b32.xlu0 %v4854, 120
      %v5328 = vpop.permute.xlu0 %5327
      %5329 = vrot.lane.b32.xlu0 %v4856, 120
      %v5330 = vpop.permute.xlu0 %5329
      %5331 = vrot.lane.b32.xlu0 %v4859, 120
      %v5332 = vpop.permute.xlu0 %5331
      %5333 = vrot.lane.b32.xlu0 %v4861, 120
      %v5334 = vpop.permute.xlu0 %5333
      %5335 = vrot.lane.b32.xlu0 %v4864, 120
      %v5336 = vpop.permute.xlu0 %5335
      %5337 = vrot.lane.b32.xlu0 %v4866, 120
      %v5338 = vpop.permute.xlu0 %5337
      %5339 = vrot.lane.b32.xlu0 %v4869, 120
      %v5340 = vpop.permute.xlu0 %5339
      %5341 = vrot.lane.b32.xlu0 %v4871, 120
      %v5342 = vpop.permute.xlu0 %5341
      %5343 = vrot.lane.b32.xlu0 %v4874, 120
      %v5344 = vpop.permute.xlu0 %5343
      %5345 = vrot.lane.b32.xlu0 %v4876, 120
      %v5346 = vpop.permute.xlu0 %5345
      %5347 = vrot.lane.b32.xlu0 %v4879, 120
      %v5348 = vpop.permute.xlu0 %5347
      %5349 = vrot.lane.b32.xlu0 %v4881, 120
      %v5350 = vpop.permute.xlu0 %5349
      %5351 = vrot.lane.b32.xlu0 %v4884, 120
      %v5352 = vpop.permute.xlu0 %5351
      %5353 = vrot.lane.b32.xlu0 %v4886, 120
      %v5354 = vpop.permute.xlu0 %5353
      %5355 = vrot.lane.b32.xlu0 %v4889, 120
      %v5356 = vpop.permute.xlu0 %5355
      %5357 = vrot.lane.b32.xlu0 %v4891, 120
      %v5358 = vpop.permute.xlu0 %5357
      %5359 = vrot.lane.b32.xlu0 %v4894, 120
      %v5360 = vpop.permute.xlu0 %5359
      %5361 = vrot.lane.b32.xlu0 %v4896, 120
      %v5362 = vpop.permute.xlu0 %5361
      %5363 = vrot.lane.b32.xlu0 %v4899, 120
      %v5364 = vpop.permute.xlu0 %5363
      %5365 = vrot.lane.b32.xlu0 %v4901, 120
      %v5366 = vpop.permute.xlu0 %5365
      %5367 = vrot.lane.b32.xlu0 %v4904, 120
      %v5368 = vpop.permute.xlu0 %5367
      %5369 = vrot.lane.b32.xlu0 %v4906, 120
      %v5370 = vpop.permute.xlu0 %5369
      %5371 = vrot.lane.b32.xlu0 %v4909, 120
      %v5372 = vpop.permute.xlu0 %5371
      %5373 = vrot.lane.b32.xlu0 %v4911, 120
      %v5374 = vpop.permute.xlu0 %5373
      %5375 = vrot.lane.b32.xlu0 %v4914, 120
      %v5376 = vpop.permute.xlu0 %5375
      %5377 = vrot.lane.b32.xlu0 %v4916, 120
      %v5378 = vpop.permute.xlu0 %5377
      %5379 = vrot.lane.b32.xlu0 %v4919, 120
      %v5380 = vpop.permute.xlu0 %5379
      %5381 = vrot.lane.b32.xlu0 %v4921, 120
      %v5382 = vpop.permute.xlu0 %5381
      %5383 = vrot.lane.b32.xlu0 %v4924, 120
      %v5384 = vpop.permute.xlu0 %5383
      %5385 = vrot.lane.b32.xlu0 %v4926, 120
      %v5386 = vpop.permute.xlu0 %5385
      %5387 = vrot.lane.b32.xlu0 %v5324, 120
      %v5388 = vpop.permute.xlu0 %5387
      %5389 = vrot.lane.b32.xlu0 %v5326, 120
      %v5390 = vpop.permute.xlu0 %5389
      %vm5423 = vcmask 1048512
      %5424 = vst.msk [vmem:[#allocation3] sm:$0xff] %vm5423, %v5328
      %5425 = vst.msk [vmem:[#allocation3 + $0x8] sm:$0xff] %vm2538, %v5328
      %5426 = vst.msk [vmem:[#allocation3 + $0x18] sm:$0xff] %vm5423, %v5330
      %5427 = vst.msk [vmem:[#allocation3 + $0x20] sm:$0xff] %vm2538, %v5330
      %5428 = vst.msk [vmem:[#allocation3 + $0x30] sm:$0xff] %vm5423, %v5332
      %5429 = vst.msk [vmem:[#allocation3 + $0x38] sm:$0xff] %vm2538, %v5332
      %5430 = vst.msk [vmem:[#allocation3 + $0x48] sm:$0xff] %vm5423, %v5334
      %5431 = vst.msk [vmem:[#allocation3 + $0x50] sm:$0xff] %vm2538, %v5334
      %5432 = vst.msk [vmem:[#allocation3 + $0x60] sm:$0xff] %vm5423, %v5336
      %5433 = vst.msk [vmem:[#allocation3 + $0x68] sm:$0xff] %vm2538, %v5336
      %5434 = vst.msk [vmem:[#allocation3 + $0x78] sm:$0xff] %vm5423, %v5338
      %5435 = vst.msk [vmem:[#allocation3 + $0x80] sm:$0xff] %vm2538, %v5338
      %5436 = vst.msk [vmem:[#allocation3 + $0x90] sm:$0xff] %vm5423, %v5340
      %5437 = vst.msk [vmem:[#allocation3 + $0x98] sm:$0xff] %vm2538, %v5340
      %5438 = vst.msk [vmem:[#allocation3 + $0xa8] sm:$0xff] %vm5423, %v5342
      %5439 = vst.msk [vmem:[#allocation3 + $0xb0] sm:$0xff] %vm2538, %v5342
      %5440 = vst.msk [vmem:[#allocation3 + $0xc0] sm:$0xff] %vm5423, %v5344
      %5441 = vst.msk [vmem:[#allocation3 + $0xc8] sm:$0xff] %vm2538, %v5344
      %5442 = vst.msk [vmem:[#allocation3 + $0xd8] sm:$0xff] %vm5423, %v5346
      %5443 = vst.msk [vmem:[#allocation3 + $0xe0] sm:$0xff] %vm2538, %v5346
      %5444 = vst.msk [vmem:[#allocation3 + $0xf0] sm:$0xff] %vm5423, %v5348
      %5445 = vst.msk [vmem:[#allocation3 + $0xf8] sm:$0xff] %vm2538, %v5348
      %5446 = vst.msk [vmem:[#allocation3 + $0x108] sm:$0xff] %vm5423, %v5350
      %5447 = vst.msk [vmem:[#allocation3 + $0x110] sm:$0xff] %vm2538, %v5350
      %5448 = vst.msk [vmem:[#allocation3 + $0x120] sm:$0xff] %vm5423, %v5352
      %5449 = vst.msk [vmem:[#allocation3 + $0x128] sm:$0xff] %vm2538, %v5352
      %5450 = vst.msk [vmem:[#allocation3 + $0x138] sm:$0xff] %vm5423, %v5354
      %5451 = vst.msk [vmem:[#allocation3 + $0x140] sm:$0xff] %vm2538, %v5354
      %5452 = vst.msk [vmem:[#allocation3 + $0x150] sm:$0xff] %vm5423, %v5356
      %5453 = vst.msk [vmem:[#allocation3 + $0x158] sm:$0xff] %vm2538, %v5356
      %5454 = vst.msk [vmem:[#allocation3 + $0x168] sm:$0xff] %vm5423, %v5358
      %5455 = vst.msk [vmem:[#allocation3 + $0x170] sm:$0xff] %vm2538, %v5358
      %5456 = vst.msk [vmem:[#allocation3 + $0x180] sm:$0xff] %vm5423, %v5360
      %5457 = vst.msk [vmem:[#allocation3 + $0x188] sm:$0xff] %vm2538, %v5360
      %5458 = vst.msk [vmem:[#allocation3 + $0x198] sm:$0xff] %vm5423, %v5362
      %5459 = vst.msk [vmem:[#allocation3 + $0x1a0] sm:$0xff] %vm2538, %v5362
      %5460 = vst.msk [vmem:[#allocation3 + $0x1b0] sm:$0xff] %vm5423, %v5364
      %5461 = vst.msk [vmem:[#allocation3 + $0x1b8] sm:$0xff] %vm2538, %v5364
      %5462 = vst.msk [vmem:[#allocation3 + $0x1c8] sm:$0xff] %vm5423, %v5366
      %5463 = vst.msk [vmem:[#allocation3 + $0x1d0] sm:$0xff] %vm2538, %v5366
      %5464 = vst.msk [vmem:[#allocation3 + $0x1e0] sm:$0xff] %vm5423, %v5368
      %5465 = vst.msk [vmem:[#allocation3 + $0x1e8] sm:$0xff] %vm2538, %v5368
      %5466 = vst.msk [vmem:[#allocation3 + $0x1f8] sm:$0xff] %vm5423, %v5370
      %5467 = vst.msk [vmem:[#allocation3 + $0x200] sm:$0xff] %vm2538, %v5370
      %5468 = vst.msk [vmem:[#allocation3 + $0x210] sm:$0xff] %vm5423, %v5372
      %5469 = vst.msk [vmem:[#allocation3 + $0x218] sm:$0xff] %vm2538, %v5372
      %5470 = vst.msk [vmem:[#allocation3 + $0x228] sm:$0xff] %vm5423, %v5374
      %5471 = vst.msk [vmem:[#allocation3 + $0x230] sm:$0xff] %vm2538, %v5374
      %5472 = vst.msk [vmem:[#allocation3 + $0x240] sm:$0xff] %vm5423, %v5376
      %5473 = vst.msk [vmem:[#allocation3 + $0x248] sm:$0xff] %vm2538, %v5376
      %5474 = vst.msk [vmem:[#allocation3 + $0x258] sm:$0xff] %vm5423, %v5378
      %5475 = vst.msk [vmem:[#allocation3 + $0x260] sm:$0xff] %vm2538, %v5378
      %5476 = vst.msk [vmem:[#allocation3 + $0x270] sm:$0xff] %vm5423, %v5380
      %5477 = vst.msk [vmem:[#allocation3 + $0x278] sm:$0xff] %vm2538, %v5380
      %5478 = vst.msk [vmem:[#allocation3 + $0x288] sm:$0xff] %vm5423, %v5382
      %5479 = vst.msk [vmem:[#allocation3 + $0x290] sm:$0xff] %vm2538, %v5382
      %5480 = vst.msk [vmem:[#allocation3 + $0x2a0] sm:$0xff] %vm5423, %v5384
      %5481 = vst.msk [vmem:[#allocation3 + $0x2a8] sm:$0xff] %vm2538, %v5384
      %5482 = vst.msk [vmem:[#allocation3 + $0x2b8] sm:$0xff] %vm5423, %v5386
      %5483 = vst.msk [vmem:[#allocation3 + $0x2c0] sm:$0xff] %vm2538, %v5386
      %5484 = vst.msk [vmem:[#allocation3 + $0x2d0] sm:$0xff] %vm5423, %v5388
      %5485 = vst.msk [vmem:[#allocation3 + $0x2d8] sm:$0xff] %vm2538, %v5388
      %5486 = vst.msk [vmem:[#allocation3 + $0x2e8] sm:$0xff] %vm5423, %v5390
      %5487 = vst.msk [vmem:[#allocation3 + $0x2f0] sm:$0xff] %vm2538, %v5390
      %5490 = vrot.lane.b32.xlu0 %v4509, 16
      %v5491 = vpop.permute.xlu0 %5490
      %5492 = vrot.lane.b32.xlu0 %v4510, 16
      %v5493 = vpop.permute.xlu0 %5492
      %5494 = vrot.lane.b32.xlu0 %v4512, 16
      %v5495 = vpop.permute.xlu0 %5494
      %5496 = vrot.lane.b32.xlu0 %v4513, 16
      %v5497 = vpop.permute.xlu0 %5496
      %5498 = vrot.lane.b32.xlu0 %v4515, 16
      %v5499 = vpop.permute.xlu0 %5498
      %5500 = vrot.lane.b32.xlu0 %v4516, 16
      %v5501 = vpop.permute.xlu0 %5500
      %5502 = vrot.lane.b32.xlu0 %v4518, 16
      %v5503 = vpop.permute.xlu0 %5502
      %5504 = vrot.lane.b32.xlu0 %v4519, 16
      %v5505 = vpop.permute.xlu0 %5504
      %5506 = vrot.lane.b32.xlu0 %v4521, 16
      %v5507 = vpop.permute.xlu0 %5506
      %5508 = vrot.lane.b32.xlu0 %v4522, 16
      %v5509 = vpop.permute.xlu0 %5508
      %5510 = vrot.lane.b32.xlu0 %v4524, 16
      %v5511 = vpop.permute.xlu0 %5510
      %5512 = vrot.lane.b32.xlu0 %v4525, 16
      %v5513 = vpop.permute.xlu0 %5512
      %5514 = vrot.lane.b32.xlu0 %v4527, 16
      %v5515 = vpop.permute.xlu0 %5514
      %5516 = vrot.lane.b32.xlu0 %v4528, 16
      %v5517 = vpop.permute.xlu0 %5516
      %5518 = vrot.lane.b32.xlu0 %v4530, 16
      %v5519 = vpop.permute.xlu0 %5518
      %5520 = vrot.lane.b32.xlu0 %v4531, 16
      %v5521 = vpop.permute.xlu0 %5520
      %5522 = vrot.lane.b32.xlu0 %v4533, 16
      %v5523 = vpop.permute.xlu0 %5522
      %5524 = vrot.lane.b32.xlu0 %v4534, 16
      %v5525 = vpop.permute.xlu0 %5524
      %5526 = vrot.lane.b32.xlu0 %v4536, 16
      %v5527 = vpop.permute.xlu0 %5526
      %5528 = vrot.lane.b32.xlu0 %v4537, 16
      %v5529 = vpop.permute.xlu0 %5528
      %5530 = vrot.lane.b32.xlu0 %v4539, 16
      %v5531 = vpop.permute.xlu0 %5530
      %5532 = vrot.lane.b32.xlu0 %v4540, 16
      %v5533 = vpop.permute.xlu0 %5532
      %5534 = vrot.lane.b32.xlu0 %v4542, 16
      %v5535 = vpop.permute.xlu0 %5534
      %5536 = vrot.lane.b32.xlu0 %v4543, 16
      %v5537 = vpop.permute.xlu0 %5536
      %5538 = vrot.lane.b32.xlu0 %v4545, 16
      %v5539 = vpop.permute.xlu0 %5538
      %5540 = vrot.lane.b32.xlu0 %v4546, 16
      %v5541 = vpop.permute.xlu0 %5540
      %5542 = vrot.lane.b32.xlu0 %v4548, 16
      %v5543 = vpop.permute.xlu0 %5542
      %5544 = vrot.lane.b32.xlu0 %v4549, 16
      %v5545 = vpop.permute.xlu0 %5544
      %5546 = vrot.lane.b32.xlu0 %v4551, 16
      %v5547 = vpop.permute.xlu0 %5546
      %5548 = vrot.lane.b32.xlu0 %v4552, 16
      %v5549 = vpop.permute.xlu0 %5548
      %5550 = vrot.lane.b32.xlu0 %v4554, 16
      %v5551 = vpop.permute.xlu0 %5550
      %5552 = vrot.lane.b32.xlu0 %v4555, 16
      %v5553 = vpop.permute.xlu0 %5552
      %vm5586 = vcmask 326784
      %5587 = vst.msk [vmem:[#allocation3 + $0x8] sm:$0xff] %vm5586, %v5491
      %5588 = vst.msk [vmem:[#allocation3 + $0x20] sm:$0xff] %vm5586, %v5493
      %5589 = vst.msk [vmem:[#allocation3 + $0x38] sm:$0xff] %vm5586, %v5495
      %5590 = vst.msk [vmem:[#allocation3 + $0x50] sm:$0xff] %vm5586, %v5497
      %5591 = vst.msk [vmem:[#allocation3 + $0x68] sm:$0xff] %vm5586, %v5499
      %5592 = vst.msk [vmem:[#allocation3 + $0x80] sm:$0xff] %vm5586, %v5501
      %5593 = vst.msk [vmem:[#allocation3 + $0x98] sm:$0xff] %vm5586, %v5503
      %5594 = vst.msk [vmem:[#allocation3 + $0xb0] sm:$0xff] %vm5586, %v5505
      %5595 = vst.msk [vmem:[#allocation3 + $0xc8] sm:$0xff] %vm5586, %v5507
      %5596 = vst.msk [vmem:[#allocation3 + $0xe0] sm:$0xff] %vm5586, %v5509
      %5597 = vst.msk [vmem:[#allocation3 + $0xf8] sm:$0xff] %vm5586, %v5511
      %5598 = vst.msk [vmem:[#allocation3 + $0x110] sm:$0xff] %vm5586, %v5513
      %5599 = vst.msk [vmem:[#allocation3 + $0x128] sm:$0xff] %vm5586, %v5515
      %5600 = vst.msk [vmem:[#allocation3 + $0x140] sm:$0xff] %vm5586, %v5517
      %5601 = vst.msk [vmem:[#allocation3 + $0x158] sm:$0xff] %vm5586, %v5519
      %5602 = vst.msk [vmem:[#allocation3 + $0x170] sm:$0xff] %vm5586, %v5521
      %5603 = vst.msk [vmem:[#allocation3 + $0x188] sm:$0xff] %vm5586, %v5523
      %5604 = vst.msk [vmem:[#allocation3 + $0x1a0] sm:$0xff] %vm5586, %v5525
      %5605 = vst.msk [vmem:[#allocation3 + $0x1b8] sm:$0xff] %vm5586, %v5527
      %5606 = vst.msk [vmem:[#allocation3 + $0x1d0] sm:$0xff] %vm5586, %v5529
      %5607 = vst.msk [vmem:[#allocation3 + $0x1e8] sm:$0xff] %vm5586, %v5531
      %5608 = vst.msk [vmem:[#allocation3 + $0x200] sm:$0xff] %vm5586, %v5533
      %5609 = vst.msk [vmem:[#allocation3 + $0x218] sm:$0xff] %vm5586, %v5535
      %5610 = vst.msk [vmem:[#allocation3 + $0x230] sm:$0xff] %vm5586, %v5537
      %5611 = vst.msk [vmem:[#allocation3 + $0x248] sm:$0xff] %vm5586, %v5539
      %5612 = vst.msk [vmem:[#allocation3 + $0x260] sm:$0xff] %vm5586, %v5541
      %5613 = vst.msk [vmem:[#allocation3 + $0x278] sm:$0xff] %vm5586, %v5543
      %5614 = vst.msk [vmem:[#allocation3 + $0x290] sm:$0xff] %vm5586, %v5545
      %5615 = vst.msk [vmem:[#allocation3 + $0x2a8] sm:$0xff] %vm5586, %v5547
      %5616 = vst.msk [vmem:[#allocation3 + $0x2c0] sm:$0xff] %vm5586, %v5549
      %5617 = vst.msk [vmem:[#allocation3 + $0x2d8] sm:$0xff] %vm5586, %v5551
      %5618 = vst.msk [vmem:[#allocation3 + $0x2f0] sm:$0xff] %vm5586, %v5553
      %v5620 = vrot.slane %v4554, 1
      %v5621 = vrot.slane %v4555, 1
      %v5622 = vsel %vm687, %v5620, %v5621
      %v5623 = vrot.slane %v4556, 1
      %v5624 = vsel %vm687, %v5621, %v5623
      %5625 = vrot.lane.b32.xlu0 %v4650, 40
      %v5626 = vpop.permute.xlu0 %5625
      %5627 = vrot.lane.b32.xlu0 %v4652, 40
      %v5628 = vpop.permute.xlu0 %5627
      %5629 = vrot.lane.b32.xlu0 %v4655, 40
      %v5630 = vpop.permute.xlu0 %5629
      %5631 = vrot.lane.b32.xlu0 %v4657, 40
      %v5632 = vpop.permute.xlu0 %5631
      %5633 = vrot.lane.b32.xlu0 %v4660, 40
      %v5634 = vpop.permute.xlu0 %5633
      %5635 = vrot.lane.b32.xlu0 %v4662, 40
      %v5636 = vpop.permute.xlu0 %5635
      %5637 = vrot.lane.b32.xlu0 %v4665, 40
      %v5638 = vpop.permute.xlu0 %5637
      %5639 = vrot.lane.b32.xlu0 %v4667, 40
      %v5640 = vpop.permute.xlu0 %5639
      %5641 = vrot.lane.b32.xlu0 %v4670, 40
      %v5642 = vpop.permute.xlu0 %5641
      %5643 = vrot.lane.b32.xlu0 %v4672, 40
      %v5644 = vpop.permute.xlu0 %5643
      %5645 = vrot.lane.b32.xlu0 %v4675, 40
      %v5646 = vpop.permute.xlu0 %5645
      %5647 = vrot.lane.b32.xlu0 %v4677, 40
      %v5648 = vpop.permute.xlu0 %5647
      %5649 = vrot.lane.b32.xlu0 %v4680, 40
      %v5650 = vpop.permute.xlu0 %5649
      %5651 = vrot.lane.b32.xlu0 %v4682, 40
      %v5652 = vpop.permute.xlu0 %5651
      %5653 = vrot.lane.b32.xlu0 %v4685, 40
      %v5654 = vpop.permute.xlu0 %5653
      %5655 = vrot.lane.b32.xlu0 %v4687, 40
      %v5656 = vpop.permute.xlu0 %5655
      %5657 = vrot.lane.b32.xlu0 %v4690, 40
      %v5658 = vpop.permute.xlu0 %5657
      %5659 = vrot.lane.b32.xlu0 %v4692, 40
      %v5660 = vpop.permute.xlu0 %5659
      %5661 = vrot.lane.b32.xlu0 %v4695, 40
      %v5662 = vpop.permute.xlu0 %5661
      %5663 = vrot.lane.b32.xlu0 %v4697, 40
      %v5664 = vpop.permute.xlu0 %5663
      %5665 = vrot.lane.b32.xlu0 %v4700, 40
      %v5666 = vpop.permute.xlu0 %5665
      %5667 = vrot.lane.b32.xlu0 %v4702, 40
      %v5668 = vpop.permute.xlu0 %5667
      %5669 = vrot.lane.b32.xlu0 %v4705, 40
      %v5670 = vpop.permute.xlu0 %5669
      %5671 = vrot.lane.b32.xlu0 %v4707, 40
      %v5672 = vpop.permute.xlu0 %5671
      %5673 = vrot.lane.b32.xlu0 %v4710, 40
      %v5674 = vpop.permute.xlu0 %5673
      %5675 = vrot.lane.b32.xlu0 %v4712, 40
      %v5676 = vpop.permute.xlu0 %5675
      %5677 = vrot.lane.b32.xlu0 %v4715, 40
      %v5678 = vpop.permute.xlu0 %5677
      %5679 = vrot.lane.b32.xlu0 %v4717, 40
      %v5680 = vpop.permute.xlu0 %5679
      %5681 = vrot.lane.b32.xlu0 %v5190, 40
      %v5682 = vpop.permute.xlu0 %5681
      %5683 = vrot.lane.b32.xlu0 %v5192, 40
      %v5684 = vpop.permute.xlu0 %5683
      %5685 = vrot.lane.b32.xlu0 %v5622, 40
      %v5686 = vpop.permute.xlu0 %5685
      %5687 = vrot.lane.b32.xlu0 %v5624, 40
      %v5688 = vpop.permute.xlu0 %5687
      %vm5721 = vcmask 523584
      %5722 = vst.msk [vmem:[#allocation3 + $0x8] sm:$0xff] %vm5721, %v5626
      %5723 = vst.msk [vmem:[#allocation3 + $0x20] sm:$0xff] %vm5721, %v5628
      %5724 = vst.msk [vmem:[#allocation3 + $0x38] sm:$0xff] %vm5721, %v5630
      %5725 = vst.msk [vmem:[#allocation3 + $0x50] sm:$0xff] %vm5721, %v5632
      %5726 = vst.msk [vmem:[#allocation3 + $0x68] sm:$0xff] %vm5721, %v5634
      %5727 = vst.msk [vmem:[#allocation3 + $0x80] sm:$0xff] %vm5721, %v5636
      %5728 = vst.msk [vmem:[#allocation3 + $0x98] sm:$0xff] %vm5721, %v5638
      %5729 = vst.msk [vmem:[#allocation3 + $0xb0] sm:$0xff] %vm5721, %v5640
      %5730 = vst.msk [vmem:[#allocation3 + $0xc8] sm:$0xff] %vm5721, %v5642
      %5731 = vst.msk [vmem:[#allocation3 + $0xe0] sm:$0xff] %vm5721, %v5644
      %5732 = vst.msk [vmem:[#allocation3 + $0xf8] sm:$0xff] %vm5721, %v5646
      %5733 = vst.msk [vmem:[#allocation3 + $0x110] sm:$0xff] %vm5721, %v5648
      %5734 = vst.msk [vmem:[#allocation3 + $0x128] sm:$0xff] %vm5721, %v5650
      %5735 = vst.msk [vmem:[#allocation3 + $0x140] sm:$0xff] %vm5721, %v5652
      %5736 = vst.msk [vmem:[#allocation3 + $0x158] sm:$0xff] %vm5721, %v5654
      %5737 = vst.msk [vmem:[#allocation3 + $0x170] sm:$0xff] %vm5721, %v5656
      %5738 = vst.msk [vmem:[#allocation3 + $0x188] sm:$0xff] %vm5721, %v5658
      %5739 = vst.msk [vmem:[#allocation3 + $0x1a0] sm:$0xff] %vm5721, %v5660
      %5740 = vst.msk [vmem:[#allocation3 + $0x1b8] sm:$0xff] %vm5721, %v5662
      %5741 = vst.msk [vmem:[#allocation3 + $0x1d0] sm:$0xff] %vm5721, %v5664
      %5742 = vst.msk [vmem:[#allocation3 + $0x1e8] sm:$0xff] %vm5721, %v5666
      %5743 = vst.msk [vmem:[#allocation3 + $0x200] sm:$0xff] %vm5721, %v5668
      %5744 = vst.msk [vmem:[#allocation3 + $0x218] sm:$0xff] %vm5721, %v5670
      %5745 = vst.msk [vmem:[#allocation3 + $0x230] sm:$0xff] %vm5721, %v5672
      %5746 = vst.msk [vmem:[#allocation3 + $0x248] sm:$0xff] %vm5721, %v5674
      %5747 = vst.msk [vmem:[#allocation3 + $0x260] sm:$0xff] %vm5721, %v5676
      %5748 = vst.msk [vmem:[#allocation3 + $0x278] sm:$0xff] %vm5721, %v5678
      %5749 = vst.msk [vmem:[#allocation3 + $0x290] sm:$0xff] %vm5721, %v5680
      %5750 = vst.msk [vmem:[#allocation3 + $0x2a8] sm:$0xff] %vm5721, %v5682
      %5751 = vst.msk [vmem:[#allocation3 + $0x2c0] sm:$0xff] %vm5721, %v5684
      %5752 = vst.msk [vmem:[#allocation3 + $0x2d8] sm:$0xff] %vm5721, %v5686
      %5753 = vst.msk [vmem:[#allocation3 + $0x2f0] sm:$0xff] %vm5721, %v5688
      %v5754 = vrot.slane %v4554, 2
      %v5755 = vrot.slane %v4555, 2
      %v5756 = vsel %vm897, %v5754, %v5755
      %v5757 = vrot.slane %v4556, 2
      %v5758 = vsel %vm897, %v5755, %v5757
      %5759 = vrot.lane.b32.xlu0 %v4859, 64
      %v5760 = vpop.permute.xlu0 %5759
      %5761 = vrot.lane.b32.xlu0 %v4861, 64
      %v5762 = vpop.permute.xlu0 %5761
      %5763 = vrot.lane.b32.xlu0 %v4864, 64
      %v5764 = vpop.permute.xlu0 %5763
      %5765 = vrot.lane.b32.xlu0 %v4866, 64
      %v5766 = vpop.permute.xlu0 %5765
      %5767 = vrot.lane.b32.xlu0 %v4869, 64
      %v5768 = vpop.permute.xlu0 %5767
      %5769 = vrot.lane.b32.xlu0 %v4871, 64
      %v5770 = vpop.permute.xlu0 %5769
      %5771 = vrot.lane.b32.xlu0 %v4874, 64
      %v5772 = vpop.permute.xlu0 %5771
      %5773 = vrot.lane.b32.xlu0 %v4876, 64
      %v5774 = vpop.permute.xlu0 %5773
      %5775 = vrot.lane.b32.xlu0 %v4879, 64
      %v5776 = vpop.permute.xlu0 %5775
      %5777 = vrot.lane.b32.xlu0 %v4881, 64
      %v5778 = vpop.permute.xlu0 %5777
      %5779 = vrot.lane.b32.xlu0 %v4884, 64
      %v5780 = vpop.permute.xlu0 %5779
      %5781 = vrot.lane.b32.xlu0 %v4886, 64
      %v5782 = vpop.permute.xlu0 %5781
      %5783 = vrot.lane.b32.xlu0 %v4889, 64
      %v5784 = vpop.permute.xlu0 %5783
      %5785 = vrot.lane.b32.xlu0 %v4891, 64
      %v5786 = vpop.permute.xlu0 %5785
      %5787 = vrot.lane.b32.xlu0 %v4894, 64
      %v5788 = vpop.permute.xlu0 %5787
      %5789 = vrot.lane.b32.xlu0 %v4896, 64
      %v5790 = vpop.permute.xlu0 %5789
      %5791 = vrot.lane.b32.xlu0 %v4899, 64
      %v5792 = vpop.permute.xlu0 %5791
      %5793 = vrot.lane.b32.xlu0 %v4901, 64
      %v5794 = vpop.permute.xlu0 %5793
      %5795 = vrot.lane.b32.xlu0 %v4904, 64
      %v5796 = vpop.permute.xlu0 %5795
      %5797 = vrot.lane.b32.xlu0 %v4906, 64
      %v5798 = vpop.permute.xlu0 %5797
      %5799 = vrot.lane.b32.xlu0 %v4909, 64
      %v5800 = vpop.permute.xlu0 %5799
      %5801 = vrot.lane.b32.xlu0 %v4911, 64
      %v5802 = vpop.permute.xlu0 %5801
      %5803 = vrot.lane.b32.xlu0 %v4914, 64
      %v5804 = vpop.permute.xlu0 %5803
      %5805 = vrot.lane.b32.xlu0 %v4916, 64
      %v5806 = vpop.permute.xlu0 %5805
      %5807 = vrot.lane.b32.xlu0 %v4919, 64
      %v5808 = vpop.permute.xlu0 %5807
      %5809 = vrot.lane.b32.xlu0 %v4921, 64
      %v5810 = vpop.permute.xlu0 %5809
      %5811 = vrot.lane.b32.xlu0 %v4924, 64
      %v5812 = vpop.permute.xlu0 %5811
      %5813 = vrot.lane.b32.xlu0 %v4926, 64
      %v5814 = vpop.permute.xlu0 %5813
      %5815 = vrot.lane.b32.xlu0 %v5324, 64
      %v5816 = vpop.permute.xlu0 %5815
      %5817 = vrot.lane.b32.xlu0 %v5326, 64
      %v5818 = vpop.permute.xlu0 %5817
      %5819 = vrot.lane.b32.xlu0 %v5756, 64
      %v5820 = vpop.permute.xlu0 %5819
      %5821 = vrot.lane.b32.xlu0 %v5758, 64
      %v5822 = vpop.permute.xlu0 %5821
      %vm5855 = vcmask 720384
      %5856 = vst.msk [vmem:[#allocation3 + $0x8] sm:$0xff] %vm5855, %v5760
      %5857 = vst.msk [vmem:[#allocation3 + $0x20] sm:$0xff] %vm5855, %v5762
      %5858 = vst.msk [vmem:[#allocation3 + $0x38] sm:$0xff] %vm5855, %v5764
      %5859 = vst.msk [vmem:[#allocation3 + $0x50] sm:$0xff] %vm5855, %v5766
      %5860 = vst.msk [vmem:[#allocation3 + $0x68] sm:$0xff] %vm5855, %v5768
      %5861 = vst.msk [vmem:[#allocation3 + $0x80] sm:$0xff] %vm5855, %v5770
      %5862 = vst.msk [vmem:[#allocation3 + $0x98] sm:$0xff] %vm5855, %v5772
      %5863 = vst.msk [vmem:[#allocation3 + $0xb0] sm:$0xff] %vm5855, %v5774
      %5864 = vst.msk [vmem:[#allocation3 + $0xc8] sm:$0xff] %vm5855, %v5776
      %5865 = vst.msk [vmem:[#allocation3 + $0xe0] sm:$0xff] %vm5855, %v5778
      %5866 = vst.msk [vmem:[#allocation3 + $0xf8] sm:$0xff] %vm5855, %v5780
      %5867 = vst.msk [vmem:[#allocation3 + $0x110] sm:$0xff] %vm5855, %v5782
      %5868 = vst.msk [vmem:[#allocation3 + $0x128] sm:$0xff] %vm5855, %v5784
      %5869 = vst.msk [vmem:[#allocation3 + $0x140] sm:$0xff] %vm5855, %v5786
      %5870 = vst.msk [vmem:[#allocation3 + $0x158] sm:$0xff] %vm5855, %v5788
      %5871 = vst.msk [vmem:[#allocation3 + $0x170] sm:$0xff] %vm5855, %v5790
      %5872 = vst.msk [vmem:[#allocation3 + $0x188] sm:$0xff] %vm5855, %v5792
      %5873 = vst.msk [vmem:[#allocation3 + $0x1a0] sm:$0xff] %vm5855, %v5794
      %5874 = vst.msk [vmem:[#allocation3 + $0x1b8] sm:$0xff] %vm5855, %v5796
      %5875 = vst.msk [vmem:[#allocation3 + $0x1d0] sm:$0xff] %vm5855, %v5798
      %5876 = vst.msk [vmem:[#allocation3 + $0x1e8] sm:$0xff] %vm5855, %v5800
      %5877 = vst.msk [vmem:[#allocation3 + $0x200] sm:$0xff] %vm5855, %v5802
      %5878 = vst.msk [vmem:[#allocation3 + $0x218] sm:$0xff] %vm5855, %v5804
      %5879 = vst.msk [vmem:[#allocation3 + $0x230] sm:$0xff] %vm5855, %v5806
      %5880 = vst.msk [vmem:[#allocation3 + $0x248] sm:$0xff] %vm5855, %v5808
      %5881 = vst.msk [vmem:[#allocation3 + $0x260] sm:$0xff] %vm5855, %v5810
      %5882 = vst.msk [vmem:[#allocation3 + $0x278] sm:$0xff] %vm5855, %v5812
      %5883 = vst.msk [vmem:[#allocation3 + $0x290] sm:$0xff] %vm5855, %v5814
      %5884 = vst.msk [vmem:[#allocation3 + $0x2a8] sm:$0xff] %vm5855, %v5816
      %5885 = vst.msk [vmem:[#allocation3 + $0x2c0] sm:$0xff] %vm5855, %v5818
      %5886 = vst.msk [vmem:[#allocation3 + $0x2d8] sm:$0xff] %vm5855, %v5820
      %5887 = vst.msk [vmem:[#allocation3 + $0x2f0] sm:$0xff] %vm5855, %v5822
      %v5888 = vld [vmem:[#allocation3] sm:$0xff]
      %v5889 = vld [vmem:[#allocation3 + $0x8] sm:$0xff]
      %v5890 = vld [vmem:[#allocation3 + $0x18] sm:$0xff]
      %v5891 = vld [vmem:[#allocation3 + $0x20] sm:$0xff]
      %v5892 = vld [vmem:[#allocation3 + $0x30] sm:$0xff]
      %v5893 = vld [vmem:[#allocation3 + $0x38] sm:$0xff]
      %v5894 = vld [vmem:[#allocation3 + $0x48] sm:$0xff]
      %v5895 = vld [vmem:[#allocation3 + $0x50] sm:$0xff]
      %v5896 = vld [vmem:[#allocation3 + $0x60] sm:$0xff]
      %v5897 = vld [vmem:[#allocation3 + $0x68] sm:$0xff]
      %v5898 = vld [vmem:[#allocation3 + $0x78] sm:$0xff]
      %v5899 = vld [vmem:[#allocation3 + $0x80] sm:$0xff]
      %v5900 = vld [vmem:[#allocation3 + $0x90] sm:$0xff]
      %v5901 = vld [vmem:[#allocation3 + $0x98] sm:$0xff]
      %v5902 = vld [vmem:[#allocation3 + $0xa8] sm:$0xff]
      %v5903 = vld [vmem:[#allocation3 + $0xb0] sm:$0xff]
      %v5904 = vld [vmem:[#allocation3 + $0xc0] sm:$0xff]
      %v5905 = vld [vmem:[#allocation3 + $0xc8] sm:$0xff]
      %v5906 = vld [vmem:[#allocation3 + $0xd8] sm:$0xff]
      %v5907 = vld [vmem:[#allocation3 + $0xe0] sm:$0xff]
      %v5908 = vld [vmem:[#allocation3 + $0xf0] sm:$0xff]
      %v5909 = vld [vmem:[#allocation3 + $0xf8] sm:$0xff]
      %v5910 = vld [vmem:[#allocation3 + $0x108] sm:$0xff]
      %v5911 = vld [vmem:[#allocation3 + $0x110] sm:$0xff]
      %v5912 = vld [vmem:[#allocation3 + $0x120] sm:$0xff]
      %v5913 = vld [vmem:[#allocation3 + $0x128] sm:$0xff]
      %v5914 = vld [vmem:[#allocation3 + $0x138] sm:$0xff]
      %v5915 = vld [vmem:[#allocation3 + $0x140] sm:$0xff]
      %v5916 = vld [vmem:[#allocation3 + $0x150] sm:$0xff]
      %v5917 = vld [vmem:[#allocation3 + $0x158] sm:$0xff]
      %v5918 = vld [vmem:[#allocation3 + $0x168] sm:$0xff]
      %v5919 = vld [vmem:[#allocation3 + $0x170] sm:$0xff]
      %v5920 = vld [vmem:[#allocation3 + $0x180] sm:$0xff]
      %v5921 = vld [vmem:[#allocation3 + $0x188] sm:$0xff]
      %v5922 = vld [vmem:[#allocation3 + $0x198] sm:$0xff]
      %v5923 = vld [vmem:[#allocation3 + $0x1a0] sm:$0xff]
      %v5924 = vld [vmem:[#allocation3 + $0x1b0] sm:$0xff]
      %v5925 = vld [vmem:[#allocation3 + $0x1b8] sm:$0xff]
      %v5926 = vld [vmem:[#allocation3 + $0x1c8] sm:$0xff]
      %v5927 = vld [vmem:[#allocation3 + $0x1d0] sm:$0xff]
      %v5928 = vld [vmem:[#allocation3 + $0x1e0] sm:$0xff]
      %v5929 = vld [vmem:[#allocation3 + $0x1e8] sm:$0xff]
      %v5930 = vld [vmem:[#allocation3 + $0x1f8] sm:$0xff]
      %v5931 = vld [vmem:[#allocation3 + $0x200] sm:$0xff]
      %v5932 = vld [vmem:[#allocation3 + $0x210] sm:$0xff]
      %v5933 = vld [vmem:[#allocation3 + $0x218] sm:$0xff]
      %v5934 = vld [vmem:[#allocation3 + $0x228] sm:$0xff]
      %v5935 = vld [vmem:[#allocation3 + $0x230] sm:$0xff]
      %v5936 = vld [vmem:[#allocation3 + $0x240] sm:$0xff]
      %v5937 = vld [vmem:[#allocation3 + $0x248] sm:$0xff]
      %v5938 = vld [vmem:[#allocation3 + $0x258] sm:$0xff]
      %v5939 = vld [vmem:[#allocation3 + $0x260] sm:$0xff]
      %v5940 = vld [vmem:[#allocation3 + $0x270] sm:$0xff]
      %v5941 = vld [vmem:[#allocation3 + $0x278] sm:$0xff]
      %v5942 = vld [vmem:[#allocation3 + $0x288] sm:$0xff]
      %v5943 = vld [vmem:[#allocation3 + $0x290] sm:$0xff]
      %v5944 = vld [vmem:[#allocation3 + $0x2a0] sm:$0xff]
      %v5945 = vld [vmem:[#allocation3 + $0x2a8] sm:$0xff]
      %v5946 = vld [vmem:[#allocation3 + $0x2b8] sm:$0xff]
      %v5947 = vld [vmem:[#allocation3 + $0x2c0] sm:$0xff]
      %v5948 = vld [vmem:[#allocation3 + $0x2d0] sm:$0xff]
      %v5949 = vld [vmem:[#allocation3 + $0x2d8] sm:$0xff]
      %v5950 = vld [vmem:[#allocation3 + $0x2e8] sm:$0xff]
      %v5951 = vld [vmem:[#allocation3 + $0x2f0] sm:$0xff]
      %v5952 = vld [vmem:[%s3] sm:$0xff]
      %v5953 = vld [vmem:[%s3 + $0x8] sm:$0xff]
      %v5954 = vld [vmem:[%s3 + $0x10] sm:$0xff]
      %v5955 = vld [vmem:[%s3 + $0x18] sm:$0xff]
      %v5956 = vld [vmem:[%s3 + $0x20] sm:$0xff]
      %v5957 = vld [vmem:[%s3 + $0x28] sm:$0xff]
      %v5958 = vld [vmem:[%s3 + $0x30] sm:$0xff]
      %v5959 = vld [vmem:[%s3 + $0x38] sm:$0xff]
      %v5960 = vld [vmem:[%s3 + $0x40] sm:$0xff]
      %v5961 = vld [vmem:[%s3 + $0x48] sm:$0xff]
      %v5962 = vld [vmem:[%s3 + $0x50] sm:$0xff]
      %v5963 = vld [vmem:[%s3 + $0x58] sm:$0xff]
      %v5964 = vld [vmem:[%s3 + $0x60] sm:$0xff]
      %v5965 = vld [vmem:[%s3 + $0x68] sm:$0xff]
      %v5966 = vld [vmem:[%s3 + $0x70] sm:$0xff]
      %v5967 = vld [vmem:[%s3 + $0x78] sm:$0xff]
      %v5968 = vld [vmem:[%s3 + $0x80] sm:$0xff]
      %v5969 = vld [vmem:[%s3 + $0x88] sm:$0xff]
      %v5970 = vld [vmem:[%s3 + $0x90] sm:$0xff]
      %v5971 = vld [vmem:[%s3 + $0x98] sm:$0xff]
      %v5972 = vld [vmem:[%s3 + $0xa0] sm:$0xff]
      %v5973 = vld [vmem:[%s3 + $0xa8] sm:$0xff]
      %v5974 = vld [vmem:[%s3 + $0xb0] sm:$0xff]
      %v5975 = vld [vmem:[%s3 + $0xb8] sm:$0xff]
      %v5976 = vld [vmem:[%s3 + $0xc0] sm:$0xff]
      %v5977 = vld [vmem:[%s3 + $0xc8] sm:$0xff]
      %v5978 = vld [vmem:[%s3 + $0xd0] sm:$0xff]
      %s5979 = scalar_lea.vmem %s6, 2
      %v5980 = vld [vmem:[%s5979] sm:$0x1]
      %v5982 = vperm.slane %v5980, 0
      %vm5984 = vcmask 719872
      %v5986 = vsel %vm5984, %v5889, 0
      %v5989 = vsel %vm5984, %v5891, 0
      %v5992 = vsel %vm5984, %v5893, 0
      %v5995 = vsel %vm5984, %v5895, 0
      %v5998 = vsel %vm5984, %v5897, 0
      %v6001 = vsel %vm5984, %v5899, 0
      %v6004 = vsel %vm5984, %v5901, 0
      %v6007 = vsel %vm5984, %v5903, 0
      %v6010 = vsel %vm5984, %v5905, 0
      %v6013 = vsel %vm5984, %v5907, 0
      %v6016 = vsel %vm5984, %v5909, 0
      %v6019 = vsel %vm5984, %v5911, 0
      %v6022 = vsel %vm5984, %v5913, 0
      %v6025 = vsel %vm5984, %v5915, 0
      %v6028 = vsel %vm5984, %v5917, 0
      %v6031 = vsel %vm5984, %v5919, 0
      %v6034 = vsel %vm5984, %v5921, 0
      %v6037 = vsel %vm5984, %v5923, 0
      %v6040 = vsel %vm5984, %v5925, 0
      %v6043 = vsel %vm5984, %v5927, 0
      %v6046 = vsel %vm5984, %v5929, 0
      %v6049 = vsel %vm5984, %v5931, 0
      %v6052 = vsel %vm5984, %v5933, 0
      %v6055 = vsel %vm5984, %v5935, 0
      %v6058 = vsel %vm5984, %v5937, 0
      %v6061 = vsel %vm5984, %v5939, 0
      %v6064 = vsel %vm5984, %v5941, 0
      %v6067 = vsel %vm5984, %v5943, 0
      %v6070 = vsel %vm5984, %v5945, 0
      %v6073 = vsel %vm5984, %v5947, 0
      %v6076 = vsel %vm5984, %v5949, 0
      %v6079 = vsel %vm5984, %v5951, 0
      %6081 = vmatpush.msra.mxu0 %v5967
      %6082 = vmatpush.msra.mxu0 %v5966
      %6083 = vmatpush.msra.mxu0 %v5965
      %6084 = vmatpush.msra.mxu0 %v5964
      %6085 = vmatpush.msra.mxu0 %v5963
      %6086 = vmatpush.msra.mxu0 %v5962
      %6087 = vmatpush.msra.mxu0 %v5961
      %6088 = vmatpush.msra.mxu0 %v5960
      %6089 = vmatpush.msra.mxu0 %v5959
      %6090 = vmatpush.msra.mxu0 %v5958
      %6091 = vmatpush.msra.mxu0 %v5957
      %6092 = vmatpush.msra.mxu0 %v5956
      %6093 = vmatpush.msra.mxu0 %v5955
      %6094 = vmatpush.msra.mxu0 %v5954
      %6095 = vmatpush.msra.mxu0 %v5953
      %6096 = vmatpush.msra.mxu0 %v5952
      %6097 = vmatmul.f32.gmra.mxu0 %v5888
      %v6098 = vpop.f32.mrf.mxu0
      %v6099 = vadd.f32 %v5982, %v6098
      %6100 = vmatmul.f32.gmra.mxu0 %v5890
      %v6101 = vpop.f32.mrf.mxu0
      %v6102 = vadd.f32 %v5982, %v6101
      %6103 = vmatmul.f32.gmra.mxu0 %v5892
      %v6104 = vpop.f32.mrf.mxu0
      %v6105 = vadd.f32 %v5982, %v6104
      %6106 = vmatmul.f32.gmra.mxu0 %v5894
      %v6107 = vpop.f32.mrf.mxu0
      %v6108 = vadd.f32 %v5982, %v6107
      %6109 = vmatmul.f32.gmra.mxu0 %v5896
      %v6110 = vpop.f32.mrf.mxu0
      %v6111 = vadd.f32 %v5982, %v6110
      %6112 = vmatmul.f32.gmra.mxu0 %v5898
      %v6113 = vpop.f32.mrf.mxu0
      %v6114 = vadd.f32 %v5982, %v6113
      %6115 = vmatmul.f32.gmra.mxu0 %v5900
      %v6116 = vpop.f32.mrf.mxu0
      %v6117 = vadd.f32 %v5982, %v6116
      %6118 = vmatmul.f32.gmra.mxu0 %v5902
      %v6119 = vpop.f32.mrf.mxu0
      %v6120 = vadd.f32 %v5982, %v6119
      %6121 = vmatmul.f32.gmra.mxu0 %v5904
      %v6122 = vpop.f32.mrf.mxu0
      %v6123 = vadd.f32 %v5982, %v6122
      %6124 = vmatmul.f32.gmra.mxu0 %v5906
      %v6125 = vpop.f32.mrf.mxu0
      %v6126 = vadd.f32 %v5982, %v6125
      %6127 = vmatmul.f32.gmra.mxu0 %v5908
      %v6128 = vpop.f32.mrf.mxu0
      %v6129 = vadd.f32 %v5982, %v6128
      %6130 = vmatmul.f32.gmra.mxu0 %v5910
      %v6131 = vpop.f32.mrf.mxu0
      %v6132 = vadd.f32 %v5982, %v6131
      %6133 = vmatmul.f32.gmra.mxu0 %v5912
      %v6134 = vpop.f32.mrf.mxu0
      %v6135 = vadd.f32 %v5982, %v6134
      %6136 = vmatmul.f32.gmra.mxu0 %v5914
      %v6137 = vpop.f32.mrf.mxu0
      %v6138 = vadd.f32 %v5982, %v6137
      %6139 = vmatmul.f32.gmra.mxu0 %v5916
      %v6140 = vpop.f32.mrf.mxu0
      %v6141 = vadd.f32 %v5982, %v6140
      %6142 = vmatmul.f32.gmra.mxu0 %v5918
      %v6143 = vpop.f32.mrf.mxu0
      %v6144 = vadd.f32 %v5982, %v6143
      %6145 = vmatmul.f32.gmra.mxu0 %v5920
      %v6146 = vpop.f32.mrf.mxu0
      %v6147 = vadd.f32 %v5982, %v6146
      %6148 = vmatmul.f32.gmra.mxu0 %v5922
      %v6149 = vpop.f32.mrf.mxu0
      %v6150 = vadd.f32 %v5982, %v6149
      %6151 = vmatmul.f32.gmra.mxu0 %v5924
      %v6152 = vpop.f32.mrf.mxu0
      %v6153 = vadd.f32 %v5982, %v6152
      %6154 = vmatmul.f32.gmra.mxu0 %v5926
      %v6155 = vpop.f32.mrf.mxu0
      %v6156 = vadd.f32 %v5982, %v6155
      %6157 = vmatmul.f32.gmra.mxu0 %v5928
      %v6158 = vpop.f32.mrf.mxu0
      %v6159 = vadd.f32 %v5982, %v6158
      %6160 = vmatmul.f32.gmra.mxu0 %v5930
      %v6161 = vpop.f32.mrf.mxu0
      %v6162 = vadd.f32 %v5982, %v6161
      %6163 = vmatmul.f32.gmra.mxu0 %v5932
      %v6164 = vpop.f32.mrf.mxu0
      %v6165 = vadd.f32 %v5982, %v6164
      %6166 = vmatmul.f32.gmra.mxu0 %v5934
      %v6167 = vpop.f32.mrf.mxu0
      %v6168 = vadd.f32 %v5982, %v6167
      %6169 = vmatmul.f32.gmra.mxu0 %v5936
      %v6170 = vpop.f32.mrf.mxu0
      %v6171 = vadd.f32 %v5982, %v6170
      %6172 = vmatmul.f32.gmra.mxu0 %v5938
      %v6173 = vpop.f32.mrf.mxu0
      %v6174 = vadd.f32 %v5982, %v6173
      %6175 = vmatmul.f32.gmra.mxu0 %v5940
      %v6176 = vpop.f32.mrf.mxu0
      %v6177 = vadd.f32 %v5982, %v6176
      %6178 = vmatmul.f32.gmra.mxu0 %v5942
      %v6179 = vpop.f32.mrf.mxu0
      %v6180 = vadd.f32 %v5982, %v6179
      %6181 = vmatmul.f32.gmra.mxu0 %v5944
      %v6182 = vpop.f32.mrf.mxu0
      %v6183 = vadd.f32 %v5982, %v6182
      %6184 = vmatmul.f32.gmra.mxu0 %v5946
      %v6185 = vpop.f32.mrf.mxu0
      %v6186 = vadd.f32 %v5982, %v6185
      %6187 = vmatmul.f32.gmra.mxu0 %v5948
      %v6188 = vpop.f32.mrf.mxu0
      %v6189 = vadd.f32 %v5982, %v6188
      %6190 = vmatmul.f32.gmra.mxu0 %v5950
      %v6191 = vpop.f32.mrf.mxu0
      %v6192 = vadd.f32 %v5982, %v6191
      %6193 = vdwg.mxu0
      %6194 = vmatpush.msra.mxu0 0.0
      %6195 = vmatpush.msra.mxu0 0.0
      %6196 = vmatpush.msra.mxu0 0.0
      %6197 = vmatpush.msra.mxu0 0.0
      %6198 = vmatpush.msra.mxu0 0.0
      %6199 = vmatpush.msra.mxu0 %v5978
      %6200 = vmatpush.msra.mxu0 %v5977
      %6201 = vmatpush.msra.mxu0 %v5976
      %6202 = vmatpush.msra.mxu0 %v5975
      %6203 = vmatpush.msra.mxu0 %v5974
      %6204 = vmatpush.msra.mxu0 %v5973
      %6205 = vmatpush.msra.mxu0 %v5972
      %6206 = vmatpush.msra.mxu0 %v5971
      %6207 = vmatpush.msra.mxu0 %v5970
      %6208 = vmatpush.msra.mxu0 %v5969
      %6209 = vmatpush.msra.mxu0 %v5968
      %6210 = vmatmul.f32.gmra.mxu0 %v5986
      %v6211 = vpop.f32.mrf.mxu0
      %v6212 = vadd.f32 %v6099, %v6211
      %6213 = vmatmul.f32.gmra.mxu0 %v5989
      %v6214 = vpop.f32.mrf.mxu0
      %v6215 = vadd.f32 %v6102, %v6214
      %6216 = vmatmul.f32.gmra.mxu0 %v5992
      %v6217 = vpop.f32.mrf.mxu0
      %v6218 = vadd.f32 %v6105, %v6217
      %6219 = vmatmul.f32.gmra.mxu0 %v5995
      %v6220 = vpop.f32.mrf.mxu0
      %v6221 = vadd.f32 %v6108, %v6220
      %6222 = vmatmul.f32.gmra.mxu0 %v5998
      %v6223 = vpop.f32.mrf.mxu0
      %v6224 = vadd.f32 %v6111, %v6223
      %6225 = vmatmul.f32.gmra.mxu0 %v6001
      %v6226 = vpop.f32.mrf.mxu0
      %v6227 = vadd.f32 %v6114, %v6226
      %6228 = vmatmul.f32.gmra.mxu0 %v6004
      %v6229 = vpop.f32.mrf.mxu0
      %v6230 = vadd.f32 %v6117, %v6229
      %6231 = vmatmul.f32.gmra.mxu0 %v6007
      %v6232 = vpop.f32.mrf.mxu0
      %v6233 = vadd.f32 %v6120, %v6232
      %6234 = vmatmul.f32.gmra.mxu0 %v6010
      %v6235 = vpop.f32.mrf.mxu0
      %v6236 = vadd.f32 %v6123, %v6235
      %6237 = vmatmul.f32.gmra.mxu0 %v6013
      %v6238 = vpop.f32.mrf.mxu0
      %v6239 = vadd.f32 %v6126, %v6238
      %6240 = vmatmul.f32.gmra.mxu0 %v6016
      %v6241 = vpop.f32.mrf.mxu0
      %v6242 = vadd.f32 %v6129, %v6241
      %6243 = vmatmul.f32.gmra.mxu0 %v6019
      %v6244 = vpop.f32.mrf.mxu0
      %v6245 = vadd.f32 %v6132, %v6244
      %6246 = vmatmul.f32.gmra.mxu0 %v6022
      %v6247 = vpop.f32.mrf.mxu0
      %v6248 = vadd.f32 %v6135, %v6247
      %6249 = vmatmul.f32.gmra.mxu0 %v6025
      %v6250 = vpop.f32.mrf.mxu0
      %v6251 = vadd.f32 %v6138, %v6250
      %6252 = vmatmul.f32.gmra.mxu0 %v6028
      %v6253 = vpop.f32.mrf.mxu0
      %v6254 = vadd.f32 %v6141, %v6253
      %6255 = vmatmul.f32.gmra.mxu0 %v6031
      %v6256 = vpop.f32.mrf.mxu0
      %v6257 = vadd.f32 %v6144, %v6256
      %6258 = vmatmul.f32.gmra.mxu0 %v6034
      %v6259 = vpop.f32.mrf.mxu0
      %v6260 = vadd.f32 %v6147, %v6259
      %6261 = vmatmul.f32.gmra.mxu0 %v6037
      %v6262 = vpop.f32.mrf.mxu0
      %v6263 = vadd.f32 %v6150, %v6262
      %6264 = vmatmul.f32.gmra.mxu0 %v6040
      %v6265 = vpop.f32.mrf.mxu0
      %v6266 = vadd.f32 %v6153, %v6265
      %6267 = vmatmul.f32.gmra.mxu0 %v6043
      %v6268 = vpop.f32.mrf.mxu0
      %v6269 = vadd.f32 %v6156, %v6268
      %6270 = vmatmul.f32.gmra.mxu0 %v6046
      %v6271 = vpop.f32.mrf.mxu0
      %v6272 = vadd.f32 %v6159, %v6271
      %6273 = vmatmul.f32.gmra.mxu0 %v6049
      %v6274 = vpop.f32.mrf.mxu0
      %v6275 = vadd.f32 %v6162, %v6274
      %6276 = vmatmul.f32.gmra.mxu0 %v6052
      %v6277 = vpop.f32.mrf.mxu0
      %v6278 = vadd.f32 %v6165, %v6277
      %6279 = vmatmul.f32.gmra.mxu0 %v6055
      %v6280 = vpop.f32.mrf.mxu0
      %v6281 = vadd.f32 %v6168, %v6280
      %6282 = vmatmul.f32.gmra.mxu0 %v6058
      %v6283 = vpop.f32.mrf.mxu0
      %v6284 = vadd.f32 %v6171, %v6283
      %6285 = vmatmul.f32.gmra.mxu0 %v6061
      %v6286 = vpop.f32.mrf.mxu0
      %v6287 = vadd.f32 %v6174, %v6286
      %6288 = vmatmul.f32.gmra.mxu0 %v6064
      %v6289 = vpop.f32.mrf.mxu0
      %v6290 = vadd.f32 %v6177, %v6289
      %6291 = vmatmul.f32.gmra.mxu0 %v6067
      %v6292 = vpop.f32.mrf.mxu0
      %v6293 = vadd.f32 %v6180, %v6292
      %6294 = vmatmul.f32.gmra.mxu0 %v6070
      %v6295 = vpop.f32.mrf.mxu0
      %v6296 = vadd.f32 %v6183, %v6295
      %6297 = vmatmul.f32.gmra.mxu0 %v6073
      %v6298 = vpop.f32.mrf.mxu0
      %v6299 = vadd.f32 %v6186, %v6298
      %6300 = vmatmul.f32.gmra.mxu0 %v6076
      %v6301 = vpop.f32.mrf.mxu0
      %v6302 = vadd.f32 %v6189, %v6301
      %6303 = vmatmul.f32.gmra.mxu0 %v6079
      %v6304 = vpop.f32.mrf.mxu0
      %v6305 = vadd.f32 %v6192, %v6304
      %6306 = vdwg.mxu0
      %6339 = vrot.lane.b32.xlu0 %v6212, 24
      %v6340 = vpop.permute.xlu0 %6339
      %6341 = vrot.lane.b32.xlu0 %v6215, 24
      %v6342 = vpop.permute.xlu0 %6341
      %6343 = vrot.lane.b32.xlu0 %v6218, 24
      %v6344 = vpop.permute.xlu0 %6343
      %6345 = vrot.lane.b32.xlu0 %v6221, 24
      %v6346 = vpop.permute.xlu0 %6345
      %6347 = vrot.lane.b32.xlu0 %v6224, 24
      %v6348 = vpop.permute.xlu0 %6347
      %6349 = vrot.lane.b32.xlu0 %v6227, 24
      %v6350 = vpop.permute.xlu0 %6349
      %6351 = vrot.lane.b32.xlu0 %v6230, 24
      %v6352 = vpop.permute.xlu0 %6351
      %6353 = vrot.lane.b32.xlu0 %v6233, 24
      %v6354 = vpop.permute.xlu0 %6353
      %6355 = vrot.lane.b32.xlu0 %v6236, 24
      %v6356 = vpop.permute.xlu0 %6355
      %6357 = vrot.lane.b32.xlu0 %v6239, 24
      %v6358 = vpop.permute.xlu0 %6357
      %6359 = vrot.lane.b32.xlu0 %v6242, 24
      %v6360 = vpop.permute.xlu0 %6359
      %6361 = vrot.lane.b32.xlu0 %v6245, 24
      %v6362 = vpop.permute.xlu0 %6361
      %6363 = vrot.lane.b32.xlu0 %v6248, 24
      %v6364 = vpop.permute.xlu0 %6363
      %6365 = vrot.lane.b32.xlu0 %v6251, 24
      %v6366 = vpop.permute.xlu0 %6365
      %6367 = vrot.lane.b32.xlu0 %v6254, 24
      %v6368 = vpop.permute.xlu0 %6367
      %6369 = vrot.lane.b32.xlu0 %v6257, 24
      %v6370 = vpop.permute.xlu0 %6369
      %6371 = vrot.lane.b32.xlu0 %v6260, 24
      %v6372 = vpop.permute.xlu0 %6371
      %6373 = vrot.lane.b32.xlu0 %v6263, 24
      %v6374 = vpop.permute.xlu0 %6373
      %6375 = vrot.lane.b32.xlu0 %v6266, 24
      %v6376 = vpop.permute.xlu0 %6375
      %6377 = vrot.lane.b32.xlu0 %v6269, 24
      %v6378 = vpop.permute.xlu0 %6377
      %6379 = vrot.lane.b32.xlu0 %v6272, 24
      %v6380 = vpop.permute.xlu0 %6379
      %6381 = vrot.lane.b32.xlu0 %v6275, 24
      %v6382 = vpop.permute.xlu0 %6381
      %6383 = vrot.lane.b32.xlu0 %v6278, 24
      %v6384 = vpop.permute.xlu0 %6383
      %6385 = vrot.lane.b32.xlu0 %v6281, 24
      %v6386 = vpop.permute.xlu0 %6385
      %6387 = vrot.lane.b32.xlu0 %v6284, 24
      %v6388 = vpop.permute.xlu0 %6387
      %6389 = vrot.lane.b32.xlu0 %v6287, 24
      %v6390 = vpop.permute.xlu0 %6389
      %6391 = vrot.lane.b32.xlu0 %v6290, 24
      %v6392 = vpop.permute.xlu0 %6391
      %6393 = vrot.lane.b32.xlu0 %v6293, 24
      %v6394 = vpop.permute.xlu0 %6393
      %6395 = vrot.lane.b32.xlu0 %v6296, 24
      %v6396 = vpop.permute.xlu0 %6395
      %6397 = vrot.lane.b32.xlu0 %v6299, 24
      %v6398 = vpop.permute.xlu0 %6397
      %6399 = vrot.lane.b32.xlu0 %v6302, 24
      %v6400 = vpop.permute.xlu0 %6399
      %6401 = vrot.lane.b32.xlu0 %v6305, 24
      %v6402 = vpop.permute.xlu0 %6401
      %6435 = vst.msk [vmem:[%s357 + $0x1] sm:$0xff] %vm1205, %v6340
      %6436 = vst.msk [vmem:[%s357 + $0x9] sm:$0xff] %vm1205, %v6342
      %6437 = vst.msk [vmem:[%s357 + $0x19] sm:$0xff] %vm1205, %v6344
      %6438 = vst.msk [vmem:[%s357 + $0x21] sm:$0xff] %vm1205, %v6346
      %6439 = vst.msk [vmem:[%s357 + $0x31] sm:$0xff] %vm1205, %v6348
      %6440 = vst.msk [vmem:[%s357 + $0x39] sm:$0xff] %vm1205, %v6350
      %6441 = vst.msk [vmem:[%s357 + $0x49] sm:$0xff] %vm1205, %v6352
      %6442 = vst.msk [vmem:[%s357 + $0x51] sm:$0xff] %vm1205, %v6354
      %6443 = vst.msk [vmem:[%s357 + $0x61] sm:$0xff] %vm1205, %v6356
      %6444 = vst.msk [vmem:[%s357 + $0x69] sm:$0xff] %vm1205, %v6358
      %6445 = vst.msk [vmem:[%s357 + $0x79] sm:$0xff] %vm1205, %v6360
      %6446 = vst.msk [vmem:[%s357 + $0x81] sm:$0xff] %vm1205, %v6362
      %6447 = vst.msk [vmem:[%s357 + $0x91] sm:$0xff] %vm1205, %v6364
      %6448 = vst.msk [vmem:[%s357 + $0x99] sm:$0xff] %vm1205, %v6366
      %6449 = vst.msk [vmem:[%s357 + $0xa9] sm:$0xff] %vm1205, %v6368
      %6450 = vst.msk [vmem:[%s357 + $0xb1] sm:$0xff] %vm1205, %v6370
      %6451 = vst.msk [vmem:[%s357 + $0xc1] sm:$0xff] %vm1205, %v6372
      %6452 = vst.msk [vmem:[%s357 + $0xc9] sm:$0xff] %vm1205, %v6374
      %6453 = vst.msk [vmem:[%s357 + $0xd9] sm:$0xff] %vm1205, %v6376
      %6454 = vst.msk [vmem:[%s357 + $0xe1] sm:$0xff] %vm1205, %v6378
      %6455 = vst.msk [vmem:[%s357 + $0xf1] sm:$0xff] %vm1205, %v6380
      %6456 = vst.msk [vmem:[%s357 + $0xf9] sm:$0xff] %vm1205, %v6382
      %6457 = vst.msk [vmem:[%s357 + $0x109] sm:$0xff] %vm1205, %v6384
      %6458 = vst.msk [vmem:[%s357 + $0x111] sm:$0xff] %vm1205, %v6386
      %6459 = vst.msk [vmem:[%s357 + $0x121] sm:$0xff] %vm1205, %v6388
      %6460 = vst.msk [vmem:[%s357 + $0x129] sm:$0xff] %vm1205, %v6390
      %6461 = vst.msk [vmem:[%s357 + $0x139] sm:$0xff] %vm1205, %v6392
      %6462 = vst.msk [vmem:[%s357 + $0x141] sm:$0xff] %vm1205, %v6394
      %6463 = vst.msk [vmem:[%s357 + $0x151] sm:$0xff] %vm1205, %v6396
      %6464 = vst.msk [vmem:[%s357 + $0x159] sm:$0xff] %vm1205, %v6398
      %6465 = vst.msk [vmem:[%s357 + $0x169] sm:$0xff] %vm1205, %v6400
      %6466 = vst.msk [vmem:[%s357 + $0x171] sm:$0xff] %vm1205, %v6402
      %v6467 = vld [vmem:[#allocation2] sm:$0xff]
      %v6468 = vld [vmem:[#allocation2 + $0x8] sm:$0xff]
      %v6469 = vld [vmem:[#allocation2 + $0x10] sm:$0x3]
      %v6470 = vld [vmem:[#allocation2 + $0x18] sm:$0xff]
      %v6471 = vld [vmem:[#allocation2 + $0x20] sm:$0xff]
      %v6472 = vld [vmem:[#allocation2 + $0x28] sm:$0x3]
      %v6473 = vld [vmem:[#allocation2 + $0x30] sm:$0xff]
      %v6474 = vld [vmem:[#allocation2 + $0x38] sm:$0xff]
      %v6475 = vld [vmem:[#allocation2 + $0x40] sm:$0x3]
      %v6476 = vld [vmem:[#allocation2 + $0x48] sm:$0xff]
      %v6477 = vld [vmem:[#allocation2 + $0x50] sm:$0xff]
      %v6478 = vld [vmem:[#allocation2 + $0x58] sm:$0x3]
      %v6479 = vld [vmem:[#allocation2 + $0x60] sm:$0xff]
      %v6480 = vld [vmem:[#allocation2 + $0x68] sm:$0xff]
      %v6481 = vld [vmem:[#allocation2 + $0x70] sm:$0x3]
      %v6482 = vld [vmem:[#allocation2 + $0x78] sm:$0xff]
      %v6483 = vld [vmem:[#allocation2 + $0x80] sm:$0xff]
      %v6484 = vld [vmem:[#allocation2 + $0x88] sm:$0x3]
      %v6485 = vld [vmem:[#allocation2 + $0x90] sm:$0xff]
      %v6486 = vld [vmem:[#allocation2 + $0x98] sm:$0xff]
      %v6487 = vld [vmem:[#allocation2 + $0xa0] sm:$0x3]
      %v6488 = vld [vmem:[#allocation2 + $0xa8] sm:$0xff]
      %v6489 = vld [vmem:[#allocation2 + $0xb0] sm:$0xff]
      %v6490 = vld [vmem:[#allocation2 + $0xb8] sm:$0x3]
      %v6491 = vld [vmem:[#allocation2 + $0xc0] sm:$0xff]
      %v6492 = vld [vmem:[#allocation2 + $0xc8] sm:$0xff]
      %v6493 = vld [vmem:[#allocation2 + $0xd0] sm:$0x3]
      %v6494 = vld [vmem:[#allocation2 + $0xd8] sm:$0xff]
      %v6495 = vld [vmem:[#allocation2 + $0xe0] sm:$0xff]
      %v6496 = vld [vmem:[#allocation2 + $0xe8] sm:$0x3]
      %v6497 = vld [vmem:[#allocation2 + $0xf0] sm:$0xff]
      %v6498 = vld [vmem:[#allocation2 + $0xf8] sm:$0xff]
      %v6499 = vld [vmem:[#allocation2 + $0x100] sm:$0x3]
      %v6500 = vld [vmem:[#allocation2 + $0x108] sm:$0xff]
      %v6501 = vld [vmem:[#allocation2 + $0x110] sm:$0xff]
      %v6502 = vld [vmem:[#allocation2 + $0x118] sm:$0x3]
      %v6503 = vld [vmem:[#allocation2 + $0x120] sm:$0xff]
      %v6504 = vld [vmem:[#allocation2 + $0x128] sm:$0xff]
      %v6505 = vld [vmem:[#allocation2 + $0x130] sm:$0x3]
      %v6506 = vld [vmem:[#allocation2 + $0x138] sm:$0xff]
      %v6507 = vld [vmem:[#allocation2 + $0x140] sm:$0xff]
      %v6508 = vld [vmem:[#allocation2 + $0x148] sm:$0x3]
      %v6509 = vld [vmem:[#allocation2 + $0x150] sm:$0xff]
      %v6510 = vld [vmem:[#allocation2 + $0x158] sm:$0xff]
      %v6511 = vld [vmem:[#allocation2 + $0x160] sm:$0x3]
      %v6512 = vld [vmem:[#allocation2 + $0x168] sm:$0xff]
      %v6513 = vld [vmem:[#allocation2 + $0x170] sm:$0xff]
      %v6514 = vld [vmem:[#allocation2 + $0x178] sm:$0x3]
      %v6515 = vld [vmem:[#allocation2 + $0x180] sm:$0xff]
      %v6516 = vld [vmem:[#allocation2 + $0x188] sm:$0xff]
      %v6517 = vld [vmem:[#allocation2 + $0x190] sm:$0x3]
      %v6518 = vld [vmem:[#allocation2 + $0x198] sm:$0xff]
      %v6519 = vld [vmem:[#allocation2 + $0x1a0] sm:$0xff]
      %v6520 = vld [vmem:[#allocation2 + $0x1a8] sm:$0x3]
      %vm6521 = vcmp.ge.f32.partialorder %v6467, 0.0
      %vm6522 = vcmp.ge.f32.partialorder %v6468, 0.0
      %vm6523 = vcmp.ge.f32.partialorder %v6469, 0.0
      %vm6524 = vcmp.ge.f32.partialorder %v6470, 0.0
      %vm6525 = vcmp.ge.f32.partialorder %v6471, 0.0
      %vm6526 = vcmp.ge.f32.partialorder %v6472, 0.0
      %vm6527 = vcmp.ge.f32.partialorder %v6473, 0.0
      %vm6528 = vcmp.ge.f32.partialorder %v6474, 0.0
      %vm6529 = vcmp.ge.f32.partialorder %v6475, 0.0
      %vm6530 = vcmp.ge.f32.partialorder %v6476, 0.0
      %vm6531 = vcmp.ge.f32.partialorder %v6477, 0.0
      %vm6532 = vcmp.ge.f32.partialorder %v6478, 0.0
      %vm6533 = vcmp.ge.f32.partialorder %v6479, 0.0
      %vm6534 = vcmp.ge.f32.partialorder %v6480, 0.0
      %vm6535 = vcmp.ge.f32.partialorder %v6481, 0.0
      %vm6536 = vcmp.ge.f32.partialorder %v6482, 0.0
      %vm6537 = vcmp.ge.f32.partialorder %v6483, 0.0
      %vm6538 = vcmp.ge.f32.partialorder %v6484, 0.0
      %vm6539 = vcmp.ge.f32.partialorder %v6485, 0.0
      %vm6540 = vcmp.ge.f32.partialorder %v6486, 0.0
      %vm6541 = vcmp.ge.f32.partialorder %v6487, 0.0
      %vm6542 = vcmp.ge.f32.partialorder %v6488, 0.0
      %vm6543 = vcmp.ge.f32.partialorder %v6489, 0.0
      %vm6544 = vcmp.ge.f32.partialorder %v6490, 0.0
      %vm6545 = vcmp.ge.f32.partialorder %v6491, 0.0
      %vm6546 = vcmp.ge.f32.partialorder %v6492, 0.0
      %vm6547 = vcmp.ge.f32.partialorder %v6493, 0.0
      %vm6548 = vcmp.ge.f32.partialorder %v6494, 0.0
      %vm6549 = vcmp.ge.f32.partialorder %v6495, 0.0
      %vm6550 = vcmp.ge.f32.partialorder %v6496, 0.0
      %vm6551 = vcmp.ge.f32.partialorder %v6497, 0.0
      %vm6552 = vcmp.ge.f32.partialorder %v6498, 0.0
      %vm6553 = vcmp.ge.f32.partialorder %v6499, 0.0
      %vm6554 = vcmp.ge.f32.partialorder %v6500, 0.0
      %vm6555 = vcmp.ge.f32.partialorder %v6501, 0.0
      %vm6556 = vcmp.ge.f32.partialorder %v6502, 0.0
      %vm6557 = vcmp.ge.f32.partialorder %v6503, 0.0
      %vm6558 = vcmp.ge.f32.partialorder %v6504, 0.0
      %vm6559 = vcmp.ge.f32.partialorder %v6505, 0.0
      %vm6560 = vcmp.ge.f32.partialorder %v6506, 0.0
      %vm6561 = vcmp.ge.f32.partialorder %v6507, 0.0
      %vm6562 = vcmp.ge.f32.partialorder %v6508, 0.0
      %vm6563 = vcmp.ge.f32.partialorder %v6509, 0.0
      %vm6564 = vcmp.ge.f32.partialorder %v6510, 0.0
      %vm6565 = vcmp.ge.f32.partialorder %v6511, 0.0
      %vm6566 = vcmp.ge.f32.partialorder %v6512, 0.0
      %vm6567 = vcmp.ge.f32.partialorder %v6513, 0.0
      %vm6568 = vcmp.ge.f32.partialorder %v6514, 0.0
      %vm6569 = vcmp.ge.f32.partialorder %v6515, 0.0
      %vm6570 = vcmp.ge.f32.partialorder %v6516, 0.0
      %vm6571 = vcmp.ge.f32.partialorder %v6517, 0.0
      %vm6572 = vcmp.ge.f32.partialorder %v6518, 0.0
      %vm6573 = vcmp.ge.f32.partialorder %v6519, 0.0
      %vm6574 = vcmp.ge.f32.partialorder %v6520, 0.0
      %v6575 = vmul.f32 %v6467, 0.1
      %v6576 = vmul.f32 %v6468, 0.1
      %v6577 = vmul.f32 %v6469, 0.1
      %v6578 = vmul.f32 %v6470, 0.1
      %v6579 = vmul.f32 %v6471, 0.1
      %v6580 = vmul.f32 %v6472, 0.1
      %v6581 = vmul.f32 %v6473, 0.1
      %v6582 = vmul.f32 %v6474, 0.1
      %v6583 = vmul.f32 %v6475, 0.1
      %v6584 = vmul.f32 %v6476, 0.1
      %v6585 = vmul.f32 %v6477, 0.1
      %v6586 = vmul.f32 %v6478, 0.1
      %v6587 = vmul.f32 %v6479, 0.1
      %v6588 = vmul.f32 %v6480, 0.1
      %v6589 = vmul.f32 %v6481, 0.1
      %v6590 = vmul.f32 %v6482, 0.1
      %v6591 = vmul.f32 %v6483, 0.1
      %v6592 = vmul.f32 %v6484, 0.1
      %v6593 = vmul.f32 %v6485, 0.1
      %v6594 = vmul.f32 %v6486, 0.1
      %v6595 = vmul.f32 %v6487, 0.1
      %v6596 = vmul.f32 %v6488, 0.1
      %v6597 = vmul.f32 %v6489, 0.1
      %v6598 = vmul.f32 %v6490, 0.1
      %v6599 = vmul.f32 %v6491, 0.1
      %v6600 = vmul.f32 %v6492, 0.1
      %v6601 = vmul.f32 %v6493, 0.1
      %v6602 = vmul.f32 %v6494, 0.1
      %v6603 = vmul.f32 %v6495, 0.1
      %v6604 = vmul.f32 %v6496, 0.1
      %v6605 = vmul.f32 %v6497, 0.1
      %v6606 = vmul.f32 %v6498, 0.1
      %v6607 = vmul.f32 %v6499, 0.1
      %v6608 = vmul.f32 %v6500, 0.1
      %v6609 = vmul.f32 %v6501, 0.1
      %v6610 = vmul.f32 %v6502, 0.1
      %v6611 = vmul.f32 %v6503, 0.1
      %v6612 = vmul.f32 %v6504, 0.1
      %v6613 = vmul.f32 %v6505, 0.1
      %v6614 = vmul.f32 %v6506, 0.1
      %v6615 = vmul.f32 %v6507, 0.1
      %v6616 = vmul.f32 %v6508, 0.1
      %v6617 = vmul.f32 %v6509, 0.1
      %v6618 = vmul.f32 %v6510, 0.1
      %v6619 = vmul.f32 %v6511, 0.1
      %v6620 = vmul.f32 %v6512, 0.1
      %v6621 = vmul.f32 %v6513, 0.1
      %v6622 = vmul.f32 %v6514, 0.1
      %v6623 = vmul.f32 %v6515, 0.1
      %v6624 = vmul.f32 %v6516, 0.1
      %v6625 = vmul.f32 %v6517, 0.1
      %v6626 = vmul.f32 %v6518, 0.1
      %v6627 = vmul.f32 %v6519, 0.1
      %v6628 = vmul.f32 %v6520, 0.1
      %v6629 = vsel %vm6521, %v6467, %v6575
      %v6630 = vsel %vm6522, %v6468, %v6576
      %v6631 = vsel %vm6523, %v6469, %v6577
      %v6632 = vsel %vm6524, %v6470, %v6578
      %v6633 = vsel %vm6525, %v6471, %v6579
      %v6634 = vsel %vm6526, %v6472, %v6580
      %v6635 = vsel %vm6527, %v6473, %v6581
      %v6636 = vsel %vm6528, %v6474, %v6582
      %v6637 = vsel %vm6529, %v6475, %v6583
      %v6638 = vsel %vm6530, %v6476, %v6584
      %v6639 = vsel %vm6531, %v6477, %v6585
      %v6640 = vsel %vm6532, %v6478, %v6586
      %v6641 = vsel %vm6533, %v6479, %v6587
      %v6642 = vsel %vm6534, %v6480, %v6588
      %v6643 = vsel %vm6535, %v6481, %v6589
      %v6644 = vsel %vm6536, %v6482, %v6590
      %v6645 = vsel %vm6537, %v6483, %v6591
      %v6646 = vsel %vm6538, %v6484, %v6592
      %v6647 = vsel %vm6539, %v6485, %v6593
      %v6648 = vsel %vm6540, %v6486, %v6594
      %v6649 = vsel %vm6541, %v6487, %v6595
      %v6650 = vsel %vm6542, %v6488, %v6596
      %v6651 = vsel %vm6543, %v6489, %v6597
      %v6652 = vsel %vm6544, %v6490, %v6598
      %v6653 = vsel %vm6545, %v6491, %v6599
      %v6654 = vsel %vm6546, %v6492, %v6600
      %v6655 = vsel %vm6547, %v6493, %v6601
      %v6656 = vsel %vm6548, %v6494, %v6602
      %v6657 = vsel %vm6549, %v6495, %v6603
      %v6658 = vsel %vm6550, %v6496, %v6604
      %v6659 = vsel %vm6551, %v6497, %v6605
      %v6660 = vsel %vm6552, %v6498, %v6606
      %v6661 = vsel %vm6553, %v6499, %v6607
      %v6662 = vsel %vm6554, %v6500, %v6608
      %v6663 = vsel %vm6555, %v6501, %v6609
      %v6664 = vsel %vm6556, %v6502, %v6610
      %v6665 = vsel %vm6557, %v6503, %v6611
      %v6666 = vsel %vm6558, %v6504, %v6612
      %v6667 = vsel %vm6559, %v6505, %v6613
      %v6668 = vsel %vm6560, %v6506, %v6614
      %v6669 = vsel %vm6561, %v6507, %v6615
      %v6670 = vsel %vm6562, %v6508, %v6616
      %v6671 = vsel %vm6563, %v6509, %v6617
      %v6672 = vsel %vm6564, %v6510, %v6618
      %v6673 = vsel %vm6565, %v6511, %v6619
      %v6674 = vsel %vm6566, %v6512, %v6620
      %v6675 = vsel %vm6567, %v6513, %v6621
      %v6676 = vsel %vm6568, %v6514, %v6622
      %v6677 = vsel %vm6569, %v6515, %v6623
      %v6678 = vsel %vm6570, %v6516, %v6624
      %v6679 = vsel %vm6571, %v6517, %v6625
      %v6680 = vsel %vm6572, %v6518, %v6626
      %v6681 = vsel %vm6573, %v6519, %v6627
      %v6682 = vsel %vm6574, %v6520, %v6628
      %vm6683 = vcmask 261120
      %6684 = vst.msk [vmem:[#allocation3] sm:$0xff] %vm6683, %v6629
      %6685 = vst.msk [vmem:[#allocation3 + $0x18] sm:$0xff] %vm6683, %v6630
      %6686 = vst.msk [vmem:[#allocation3 + $0x30] sm:$0xff] %vm6683, %v6632
      %6687 = vst.msk [vmem:[#allocation3 + $0x48] sm:$0xff] %vm6683, %v6633
      %6688 = vst.msk [vmem:[#allocation3 + $0x60] sm:$0xff] %vm6683, %v6635
      %6689 = vst.msk [vmem:[#allocation3 + $0x78] sm:$0xff] %vm6683, %v6636
      %6690 = vst.msk [vmem:[#allocation3 + $0x90] sm:$0xff] %vm6683, %v6638
      %6691 = vst.msk [vmem:[#allocation3 + $0xa8] sm:$0xff] %vm6683, %v6639
      %6692 = vst.msk [vmem:[#allocation3 + $0xc0] sm:$0xff] %vm6683, %v6641
      %6693 = vst.msk [vmem:[#allocation3 + $0xd8] sm:$0xff] %vm6683, %v6642
      %6694 = vst.msk [vmem:[#allocation3 + $0xf0] sm:$0xff] %vm6683, %v6644
      %6695 = vst.msk [vmem:[#allocation3 + $0x108] sm:$0xff] %vm6683, %v6645
      %6696 = vst.msk [vmem:[#allocation3 + $0x120] sm:$0xff] %vm6683, %v6647
      %6697 = vst.msk [vmem:[#allocation3 + $0x138] sm:$0xff] %vm6683, %v6648
      %6698 = vst.msk [vmem:[#allocation3 + $0x150] sm:$0xff] %vm6683, %v6650
      %6699 = vst.msk [vmem:[#allocation3 + $0x168] sm:$0xff] %vm6683, %v6651
      %6700 = vst.msk [vmem:[#allocation3 + $0x180] sm:$0xff] %vm6683, %v6653
      %6701 = vst.msk [vmem:[#allocation3 + $0x198] sm:$0xff] %vm6683, %v6654
      %6702 = vst.msk [vmem:[#allocation3 + $0x1b0] sm:$0xff] %vm6683, %v6656
      %6703 = vst.msk [vmem:[#allocation3 + $0x1c8] sm:$0xff] %vm6683, %v6657
      %6704 = vst.msk [vmem:[#allocation3 + $0x1e0] sm:$0xff] %vm6683, %v6659
      %6705 = vst.msk [vmem:[#allocation3 + $0x1f8] sm:$0xff] %vm6683, %v6660
      %6706 = vst.msk [vmem:[#allocation3 + $0x210] sm:$0xff] %vm6683, %v6662
      %6707 = vst.msk [vmem:[#allocation3 + $0x228] sm:$0xff] %vm6683, %v6663
      %6708 = vst.msk [vmem:[#allocation3 + $0x240] sm:$0xff] %vm6683, %v6665
      %6709 = vst.msk [vmem:[#allocation3 + $0x258] sm:$0xff] %vm6683, %v6666
      %6710 = vst.msk [vmem:[#allocation3 + $0x270] sm:$0xff] %vm6683, %v6668
      %6711 = vst.msk [vmem:[#allocation3 + $0x288] sm:$0xff] %vm6683, %v6669
      %6712 = vst.msk [vmem:[#allocation3 + $0x2a0] sm:$0xff] %vm6683, %v6671
      %6713 = vst.msk [vmem:[#allocation3 + $0x2b8] sm:$0xff] %vm6683, %v6672
      %6714 = vst.msk [vmem:[#allocation3 + $0x2d0] sm:$0xff] %vm6683, %v6674
      %6715 = vst.msk [vmem:[#allocation3 + $0x2e8] sm:$0xff] %vm6683, %v6675
      %v6764 = vrot.slane %v6629, 1
      %v6765 = vrot.slane %v6630, 1
      %v6766 = vsel %vm687, %v6764, %v6765
      %v6767 = vrot.slane %v6631, 1
      %v6768 = vsel %vm687, %v6765, %v6767
      %v6769 = vrot.slane %v6632, 1
      %v6770 = vrot.slane %v6633, 1
      %v6771 = vsel %vm687, %v6769, %v6770
      %v6772 = vrot.slane %v6634, 1
      %v6773 = vsel %vm687, %v6770, %v6772
      %v6774 = vrot.slane %v6635, 1
      %v6775 = vrot.slane %v6636, 1
      %v6776 = vsel %vm687, %v6774, %v6775
      %v6777 = vrot.slane %v6637, 1
      %v6778 = vsel %vm687, %v6775, %v6777
      %v6779 = vrot.slane %v6638, 1
      %v6780 = vrot.slane %v6639, 1
      %v6781 = vsel %vm687, %v6779, %v6780
      %v6782 = vrot.slane %v6640, 1
      %v6783 = vsel %vm687, %v6780, %v6782
      %v6784 = vrot.slane %v6641, 1
      %v6785 = vrot.slane %v6642, 1
      %v6786 = vsel %vm687, %v6784, %v6785
      %v6787 = vrot.slane %v6643, 1
      %v6788 = vsel %vm687, %v6785, %v6787
      %v6789 = vrot.slane %v6644, 1
      %v6790 = vrot.slane %v6645, 1
      %v6791 = vsel %vm687, %v6789, %v6790
      %v6792 = vrot.slane %v6646, 1
      %v6793 = vsel %vm687, %v6790, %v6792
      %v6794 = vrot.slane %v6647, 1
      %v6795 = vrot.slane %v6648, 1
      %v6796 = vsel %vm687, %v6794, %v6795
      %v6797 = vrot.slane %v6649, 1
      %v6798 = vsel %vm687, %v6795, %v6797
      %v6799 = vrot.slane %v6650, 1
      %v6800 = vrot.slane %v6651, 1
      %v6801 = vsel %vm687, %v6799, %v6800
      %v6802 = vrot.slane %v6652, 1
      %v6803 = vsel %vm687, %v6800, %v6802
      %v6804 = vrot.slane %v6653, 1
      %v6805 = vrot.slane %v6654, 1
      %v6806 = vsel %vm687, %v6804, %v6805
      %v6807 = vrot.slane %v6655, 1
      %v6808 = vsel %vm687, %v6805, %v6807
      %v6809 = vrot.slane %v6656, 1
      %v6810 = vrot.slane %v6657, 1
      %v6811 = vsel %vm687, %v6809, %v6810
      %v6812 = vrot.slane %v6658, 1
      %v6813 = vsel %vm687, %v6810, %v6812
      %v6814 = vrot.slane %v6659, 1
      %v6815 = vrot.slane %v6660, 1
      %v6816 = vsel %vm687, %v6814, %v6815
      %v6817 = vrot.slane %v6661, 1
      %v6818 = vsel %vm687, %v6815, %v6817
      %v6819 = vrot.slane %v6662, 1
      %v6820 = vrot.slane %v6663, 1
      %v6821 = vsel %vm687, %v6819, %v6820
      %v6822 = vrot.slane %v6664, 1
      %v6823 = vsel %vm687, %v6820, %v6822
      %v6824 = vrot.slane %v6665, 1
      %v6825 = vrot.slane %v6666, 1
      %v6826 = vsel %vm687, %v6824, %v6825
      %v6827 = vrot.slane %v6667, 1
      %v6828 = vsel %vm687, %v6825, %v6827
      %v6829 = vrot.slane %v6668, 1
      %v6830 = vrot.slane %v6669, 1
      %v6831 = vsel %vm687, %v6829, %v6830
      %v6832 = vrot.slane %v6670, 1
      %v6833 = vsel %vm687, %v6830, %v6832
      %v6834 = vrot.slane %v6671, 1
      %v6835 = vrot.slane %v6672, 1
      %v6836 = vsel %vm687, %v6834, %v6835
      %v6837 = vrot.slane %v6673, 1
      %v6838 = vsel %vm687, %v6835, %v6837
      %v6839 = vrot.slane %v6674, 1
      %v6840 = vrot.slane %v6675, 1
      %v6841 = vsel %vm687, %v6839, %v6840
      %v6842 = vrot.slane %v6676, 1
      %v6843 = vsel %vm687, %v6840, %v6842
      %6844 = vrot.lane.b32.xlu0 %v6766, 32
      %v6845 = vpop.permute.xlu0 %6844
      %6846 = vrot.lane.b32.xlu0 %v6768, 32
      %v6847 = vpop.permute.xlu0 %6846
      %6848 = vrot.lane.b32.xlu0 %v6771, 32
      %v6849 = vpop.permute.xlu0 %6848
      %6850 = vrot.lane.b32.xlu0 %v6773, 32
      %v6851 = vpop.permute.xlu0 %6850
      %6852 = vrot.lane.b32.xlu0 %v6776, 32
      %v6853 = vpop.permute.xlu0 %6852
      %6854 = vrot.lane.b32.xlu0 %v6778, 32
      %v6855 = vpop.permute.xlu0 %6854
      %6856 = vrot.lane.b32.xlu0 %v6781, 32
      %v6857 = vpop.permute.xlu0 %6856
      %6858 = vrot.lane.b32.xlu0 %v6783, 32
      %v6859 = vpop.permute.xlu0 %6858
      %6860 = vrot.lane.b32.xlu0 %v6786, 32
      %v6861 = vpop.permute.xlu0 %6860
      %6862 = vrot.lane.b32.xlu0 %v6788, 32
      %v6863 = vpop.permute.xlu0 %6862
      %6864 = vrot.lane.b32.xlu0 %v6791, 32
      %v6865 = vpop.permute.xlu0 %6864
      %6866 = vrot.lane.b32.xlu0 %v6793, 32
      %v6867 = vpop.permute.xlu0 %6866
      %6868 = vrot.lane.b32.xlu0 %v6796, 32
      %v6869 = vpop.permute.xlu0 %6868
      %6870 = vrot.lane.b32.xlu0 %v6798, 32
      %v6871 = vpop.permute.xlu0 %6870
      %6872 = vrot.lane.b32.xlu0 %v6801, 32
      %v6873 = vpop.permute.xlu0 %6872
      %6874 = vrot.lane.b32.xlu0 %v6803, 32
      %v6875 = vpop.permute.xlu0 %6874
      %6876 = vrot.lane.b32.xlu0 %v6806, 32
      %v6877 = vpop.permute.xlu0 %6876
      %6878 = vrot.lane.b32.xlu0 %v6808, 32
      %v6879 = vpop.permute.xlu0 %6878
      %6880 = vrot.lane.b32.xlu0 %v6811, 32
      %v6881 = vpop.permute.xlu0 %6880
      %6882 = vrot.lane.b32.xlu0 %v6813, 32
      %v6883 = vpop.permute.xlu0 %6882
      %6884 = vrot.lane.b32.xlu0 %v6816, 32
      %v6885 = vpop.permute.xlu0 %6884
      %6886 = vrot.lane.b32.xlu0 %v6818, 32
      %v6887 = vpop.permute.xlu0 %6886
      %6888 = vrot.lane.b32.xlu0 %v6821, 32
      %v6889 = vpop.permute.xlu0 %6888
      %6890 = vrot.lane.b32.xlu0 %v6823, 32
      %v6891 = vpop.permute.xlu0 %6890
      %6892 = vrot.lane.b32.xlu0 %v6826, 32
      %v6893 = vpop.permute.xlu0 %6892
      %6894 = vrot.lane.b32.xlu0 %v6828, 32
      %v6895 = vpop.permute.xlu0 %6894
      %6896 = vrot.lane.b32.xlu0 %v6831, 32
      %v6897 = vpop.permute.xlu0 %6896
      %6898 = vrot.lane.b32.xlu0 %v6833, 32
      %v6899 = vpop.permute.xlu0 %6898
      %6900 = vrot.lane.b32.xlu0 %v6836, 32
      %v6901 = vpop.permute.xlu0 %6900
      %6902 = vrot.lane.b32.xlu0 %v6838, 32
      %v6903 = vpop.permute.xlu0 %6902
      %6904 = vrot.lane.b32.xlu0 %v6841, 32
      %v6905 = vpop.permute.xlu0 %6904
      %6906 = vrot.lane.b32.xlu0 %v6843, 32
      %v6907 = vpop.permute.xlu0 %6906
      %vm6940 = vcmask 523520
      %6941 = vst.msk [vmem:[#allocation3] sm:$0xff] %vm6940, %v6845
      %6942 = vst.msk [vmem:[#allocation3 + $0x18] sm:$0xff] %vm6940, %v6847
      %6943 = vst.msk [vmem:[#allocation3 + $0x30] sm:$0xff] %vm6940, %v6849
      %6944 = vst.msk [vmem:[#allocation3 + $0x48] sm:$0xff] %vm6940, %v6851
      %6945 = vst.msk [vmem:[#allocation3 + $0x60] sm:$0xff] %vm6940, %v6853
      %6946 = vst.msk [vmem:[#allocation3 + $0x78] sm:$0xff] %vm6940, %v6855
      %6947 = vst.msk [vmem:[#allocation3 + $0x90] sm:$0xff] %vm6940, %v6857
      %6948 = vst.msk [vmem:[#allocation3 + $0xa8] sm:$0xff] %vm6940, %v6859
      %6949 = vst.msk [vmem:[#allocation3 + $0xc0] sm:$0xff] %vm6940, %v6861
      %6950 = vst.msk [vmem:[#allocation3 + $0xd8] sm:$0xff] %vm6940, %v6863
      %6951 = vst.msk [vmem:[#allocation3 + $0xf0] sm:$0xff] %vm6940, %v6865
      %6952 = vst.msk [vmem:[#allocation3 + $0x108] sm:$0xff] %vm6940, %v6867
      %6953 = vst.msk [vmem:[#allocation3 + $0x120] sm:$0xff] %vm6940, %v6869
      %6954 = vst.msk [vmem:[#allocation3 + $0x138] sm:$0xff] %vm6940, %v6871
      %6955 = vst.msk [vmem:[#allocation3 + $0x150] sm:$0xff] %vm6940, %v6873
      %6956 = vst.msk [vmem:[#allocation3 + $0x168] sm:$0xff] %vm6940, %v6875
      %6957 = vst.msk [vmem:[#allocation3 + $0x180] sm:$0xff] %vm6940, %v6877
      %6958 = vst.msk [vmem:[#allocation3 + $0x198] sm:$0xff] %vm6940, %v6879
      %6959 = vst.msk [vmem:[#allocation3 + $0x1b0] sm:$0xff] %vm6940, %v6881
      %6960 = vst.msk [vmem:[#allocation3 + $0x1c8] sm:$0xff] %vm6940, %v6883
      %6961 = vst.msk [vmem:[#allocation3 + $0x1e0] sm:$0xff] %vm6940, %v6885
      %6962 = vst.msk [vmem:[#allocation3 + $0x1f8] sm:$0xff] %vm6940, %v6887
      %6963 = vst.msk [vmem:[#allocation3 + $0x210] sm:$0xff] %vm6940, %v6889
      %6964 = vst.msk [vmem:[#allocation3 + $0x228] sm:$0xff] %vm6940, %v6891
      %6965 = vst.msk [vmem:[#allocation3 + $0x240] sm:$0xff] %vm6940, %v6893
      %6966 = vst.msk [vmem:[#allocation3 + $0x258] sm:$0xff] %vm6940, %v6895
      %6967 = vst.msk [vmem:[#allocation3 + $0x270] sm:$0xff] %vm6940, %v6897
      %6968 = vst.msk [vmem:[#allocation3 + $0x288] sm:$0xff] %vm6940, %v6899
      %6969 = vst.msk [vmem:[#allocation3 + $0x2a0] sm:$0xff] %vm6940, %v6901
      %6970 = vst.msk [vmem:[#allocation3 + $0x2b8] sm:$0xff] %vm6940, %v6903
      %6971 = vst.msk [vmem:[#allocation3 + $0x2d0] sm:$0xff] %vm6940, %v6905
      %6972 = vst.msk [vmem:[#allocation3 + $0x2e8] sm:$0xff] %vm6940, %v6907
      %v6973 = vrot.slane %v6629, 2
      %v6974 = vrot.slane %v6630, 2
      %v6975 = vsel %vm897, %v6973, %v6974
      %v6976 = vrot.slane %v6631, 2
      %v6977 = vsel %vm897, %v6974, %v6976
      %v6978 = vrot.slane %v6632, 2
      %v6979 = vrot.slane %v6633, 2
      %v6980 = vsel %vm897, %v6978, %v6979
      %v6981 = vrot.slane %v6634, 2
      %v6982 = vsel %vm897, %v6979, %v6981
      %v6983 = vrot.slane %v6635, 2
      %v6984 = vrot.slane %v6636, 2
      %v6985 = vsel %vm897, %v6983, %v6984
      %v6986 = vrot.slane %v6637, 2
      %v6987 = vsel %vm897, %v6984, %v6986
      %v6988 = vrot.slane %v6638, 2
      %v6989 = vrot.slane %v6639, 2
      %v6990 = vsel %vm897, %v6988, %v6989
      %v6991 = vrot.slane %v6640, 2
      %v6992 = vsel %vm897, %v6989, %v6991
      %v6993 = vrot.slane %v6641, 2
      %v6994 = vrot.slane %v6642, 2
      %v6995 = vsel %vm897, %v6993, %v6994
      %v6996 = vrot.slane %v6643, 2
      %v6997 = vsel %vm897, %v6994, %v6996
      %v6998 = vrot.slane %v6644, 2
      %v6999 = vrot.slane %v6645, 2
      %v7000 = vsel %vm897, %v6998, %v6999
      %v7001 = vrot.slane %v6646, 2
      %v7002 = vsel %vm897, %v6999, %v7001
      %v7003 = vrot.slane %v6647, 2
      %v7004 = vrot.slane %v6648, 2
      %v7005 = vsel %vm897, %v7003, %v7004
      %v7006 = vrot.slane %v6649, 2
      %v7007 = vsel %vm897, %v7004, %v7006
      %v7008 = vrot.slane %v6650, 2
      %v7009 = vrot.slane %v6651, 2
      %v7010 = vsel %vm897, %v7008, %v7009
      %v7011 = vrot.slane %v6652, 2
      %v7012 = vsel %vm897, %v7009, %v7011
      %v7013 = vrot.slane %v6653, 2
      %v7014 = vrot.slane %v6654, 2
      %v7015 = vsel %vm897, %v7013, %v7014
      %v7016 = vrot.slane %v6655, 2
      %v7017 = vsel %vm897, %v7014, %v7016
      %v7018 = vrot.slane %v6656, 2
      %v7019 = vrot.slane %v6657, 2
      %v7020 = vsel %vm897, %v7018, %v7019
      %v7021 = vrot.slane %v6658, 2
      %v7022 = vsel %vm897, %v7019, %v7021
      %v7023 = vrot.slane %v6659, 2
      %v7024 = vrot.slane %v6660, 2
      %v7025 = vsel %vm897, %v7023, %v7024
      %v7026 = vrot.slane %v6661, 2
      %v7027 = vsel %vm897, %v7024, %v7026
      %v7028 = vrot.slane %v6662, 2
      %v7029 = vrot.slane %v6663, 2
      %v7030 = vsel %vm897, %v7028, %v7029
      %v7031 = vrot.slane %v6664, 2
      %v7032 = vsel %vm897, %v7029, %v7031
      %v7033 = vrot.slane %v6665, 2
      %v7034 = vrot.slane %v6666, 2
      %v7035 = vsel %vm897, %v7033, %v7034
      %v7036 = vrot.slane %v6667, 2
      %v7037 = vsel %vm897, %v7034, %v7036
      %v7038 = vrot.slane %v6668, 2
      %v7039 = vrot.slane %v6669, 2
      %v7040 = vsel %vm897, %v7038, %v7039
      %v7041 = vrot.slane %v6670, 2
      %v7042 = vsel %vm897, %v7039, %v7041
      %v7043 = vrot.slane %v6671, 2
      %v7044 = vrot.slane %v6672, 2
      %v7045 = vsel %vm897, %v7043, %v7044
      %v7046 = vrot.slane %v6673, 2
      %v7047 = vsel %vm897, %v7044, %v7046
      %v7048 = vrot.slane %v6674, 2
      %v7049 = vrot.slane %v6675, 2
      %v7050 = vsel %vm897, %v7048, %v7049
      %v7051 = vrot.slane %v6676, 2
      %v7052 = vsel %vm897, %v7049, %v7051
      %7053 = vrot.lane.b32.xlu0 %v6975, 64
      %v7054 = vpop.permute.xlu0 %7053
      %7055 = vrot.lane.b32.xlu0 %v6977, 64
      %v7056 = vpop.permute.xlu0 %7055
      %7057 = vrot.lane.b32.xlu0 %v6980, 64
      %v7058 = vpop.permute.xlu0 %7057
      %7059 = vrot.lane.b32.xlu0 %v6982, 64
      %v7060 = vpop.permute.xlu0 %7059
      %7061 = vrot.lane.b32.xlu0 %v6985, 64
      %v7062 = vpop.permute.xlu0 %7061
      %7063 = vrot.lane.b32.xlu0 %v6987, 64
      %v7064 = vpop.permute.xlu0 %7063
      %7065 = vrot.lane.b32.xlu0 %v6990, 64
      %v7066 = vpop.permute.xlu0 %7065
      %7067 = vrot.lane.b32.xlu0 %v6992, 64
      %v7068 = vpop.permute.xlu0 %7067
      %7069 = vrot.lane.b32.xlu0 %v6995, 64
      %v7070 = vpop.permute.xlu0 %7069
      %7071 = vrot.lane.b32.xlu0 %v6997, 64
      %v7072 = vpop.permute.xlu0 %7071
      %7073 = vrot.lane.b32.xlu0 %v7000, 64
      %v7074 = vpop.permute.xlu0 %7073
      %7075 = vrot.lane.b32.xlu0 %v7002, 64
      %v7076 = vpop.permute.xlu0 %7075
      %7077 = vrot.lane.b32.xlu0 %v7005, 64
      %v7078 = vpop.permute.xlu0 %7077
      %7079 = vrot.lane.b32.xlu0 %v7007, 64
      %v7080 = vpop.permute.xlu0 %7079
      %7081 = vrot.lane.b32.xlu0 %v7010, 64
      %v7082 = vpop.permute.xlu0 %7081
      %7083 = vrot.lane.b32.xlu0 %v7012, 64
      %v7084 = vpop.permute.xlu0 %7083
      %7085 = vrot.lane.b32.xlu0 %v7015, 64
      %v7086 = vpop.permute.xlu0 %7085
      %7087 = vrot.lane.b32.xlu0 %v7017, 64
      %v7088 = vpop.permute.xlu0 %7087
      %7089 = vrot.lane.b32.xlu0 %v7020, 64
      %v7090 = vpop.permute.xlu0 %7089
      %7091 = vrot.lane.b32.xlu0 %v7022, 64
      %v7092 = vpop.permute.xlu0 %7091
      %7093 = vrot.lane.b32.xlu0 %v7025, 64
      %v7094 = vpop.permute.xlu0 %7093
      %7095 = vrot.lane.b32.xlu0 %v7027, 64
      %v7096 = vpop.permute.xlu0 %7095
      %7097 = vrot.lane.b32.xlu0 %v7030, 64
      %v7098 = vpop.permute.xlu0 %7097
      %7099 = vrot.lane.b32.xlu0 %v7032, 64
      %v7100 = vpop.permute.xlu0 %7099
      %7101 = vrot.lane.b32.xlu0 %v7035, 64
      %v7102 = vpop.permute.xlu0 %7101
      %7103 = vrot.lane.b32.xlu0 %v7037, 64
      %v7104 = vpop.permute.xlu0 %7103
      %7105 = vrot.lane.b32.xlu0 %v7040, 64
      %v7106 = vpop.permute.xlu0 %7105
      %7107 = vrot.lane.b32.xlu0 %v7042, 64
      %v7108 = vpop.permute.xlu0 %7107
      %7109 = vrot.lane.b32.xlu0 %v7045, 64
      %v7110 = vpop.permute.xlu0 %7109
      %7111 = vrot.lane.b32.xlu0 %v7047, 64
      %v7112 = vpop.permute.xlu0 %7111
      %7113 = vrot.lane.b32.xlu0 %v7050, 64
      %v7114 = vpop.permute.xlu0 %7113
      %7115 = vrot.lane.b32.xlu0 %v7052, 64
      %v7116 = vpop.permute.xlu0 %7115
      %vm7149 = vcmask 785920
      %7150 = vst.msk [vmem:[#allocation3] sm:$0xff] %vm7149, %v7054
      %7151 = vst.msk [vmem:[#allocation3 + $0x18] sm:$0xff] %vm7149, %v7056
      %7152 = vst.msk [vmem:[#allocation3 + $0x30] sm:$0xff] %vm7149, %v7058
      %7153 = vst.msk [vmem:[#allocation3 + $0x48] sm:$0xff] %vm7149, %v7060
      %7154 = vst.msk [vmem:[#allocation3 + $0x60] sm:$0xff] %vm7149, %v7062
      %7155 = vst.msk [vmem:[#allocation3 + $0x78] sm:$0xff] %vm7149, %v7064
      %7156 = vst.msk [vmem:[#allocation3 + $0x90] sm:$0xff] %vm7149, %v7066
      %7157 = vst.msk [vmem:[#allocation3 + $0xa8] sm:$0xff] %vm7149, %v7068
      %7158 = vst.msk [vmem:[#allocation3 + $0xc0] sm:$0xff] %vm7149, %v7070
      %7159 = vst.msk [vmem:[#allocation3 + $0xd8] sm:$0xff] %vm7149, %v7072
      %7160 = vst.msk [vmem:[#allocation3 + $0xf0] sm:$0xff] %vm7149, %v7074
      %7161 = vst.msk [vmem:[#allocation3 + $0x108] sm:$0xff] %vm7149, %v7076
      %7162 = vst.msk [vmem:[#allocation3 + $0x120] sm:$0xff] %vm7149, %v7078
      %7163 = vst.msk [vmem:[#allocation3 + $0x138] sm:$0xff] %vm7149, %v7080
      %7164 = vst.msk [vmem:[#allocation3 + $0x150] sm:$0xff] %vm7149, %v7082
      %7165 = vst.msk [vmem:[#allocation3 + $0x168] sm:$0xff] %vm7149, %v7084
      %7166 = vst.msk [vmem:[#allocation3 + $0x180] sm:$0xff] %vm7149, %v7086
      %7167 = vst.msk [vmem:[#allocation3 + $0x198] sm:$0xff] %vm7149, %v7088
      %7168 = vst.msk [vmem:[#allocation3 + $0x1b0] sm:$0xff] %vm7149, %v7090
      %7169 = vst.msk [vmem:[#allocation3 + $0x1c8] sm:$0xff] %vm7149, %v7092
      %7170 = vst.msk [vmem:[#allocation3 + $0x1e0] sm:$0xff] %vm7149, %v7094
      %7171 = vst.msk [vmem:[#allocation3 + $0x1f8] sm:$0xff] %vm7149, %v7096
      %7172 = vst.msk [vmem:[#allocation3 + $0x210] sm:$0xff] %vm7149, %v7098
      %7173 = vst.msk [vmem:[#allocation3 + $0x228] sm:$0xff] %vm7149, %v7100
      %7174 = vst.msk [vmem:[#allocation3 + $0x240] sm:$0xff] %vm7149, %v7102
      %7175 = vst.msk [vmem:[#allocation3 + $0x258] sm:$0xff] %vm7149, %v7104
      %7176 = vst.msk [vmem:[#allocation3 + $0x270] sm:$0xff] %vm7149, %v7106
      %7177 = vst.msk [vmem:[#allocation3 + $0x288] sm:$0xff] %vm7149, %v7108
      %7178 = vst.msk [vmem:[#allocation3 + $0x2a0] sm:$0xff] %vm7149, %v7110
      %7179 = vst.msk [vmem:[#allocation3 + $0x2b8] sm:$0xff] %vm7149, %v7112
      %7180 = vst.msk [vmem:[#allocation3 + $0x2d0] sm:$0xff] %vm7149, %v7114
      %7181 = vst.msk [vmem:[#allocation3 + $0x2e8] sm:$0xff] %vm7149, %v7116
      %7184 = vrot.lane.b32.xlu0 %v6632, 96
      %v7185 = vpop.permute.xlu0 %7184
      %7186 = vrot.lane.b32.xlu0 %v6633, 96
      %v7187 = vpop.permute.xlu0 %7186
      %7188 = vrot.lane.b32.xlu0 %v6635, 96
      %v7189 = vpop.permute.xlu0 %7188
      %7190 = vrot.lane.b32.xlu0 %v6636, 96
      %v7191 = vpop.permute.xlu0 %7190
      %7192 = vrot.lane.b32.xlu0 %v6638, 96
      %v7193 = vpop.permute.xlu0 %7192
      %7194 = vrot.lane.b32.xlu0 %v6639, 96
      %v7195 = vpop.permute.xlu0 %7194
      %7196 = vrot.lane.b32.xlu0 %v6641, 96
      %v7197 = vpop.permute.xlu0 %7196
      %7198 = vrot.lane.b32.xlu0 %v6642, 96
      %v7199 = vpop.permute.xlu0 %7198
      %7200 = vrot.lane.b32.xlu0 %v6644, 96
      %v7201 = vpop.permute.xlu0 %7200
      %7202 = vrot.lane.b32.xlu0 %v6645, 96
      %v7203 = vpop.permute.xlu0 %7202
      %7204 = vrot.lane.b32.xlu0 %v6647, 96
      %v7205 = vpop.permute.xlu0 %7204
      %7206 = vrot.lane.b32.xlu0 %v6648, 96
      %v7207 = vpop.permute.xlu0 %7206
      %7208 = vrot.lane.b32.xlu0 %v6650, 96
      %v7209 = vpop.permute.xlu0 %7208
      %7210 = vrot.lane.b32.xlu0 %v6651, 96
      %v7211 = vpop.permute.xlu0 %7210
      %7212 = vrot.lane.b32.xlu0 %v6653, 96
      %v7213 = vpop.permute.xlu0 %7212
      %7214 = vrot.lane.b32.xlu0 %v6654, 96
      %v7215 = vpop.permute.xlu0 %7214
      %7216 = vrot.lane.b32.xlu0 %v6656, 96
      %v7217 = vpop.permute.xlu0 %7216
      %7218 = vrot.lane.b32.xlu0 %v6657, 96
      %v7219 = vpop.permute.xlu0 %7218
      %7220 = vrot.lane.b32.xlu0 %v6659, 96
      %v7221 = vpop.permute.xlu0 %7220
      %7222 = vrot.lane.b32.xlu0 %v6660, 96
      %v7223 = vpop.permute.xlu0 %7222
      %7224 = vrot.lane.b32.xlu0 %v6662, 96
      %v7225 = vpop.permute.xlu0 %7224
      %7226 = vrot.lane.b32.xlu0 %v6663, 96
      %v7227 = vpop.permute.xlu0 %7226
      %7228 = vrot.lane.b32.xlu0 %v6665, 96
      %v7229 = vpop.permute.xlu0 %7228
      %7230 = vrot.lane.b32.xlu0 %v6666, 96
      %v7231 = vpop.permute.xlu0 %7230
      %7232 = vrot.lane.b32.xlu0 %v6668, 96
      %v7233 = vpop.permute.xlu0 %7232
      %7234 = vrot.lane.b32.xlu0 %v6669, 96
      %v7235 = vpop.permute.xlu0 %7234
      %7236 = vrot.lane.b32.xlu0 %v6671, 96
      %v7237 = vpop.permute.xlu0 %7236
      %7238 = vrot.lane.b32.xlu0 %v6672, 96
      %v7239 = vpop.permute.xlu0 %7238
      %7240 = vrot.lane.b32.xlu0 %v6674, 96
      %v7241 = vpop.permute.xlu0 %7240
      %7242 = vrot.lane.b32.xlu0 %v6675, 96
      %v7243 = vpop.permute.xlu0 %7242
      %7244 = vrot.lane.b32.xlu0 %v6677, 96
      %v7245 = vpop.permute.xlu0 %7244
      %7246 = vrot.lane.b32.xlu0 %v6678, 96
      %v7247 = vpop.permute.xlu0 %7246
      %vm7280 = vcmask 1048320
      %7281 = vst.msk [vmem:[#allocation3] sm:$0xff] %vm7280, %v7185
      %7282 = vst.msk [vmem:[#allocation3 + $0x18] sm:$0xff] %vm7280, %v7187
      %7283 = vst.msk [vmem:[#allocation3 + $0x30] sm:$0xff] %vm7280, %v7189
      %7284 = vst.msk [vmem:[#allocation3 + $0x48] sm:$0xff] %vm7280, %v7191
      %7285 = vst.msk [vmem:[#allocation3 + $0x60] sm:$0xff] %vm7280, %v7193
      %7286 = vst.msk [vmem:[#allocation3 + $0x78] sm:$0xff] %vm7280, %v7195
      %7287 = vst.msk [vmem:[#allocation3 + $0x90] sm:$0xff] %vm7280, %v7197
      %7288 = vst.msk [vmem:[#allocation3 + $0xa8] sm:$0xff] %vm7280, %v7199
      %7289 = vst.msk [vmem:[#allocation3 + $0xc0] sm:$0xff] %vm7280, %v7201
      %7290 = vst.msk [vmem:[#allocation3 + $0xd8] sm:$0xff] %vm7280, %v7203
      %7291 = vst.msk [vmem:[#allocation3 + $0xf0] sm:$0xff] %vm7280, %v7205
      %7292 = vst.msk [vmem:[#allocation3 + $0x108] sm:$0xff] %vm7280, %v7207
      %7293 = vst.msk [vmem:[#allocation3 + $0x120] sm:$0xff] %vm7280, %v7209
      %7294 = vst.msk [vmem:[#allocation3 + $0x138] sm:$0xff] %vm7280, %v7211
      %7295 = vst.msk [vmem:[#allocation3 + $0x150] sm:$0xff] %vm7280, %v7213
      %7296 = vst.msk [vmem:[#allocation3 + $0x168] sm:$0xff] %vm7280, %v7215
      %7297 = vst.msk [vmem:[#allocation3 + $0x180] sm:$0xff] %vm7280, %v7217
      %7298 = vst.msk [vmem:[#allocation3 + $0x198] sm:$0xff] %vm7280, %v7219
      %7299 = vst.msk [vmem:[#allocation3 + $0x1b0] sm:$0xff] %vm7280, %v7221
      %7300 = vst.msk [vmem:[#allocation3 + $0x1c8] sm:$0xff] %vm7280, %v7223
      %7301 = vst.msk [vmem:[#allocation3 + $0x1e0] sm:$0xff] %vm7280, %v7225
      %7302 = vst.msk [vmem:[#allocation3 + $0x1f8] sm:$0xff] %vm7280, %v7227
      %7303 = vst.msk [vmem:[#allocation3 + $0x210] sm:$0xff] %vm7280, %v7229
      %7304 = vst.msk [vmem:[#allocation3 + $0x228] sm:$0xff] %vm7280, %v7231
      %7305 = vst.msk [vmem:[#allocation3 + $0x240] sm:$0xff] %vm7280, %v7233
      %7306 = vst.msk [vmem:[#allocation3 + $0x258] sm:$0xff] %vm7280, %v7235
      %7307 = vst.msk [vmem:[#allocation3 + $0x270] sm:$0xff] %vm7280, %v7237
      %7308 = vst.msk [vmem:[#allocation3 + $0x288] sm:$0xff] %vm7280, %v7239
      %7309 = vst.msk [vmem:[#allocation3 + $0x2a0] sm:$0xff] %vm7280, %v7241
      %7310 = vst.msk [vmem:[#allocation3 + $0x2b8] sm:$0xff] %vm7280, %v7243
      %7311 = vst.msk [vmem:[#allocation3 + $0x2d0] sm:$0xff] %vm7280, %v7245
      %7312 = vst.msk [vmem:[#allocation3 + $0x2e8] sm:$0xff] %vm7280, %v7247
      %v7314 = vrot.slane %v6677, 1
      %v7315 = vrot.slane %v6678, 1
      %v7316 = vsel %vm687, %v7314, %v7315
      %v7317 = vrot.slane %v6679, 1
      %v7318 = vsel %vm687, %v7315, %v7317
      %7351 = vst.msk [vmem:[#allocation3 + $0x8] sm:$0xff] %vm6683, %v6771
      %7352 = vst.msk [vmem:[#allocation3 + $0x20] sm:$0xff] %vm6683, %v6773
      %7353 = vst.msk [vmem:[#allocation3 + $0x38] sm:$0xff] %vm6683, %v6776
      %7354 = vst.msk [vmem:[#allocation3 + $0x50] sm:$0xff] %vm6683, %v6778
      %7355 = vst.msk [vmem:[#allocation3 + $0x68] sm:$0xff] %vm6683, %v6781
      %7356 = vst.msk [vmem:[#allocation3 + $0x80] sm:$0xff] %vm6683, %v6783
      %7357 = vst.msk [vmem:[#allocation3 + $0x98] sm:$0xff] %vm6683, %v6786
      %7358 = vst.msk [vmem:[#allocation3 + $0xb0] sm:$0xff] %vm6683, %v6788
      %7359 = vst.msk [vmem:[#allocation3 + $0xc8] sm:$0xff] %vm6683, %v6791
      %7360 = vst.msk [vmem:[#allocation3 + $0xe0] sm:$0xff] %vm6683, %v6793
      %7361 = vst.msk [vmem:[#allocation3 + $0xf8] sm:$0xff] %vm6683, %v6796
      %7362 = vst.msk [vmem:[#allocation3 + $0x110] sm:$0xff] %vm6683, %v6798
      %7363 = vst.msk [vmem:[#allocation3 + $0x128] sm:$0xff] %vm6683, %v6801
      %7364 = vst.msk [vmem:[#allocation3 + $0x140] sm:$0xff] %vm6683, %v6803
      %7365 = vst.msk [vmem:[#allocation3 + $0x158] sm:$0xff] %vm6683, %v6806
      %7366 = vst.msk [vmem:[#allocation3 + $0x170] sm:$0xff] %vm6683, %v6808
      %7367 = vst.msk [vmem:[#allocation3 + $0x188] sm:$0xff] %vm6683, %v6811
      %7368 = vst.msk [vmem:[#allocation3 + $0x1a0] sm:$0xff] %vm6683, %v6813
      %7369 = vst.msk [vmem:[#allocation3 + $0x1b8] sm:$0xff] %vm6683, %v6816
      %7370 = vst.msk [vmem:[#allocation3 + $0x1d0] sm:$0xff] %vm6683, %v6818
      %7371 = vst.msk [vmem:[#allocation3 + $0x1e8] sm:$0xff] %vm6683, %v6821
      %7372 = vst.msk [vmem:[#allocation3 + $0x200] sm:$0xff] %vm6683, %v6823
      %7373 = vst.msk [vmem:[#allocation3 + $0x218] sm:$0xff] %vm6683, %v6826
      %7374 = vst.msk [vmem:[#allocation3 + $0x230] sm:$0xff] %vm6683, %v6828
      %7375 = vst.msk [vmem:[#allocation3 + $0x248] sm:$0xff] %vm6683, %v6831
      %7376 = vst.msk [vmem:[#allocation3 + $0x260] sm:$0xff] %vm6683, %v6833
      %7377 = vst.msk [vmem:[#allocation3 + $0x278] sm:$0xff] %vm6683, %v6836
      %7378 = vst.msk [vmem:[#allocation3 + $0x290] sm:$0xff] %vm6683, %v6838
      %7379 = vst.msk [vmem:[#allocation3 + $0x2a8] sm:$0xff] %vm6683, %v6841
      %7380 = vst.msk [vmem:[#allocation3 + $0x2c0] sm:$0xff] %vm6683, %v6843
      %7381 = vst.msk [vmem:[#allocation3 + $0x2d8] sm:$0xff] %vm6683, %v7316
      %7382 = vst.msk [vmem:[#allocation3 + $0x2f0] sm:$0xff] %vm6683, %v7318
      %v7383 = vrot.slane %v6677, 2
      %v7384 = vrot.slane %v6678, 2
      %v7385 = vsel %vm897, %v7383, %v7384
      %v7386 = vrot.slane %v6679, 2
      %v7387 = vsel %vm897, %v7384, %v7386
      %7388 = vrot.lane.b32.xlu0 %v6980, 32
      %v7389 = vpop.permute.xlu0 %7388
      %7390 = vrot.lane.b32.xlu0 %v6982, 32
      %v7391 = vpop.permute.xlu0 %7390
      %7392 = vrot.lane.b32.xlu0 %v6985, 32
      %v7393 = vpop.permute.xlu0 %7392
      %7394 = vrot.lane.b32.xlu0 %v6987, 32
      %v7395 = vpop.permute.xlu0 %7394
      %7396 = vrot.lane.b32.xlu0 %v6990, 32
      %v7397 = vpop.permute.xlu0 %7396
      %7398 = vrot.lane.b32.xlu0 %v6992, 32
      %v7399 = vpop.permute.xlu0 %7398
      %7400 = vrot.lane.b32.xlu0 %v6995, 32
      %v7401 = vpop.permute.xlu0 %7400
      %7402 = vrot.lane.b32.xlu0 %v6997, 32
      %v7403 = vpop.permute.xlu0 %7402
      %7404 = vrot.lane.b32.xlu0 %v7000, 32
      %v7405 = vpop.permute.xlu0 %7404
      %7406 = vrot.lane.b32.xlu0 %v7002, 32
      %v7407 = vpop.permute.xlu0 %7406
      %7408 = vrot.lane.b32.xlu0 %v7005, 32
      %v7409 = vpop.permute.xlu0 %7408
      %7410 = vrot.lane.b32.xlu0 %v7007, 32
      %v7411 = vpop.permute.xlu0 %7410
      %7412 = vrot.lane.b32.xlu0 %v7010, 32
      %v7413 = vpop.permute.xlu0 %7412
      %7414 = vrot.lane.b32.xlu0 %v7012, 32
      %v7415 = vpop.permute.xlu0 %7414
      %7416 = vrot.lane.b32.xlu0 %v7015, 32
      %v7417 = vpop.permute.xlu0 %7416
      %7418 = vrot.lane.b32.xlu0 %v7017, 32
      %v7419 = vpop.permute.xlu0 %7418
      %7420 = vrot.lane.b32.xlu0 %v7020, 32
      %v7421 = vpop.permute.xlu0 %7420
      %7422 = vrot.lane.b32.xlu0 %v7022, 32
      %v7423 = vpop.permute.xlu0 %7422
      %7424 = vrot.lane.b32.xlu0 %v7025, 32
      %v7425 = vpop.permute.xlu0 %7424
      %7426 = vrot.lane.b32.xlu0 %v7027, 32
      %v7427 = vpop.permute.xlu0 %7426
      %7428 = vrot.lane.b32.xlu0 %v7030, 32
      %v7429 = vpop.permute.xlu0 %7428
      %7430 = vrot.lane.b32.xlu0 %v7032, 32
      %v7431 = vpop.permute.xlu0 %7430
      %7432 = vrot.lane.b32.xlu0 %v7035, 32
      %v7433 = vpop.permute.xlu0 %7432
      %7434 = vrot.lane.b32.xlu0 %v7037, 32
      %v7435 = vpop.permute.xlu0 %7434
      %7436 = vrot.lane.b32.xlu0 %v7040, 32
      %v7437 = vpop.permute.xlu0 %7436
      %7438 = vrot.lane.b32.xlu0 %v7042, 32
      %v7439 = vpop.permute.xlu0 %7438
      %7440 = vrot.lane.b32.xlu0 %v7045, 32
      %v7441 = vpop.permute.xlu0 %7440
      %7442 = vrot.lane.b32.xlu0 %v7047, 32
      %v7443 = vpop.permute.xlu0 %7442
      %7444 = vrot.lane.b32.xlu0 %v7050, 32
      %v7445 = vpop.permute.xlu0 %7444
      %7446 = vrot.lane.b32.xlu0 %v7052, 32
      %v7447 = vpop.permute.xlu0 %7446
      %7448 = vrot.lane.b32.xlu0 %v7385, 32
      %v7449 = vpop.permute.xlu0 %7448
      %7450 = vrot.lane.b32.xlu0 %v7387, 32
      %v7451 = vpop.permute.xlu0 %7450
      %7484 = vst.msk [vmem:[#allocation3 + $0x8] sm:$0xff] %vm6940, %v7389
      %7485 = vst.msk [vmem:[#allocation3 + $0x20] sm:$0xff] %vm6940, %v7391
      %7486 = vst.msk [vmem:[#allocation3 + $0x38] sm:$0xff] %vm6940, %v7393
      %7487 = vst.msk [vmem:[#allocation3 + $0x50] sm:$0xff] %vm6940, %v7395
      %7488 = vst.msk [vmem:[#allocation3 + $0x68] sm:$0xff] %vm6940, %v7397
      %7489 = vst.msk [vmem:[#allocation3 + $0x80] sm:$0xff] %vm6940, %v7399
      %7490 = vst.msk [vmem:[#allocation3 + $0x98] sm:$0xff] %vm6940, %v7401
      %7491 = vst.msk [vmem:[#allocation3 + $0xb0] sm:$0xff] %vm6940, %v7403
      %7492 = vst.msk [vmem:[#allocation3 + $0xc8] sm:$0xff] %vm6940, %v7405
      %7493 = vst.msk [vmem:[#allocation3 + $0xe0] sm:$0xff] %vm6940, %v7407
      %7494 = vst.msk [vmem:[#allocation3 + $0xf8] sm:$0xff] %vm6940, %v7409
      %7495 = vst.msk [vmem:[#allocation3 + $0x110] sm:$0xff] %vm6940, %v7411
      %7496 = vst.msk [vmem:[#allocation3 + $0x128] sm:$0xff] %vm6940, %v7413
      %7497 = vst.msk [vmem:[#allocation3 + $0x140] sm:$0xff] %vm6940, %v7415
      %7498 = vst.msk [vmem:[#allocation3 + $0x158] sm:$0xff] %vm6940, %v7417
      %7499 = vst.msk [vmem:[#allocation3 + $0x170] sm:$0xff] %vm6940, %v7419
      %7500 = vst.msk [vmem:[#allocation3 + $0x188] sm:$0xff] %vm6940, %v7421
      %7501 = vst.msk [vmem:[#allocation3 + $0x1a0] sm:$0xff] %vm6940, %v7423
      %7502 = vst.msk [vmem:[#allocation3 + $0x1b8] sm:$0xff] %vm6940, %v7425
      %7503 = vst.msk [vmem:[#allocation3 + $0x1d0] sm:$0xff] %vm6940, %v7427
      %7504 = vst.msk [vmem:[#allocation3 + $0x1e8] sm:$0xff] %vm6940, %v7429
      %7505 = vst.msk [vmem:[#allocation3 + $0x200] sm:$0xff] %vm6940, %v7431
      %7506 = vst.msk [vmem:[#allocation3 + $0x218] sm:$0xff] %vm6940, %v7433
      %7507 = vst.msk [vmem:[#allocation3 + $0x230] sm:$0xff] %vm6940, %v7435
      %7508 = vst.msk [vmem:[#allocation3 + $0x248] sm:$0xff] %vm6940, %v7437
      %7509 = vst.msk [vmem:[#allocation3 + $0x260] sm:$0xff] %vm6940, %v7439
      %7510 = vst.msk [vmem:[#allocation3 + $0x278] sm:$0xff] %vm6940, %v7441
      %7511 = vst.msk [vmem:[#allocation3 + $0x290] sm:$0xff] %vm6940, %v7443
      %7512 = vst.msk [vmem:[#allocation3 + $0x2a8] sm:$0xff] %vm6940, %v7445
      %7513 = vst.msk [vmem:[#allocation3 + $0x2c0] sm:$0xff] %vm6940, %v7447
      %7514 = vst.msk [vmem:[#allocation3 + $0x2d8] sm:$0xff] %vm6940, %v7449
      %7515 = vst.msk [vmem:[#allocation3 + $0x2f0] sm:$0xff] %vm6940, %v7451
      %7518 = vrot.lane.b32.xlu0 %v6635, 64
      %v7519 = vpop.permute.xlu0 %7518
      %7520 = vrot.lane.b32.xlu0 %v6636, 64
      %v7521 = vpop.permute.xlu0 %7520
      %7522 = vrot.lane.b32.xlu0 %v6638, 64
      %v7523 = vpop.permute.xlu0 %7522
      %7524 = vrot.lane.b32.xlu0 %v6639, 64
      %v7525 = vpop.permute.xlu0 %7524
      %7526 = vrot.lane.b32.xlu0 %v6641, 64
      %v7527 = vpop.permute.xlu0 %7526
      %7528 = vrot.lane.b32.xlu0 %v6642, 64
      %v7529 = vpop.permute.xlu0 %7528
      %7530 = vrot.lane.b32.xlu0 %v6644, 64
      %v7531 = vpop.permute.xlu0 %7530
      %7532 = vrot.lane.b32.xlu0 %v6645, 64
      %v7533 = vpop.permute.xlu0 %7532
      %7534 = vrot.lane.b32.xlu0 %v6647, 64
      %v7535 = vpop.permute.xlu0 %7534
      %7536 = vrot.lane.b32.xlu0 %v6648, 64
      %v7537 = vpop.permute.xlu0 %7536
      %7538 = vrot.lane.b32.xlu0 %v6650, 64
      %v7539 = vpop.permute.xlu0 %7538
      %7540 = vrot.lane.b32.xlu0 %v6651, 64
      %v7541 = vpop.permute.xlu0 %7540
      %7542 = vrot.lane.b32.xlu0 %v6653, 64
      %v7543 = vpop.permute.xlu0 %7542
      %7544 = vrot.lane.b32.xlu0 %v6654, 64
      %v7545 = vpop.permute.xlu0 %7544
      %7546 = vrot.lane.b32.xlu0 %v6656, 64
      %v7547 = vpop.permute.xlu0 %7546
      %7548 = vrot.lane.b32.xlu0 %v6657, 64
      %v7549 = vpop.permute.xlu0 %7548
      %7550 = vrot.lane.b32.xlu0 %v6659, 64
      %v7551 = vpop.permute.xlu0 %7550
      %7552 = vrot.lane.b32.xlu0 %v6660, 64
      %v7553 = vpop.permute.xlu0 %7552
      %7554 = vrot.lane.b32.xlu0 %v6662, 64
      %v7555 = vpop.permute.xlu0 %7554
      %7556 = vrot.lane.b32.xlu0 %v6663, 64
      %v7557 = vpop.permute.xlu0 %7556
      %7558 = vrot.lane.b32.xlu0 %v6665, 64
      %v7559 = vpop.permute.xlu0 %7558
      %7560 = vrot.lane.b32.xlu0 %v6666, 64
      %v7561 = vpop.permute.xlu0 %7560
      %7562 = vrot.lane.b32.xlu0 %v6668, 64
      %v7563 = vpop.permute.xlu0 %7562
      %7564 = vrot.lane.b32.xlu0 %v6669, 64
      %v7565 = vpop.permute.xlu0 %7564
      %7566 = vrot.lane.b32.xlu0 %v6671, 64
      %v7567 = vpop.permute.xlu0 %7566
      %7568 = vrot.lane.b32.xlu0 %v6672, 64
      %v7569 = vpop.permute.xlu0 %7568
      %7570 = vrot.lane.b32.xlu0 %v6674, 64
      %v7571 = vpop.permute.xlu0 %7570
      %7572 = vrot.lane.b32.xlu0 %v6675, 64
      %v7573 = vpop.permute.xlu0 %7572
      %7574 = vrot.lane.b32.xlu0 %v6677, 64
      %v7575 = vpop.permute.xlu0 %7574
      %7576 = vrot.lane.b32.xlu0 %v6678, 64
      %v7577 = vpop.permute.xlu0 %7576
      %7578 = vrot.lane.b32.xlu0 %v6680, 64
      %v7579 = vpop.permute.xlu0 %7578
      %7580 = vrot.lane.b32.xlu0 %v6681, 64
      %v7581 = vpop.permute.xlu0 %7580
      %7614 = vst.msk [vmem:[#allocation3 + $0x8] sm:$0xff] %vm7149, %v7519
      %7615 = vst.msk [vmem:[#allocation3 + $0x20] sm:$0xff] %vm7149, %v7521
      %7616 = vst.msk [vmem:[#allocation3 + $0x38] sm:$0xff] %vm7149, %v7523
      %7617 = vst.msk [vmem:[#allocation3 + $0x50] sm:$0xff] %vm7149, %v7525
      %7618 = vst.msk [vmem:[#allocation3 + $0x68] sm:$0xff] %vm7149, %v7527
      %7619 = vst.msk [vmem:[#allocation3 + $0x80] sm:$0xff] %vm7149, %v7529
      %7620 = vst.msk [vmem:[#allocation3 + $0x98] sm:$0xff] %vm7149, %v7531
      %7621 = vst.msk [vmem:[#allocation3 + $0xb0] sm:$0xff] %vm7149, %v7533
      %7622 = vst.msk [vmem:[#allocation3 + $0xc8] sm:$0xff] %vm7149, %v7535
      %7623 = vst.msk [vmem:[#allocation3 + $0xe0] sm:$0xff] %vm7149, %v7537
      %7624 = vst.msk [vmem:[#allocation3 + $0xf8] sm:$0xff] %vm7149, %v7539
      %7625 = vst.msk [vmem:[#allocation3 + $0x110] sm:$0xff] %vm7149, %v7541
      %7626 = vst.msk [vmem:[#allocation3 + $0x128] sm:$0xff] %vm7149, %v7543
      %7627 = vst.msk [vmem:[#allocation3 + $0x140] sm:$0xff] %vm7149, %v7545
      %7628 = vst.msk [vmem:[#allocation3 + $0x158] sm:$0xff] %vm7149, %v7547
      %7629 = vst.msk [vmem:[#allocation3 + $0x170] sm:$0xff] %vm7149, %v7549
      %7630 = vst.msk [vmem:[#allocation3 + $0x188] sm:$0xff] %vm7149, %v7551
      %7631 = vst.msk [vmem:[#allocation3 + $0x1a0] sm:$0xff] %vm7149, %v7553
      %7632 = vst.msk [vmem:[#allocation3 + $0x1b8] sm:$0xff] %vm7149, %v7555
      %7633 = vst.msk [vmem:[#allocation3 + $0x1d0] sm:$0xff] %vm7149, %v7557
      %7634 = vst.msk [vmem:[#allocation3 + $0x1e8] sm:$0xff] %vm7149, %v7559
      %7635 = vst.msk [vmem:[#allocation3 + $0x200] sm:$0xff] %vm7149, %v7561
      %7636 = vst.msk [vmem:[#allocation3 + $0x218] sm:$0xff] %vm7149, %v7563
      %7637 = vst.msk [vmem:[#allocation3 + $0x230] sm:$0xff] %vm7149, %v7565
      %7638 = vst.msk [vmem:[#allocation3 + $0x248] sm:$0xff] %vm7149, %v7567
      %7639 = vst.msk [vmem:[#allocation3 + $0x260] sm:$0xff] %vm7149, %v7569
      %7640 = vst.msk [vmem:[#allocation3 + $0x278] sm:$0xff] %vm7149, %v7571
      %7641 = vst.msk [vmem:[#allocation3 + $0x290] sm:$0xff] %vm7149, %v7573
      %7642 = vst.msk [vmem:[#allocation3 + $0x2a8] sm:$0xff] %vm7149, %v7575
      %7643 = vst.msk [vmem:[#allocation3 + $0x2c0] sm:$0xff] %vm7149, %v7577
      %7644 = vst.msk [vmem:[#allocation3 + $0x2d8] sm:$0xff] %vm7149, %v7579
      %7645 = vst.msk [vmem:[#allocation3 + $0x2f0] sm:$0xff] %vm7149, %v7581
      %v7647 = vrot.slane %v6680, 1
      %v7648 = vrot.slane %v6681, 1
      %v7649 = vsel %vm687, %v7647, %v7648
      %v7650 = vrot.slane %v6682, 1
      %v7651 = vsel %vm687, %v7648, %v7650
      %7652 = vrot.lane.b32.xlu0 %v6776, 96
      %v7653 = vpop.permute.xlu0 %7652
      %7654 = vrot.lane.b32.xlu0 %v6778, 96
      %v7655 = vpop.permute.xlu0 %7654
      %7656 = vrot.lane.b32.xlu0 %v6781, 96
      %v7657 = vpop.permute.xlu0 %7656
      %7658 = vrot.lane.b32.xlu0 %v6783, 96
      %v7659 = vpop.permute.xlu0 %7658
      %7660 = vrot.lane.b32.xlu0 %v6786, 96
      %v7661 = vpop.permute.xlu0 %7660
      %7662 = vrot.lane.b32.xlu0 %v6788, 96
      %v7663 = vpop.permute.xlu0 %7662
      %7664 = vrot.lane.b32.xlu0 %v6791, 96
      %v7665 = vpop.permute.xlu0 %7664
      %7666 = vrot.lane.b32.xlu0 %v6793, 96
      %v7667 = vpop.permute.xlu0 %7666
      %7668 = vrot.lane.b32.xlu0 %v6796, 96
      %v7669 = vpop.permute.xlu0 %7668
      %7670 = vrot.lane.b32.xlu0 %v6798, 96
      %v7671 = vpop.permute.xlu0 %7670
      %7672 = vrot.lane.b32.xlu0 %v6801, 96
      %v7673 = vpop.permute.xlu0 %7672
      %7674 = vrot.lane.b32.xlu0 %v6803, 96
      %v7675 = vpop.permute.xlu0 %7674
      %7676 = vrot.lane.b32.xlu0 %v6806, 96
      %v7677 = vpop.permute.xlu0 %7676
      %7678 = vrot.lane.b32.xlu0 %v6808, 96
      %v7679 = vpop.permute.xlu0 %7678
      %7680 = vrot.lane.b32.xlu0 %v6811, 96
      %v7681 = vpop.permute.xlu0 %7680
      %7682 = vrot.lane.b32.xlu0 %v6813, 96
      %v7683 = vpop.permute.xlu0 %7682
      %7684 = vrot.lane.b32.xlu0 %v6816, 96
      %v7685 = vpop.permute.xlu0 %7684
      %7686 = vrot.lane.b32.xlu0 %v6818, 96
      %v7687 = vpop.permute.xlu0 %7686
      %7688 = vrot.lane.b32.xlu0 %v6821, 96
      %v7689 = vpop.permute.xlu0 %7688
      %7690 = vrot.lane.b32.xlu0 %v6823, 96
      %v7691 = vpop.permute.xlu0 %7690
      %7692 = vrot.lane.b32.xlu0 %v6826, 96
      %v7693 = vpop.permute.xlu0 %7692
      %7694 = vrot.lane.b32.xlu0 %v6828, 96
      %v7695 = vpop.permute.xlu0 %7694
      %7696 = vrot.lane.b32.xlu0 %v6831, 96
      %v7697 = vpop.permute.xlu0 %7696
      %7698 = vrot.lane.b32.xlu0 %v6833, 96
      %v7699 = vpop.permute.xlu0 %7698
      %7700 = vrot.lane.b32.xlu0 %v6836, 96
      %v7701 = vpop.permute.xlu0 %7700
      %7702 = vrot.lane.b32.xlu0 %v6838, 96
      %v7703 = vpop.permute.xlu0 %7702
      %7704 = vrot.lane.b32.xlu0 %v6841, 96
      %v7705 = vpop.permute.xlu0 %7704
      %7706 = vrot.lane.b32.xlu0 %v6843, 96
      %v7707 = vpop.permute.xlu0 %7706
      %7708 = vrot.lane.b32.xlu0 %v7316, 96
      %v7709 = vpop.permute.xlu0 %7708
      %7710 = vrot.lane.b32.xlu0 %v7318, 96
      %v7711 = vpop.permute.xlu0 %7710
      %7712 = vrot.lane.b32.xlu0 %v7649, 96
      %v7713 = vpop.permute.xlu0 %7712
      %7714 = vrot.lane.b32.xlu0 %v7651, 96
      %v7715 = vpop.permute.xlu0 %7714
      %7748 = vst.msk [vmem:[#allocation3 + $0x8] sm:$0xff] %vm7280, %v7653
      %7749 = vst.msk [vmem:[#allocation3 + $0x20] sm:$0xff] %vm7280, %v7655
      %7750 = vst.msk [vmem:[#allocation3 + $0x38] sm:$0xff] %vm7280, %v7657
      %7751 = vst.msk [vmem:[#allocation3 + $0x50] sm:$0xff] %vm7280, %v7659
      %7752 = vst.msk [vmem:[#allocation3 + $0x68] sm:$0xff] %vm7280, %v7661
      %7753 = vst.msk [vmem:[#allocation3 + $0x80] sm:$0xff] %vm7280, %v7663
      %7754 = vst.msk [vmem:[#allocation3 + $0x98] sm:$0xff] %vm7280, %v7665
      %7755 = vst.msk [vmem:[#allocation3 + $0xb0] sm:$0xff] %vm7280, %v7667
      %7756 = vst.msk [vmem:[#allocation3 + $0xc8] sm:$0xff] %vm7280, %v7669
      %7757 = vst.msk [vmem:[#allocation3 + $0xe0] sm:$0xff] %vm7280, %v7671
      %7758 = vst.msk [vmem:[#allocation3 + $0xf8] sm:$0xff] %vm7280, %v7673
      %7759 = vst.msk [vmem:[#allocation3 + $0x110] sm:$0xff] %vm7280, %v7675
      %7760 = vst.msk [vmem:[#allocation3 + $0x128] sm:$0xff] %vm7280, %v7677
      %7761 = vst.msk [vmem:[#allocation3 + $0x140] sm:$0xff] %vm7280, %v7679
      %7762 = vst.msk [vmem:[#allocation3 + $0x158] sm:$0xff] %vm7280, %v7681
      %7763 = vst.msk [vmem:[#allocation3 + $0x170] sm:$0xff] %vm7280, %v7683
      %7764 = vst.msk [vmem:[#allocation3 + $0x188] sm:$0xff] %vm7280, %v7685
      %7765 = vst.msk [vmem:[#allocation3 + $0x1a0] sm:$0xff] %vm7280, %v7687
      %7766 = vst.msk [vmem:[#allocation3 + $0x1b8] sm:$0xff] %vm7280, %v7689
      %7767 = vst.msk [vmem:[#allocation3 + $0x1d0] sm:$0xff] %vm7280, %v7691
      %7768 = vst.msk [vmem:[#allocation3 + $0x1e8] sm:$0xff] %vm7280, %v7693
      %7769 = vst.msk [vmem:[#allocation3 + $0x200] sm:$0xff] %vm7280, %v7695
      %7770 = vst.msk [vmem:[#allocation3 + $0x218] sm:$0xff] %vm7280, %v7697
      %7771 = vst.msk [vmem:[#allocation3 + $0x230] sm:$0xff] %vm7280, %v7699
      %7772 = vst.msk [vmem:[#allocation3 + $0x248] sm:$0xff] %vm7280, %v7701
      %7773 = vst.msk [vmem:[#allocation3 + $0x260] sm:$0xff] %vm7280, %v7703
      %7774 = vst.msk [vmem:[#allocation3 + $0x278] sm:$0xff] %vm7280, %v7705
      %7775 = vst.msk [vmem:[#allocation3 + $0x290] sm:$0xff] %vm7280, %v7707
      %7776 = vst.msk [vmem:[#allocation3 + $0x2a8] sm:$0xff] %vm7280, %v7709
      %7777 = vst.msk [vmem:[#allocation3 + $0x2c0] sm:$0xff] %vm7280, %v7711
      %7778 = vst.msk [vmem:[#allocation3 + $0x2d8] sm:$0xff] %vm7280, %v7713
      %7779 = vst.msk [vmem:[#allocation3 + $0x2f0] sm:$0xff] %vm7280, %v7715
      %v7780 = vrot.slane %v6680, 2
      %v7781 = vrot.slane %v6681, 2
      %v7782 = vsel %vm897, %v7780, %v7781
      %v7783 = vrot.slane %v6682, 2
      %v7784 = vsel %vm897, %v7781, %v7783
      %7817 = vst.msk [vmem:[#allocation3 + $0x10] sm:$0xff] %vm6683, %v6985
      %7818 = vst.msk [vmem:[#allocation3 + $0x28] sm:$0xff] %vm6683, %v6987
      %7819 = vst.msk [vmem:[#allocation3 + $0x40] sm:$0xff] %vm6683, %v6990
      %7820 = vst.msk [vmem:[#allocation3 + $0x58] sm:$0xff] %vm6683, %v6992
      %7821 = vst.msk [vmem:[#allocation3 + $0x70] sm:$0xff] %vm6683, %v6995
      %7822 = vst.msk [vmem:[#allocation3 + $0x88] sm:$0xff] %vm6683, %v6997
      %7823 = vst.msk [vmem:[#allocation3 + $0xa0] sm:$0xff] %vm6683, %v7000
      %7824 = vst.msk [vmem:[#allocation3 + $0xb8] sm:$0xff] %vm6683, %v7002
      %7825 = vst.msk [vmem:[#allocation3 + $0xd0] sm:$0xff] %vm6683, %v7005
      %7826 = vst.msk [vmem:[#allocation3 + $0xe8] sm:$0xff] %vm6683, %v7007
      %7827 = vst.msk [vmem:[#allocation3 + $0x100] sm:$0xff] %vm6683, %v7010
      %7828 = vst.msk [vmem:[#allocation3 + $0x118] sm:$0xff] %vm6683, %v7012
      %7829 = vst.msk [vmem:[#allocation3 + $0x130] sm:$0xff] %vm6683, %v7015
      %7830 = vst.msk [vmem:[#allocation3 + $0x148] sm:$0xff] %vm6683, %v7017
      %7831 = vst.msk [vmem:[#allocation3 + $0x160] sm:$0xff] %vm6683, %v7020
      %7832 = vst.msk [vmem:[#allocation3 + $0x178] sm:$0xff] %vm6683, %v7022
      %7833 = vst.msk [vmem:[#allocation3 + $0x190] sm:$0xff] %vm6683, %v7025
      %7834 = vst.msk [vmem:[#allocation3 + $0x1a8] sm:$0xff] %vm6683, %v7027
      %7835 = vst.msk [vmem:[#allocation3 + $0x1c0] sm:$0xff] %vm6683, %v7030
      %7836 = vst.msk [vmem:[#allocation3 + $0x1d8] sm:$0xff] %vm6683, %v7032
      %7837 = vst.msk [vmem:[#allocation3 + $0x1f0] sm:$0xff] %vm6683, %v7035
      %7838 = vst.msk [vmem:[#allocation3 + $0x208] sm:$0xff] %vm6683, %v7037
      %7839 = vst.msk [vmem:[#allocation3 + $0x220] sm:$0xff] %vm6683, %v7040
      %7840 = vst.msk [vmem:[#allocation3 + $0x238] sm:$0xff] %vm6683, %v7042
      %7841 = vst.msk [vmem:[#allocation3 + $0x250] sm:$0xff] %vm6683, %v7045
      %7842 = vst.msk [vmem:[#allocation3 + $0x268] sm:$0xff] %vm6683, %v7047
      %7843 = vst.msk [vmem:[#allocation3 + $0x280] sm:$0xff] %vm6683, %v7050
      %7844 = vst.msk [vmem:[#allocation3 + $0x298] sm:$0xff] %vm6683, %v7052
      %7845 = vst.msk [vmem:[#allocation3 + $0x2b0] sm:$0xff] %vm6683, %v7385
      %7846 = vst.msk [vmem:[#allocation3 + $0x2c8] sm:$0xff] %vm6683, %v7387
      %7847 = vst.msk [vmem:[#allocation3 + $0x2e0] sm:$0xff] %vm6683, %v7782
      %7848 = vst.msk [vmem:[#allocation3 + $0x2f8] sm:$0xff] %vm6683, %v7784
      %v7849 = vld [vmem:[#allocation3] sm:$0xff]
      %v7850 = vld [vmem:[#allocation3 + $0x8] sm:$0xff]
      %v7851 = vld [vmem:[#allocation3 + $0x10] sm:$0xff]
      %v7852 = vld [vmem:[#allocation3 + $0x18] sm:$0xff]
      %v7853 = vld [vmem:[#allocation3 + $0x20] sm:$0xff]
      %v7854 = vld [vmem:[#allocation3 + $0x28] sm:$0xff]
      %v7855 = vld [vmem:[#allocation3 + $0x30] sm:$0xff]
      %v7856 = vld [vmem:[#allocation3 + $0x38] sm:$0xff]
      %v7857 = vld [vmem:[#allocation3 + $0x40] sm:$0xff]
      %v7858 = vld [vmem:[#allocation3 + $0x48] sm:$0xff]
      %v7859 = vld [vmem:[#allocation3 + $0x50] sm:$0xff]
      %v7860 = vld [vmem:[#allocation3 + $0x58] sm:$0xff]
      %v7861 = vld [vmem:[#allocation3 + $0x60] sm:$0xff]
      %v7862 = vld [vmem:[#allocation3 + $0x68] sm:$0xff]
      %v7863 = vld [vmem:[#allocation3 + $0x70] sm:$0xff]
      %v7864 = vld [vmem:[#allocation3 + $0x78] sm:$0xff]
      %v7865 = vld [vmem:[#allocation3 + $0x80] sm:$0xff]
      %v7866 = vld [vmem:[#allocation3 + $0x88] sm:$0xff]
      %v7867 = vld [vmem:[#allocation3 + $0x90] sm:$0xff]
      %v7868 = vld [vmem:[#allocation3 + $0x98] sm:$0xff]
      %v7869 = vld [vmem:[#allocation3 + $0xa0] sm:$0xff]
      %v7870 = vld [vmem:[#allocation3 + $0xa8] sm:$0xff]
      %v7871 = vld [vmem:[#allocation3 + $0xb0] sm:$0xff]
      %v7872 = vld [vmem:[#allocation3 + $0xb8] sm:$0xff]
      %v7873 = vld [vmem:[#allocation3 + $0xc0] sm:$0xff]
      %v7874 = vld [vmem:[#allocation3 + $0xc8] sm:$0xff]
      %v7875 = vld [vmem:[#allocation3 + $0xd0] sm:$0xff]
      %v7876 = vld [vmem:[#allocation3 + $0xd8] sm:$0xff]
      %v7877 = vld [vmem:[#allocation3 + $0xe0] sm:$0xff]
      %v7878 = vld [vmem:[#allocation3 + $0xe8] sm:$0xff]
      %v7879 = vld [vmem:[#allocation3 + $0xf0] sm:$0xff]
      %v7880 = vld [vmem:[#allocation3 + $0xf8] sm:$0xff]
      %v7881 = vld [vmem:[#allocation3 + $0x100] sm:$0xff]
      %v7882 = vld [vmem:[#allocation3 + $0x108] sm:$0xff]
      %v7883 = vld [vmem:[#allocation3 + $0x110] sm:$0xff]
      %v7884 = vld [vmem:[#allocation3 + $0x118] sm:$0xff]
      %v7885 = vld [vmem:[#allocation3 + $0x120] sm:$0xff]
      %v7886 = vld [vmem:[#allocation3 + $0x128] sm:$0xff]
      %v7887 = vld [vmem:[#allocation3 + $0x130] sm:$0xff]
      %v7888 = vld [vmem:[#allocation3 + $0x138] sm:$0xff]
      %v7889 = vld [vmem:[#allocation3 + $0x140] sm:$0xff]
      %v7890 = vld [vmem:[#allocation3 + $0x148] sm:$0xff]
      %v7891 = vld [vmem:[#allocation3 + $0x150] sm:$0xff]
      %v7892 = vld [vmem:[#allocation3 + $0x158] sm:$0xff]
      %v7893 = vld [vmem:[#allocation3 + $0x160] sm:$0xff]
      %v7894 = vld [vmem:[#allocation3 + $0x168] sm:$0xff]
      %v7895 = vld [vmem:[#allocation3 + $0x170] sm:$0xff]
      %v7896 = vld [vmem:[#allocation3 + $0x178] sm:$0xff]
      %v7897 = vld [vmem:[#allocation3 + $0x180] sm:$0xff]
      %v7898 = vld [vmem:[#allocation3 + $0x188] sm:$0xff]
      %v7899 = vld [vmem:[#allocation3 + $0x190] sm:$0xff]
      %v7900 = vld [vmem:[#allocation3 + $0x198] sm:$0xff]
      %v7901 = vld [vmem:[#allocation3 + $0x1a0] sm:$0xff]
      %v7902 = vld [vmem:[#allocation3 + $0x1a8] sm:$0xff]
      %v7903 = vld [vmem:[#allocation3 + $0x1b0] sm:$0xff]
      %v7904 = vld [vmem:[#allocation3 + $0x1b8] sm:$0xff]
      %v7905 = vld [vmem:[#allocation3 + $0x1c0] sm:$0xff]
      %v7906 = vld [vmem:[#allocation3 + $0x1c8] sm:$0xff]
      %v7907 = vld [vmem:[#allocation3 + $0x1d0] sm:$0xff]
      %v7908 = vld [vmem:[#allocation3 + $0x1d8] sm:$0xff]
      %v7909 = vld [vmem:[#allocation3 + $0x1e0] sm:$0xff]
      %v7910 = vld [vmem:[#allocation3 + $0x1e8] sm:$0xff]
      %v7911 = vld [vmem:[#allocation3 + $0x1f0] sm:$0xff]
      %v7912 = vld [vmem:[#allocation3 + $0x1f8] sm:$0xff]
      %v7913 = vld [vmem:[#allocation3 + $0x200] sm:$0xff]
      %v7914 = vld [vmem:[#allocation3 + $0x208] sm:$0xff]
      %v7915 = vld [vmem:[#allocation3 + $0x210] sm:$0xff]
      %v7916 = vld [vmem:[#allocation3 + $0x218] sm:$0xff]
      %v7917 = vld [vmem:[#allocation3 + $0x220] sm:$0xff]
      %v7918 = vld [vmem:[#allocation3 + $0x228] sm:$0xff]
      %v7919 = vld [vmem:[#allocation3 + $0x230] sm:$0xff]
      %v7920 = vld [vmem:[#allocation3 + $0x238] sm:$0xff]
      %v7921 = vld [vmem:[#allocation3 + $0x240] sm:$0xff]
      %v7922 = vld [vmem:[#allocation3 + $0x248] sm:$0xff]
      %v7923 = vld [vmem:[#allocation3 + $0x250] sm:$0xff]
      %v7924 = vld [vmem:[#allocation3 + $0x258] sm:$0xff]
      %v7925 = vld [vmem:[#allocation3 + $0x260] sm:$0xff]
      %v7926 = vld [vmem:[#allocation3 + $0x268] sm:$0xff]
      %v7927 = vld [vmem:[#allocation3 + $0x270] sm:$0xff]
      %v7928 = vld [vmem:[#allocation3 + $0x278] sm:$0xff]
      %v7929 = vld [vmem:[#allocation3 + $0x280] sm:$0xff]
      %v7930 = vld [vmem:[#allocation3 + $0x288] sm:$0xff]
      %v7931 = vld [vmem:[#allocation3 + $0x290] sm:$0xff]
      %v7932 = vld [vmem:[#allocation3 + $0x298] sm:$0xff]
      %v7933 = vld [vmem:[#allocation3 + $0x2a0] sm:$0xff]
      %v7934 = vld [vmem:[#allocation3 + $0x2a8] sm:$0xff]
      %v7935 = vld [vmem:[#allocation3 + $0x2b0] sm:$0xff]
      %v7936 = vld [vmem:[#allocation3 + $0x2b8] sm:$0xff]
      %v7937 = vld [vmem:[#allocation3 + $0x2c0] sm:$0xff]
      %v7938 = vld [vmem:[#allocation3 + $0x2c8] sm:$0xff]
      %v7939 = vld [vmem:[#allocation3 + $0x2d0] sm:$0xff]
      %v7940 = vld [vmem:[#allocation3 + $0x2d8] sm:$0xff]
      %v7941 = vld [vmem:[#allocation3 + $0x2e0] sm:$0xff]
      %v7942 = vld [vmem:[#allocation3 + $0x2e8] sm:$0xff]
      %v7943 = vld [vmem:[#allocation3 + $0x2f0] sm:$0xff]
      %v7944 = vld [vmem:[#allocation3 + $0x2f8] sm:$0xff]
      %v7945 = vld [vmem:[%s4] sm:$0xff]
      %v7946 = vld [vmem:[%s4 + $0x8] sm:$0xff]
      %v7947 = vld [vmem:[%s4 + $0x10] sm:$0xff]
      %v7948 = vld [vmem:[%s4 + $0x18] sm:$0xff]
      %v7949 = vld [vmem:[%s4 + $0x20] sm:$0xff]
      %v7950 = vld [vmem:[%s4 + $0x28] sm:$0xff]
      %v7951 = vld [vmem:[%s4 + $0x30] sm:$0xff]
      %v7952 = vld [vmem:[%s4 + $0x38] sm:$0xff]
      %v7953 = vld [vmem:[%s4 + $0x40] sm:$0xff]
      %v7954 = vld [vmem:[%s4 + $0x48] sm:$0xff]
      %v7955 = vld [vmem:[%s4 + $0x50] sm:$0xff]
      %v7956 = vld [vmem:[%s4 + $0x58] sm:$0xff]
      %v7957 = vld [vmem:[%s4 + $0x60] sm:$0xff]
      %v7958 = vld [vmem:[%s4 + $0x68] sm:$0xff]
      %v7959 = vld [vmem:[%s4 + $0x70] sm:$0xff]
      %v7960 = vld [vmem:[%s4 + $0x78] sm:$0xff]
      %v7961 = vld [vmem:[%s4 + $0x80] sm:$0xff]
      %v7962 = vld [vmem:[%s4 + $0x88] sm:$0xff]
      %v7963 = vld [vmem:[%s4 + $0x90] sm:$0xff]
      %v7964 = vld [vmem:[%s4 + $0x98] sm:$0xff]
      %v7965 = vld [vmem:[%s4 + $0xa0] sm:$0xff]
      %v7966 = vld [vmem:[%s4 + $0xa8] sm:$0xff]
      %v7967 = vld [vmem:[%s4 + $0xb0] sm:$0xff]
      %v7968 = vld [vmem:[%s4 + $0xb8] sm:$0xff]
      %v7969 = vld [vmem:[%s4 + $0xc0] sm:$0xff]
      %v7970 = vld [vmem:[%s4 + $0xc8] sm:$0xff]
      %v7971 = vld [vmem:[%s4 + $0xd0] sm:$0xff]
      %v7972 = vld [vmem:[%s4 + $0xd8] sm:$0xff]
      %v7973 = vld [vmem:[%s4 + $0xe0] sm:$0xff]
      %v7974 = vld [vmem:[%s4 + $0xe8] sm:$0xff]
      %v7975 = vld [vmem:[%s4 + $0xf0] sm:$0xff]
      %v7976 = vld [vmem:[%s4 + $0xf8] sm:$0xff]
      %v7977 = vld [vmem:[%s4 + $0x100] sm:$0xff]
      %v7978 = vld [vmem:[%s4 + $0x108] sm:$0xff]
      %v7979 = vld [vmem:[%s4 + $0x110] sm:$0xff]
      %v7980 = vld [vmem:[%s4 + $0x118] sm:$0xff]
      %s7981 = scalar_lea.vmem %s6, 3
      %v7982 = vld [vmem:[%s7981] sm:$0x1]
      %v7984 = vperm.slane %v7982, 0
      %v7987 = vsel %vm6683, %v7851, 0
      %v7990 = vsel %vm6683, %v7854, 0
      %v7993 = vsel %vm6683, %v7857, 0
      %v7996 = vsel %vm6683, %v7860, 0
      %v7999 = vsel %vm6683, %v7863, 0
      %v8002 = vsel %vm6683, %v7866, 0
      %v8005 = vsel %vm6683, %v7869, 0
      %v8008 = vsel %vm6683, %v7872, 0
      %v8011 = vsel %vm6683, %v7875, 0
      %v8014 = vsel %vm6683, %v7878, 0
      %v8017 = vsel %vm6683, %v7881, 0
      %v8020 = vsel %vm6683, %v7884, 0
      %v8023 = vsel %vm6683, %v7887, 0
      %v8026 = vsel %vm6683, %v7890, 0
      %v8029 = vsel %vm6683, %v7893, 0
      %v8032 = vsel %vm6683, %v7896, 0
      %v8035 = vsel %vm6683, %v7899, 0
      %v8038 = vsel %vm6683, %v7902, 0
      %v8041 = vsel %vm6683, %v7905, 0
      %v8044 = vsel %vm6683, %v7908, 0
      %v8047 = vsel %vm6683, %v7911, 0
      %v8050 = vsel %vm6683, %v7914, 0
      %v8053 = vsel %vm6683, %v7917, 0
      %v8056 = vsel %vm6683, %v7920, 0
      %v8059 = vsel %vm6683, %v7923, 0
      %v8062 = vsel %vm6683, %v7926, 0
      %v8065 = vsel %vm6683, %v7929, 0
      %v8068 = vsel %vm6683, %v7932, 0
      %v8071 = vsel %vm6683, %v7935, 0
      %v8074 = vsel %vm6683, %v7938, 0
      %v8077 = vsel %vm6683, %v7941, 0
      %v8080 = vsel %vm6683, %v7944, 0
      %8082 = vmatpush.msra.mxu0 %v7960
      %8083 = vmatpush.msra.mxu0 %v7959
      %8084 = vmatpush.msra.mxu0 %v7958
      %8085 = vmatpush.msra.mxu0 %v7957
      %8086 = vmatpush.msra.mxu0 %v7956
      %8087 = vmatpush.msra.mxu0 %v7955
      %8088 = vmatpush.msra.mxu0 %v7954
      %8089 = vmatpush.msra.mxu0 %v7953
      %8090 = vmatpush.msra.mxu0 %v7952
      %8091 = vmatpush.msra.mxu0 %v7951
      %8092 = vmatpush.msra.mxu0 %v7950
      %8093 = vmatpush.msra.mxu0 %v7949
      %8094 = vmatpush.msra.mxu0 %v7948
      %8095 = vmatpush.msra.mxu0 %v7947
      %8096 = vmatpush.msra.mxu0 %v7946
      %8097 = vmatpush.msra.mxu0 %v7945
      %8098 = vmatmul.f32.gmra.mxu0 %v7849
      %v8099 = vpop.f32.mrf.mxu0
      %v8100 = vadd.f32 %v7984, %v8099
      %8101 = vmatmul.f32.gmra.mxu0 %v7852
      %v8102 = vpop.f32.mrf.mxu0
      %v8103 = vadd.f32 %v7984, %v8102
      %8104 = vmatmul.f32.gmra.mxu0 %v7855
      %v8105 = vpop.f32.mrf.mxu0
      %v8106 = vadd.f32 %v7984, %v8105
      %8107 = vmatmul.f32.gmra.mxu0 %v7858
      %v8108 = vpop.f32.mrf.mxu0
      %v8109 = vadd.f32 %v7984, %v8108
      %8110 = vmatmul.f32.gmra.mxu0 %v7861
      %v8111 = vpop.f32.mrf.mxu0
      %v8112 = vadd.f32 %v7984, %v8111
      %8113 = vmatmul.f32.gmra.mxu0 %v7864
      %v8114 = vpop.f32.mrf.mxu0
      %v8115 = vadd.f32 %v7984, %v8114
      %8116 = vmatmul.f32.gmra.mxu0 %v7867
      %v8117 = vpop.f32.mrf.mxu0
      %v8118 = vadd.f32 %v7984, %v8117
      %8119 = vmatmul.f32.gmra.mxu0 %v7870
      %v8120 = vpop.f32.mrf.mxu0
      %v8121 = vadd.f32 %v7984, %v8120
      %8122 = vmatmul.f32.gmra.mxu0 %v7873
      %v8123 = vpop.f32.mrf.mxu0
      %v8124 = vadd.f32 %v7984, %v8123
      %8125 = vmatmul.f32.gmra.mxu0 %v7876
      %v8126 = vpop.f32.mrf.mxu0
      %v8127 = vadd.f32 %v7984, %v8126
      %8128 = vmatmul.f32.gmra.mxu0 %v7879
      %v8129 = vpop.f32.mrf.mxu0
      %v8130 = vadd.f32 %v7984, %v8129
      %8131 = vmatmul.f32.gmra.mxu0 %v7882
      %v8132 = vpop.f32.mrf.mxu0
      %v8133 = vadd.f32 %v7984, %v8132
      %8134 = vmatmul.f32.gmra.mxu0 %v7885
      %v8135 = vpop.f32.mrf.mxu0
      %v8136 = vadd.f32 %v7984, %v8135
      %8137 = vmatmul.f32.gmra.mxu0 %v7888
      %v8138 = vpop.f32.mrf.mxu0
      %v8139 = vadd.f32 %v7984, %v8138
      %8140 = vmatmul.f32.gmra.mxu0 %v7891
      %v8141 = vpop.f32.mrf.mxu0
      %v8142 = vadd.f32 %v7984, %v8141
      %8143 = vmatmul.f32.gmra.mxu0 %v7894
      %v8144 = vpop.f32.mrf.mxu0
      %v8145 = vadd.f32 %v7984, %v8144
      %8146 = vmatmul.f32.gmra.mxu0 %v7897
      %v8147 = vpop.f32.mrf.mxu0
      %v8148 = vadd.f32 %v7984, %v8147
      %8149 = vmatmul.f32.gmra.mxu0 %v7900
      %v8150 = vpop.f32.mrf.mxu0
      %v8151 = vadd.f32 %v7984, %v8150
      %8152 = vmatmul.f32.gmra.mxu0 %v7903
      %v8153 = vpop.f32.mrf.mxu0
      %v8154 = vadd.f32 %v7984, %v8153
      %8155 = vmatmul.f32.gmra.mxu0 %v7906
      %v8156 = vpop.f32.mrf.mxu0
      %v8157 = vadd.f32 %v7984, %v8156
      %8158 = vmatmul.f32.gmra.mxu0 %v7909
      %v8159 = vpop.f32.mrf.mxu0
      %v8160 = vadd.f32 %v7984, %v8159
      %8161 = vmatmul.f32.gmra.mxu0 %v7912
      %v8162 = vpop.f32.mrf.mxu0
      %v8163 = vadd.f32 %v7984, %v8162
      %8164 = vmatmul.f32.gmra.mxu0 %v7915
      %v8165 = vpop.f32.mrf.mxu0
      %v8166 = vadd.f32 %v7984, %v8165
      %8167 = vmatmul.f32.gmra.mxu0 %v7918
      %v8168 = vpop.f32.mrf.mxu0
      %v8169 = vadd.f32 %v7984, %v8168
      %8170 = vmatmul.f32.gmra.mxu0 %v7921
      %v8171 = vpop.f32.mrf.mxu0
      %v8172 = vadd.f32 %v7984, %v8171
      %8173 = vmatmul.f32.gmra.mxu0 %v7924
      %v8174 = vpop.f32.mrf.mxu0
      %v8175 = vadd.f32 %v7984, %v8174
      %8176 = vmatmul.f32.gmra.mxu0 %v7927
      %v8177 = vpop.f32.mrf.mxu0
      %v8178 = vadd.f32 %v7984, %v8177
      %8179 = vmatmul.f32.gmra.mxu0 %v7930
      %v8180 = vpop.f32.mrf.mxu0
      %v8181 = vadd.f32 %v7984, %v8180
      %8182 = vmatmul.f32.gmra.mxu0 %v7933
      %v8183 = vpop.f32.mrf.mxu0
      %v8184 = vadd.f32 %v7984, %v8183
      %8185 = vmatmul.f32.gmra.mxu0 %v7936
      %v8186 = vpop.f32.mrf.mxu0
      %v8187 = vadd.f32 %v7984, %v8186
      %8188 = vmatmul.f32.gmra.mxu0 %v7939
      %v8189 = vpop.f32.mrf.mxu0
      %v8190 = vadd.f32 %v7984, %v8189
      %8191 = vmatmul.f32.gmra.mxu0 %v7942
      %v8192 = vpop.f32.mrf.mxu0
      %v8193 = vadd.f32 %v7984, %v8192
      %8194 = vdwg.mxu0
      %8195 = vmatpush.msra.mxu0 %v7976
      %8196 = vmatpush.msra.mxu0 %v7975
      %8197 = vmatpush.msra.mxu0 %v7974
      %8198 = vmatpush.msra.mxu0 %v7973
      %8199 = vmatpush.msra.mxu0 %v7972
      %8200 = vmatpush.msra.mxu0 %v7971
      %8201 = vmatpush.msra.mxu0 %v7970
      %8202 = vmatpush.msra.mxu0 %v7969
      %8203 = vmatpush.msra.mxu0 %v7968
      %8204 = vmatpush.msra.mxu0 %v7967
      %8205 = vmatpush.msra.mxu0 %v7966
      %8206 = vmatpush.msra.mxu0 %v7965
      %8207 = vmatpush.msra.mxu0 %v7964
      %8208 = vmatpush.msra.mxu0 %v7963
      %8209 = vmatpush.msra.mxu0 %v7962
      %8210 = vmatpush.msra.mxu0 %v7961
      %8211 = vmatmul.f32.gmra.mxu0 %v7850
      %v8212 = vpop.f32.mrf.mxu0
      %v8213 = vadd.f32 %v8100, %v8212
      %8214 = vmatmul.f32.gmra.mxu0 %v7853
      %v8215 = vpop.f32.mrf.mxu0
      %v8216 = vadd.f32 %v8103, %v8215
      %8217 = vmatmul.f32.gmra.mxu0 %v7856
      %v8218 = vpop.f32.mrf.mxu0
      %v8219 = vadd.f32 %v8106, %v8218
      %8220 = vmatmul.f32.gmra.mxu0 %v7859
      %v8221 = vpop.f32.mrf.mxu0
      %v8222 = vadd.f32 %v8109, %v8221
      %8223 = vmatmul.f32.gmra.mxu0 %v7862
      %v8224 = vpop.f32.mrf.mxu0
      %v8225 = vadd.f32 %v8112, %v8224
      %8226 = vmatmul.f32.gmra.mxu0 %v7865
      %v8227 = vpop.f32.mrf.mxu0
      %v8228 = vadd.f32 %v8115, %v8227
      %8229 = vmatmul.f32.gmra.mxu0 %v7868
      %v8230 = vpop.f32.mrf.mxu0
      %v8231 = vadd.f32 %v8118, %v8230
      %8232 = vmatmul.f32.gmra.mxu0 %v7871
      %v8233 = vpop.f32.mrf.mxu0
      %v8234 = vadd.f32 %v8121, %v8233
      %8235 = vmatmul.f32.gmra.mxu0 %v7874
      %v8236 = vpop.f32.mrf.mxu0
      %v8237 = vadd.f32 %v8124, %v8236
      %8238 = vmatmul.f32.gmra.mxu0 %v7877
      %v8239 = vpop.f32.mrf.mxu0
      %v8240 = vadd.f32 %v8127, %v8239
      %8241 = vmatmul.f32.gmra.mxu0 %v7880
      %v8242 = vpop.f32.mrf.mxu0
      %v8243 = vadd.f32 %v8130, %v8242
      %8244 = vmatmul.f32.gmra.mxu0 %v7883
      %v8245 = vpop.f32.mrf.mxu0
      %v8246 = vadd.f32 %v8133, %v8245
      %8247 = vmatmul.f32.gmra.mxu0 %v7886
      %v8248 = vpop.f32.mrf.mxu0
      %v8249 = vadd.f32 %v8136, %v8248
      %8250 = vmatmul.f32.gmra.mxu0 %v7889
      %v8251 = vpop.f32.mrf.mxu0
      %v8252 = vadd.f32 %v8139, %v8251
      %8253 = vmatmul.f32.gmra.mxu0 %v7892
      %v8254 = vpop.f32.mrf.mxu0
      %v8255 = vadd.f32 %v8142, %v8254
      %8256 = vmatmul.f32.gmra.mxu0 %v7895
      %v8257 = vpop.f32.mrf.mxu0
      %v8258 = vadd.f32 %v8145, %v8257
      %8259 = vmatmul.f32.gmra.mxu0 %v7898
      %v8260 = vpop.f32.mrf.mxu0
      %v8261 = vadd.f32 %v8148, %v8260
      %8262 = vmatmul.f32.gmra.mxu0 %v7901
      %v8263 = vpop.f32.mrf.mxu0
      %v8264 = vadd.f32 %v8151, %v8263
      %8265 = vmatmul.f32.gmra.mxu0 %v7904
      %v8266 = vpop.f32.mrf.mxu0
      %v8267 = vadd.f32 %v8154, %v8266
      %8268 = vmatmul.f32.gmra.mxu0 %v7907
      %v8269 = vpop.f32.mrf.mxu0
      %v8270 = vadd.f32 %v8157, %v8269
      %8271 = vmatmul.f32.gmra.mxu0 %v7910
      %v8272 = vpop.f32.mrf.mxu0
      %v8273 = vadd.f32 %v8160, %v8272
      %8274 = vmatmul.f32.gmra.mxu0 %v7913
      %v8275 = vpop.f32.mrf.mxu0
      %v8276 = vadd.f32 %v8163, %v8275
      %8277 = vmatmul.f32.gmra.mxu0 %v7916
      %v8278 = vpop.f32.mrf.mxu0
      %v8279 = vadd.f32 %v8166, %v8278
      %8280 = vmatmul.f32.gmra.mxu0 %v7919
      %v8281 = vpop.f32.mrf.mxu0
      %v8282 = vadd.f32 %v8169, %v8281
      %8283 = vmatmul.f32.gmra.mxu0 %v7922
      %v8284 = vpop.f32.mrf.mxu0
      %v8285 = vadd.f32 %v8172, %v8284
      %8286 = vmatmul.f32.gmra.mxu0 %v7925
      %v8287 = vpop.f32.mrf.mxu0
      %v8288 = vadd.f32 %v8175, %v8287
      %8289 = vmatmul.f32.gmra.mxu0 %v7928
      %v8290 = vpop.f32.mrf.mxu0
      %v8291 = vadd.f32 %v8178, %v8290
      %8292 = vmatmul.f32.gmra.mxu0 %v7931
      %v8293 = vpop.f32.mrf.mxu0
      %v8294 = vadd.f32 %v8181, %v8293
      %8295 = vmatmul.f32.gmra.mxu0 %v7934
      %v8296 = vpop.f32.mrf.mxu0
      %v8297 = vadd.f32 %v8184, %v8296
      %8298 = vmatmul.f32.gmra.mxu0 %v7937
      %v8299 = vpop.f32.mrf.mxu0
      %v8300 = vadd.f32 %v8187, %v8299
      %8301 = vmatmul.f32.gmra.mxu0 %v7940
      %v8302 = vpop.f32.mrf.mxu0
      %v8303 = vadd.f32 %v8190, %v8302
      %8304 = vmatmul.f32.gmra.mxu0 %v7943
      %v8305 = vpop.f32.mrf.mxu0
      %v8306 = vadd.f32 %v8193, %v8305
      %8307 = vdwg.mxu0
      %8308 = vmatpush.msra.mxu0 0.0
      %8309 = vmatpush.msra.mxu0 0.0
      %8310 = vmatpush.msra.mxu0 0.0
      %8311 = vmatpush.msra.mxu0 0.0
      %8312 = vmatpush.msra.mxu0 0.0
      %8313 = vmatpush.msra.mxu0 0.0
      %8314 = vmatpush.msra.mxu0 0.0
      %8315 = vmatpush.msra.mxu0 0.0
      %8316 = vmatpush.msra.mxu0 0.0
      %8317 = vmatpush.msra.mxu0 0.0
      %8318 = vmatpush.msra.mxu0 0.0
      %8319 = vmatpush.msra.mxu0 0.0
      %8320 = vmatpush.msra.mxu0 %v7980
      %8321 = vmatpush.msra.mxu0 %v7979
      %8322 = vmatpush.msra.mxu0 %v7978
      %8323 = vmatpush.msra.mxu0 %v7977
      %8324 = vmatmul.f32.gmra.mxu0 %v7987
      %v8325 = vpop.f32.mrf.mxu0
      %v8326 = vadd.f32 %v8213, %v8325
      %8327 = vmatmul.f32.gmra.mxu0 %v7990
      %v8328 = vpop.f32.mrf.mxu0
      %v8329 = vadd.f32 %v8216, %v8328
      %8330 = vmatmul.f32.gmra.mxu0 %v7993
      %v8331 = vpop.f32.mrf.mxu0
      %v8332 = vadd.f32 %v8219, %v8331
      %8333 = vmatmul.f32.gmra.mxu0 %v7996
      %v8334 = vpop.f32.mrf.mxu0
      %v8335 = vadd.f32 %v8222, %v8334
      %8336 = vmatmul.f32.gmra.mxu0 %v7999
      %v8337 = vpop.f32.mrf.mxu0
      %v8338 = vadd.f32 %v8225, %v8337
      %8339 = vmatmul.f32.gmra.mxu0 %v8002
      %v8340 = vpop.f32.mrf.mxu0
      %v8341 = vadd.f32 %v8228, %v8340
      %8342 = vmatmul.f32.gmra.mxu0 %v8005
      %v8343 = vpop.f32.mrf.mxu0
      %v8344 = vadd.f32 %v8231, %v8343
      %8345 = vmatmul.f32.gmra.mxu0 %v8008
      %v8346 = vpop.f32.mrf.mxu0
      %v8347 = vadd.f32 %v8234, %v8346
      %8348 = vmatmul.f32.gmra.mxu0 %v8011
      %v8349 = vpop.f32.mrf.mxu0
      %v8350 = vadd.f32 %v8237, %v8349
      %8351 = vmatmul.f32.gmra.mxu0 %v8014
      %v8352 = vpop.f32.mrf.mxu0
      %v8353 = vadd.f32 %v8240, %v8352
      %8354 = vmatmul.f32.gmra.mxu0 %v8017
      %v8355 = vpop.f32.mrf.mxu0
      %v8356 = vadd.f32 %v8243, %v8355
      %8357 = vmatmul.f32.gmra.mxu0 %v8020
      %v8358 = vpop.f32.mrf.mxu0
      %v8359 = vadd.f32 %v8246, %v8358
      %8360 = vmatmul.f32.gmra.mxu0 %v8023
      %v8361 = vpop.f32.mrf.mxu0
      %v8362 = vadd.f32 %v8249, %v8361
      %8363 = vmatmul.f32.gmra.mxu0 %v8026
      %v8364 = vpop.f32.mrf.mxu0
      %v8365 = vadd.f32 %v8252, %v8364
      %8366 = vmatmul.f32.gmra.mxu0 %v8029
      %v8367 = vpop.f32.mrf.mxu0
      %v8368 = vadd.f32 %v8255, %v8367
      %8369 = vmatmul.f32.gmra.mxu0 %v8032
      %v8370 = vpop.f32.mrf.mxu0
      %v8371 = vadd.f32 %v8258, %v8370
      %8372 = vmatmul.f32.gmra.mxu0 %v8035
      %v8373 = vpop.f32.mrf.mxu0
      %v8374 = vadd.f32 %v8261, %v8373
      %8375 = vmatmul.f32.gmra.mxu0 %v8038
      %v8376 = vpop.f32.mrf.mxu0
      %v8377 = vadd.f32 %v8264, %v8376
      %8378 = vmatmul.f32.gmra.mxu0 %v8041
      %v8379 = vpop.f32.mrf.mxu0
      %v8380 = vadd.f32 %v8267, %v8379
      %8381 = vmatmul.f32.gmra.mxu0 %v8044
      %v8382 = vpop.f32.mrf.mxu0
      %v8383 = vadd.f32 %v8270, %v8382
      %8384 = vmatmul.f32.gmra.mxu0 %v8047
      %v8385 = vpop.f32.mrf.mxu0
      %v8386 = vadd.f32 %v8273, %v8385
      %8387 = vmatmul.f32.gmra.mxu0 %v8050
      %v8388 = vpop.f32.mrf.mxu0
      %v8389 = vadd.f32 %v8276, %v8388
      %8390 = vmatmul.f32.gmra.mxu0 %v8053
      %v8391 = vpop.f32.mrf.mxu0
      %v8392 = vadd.f32 %v8279, %v8391
      %8393 = vmatmul.f32.gmra.mxu0 %v8056
      %v8394 = vpop.f32.mrf.mxu0
      %v8395 = vadd.f32 %v8282, %v8394
      %8396 = vmatmul.f32.gmra.mxu0 %v8059
      %v8397 = vpop.f32.mrf.mxu0
      %v8398 = vadd.f32 %v8285, %v8397
      %8399 = vmatmul.f32.gmra.mxu0 %v8062
      %v8400 = vpop.f32.mrf.mxu0
      %v8401 = vadd.f32 %v8288, %v8400
      %8402 = vmatmul.f32.gmra.mxu0 %v8065
      %v8403 = vpop.f32.mrf.mxu0
      %v8404 = vadd.f32 %v8291, %v8403
      %8405 = vmatmul.f32.gmra.mxu0 %v8068
      %v8406 = vpop.f32.mrf.mxu0
      %v8407 = vadd.f32 %v8294, %v8406
      %8408 = vmatmul.f32.gmra.mxu0 %v8071
      %v8409 = vpop.f32.mrf.mxu0
      %v8410 = vadd.f32 %v8297, %v8409
      %8411 = vmatmul.f32.gmra.mxu0 %v8074
      %v8412 = vpop.f32.mrf.mxu0
      %v8413 = vadd.f32 %v8300, %v8412
      %8414 = vmatmul.f32.gmra.mxu0 %v8077
      %v8415 = vpop.f32.mrf.mxu0
      %v8416 = vadd.f32 %v8303, %v8415
      %8417 = vmatmul.f32.gmra.mxu0 %v8080
      %v8418 = vpop.f32.mrf.mxu0
      %v8419 = vadd.f32 %v8306, %v8418
      %8420 = vdwg.mxu0
      %8453 = vrot.lane.b32.xlu0 %v8326, 32
      %v8454 = vpop.permute.xlu0 %8453
      %8455 = vrot.lane.b32.xlu0 %v8329, 32
      %v8456 = vpop.permute.xlu0 %8455
      %8457 = vrot.lane.b32.xlu0 %v8332, 32
      %v8458 = vpop.permute.xlu0 %8457
      %8459 = vrot.lane.b32.xlu0 %v8335, 32
      %v8460 = vpop.permute.xlu0 %8459
      %8461 = vrot.lane.b32.xlu0 %v8338, 32
      %v8462 = vpop.permute.xlu0 %8461
      %8463 = vrot.lane.b32.xlu0 %v8341, 32
      %v8464 = vpop.permute.xlu0 %8463
      %8465 = vrot.lane.b32.xlu0 %v8344, 32
      %v8466 = vpop.permute.xlu0 %8465
      %8467 = vrot.lane.b32.xlu0 %v8347, 32
      %v8468 = vpop.permute.xlu0 %8467
      %8469 = vrot.lane.b32.xlu0 %v8350, 32
      %v8470 = vpop.permute.xlu0 %8469
      %8471 = vrot.lane.b32.xlu0 %v8353, 32
      %v8472 = vpop.permute.xlu0 %8471
      %8473 = vrot.lane.b32.xlu0 %v8356, 32
      %v8474 = vpop.permute.xlu0 %8473
      %8475 = vrot.lane.b32.xlu0 %v8359, 32
      %v8476 = vpop.permute.xlu0 %8475
      %8477 = vrot.lane.b32.xlu0 %v8362, 32
      %v8478 = vpop.permute.xlu0 %8477
      %8479 = vrot.lane.b32.xlu0 %v8365, 32
      %v8480 = vpop.permute.xlu0 %8479
      %8481 = vrot.lane.b32.xlu0 %v8368, 32
      %v8482 = vpop.permute.xlu0 %8481
      %8483 = vrot.lane.b32.xlu0 %v8371, 32
      %v8484 = vpop.permute.xlu0 %8483
      %8485 = vrot.lane.b32.xlu0 %v8374, 32
      %v8486 = vpop.permute.xlu0 %8485
      %8487 = vrot.lane.b32.xlu0 %v8377, 32
      %v8488 = vpop.permute.xlu0 %8487
      %8489 = vrot.lane.b32.xlu0 %v8380, 32
      %v8490 = vpop.permute.xlu0 %8489
      %8491 = vrot.lane.b32.xlu0 %v8383, 32
      %v8492 = vpop.permute.xlu0 %8491
      %8493 = vrot.lane.b32.xlu0 %v8386, 32
      %v8494 = vpop.permute.xlu0 %8493
      %8495 = vrot.lane.b32.xlu0 %v8389, 32
      %v8496 = vpop.permute.xlu0 %8495
      %8497 = vrot.lane.b32.xlu0 %v8392, 32
      %v8498 = vpop.permute.xlu0 %8497
      %8499 = vrot.lane.b32.xlu0 %v8395, 32
      %v8500 = vpop.permute.xlu0 %8499
      %8501 = vrot.lane.b32.xlu0 %v8398, 32
      %v8502 = vpop.permute.xlu0 %8501
      %8503 = vrot.lane.b32.xlu0 %v8401, 32
      %v8504 = vpop.permute.xlu0 %8503
      %8505 = vrot.lane.b32.xlu0 %v8404, 32
      %v8506 = vpop.permute.xlu0 %8505
      %8507 = vrot.lane.b32.xlu0 %v8407, 32
      %v8508 = vpop.permute.xlu0 %8507
      %8509 = vrot.lane.b32.xlu0 %v8410, 32
      %v8510 = vpop.permute.xlu0 %8509
      %8511 = vrot.lane.b32.xlu0 %v8413, 32
      %v8512 = vpop.permute.xlu0 %8511
      %8513 = vrot.lane.b32.xlu0 %v8416, 32
      %v8514 = vpop.permute.xlu0 %8513
      %8515 = vrot.lane.b32.xlu0 %v8419, 32
      %v8516 = vpop.permute.xlu0 %8515
      %8549 = vst.msk [vmem:[%s357 + $0x1] sm:$0xff] %vm1340, %v8454
      %8550 = vst.msk [vmem:[%s357 + $0x9] sm:$0xff] %vm1340, %v8456
      %8551 = vst.msk [vmem:[%s357 + $0x19] sm:$0xff] %vm1340, %v8458
      %8552 = vst.msk [vmem:[%s357 + $0x21] sm:$0xff] %vm1340, %v8460
      %8553 = vst.msk [vmem:[%s357 + $0x31] sm:$0xff] %vm1340, %v8462
      %8554 = vst.msk [vmem:[%s357 + $0x39] sm:$0xff] %vm1340, %v8464
      %8555 = vst.msk [vmem:[%s357 + $0x49] sm:$0xff] %vm1340, %v8466
      %8556 = vst.msk [vmem:[%s357 + $0x51] sm:$0xff] %vm1340, %v8468
      %8557 = vst.msk [vmem:[%s357 + $0x61] sm:$0xff] %vm1340, %v8470
      %8558 = vst.msk [vmem:[%s357 + $0x69] sm:$0xff] %vm1340, %v8472
      %8559 = vst.msk [vmem:[%s357 + $0x79] sm:$0xff] %vm1340, %v8474
      %8560 = vst.msk [vmem:[%s357 + $0x81] sm:$0xff] %vm1340, %v8476
      %8561 = vst.msk [vmem:[%s357 + $0x91] sm:$0xff] %vm1340, %v8478
      %8562 = vst.msk [vmem:[%s357 + $0x99] sm:$0xff] %vm1340, %v8480
      %8563 = vst.msk [vmem:[%s357 + $0xa9] sm:$0xff] %vm1340, %v8482
      %8564 = vst.msk [vmem:[%s357 + $0xb1] sm:$0xff] %vm1340, %v8484
      %8565 = vst.msk [vmem:[%s357 + $0xc1] sm:$0xff] %vm1340, %v8486
      %8566 = vst.msk [vmem:[%s357 + $0xc9] sm:$0xff] %vm1340, %v8488
      %8567 = vst.msk [vmem:[%s357 + $0xd9] sm:$0xff] %vm1340, %v8490
      %8568 = vst.msk [vmem:[%s357 + $0xe1] sm:$0xff] %vm1340, %v8492
      %8569 = vst.msk [vmem:[%s357 + $0xf1] sm:$0xff] %vm1340, %v8494
      %8570 = vst.msk [vmem:[%s357 + $0xf9] sm:$0xff] %vm1340, %v8496
      %8571 = vst.msk [vmem:[%s357 + $0x109] sm:$0xff] %vm1340, %v8498
      %8572 = vst.msk [vmem:[%s357 + $0x111] sm:$0xff] %vm1340, %v8500
      %8573 = vst.msk [vmem:[%s357 + $0x121] sm:$0xff] %vm1340, %v8502
      %8574 = vst.msk [vmem:[%s357 + $0x129] sm:$0xff] %vm1340, %v8504
      %8575 = vst.msk [vmem:[%s357 + $0x139] sm:$0xff] %vm1340, %v8506
      %8576 = vst.msk [vmem:[%s357 + $0x141] sm:$0xff] %vm1340, %v8508
      %8577 = vst.msk [vmem:[%s357 + $0x151] sm:$0xff] %vm1340, %v8510
      %8578 = vst.msk [vmem:[%s357 + $0x159] sm:$0xff] %vm1340, %v8512
      %8579 = vst.msk [vmem:[%s357 + $0x169] sm:$0xff] %vm1340, %v8514
      %8580 = vst.msk [vmem:[%s357 + $0x171] sm:$0xff] %vm1340, %v8516
      %v8581 = vld [vmem:[#allocation2] sm:$0xff]
      %v8582 = vld [vmem:[#allocation2 + $0x8] sm:$0xff]
      %v8583 = vld [vmem:[#allocation2 + $0x10] sm:$0x3]
      %v8584 = vld [vmem:[#allocation2 + $0x18] sm:$0xff]
      %v8585 = vld [vmem:[#allocation2 + $0x20] sm:$0xff]
      %v8586 = vld [vmem:[#allocation2 + $0x28] sm:$0x3]
      %v8587 = vld [vmem:[#allocation2 + $0x30] sm:$0xff]
      %v8588 = vld [vmem:[#allocation2 + $0x38] sm:$0xff]
      %v8589 = vld [vmem:[#allocation2 + $0x40] sm:$0x3]
      %v8590 = vld [vmem:[#allocation2 + $0x48] sm:$0xff]
      %v8591 = vld [vmem:[#allocation2 + $0x50] sm:$0xff]
      %v8592 = vld [vmem:[#allocation2 + $0x58] sm:$0x3]
      %v8593 = vld [vmem:[#allocation2 + $0x60] sm:$0xff]
      %v8594 = vld [vmem:[#allocation2 + $0x68] sm:$0xff]
      %v8595 = vld [vmem:[#allocation2 + $0x70] sm:$0x3]
      %v8596 = vld [vmem:[#allocation2 + $0x78] sm:$0xff]
      %v8597 = vld [vmem:[#allocation2 + $0x80] sm:$0xff]
      %v8598 = vld [vmem:[#allocation2 + $0x88] sm:$0x3]
      %v8599 = vld [vmem:[#allocation2 + $0x90] sm:$0xff]
      %v8600 = vld [vmem:[#allocation2 + $0x98] sm:$0xff]
      %v8601 = vld [vmem:[#allocation2 + $0xa0] sm:$0x3]
      %v8602 = vld [vmem:[#allocation2 + $0xa8] sm:$0xff]
      %v8603 = vld [vmem:[#allocation2 + $0xb0] sm:$0xff]
      %v8604 = vld [vmem:[#allocation2 + $0xb8] sm:$0x3]
      %v8605 = vld [vmem:[#allocation2 + $0xc0] sm:$0xff]
      %v8606 = vld [vmem:[#allocation2 + $0xc8] sm:$0xff]
      %v8607 = vld [vmem:[#allocation2 + $0xd0] sm:$0x3]
      %v8608 = vld [vmem:[#allocation2 + $0xd8] sm:$0xff]
      %v8609 = vld [vmem:[#allocation2 + $0xe0] sm:$0xff]
      %v8610 = vld [vmem:[#allocation2 + $0xe8] sm:$0x3]
      %v8611 = vld [vmem:[#allocation2 + $0xf0] sm:$0xff]
      %v8612 = vld [vmem:[#allocation2 + $0xf8] sm:$0xff]
      %v8613 = vld [vmem:[#allocation2 + $0x100] sm:$0x3]
      %v8614 = vld [vmem:[#allocation2 + $0x108] sm:$0xff]
      %v8615 = vld [vmem:[#allocation2 + $0x110] sm:$0xff]
      %v8616 = vld [vmem:[#allocation2 + $0x118] sm:$0x3]
      %v8617 = vld [vmem:[#allocation2 + $0x120] sm:$0xff]
      %v8618 = vld [vmem:[#allocation2 + $0x128] sm:$0xff]
      %v8619 = vld [vmem:[#allocation2 + $0x130] sm:$0x3]
      %v8620 = vld [vmem:[#allocation2 + $0x138] sm:$0xff]
      %v8621 = vld [vmem:[#allocation2 + $0x140] sm:$0xff]
      %v8622 = vld [vmem:[#allocation2 + $0x148] sm:$0x3]
      %v8623 = vld [vmem:[#allocation2 + $0x150] sm:$0xff]
      %v8624 = vld [vmem:[#allocation2 + $0x158] sm:$0xff]
      %v8625 = vld [vmem:[#allocation2 + $0x160] sm:$0x3]
      %v8626 = vld [vmem:[#allocation2 + $0x168] sm:$0xff]
      %v8627 = vld [vmem:[#allocation2 + $0x170] sm:$0xff]
      %v8628 = vld [vmem:[#allocation2 + $0x178] sm:$0x3]
      %v8629 = vld [vmem:[#allocation2 + $0x180] sm:$0xff]
      %v8630 = vld [vmem:[#allocation2 + $0x188] sm:$0xff]
      %v8631 = vld [vmem:[#allocation2 + $0x190] sm:$0x3]
      %v8632 = vld [vmem:[#allocation2 + $0x198] sm:$0xff]
      %v8633 = vld [vmem:[#allocation2 + $0x1a0] sm:$0xff]
      %v8634 = vld [vmem:[#allocation2 + $0x1a8] sm:$0x3]
      %8635 = vst.msk [vmem:[#allocation3] sm:$0xff] %vm279, %v8581
      %8636 = vst.msk [vmem:[#allocation3 + $0x18] sm:$0xff] %vm279, %v8582
      %8637 = vst.msk [vmem:[#allocation3 + $0x30] sm:$0xff] %vm279, %v8584
      %8638 = vst.msk [vmem:[#allocation3 + $0x48] sm:$0xff] %vm279, %v8585
      %8639 = vst.msk [vmem:[#allocation3 + $0x60] sm:$0xff] %vm279, %v8587
      %8640 = vst.msk [vmem:[#allocation3 + $0x78] sm:$0xff] %vm279, %v8588
      %8641 = vst.msk [vmem:[#allocation3 + $0x90] sm:$0xff] %vm279, %v8590
      %8642 = vst.msk [vmem:[#allocation3 + $0xa8] sm:$0xff] %vm279, %v8591
      %8643 = vst.msk [vmem:[#allocation3 + $0xc0] sm:$0xff] %vm279, %v8593
      %8644 = vst.msk [vmem:[#allocation3 + $0xd8] sm:$0xff] %vm279, %v8594
      %8645 = vst.msk [vmem:[#allocation3 + $0xf0] sm:$0xff] %vm279, %v8596
      %8646 = vst.msk [vmem:[#allocation3 + $0x108] sm:$0xff] %vm279, %v8597
      %8647 = vst.msk [vmem:[#allocation3 + $0x120] sm:$0xff] %vm279, %v8599
      %8648 = vst.msk [vmem:[#allocation3 + $0x138] sm:$0xff] %vm279, %v8600
      %8649 = vst.msk [vmem:[#allocation3 + $0x150] sm:$0xff] %vm279, %v8602
      %8650 = vst.msk [vmem:[#allocation3 + $0x168] sm:$0xff] %vm279, %v8603
      %8651 = vst.msk [vmem:[#allocation3 + $0x180] sm:$0xff] %vm279, %v8605
      %8652 = vst.msk [vmem:[#allocation3 + $0x198] sm:$0xff] %vm279, %v8606
      %8653 = vst.msk [vmem:[#allocation3 + $0x1b0] sm:$0xff] %vm279, %v8608
      %8654 = vst.msk [vmem:[#allocation3 + $0x1c8] sm:$0xff] %vm279, %v8609
      %8655 = vst.msk [vmem:[#allocation3 + $0x1e0] sm:$0xff] %vm279, %v8611
      %8656 = vst.msk [vmem:[#allocation3 + $0x1f8] sm:$0xff] %vm279, %v8612
      %8657 = vst.msk [vmem:[#allocation3 + $0x210] sm:$0xff] %vm279, %v8614
      %8658 = vst.msk [vmem:[#allocation3 + $0x228] sm:$0xff] %vm279, %v8615
      %8659 = vst.msk [vmem:[#allocation3 + $0x240] sm:$0xff] %vm279, %v8617
      %8660 = vst.msk [vmem:[#allocation3 + $0x258] sm:$0xff] %vm279, %v8618
      %8661 = vst.msk [vmem:[#allocation3 + $0x270] sm:$0xff] %vm279, %v8620
      %8662 = vst.msk [vmem:[#allocation3 + $0x288] sm:$0xff] %vm279, %v8621
      %8663 = vst.msk [vmem:[#allocation3 + $0x2a0] sm:$0xff] %vm279, %v8623
      %8664 = vst.msk [vmem:[#allocation3 + $0x2b8] sm:$0xff] %vm279, %v8624
      %8665 = vst.msk [vmem:[#allocation3 + $0x2d0] sm:$0xff] %vm279, %v8626
      %8666 = vst.msk [vmem:[#allocation3 + $0x2e8] sm:$0xff] %vm279, %v8627
      %v8715 = vrot.slane %v8581, 1
      %v8716 = vrot.slane %v8582, 1
      %v8717 = vsel %vm687, %v8715, %v8716
      %v8718 = vrot.slane %v8583, 1
      %v8719 = vsel %vm687, %v8716, %v8718
      %v8720 = vrot.slane %v8584, 1
      %v8721 = vrot.slane %v8585, 1
      %v8722 = vsel %vm687, %v8720, %v8721
      %v8723 = vrot.slane %v8586, 1
      %v8724 = vsel %vm687, %v8721, %v8723
      %v8725 = vrot.slane %v8587, 1
      %v8726 = vrot.slane %v8588, 1
      %v8727 = vsel %vm687, %v8725, %v8726
      %v8728 = vrot.slane %v8589, 1
      %v8729 = vsel %vm687, %v8726, %v8728
      %v8730 = vrot.slane %v8590, 1
      %v8731 = vrot.slane %v8591, 1
      %v8732 = vsel %vm687, %v8730, %v8731
      %v8733 = vrot.slane %v8592, 1
      %v8734 = vsel %vm687, %v8731, %v8733
      %v8735 = vrot.slane %v8593, 1
      %v8736 = vrot.slane %v8594, 1
      %v8737 = vsel %vm687, %v8735, %v8736
      %v8738 = vrot.slane %v8595, 1
      %v8739 = vsel %vm687, %v8736, %v8738
      %v8740 = vrot.slane %v8596, 1
      %v8741 = vrot.slane %v8597, 1
      %v8742 = vsel %vm687, %v8740, %v8741
      %v8743 = vrot.slane %v8598, 1
      %v8744 = vsel %vm687, %v8741, %v8743
      %v8745 = vrot.slane %v8599, 1
      %v8746 = vrot.slane %v8600, 1
      %v8747 = vsel %vm687, %v8745, %v8746
      %v8748 = vrot.slane %v8601, 1
      %v8749 = vsel %vm687, %v8746, %v8748
      %v8750 = vrot.slane %v8602, 1
      %v8751 = vrot.slane %v8603, 1
      %v8752 = vsel %vm687, %v8750, %v8751
      %v8753 = vrot.slane %v8604, 1
      %v8754 = vsel %vm687, %v8751, %v8753
      %v8755 = vrot.slane %v8605, 1
      %v8756 = vrot.slane %v8606, 1
      %v8757 = vsel %vm687, %v8755, %v8756
      %v8758 = vrot.slane %v8607, 1
      %v8759 = vsel %vm687, %v8756, %v8758
      %v8760 = vrot.slane %v8608, 1
      %v8761 = vrot.slane %v8609, 1
      %v8762 = vsel %vm687, %v8760, %v8761
      %v8763 = vrot.slane %v8610, 1
      %v8764 = vsel %vm687, %v8761, %v8763
      %v8765 = vrot.slane %v8611, 1
      %v8766 = vrot.slane %v8612, 1
      %v8767 = vsel %vm687, %v8765, %v8766
      %v8768 = vrot.slane %v8613, 1
      %v8769 = vsel %vm687, %v8766, %v8768
      %v8770 = vrot.slane %v8614, 1
      %v8771 = vrot.slane %v8615, 1
      %v8772 = vsel %vm687, %v8770, %v8771
      %v8773 = vrot.slane %v8616, 1
      %v8774 = vsel %vm687, %v8771, %v8773
      %v8775 = vrot.slane %v8617, 1
      %v8776 = vrot.slane %v8618, 1
      %v8777 = vsel %vm687, %v8775, %v8776
      %v8778 = vrot.slane %v8619, 1
      %v8779 = vsel %vm687, %v8776, %v8778
      %v8780 = vrot.slane %v8620, 1
      %v8781 = vrot.slane %v8621, 1
      %v8782 = vsel %vm687, %v8780, %v8781
      %v8783 = vrot.slane %v8622, 1
      %v8784 = vsel %vm687, %v8781, %v8783
      %v8785 = vrot.slane %v8623, 1
      %v8786 = vrot.slane %v8624, 1
      %v8787 = vsel %vm687, %v8785, %v8786
      %v8788 = vrot.slane %v8625, 1
      %v8789 = vsel %vm687, %v8786, %v8788
      %v8790 = vrot.slane %v8626, 1
      %v8791 = vrot.slane %v8627, 1
      %v8792 = vsel %vm687, %v8790, %v8791
      %v8793 = vrot.slane %v8628, 1
      %v8794 = vsel %vm687, %v8791, %v8793
      %8795 = vrot.lane.b32.xlu0 %v8717, 40
      %v8796 = vpop.permute.xlu0 %8795
      %8797 = vrot.lane.b32.xlu0 %v8719, 40
      %v8798 = vpop.permute.xlu0 %8797
      %8799 = vrot.lane.b32.xlu0 %v8722, 40
      %v8800 = vpop.permute.xlu0 %8799
      %8801 = vrot.lane.b32.xlu0 %v8724, 40
      %v8802 = vpop.permute.xlu0 %8801
      %8803 = vrot.lane.b32.xlu0 %v8727, 40
      %v8804 = vpop.permute.xlu0 %8803
      %8805 = vrot.lane.b32.xlu0 %v8729, 40
      %v8806 = vpop.permute.xlu0 %8805
      %8807 = vrot.lane.b32.xlu0 %v8732, 40
      %v8808 = vpop.permute.xlu0 %8807
      %8809 = vrot.lane.b32.xlu0 %v8734, 40
      %v8810 = vpop.permute.xlu0 %8809
      %8811 = vrot.lane.b32.xlu0 %v8737, 40
      %v8812 = vpop.permute.xlu0 %8811
      %8813 = vrot.lane.b32.xlu0 %v8739, 40
      %v8814 = vpop.permute.xlu0 %8813
      %8815 = vrot.lane.b32.xlu0 %v8742, 40
      %v8816 = vpop.permute.xlu0 %8815
      %8817 = vrot.lane.b32.xlu0 %v8744, 40
      %v8818 = vpop.permute.xlu0 %8817
      %8819 = vrot.lane.b32.xlu0 %v8747, 40
      %v8820 = vpop.permute.xlu0 %8819
      %8821 = vrot.lane.b32.xlu0 %v8749, 40
      %v8822 = vpop.permute.xlu0 %8821
      %8823 = vrot.lane.b32.xlu0 %v8752, 40
      %v8824 = vpop.permute.xlu0 %8823
      %8825 = vrot.lane.b32.xlu0 %v8754, 40
      %v8826 = vpop.permute.xlu0 %8825
      %8827 = vrot.lane.b32.xlu0 %v8757, 40
      %v8828 = vpop.permute.xlu0 %8827
      %8829 = vrot.lane.b32.xlu0 %v8759, 40
      %v8830 = vpop.permute.xlu0 %8829
      %8831 = vrot.lane.b32.xlu0 %v8762, 40
      %v8832 = vpop.permute.xlu0 %8831
      %8833 = vrot.lane.b32.xlu0 %v8764, 40
      %v8834 = vpop.permute.xlu0 %8833
      %8835 = vrot.lane.b32.xlu0 %v8767, 40
      %v8836 = vpop.permute.xlu0 %8835
      %8837 = vrot.lane.b32.xlu0 %v8769, 40
      %v8838 = vpop.permute.xlu0 %8837
      %8839 = vrot.lane.b32.xlu0 %v8772, 40
      %v8840 = vpop.permute.xlu0 %8839
      %8841 = vrot.lane.b32.xlu0 %v8774, 40
      %v8842 = vpop.permute.xlu0 %8841
      %8843 = vrot.lane.b32.xlu0 %v8777, 40
      %v8844 = vpop.permute.xlu0 %8843
      %8845 = vrot.lane.b32.xlu0 %v8779, 40
      %v8846 = vpop.permute.xlu0 %8845
      %8847 = vrot.lane.b32.xlu0 %v8782, 40
      %v8848 = vpop.permute.xlu0 %8847
      %8849 = vrot.lane.b32.xlu0 %v8784, 40
      %v8850 = vpop.permute.xlu0 %8849
      %8851 = vrot.lane.b32.xlu0 %v8787, 40
      %v8852 = vpop.permute.xlu0 %8851
      %8853 = vrot.lane.b32.xlu0 %v8789, 40
      %v8854 = vpop.permute.xlu0 %8853
      %8855 = vrot.lane.b32.xlu0 %v8792, 40
      %v8856 = vpop.permute.xlu0 %8855
      %8857 = vrot.lane.b32.xlu0 %v8794, 40
      %v8858 = vpop.permute.xlu0 %8857
      %vm8891 = vcmask 654656
      %8892 = vst.msk [vmem:[#allocation3] sm:$0xff] %vm8891, %v8796
      %8893 = vst.msk [vmem:[#allocation3 + $0x18] sm:$0xff] %vm8891, %v8798
      %8894 = vst.msk [vmem:[#allocation3 + $0x30] sm:$0xff] %vm8891, %v8800
      %8895 = vst.msk [vmem:[#allocation3 + $0x48] sm:$0xff] %vm8891, %v8802
      %8896 = vst.msk [vmem:[#allocation3 + $0x60] sm:$0xff] %vm8891, %v8804
      %8897 = vst.msk [vmem:[#allocation3 + $0x78] sm:$0xff] %vm8891, %v8806
      %8898 = vst.msk [vmem:[#allocation3 + $0x90] sm:$0xff] %vm8891, %v8808
      %8899 = vst.msk [vmem:[#allocation3 + $0xa8] sm:$0xff] %vm8891, %v8810
      %8900 = vst.msk [vmem:[#allocation3 + $0xc0] sm:$0xff] %vm8891, %v8812
      %8901 = vst.msk [vmem:[#allocation3 + $0xd8] sm:$0xff] %vm8891, %v8814
      %8902 = vst.msk [vmem:[#allocation3 + $0xf0] sm:$0xff] %vm8891, %v8816
      %8903 = vst.msk [vmem:[#allocation3 + $0x108] sm:$0xff] %vm8891, %v8818
      %8904 = vst.msk [vmem:[#allocation3 + $0x120] sm:$0xff] %vm8891, %v8820
      %8905 = vst.msk [vmem:[#allocation3 + $0x138] sm:$0xff] %vm8891, %v8822
      %8906 = vst.msk [vmem:[#allocation3 + $0x150] sm:$0xff] %vm8891, %v8824
      %8907 = vst.msk [vmem:[#allocation3 + $0x168] sm:$0xff] %vm8891, %v8826
      %8908 = vst.msk [vmem:[#allocation3 + $0x180] sm:$0xff] %vm8891, %v8828
      %8909 = vst.msk [vmem:[#allocation3 + $0x198] sm:$0xff] %vm8891, %v8830
      %8910 = vst.msk [vmem:[#allocation3 + $0x1b0] sm:$0xff] %vm8891, %v8832
      %8911 = vst.msk [vmem:[#allocation3 + $0x1c8] sm:$0xff] %vm8891, %v8834
      %8912 = vst.msk [vmem:[#allocation3 + $0x1e0] sm:$0xff] %vm8891, %v8836
      %8913 = vst.msk [vmem:[#allocation3 + $0x1f8] sm:$0xff] %vm8891, %v8838
      %8914 = vst.msk [vmem:[#allocation3 + $0x210] sm:$0xff] %vm8891, %v8840
      %8915 = vst.msk [vmem:[#allocation3 + $0x228] sm:$0xff] %vm8891, %v8842
      %8916 = vst.msk [vmem:[#allocation3 + $0x240] sm:$0xff] %vm8891, %v8844
      %8917 = vst.msk [vmem:[#allocation3 + $0x258] sm:$0xff] %vm8891, %v8846
      %8918 = vst.msk [vmem:[#allocation3 + $0x270] sm:$0xff] %vm8891, %v8848
      %8919 = vst.msk [vmem:[#allocation3 + $0x288] sm:$0xff] %vm8891, %v8850
      %8920 = vst.msk [vmem:[#allocation3 + $0x2a0] sm:$0xff] %vm8891, %v8852
      %8921 = vst.msk [vmem:[#allocation3 + $0x2b8] sm:$0xff] %vm8891, %v8854
      %8922 = vst.msk [vmem:[#allocation3 + $0x2d0] sm:$0xff] %vm8891, %v8856
      %8923 = vst.msk [vmem:[#allocation3 + $0x2e8] sm:$0xff] %vm8891, %v8858
      %v8924 = vrot.slane %v8581, 2
      %v8925 = vrot.slane %v8582, 2
      %v8926 = vsel %vm897, %v8924, %v8925
      %v8927 = vrot.slane %v8583, 2
      %v8928 = vsel %vm897, %v8925, %v8927
      %v8929 = vrot.slane %v8584, 2
      %v8930 = vrot.slane %v8585, 2
      %v8931 = vsel %vm897, %v8929, %v8930
      %v8932 = vrot.slane %v8586, 2
      %v8933 = vsel %vm897, %v8930, %v8932
      %v8934 = vrot.slane %v8587, 2
      %v8935 = vrot.slane %v8588, 2
      %v8936 = vsel %vm897, %v8934, %v8935
      %v8937 = vrot.slane %v8589, 2
      %v8938 = vsel %vm897, %v8935, %v8937
      %v8939 = vrot.slane %v8590, 2
      %v8940 = vrot.slane %v8591, 2
      %v8941 = vsel %vm897, %v8939, %v8940
      %v8942 = vrot.slane %v8592, 2
      %v8943 = vsel %vm897, %v8940, %v8942
      %v8944 = vrot.slane %v8593, 2
      %v8945 = vrot.slane %v8594, 2
      %v8946 = vsel %vm897, %v8944, %v8945
      %v8947 = vrot.slane %v8595, 2
      %v8948 = vsel %vm897, %v8945, %v8947
      %v8949 = vrot.slane %v8596, 2
      %v8950 = vrot.slane %v8597, 2
      %v8951 = vsel %vm897, %v8949, %v8950
      %v8952 = vrot.slane %v8598, 2
      %v8953 = vsel %vm897, %v8950, %v8952
      %v8954 = vrot.slane %v8599, 2
      %v8955 = vrot.slane %v8600, 2
      %v8956 = vsel %vm897, %v8954, %v8955
      %v8957 = vrot.slane %v8601, 2
      %v8958 = vsel %vm897, %v8955, %v8957
      %v8959 = vrot.slane %v8602, 2
      %v8960 = vrot.slane %v8603, 2
      %v8961 = vsel %vm897, %v8959, %v8960
      %v8962 = vrot.slane %v8604, 2
      %v8963 = vsel %vm897, %v8960, %v8962
      %v8964 = vrot.slane %v8605, 2
      %v8965 = vrot.slane %v8606, 2
      %v8966 = vsel %vm897, %v8964, %v8965
      %v8967 = vrot.slane %v8607, 2
      %v8968 = vsel %vm897, %v8965, %v8967
      %v8969 = vrot.slane %v8608, 2
      %v8970 = vrot.slane %v8609, 2
      %v8971 = vsel %vm897, %v8969, %v8970
      %v8972 = vrot.slane %v8610, 2
      %v8973 = vsel %vm897, %v8970, %v8972
      %v8974 = vrot.slane %v8611, 2
      %v8975 = vrot.slane %v8612, 2
      %v8976 = vsel %vm897, %v8974, %v8975
      %v8977 = vrot.slane %v8613, 2
      %v8978 = vsel %vm897, %v8975, %v8977
      %v8979 = vrot.slane %v8614, 2
      %v8980 = vrot.slane %v8615, 2
      %v8981 = vsel %vm897, %v8979, %v8980
      %v8982 = vrot.slane %v8616, 2
      %v8983 = vsel %vm897, %v8980, %v8982
      %v8984 = vrot.slane %v8617, 2
      %v8985 = vrot.slane %v8618, 2
      %v8986 = vsel %vm897, %v8984, %v8985
      %v8987 = vrot.slane %v8619, 2
      %v8988 = vsel %vm897, %v8985, %v8987
      %v8989 = vrot.slane %v8620, 2
      %v8990 = vrot.slane %v8621, 2
      %v8991 = vsel %vm897, %v8989, %v8990
      %v8992 = vrot.slane %v8622, 2
      %v8993 = vsel %vm897, %v8990, %v8992
      %v8994 = vrot.slane %v8623, 2
      %v8995 = vrot.slane %v8624, 2
      %v8996 = vsel %vm897, %v8994, %v8995
      %v8997 = vrot.slane %v8625, 2
      %v8998 = vsel %vm897, %v8995, %v8997
      %v8999 = vrot.slane %v8626, 2
      %v9000 = vrot.slane %v8627, 2
      %v9001 = vsel %vm897, %v8999, %v9000
      %v9002 = vrot.slane %v8628, 2
      %v9003 = vsel %vm897, %v9000, %v9002
      %9004 = vrot.lane.b32.xlu0 %v8926, 80
      %v9005 = vpop.permute.xlu0 %9004
      %9006 = vrot.lane.b32.xlu0 %v8928, 80
      %v9007 = vpop.permute.xlu0 %9006
      %9008 = vrot.lane.b32.xlu0 %v8931, 80
      %v9009 = vpop.permute.xlu0 %9008
      %9010 = vrot.lane.b32.xlu0 %v8933, 80
      %v9011 = vpop.permute.xlu0 %9010
      %9012 = vrot.lane.b32.xlu0 %v8936, 80
      %v9013 = vpop.permute.xlu0 %9012
      %9014 = vrot.lane.b32.xlu0 %v8938, 80
      %v9015 = vpop.permute.xlu0 %9014
      %9016 = vrot.lane.b32.xlu0 %v8941, 80
      %v9017 = vpop.permute.xlu0 %9016
      %9018 = vrot.lane.b32.xlu0 %v8943, 80
      %v9019 = vpop.permute.xlu0 %9018
      %9020 = vrot.lane.b32.xlu0 %v8946, 80
      %v9021 = vpop.permute.xlu0 %9020
      %9022 = vrot.lane.b32.xlu0 %v8948, 80
      %v9023 = vpop.permute.xlu0 %9022
      %9024 = vrot.lane.b32.xlu0 %v8951, 80
      %v9025 = vpop.permute.xlu0 %9024
      %9026 = vrot.lane.b32.xlu0 %v8953, 80
      %v9027 = vpop.permute.xlu0 %9026
      %9028 = vrot.lane.b32.xlu0 %v8956, 80
      %v9029 = vpop.permute.xlu0 %9028
      %9030 = vrot.lane.b32.xlu0 %v8958, 80
      %v9031 = vpop.permute.xlu0 %9030
      %9032 = vrot.lane.b32.xlu0 %v8961, 80
      %v9033 = vpop.permute.xlu0 %9032
      %9034 = vrot.lane.b32.xlu0 %v8963, 80
      %v9035 = vpop.permute.xlu0 %9034
      %9036 = vrot.lane.b32.xlu0 %v8966, 80
      %v9037 = vpop.permute.xlu0 %9036
      %9038 = vrot.lane.b32.xlu0 %v8968, 80
      %v9039 = vpop.permute.xlu0 %9038
      %9040 = vrot.lane.b32.xlu0 %v8971, 80
      %v9041 = vpop.permute.xlu0 %9040
      %9042 = vrot.lane.b32.xlu0 %v8973, 80
      %v9043 = vpop.permute.xlu0 %9042
      %9044 = vrot.lane.b32.xlu0 %v8976, 80
      %v9045 = vpop.permute.xlu0 %9044
      %9046 = vrot.lane.b32.xlu0 %v8978, 80
      %v9047 = vpop.permute.xlu0 %9046
      %9048 = vrot.lane.b32.xlu0 %v8981, 80
      %v9049 = vpop.permute.xlu0 %9048
      %9050 = vrot.lane.b32.xlu0 %v8983, 80
      %v9051 = vpop.permute.xlu0 %9050
      %9052 = vrot.lane.b32.xlu0 %v8986, 80
      %v9053 = vpop.permute.xlu0 %9052
      %9054 = vrot.lane.b32.xlu0 %v8988, 80
      %v9055 = vpop.permute.xlu0 %9054
      %9056 = vrot.lane.b32.xlu0 %v8991, 80
      %v9057 = vpop.permute.xlu0 %9056
      %9058 = vrot.lane.b32.xlu0 %v8993, 80
      %v9059 = vpop.permute.xlu0 %9058
      %9060 = vrot.lane.b32.xlu0 %v8996, 80
      %v9061 = vpop.permute.xlu0 %9060
      %9062 = vrot.lane.b32.xlu0 %v8998, 80
      %v9063 = vpop.permute.xlu0 %9062
      %9064 = vrot.lane.b32.xlu0 %v9001, 80
      %v9065 = vpop.permute.xlu0 %9064
      %9066 = vrot.lane.b32.xlu0 %v9003, 80
      %v9067 = vpop.permute.xlu0 %9066
      %vm9100 = vcmask 982656
      %9101 = vst.msk [vmem:[#allocation3] sm:$0xff] %vm9100, %v9005
      %9102 = vst.msk [vmem:[#allocation3 + $0x18] sm:$0xff] %vm9100, %v9007
      %9103 = vst.msk [vmem:[#allocation3 + $0x30] sm:$0xff] %vm9100, %v9009
      %9104 = vst.msk [vmem:[#allocation3 + $0x48] sm:$0xff] %vm9100, %v9011
      %9105 = vst.msk [vmem:[#allocation3 + $0x60] sm:$0xff] %vm9100, %v9013
      %9106 = vst.msk [vmem:[#allocation3 + $0x78] sm:$0xff] %vm9100, %v9015
      %9107 = vst.msk [vmem:[#allocation3 + $0x90] sm:$0xff] %vm9100, %v9017
      %9108 = vst.msk [vmem:[#allocation3 + $0xa8] sm:$0xff] %vm9100, %v9019
      %9109 = vst.msk [vmem:[#allocation3 + $0xc0] sm:$0xff] %vm9100, %v9021
      %9110 = vst.msk [vmem:[#allocation3 + $0xd8] sm:$0xff] %vm9100, %v9023
      %9111 = vst.msk [vmem:[#allocation3 + $0xf0] sm:$0xff] %vm9100, %v9025
      %9112 = vst.msk [vmem:[#allocation3 + $0x108] sm:$0xff] %vm9100, %v9027
      %9113 = vst.msk [vmem:[#allocation3 + $0x120] sm:$0xff] %vm9100, %v9029
      %9114 = vst.msk [vmem:[#allocation3 + $0x138] sm:$0xff] %vm9100, %v9031
      %9115 = vst.msk [vmem:[#allocation3 + $0x150] sm:$0xff] %vm9100, %v9033
      %9116 = vst.msk [vmem:[#allocation3 + $0x168] sm:$0xff] %vm9100, %v9035
      %9117 = vst.msk [vmem:[#allocation3 + $0x180] sm:$0xff] %vm9100, %v9037
      %9118 = vst.msk [vmem:[#allocation3 + $0x198] sm:$0xff] %vm9100, %v9039
      %9119 = vst.msk [vmem:[#allocation3 + $0x1b0] sm:$0xff] %vm9100, %v9041
      %9120 = vst.msk [vmem:[#allocation3 + $0x1c8] sm:$0xff] %vm9100, %v9043
      %9121 = vst.msk [vmem:[#allocation3 + $0x1e0] sm:$0xff] %vm9100, %v9045
      %9122 = vst.msk [vmem:[#allocation3 + $0x1f8] sm:$0xff] %vm9100, %v9047
      %9123 = vst.msk [vmem:[#allocation3 + $0x210] sm:$0xff] %vm9100, %v9049
      %9124 = vst.msk [vmem:[#allocation3 + $0x228] sm:$0xff] %vm9100, %v9051
      %9125 = vst.msk [vmem:[#allocation3 + $0x240] sm:$0xff] %vm9100, %v9053
      %9126 = vst.msk [vmem:[#allocation3 + $0x258] sm:$0xff] %vm9100, %v9055
      %9127 = vst.msk [vmem:[#allocation3 + $0x270] sm:$0xff] %vm9100, %v9057
      %9128 = vst.msk [vmem:[#allocation3 + $0x288] sm:$0xff] %vm9100, %v9059
      %9129 = vst.msk [vmem:[#allocation3 + $0x2a0] sm:$0xff] %vm9100, %v9061
      %9130 = vst.msk [vmem:[#allocation3 + $0x2b8] sm:$0xff] %vm9100, %v9063
      %9131 = vst.msk [vmem:[#allocation3 + $0x2d0] sm:$0xff] %vm9100, %v9065
      %9132 = vst.msk [vmem:[#allocation3 + $0x2e8] sm:$0xff] %vm9100, %v9067
      %9135 = vrot.lane.b32.xlu0 %v8584, 120
      %v9136 = vpop.permute.xlu0 %9135
      %9137 = vrot.lane.b32.xlu0 %v8585, 120
      %v9138 = vpop.permute.xlu0 %9137
      %9139 = vrot.lane.b32.xlu0 %v8587, 120
      %v9140 = vpop.permute.xlu0 %9139
      %9141 = vrot.lane.b32.xlu0 %v8588, 120
      %v9142 = vpop.permute.xlu0 %9141
      %9143 = vrot.lane.b32.xlu0 %v8590, 120
      %v9144 = vpop.permute.xlu0 %9143
      %9145 = vrot.lane.b32.xlu0 %v8591, 120
      %v9146 = vpop.permute.xlu0 %9145
      %9147 = vrot.lane.b32.xlu0 %v8593, 120
      %v9148 = vpop.permute.xlu0 %9147
      %9149 = vrot.lane.b32.xlu0 %v8594, 120
      %v9150 = vpop.permute.xlu0 %9149
      %9151 = vrot.lane.b32.xlu0 %v8596, 120
      %v9152 = vpop.permute.xlu0 %9151
      %9153 = vrot.lane.b32.xlu0 %v8597, 120
      %v9154 = vpop.permute.xlu0 %9153
      %9155 = vrot.lane.b32.xlu0 %v8599, 120
      %v9156 = vpop.permute.xlu0 %9155
      %9157 = vrot.lane.b32.xlu0 %v8600, 120
      %v9158 = vpop.permute.xlu0 %9157
      %9159 = vrot.lane.b32.xlu0 %v8602, 120
      %v9160 = vpop.permute.xlu0 %9159
      %9161 = vrot.lane.b32.xlu0 %v8603, 120
      %v9162 = vpop.permute.xlu0 %9161
      %9163 = vrot.lane.b32.xlu0 %v8605, 120
      %v9164 = vpop.permute.xlu0 %9163
      %9165 = vrot.lane.b32.xlu0 %v8606, 120
      %v9166 = vpop.permute.xlu0 %9165
      %9167 = vrot.lane.b32.xlu0 %v8608, 120
      %v9168 = vpop.permute.xlu0 %9167
      %9169 = vrot.lane.b32.xlu0 %v8609, 120
      %v9170 = vpop.permute.xlu0 %9169
      %9171 = vrot.lane.b32.xlu0 %v8611, 120
      %v9172 = vpop.permute.xlu0 %9171
      %9173 = vrot.lane.b32.xlu0 %v8612, 120
      %v9174 = vpop.permute.xlu0 %9173
      %9175 = vrot.lane.b32.xlu0 %v8614, 120
      %v9176 = vpop.permute.xlu0 %9175
      %9177 = vrot.lane.b32.xlu0 %v8615, 120
      %v9178 = vpop.permute.xlu0 %9177
      %9179 = vrot.lane.b32.xlu0 %v8617, 120
      %v9180 = vpop.permute.xlu0 %9179
      %9181 = vrot.lane.b32.xlu0 %v8618, 120
      %v9182 = vpop.permute.xlu0 %9181
      %9183 = vrot.lane.b32.xlu0 %v8620, 120
      %v9184 = vpop.permute.xlu0 %9183
      %9185 = vrot.lane.b32.xlu0 %v8621, 120
      %v9186 = vpop.permute.xlu0 %9185
      %9187 = vrot.lane.b32.xlu0 %v8623, 120
      %v9188 = vpop.permute.xlu0 %9187
      %9189 = vrot.lane.b32.xlu0 %v8624, 120
      %v9190 = vpop.permute.xlu0 %9189
      %9191 = vrot.lane.b32.xlu0 %v8626, 120
      %v9192 = vpop.permute.xlu0 %9191
      %9193 = vrot.lane.b32.xlu0 %v8627, 120
      %v9194 = vpop.permute.xlu0 %9193
      %9195 = vrot.lane.b32.xlu0 %v8629, 120
      %v9196 = vpop.permute.xlu0 %9195
      %9197 = vrot.lane.b32.xlu0 %v8630, 120
      %v9198 = vpop.permute.xlu0 %9197
      %9231 = vst.msk [vmem:[#allocation3] sm:$0xff] %vm5423, %v9136
      %9232 = vst.msk [vmem:[#allocation3 + $0x8] sm:$0xff] %vm6683, %v9136
      %9233 = vst.msk [vmem:[#allocation3 + $0x18] sm:$0xff] %vm5423, %v9138
      %9234 = vst.msk [vmem:[#allocation3 + $0x20] sm:$0xff] %vm6683, %v9138
      %9235 = vst.msk [vmem:[#allocation3 + $0x30] sm:$0xff] %vm5423, %v9140
      %9236 = vst.msk [vmem:[#allocation3 + $0x38] sm:$0xff] %vm6683, %v9140
      %9237 = vst.msk [vmem:[#allocation3 + $0x48] sm:$0xff] %vm5423, %v9142
      %9238 = vst.msk [vmem:[#allocation3 + $0x50] sm:$0xff] %vm6683, %v9142
      %9239 = vst.msk [vmem:[#allocation3 + $0x60] sm:$0xff] %vm5423, %v9144
      %9240 = vst.msk [vmem:[#allocation3 + $0x68] sm:$0xff] %vm6683, %v9144
      %9241 = vst.msk [vmem:[#allocation3 + $0x78] sm:$0xff] %vm5423, %v9146
      %9242 = vst.msk [vmem:[#allocation3 + $0x80] sm:$0xff] %vm6683, %v9146
      %9243 = vst.msk [vmem:[#allocation3 + $0x90] sm:$0xff] %vm5423, %v9148
      %9244 = vst.msk [vmem:[#allocation3 + $0x98] sm:$0xff] %vm6683, %v9148
      %9245 = vst.msk [vmem:[#allocation3 + $0xa8] sm:$0xff] %vm5423, %v9150
      %9246 = vst.msk [vmem:[#allocation3 + $0xb0] sm:$0xff] %vm6683, %v9150
      %9247 = vst.msk [vmem:[#allocation3 + $0xc0] sm:$0xff] %vm5423, %v9152
      %9248 = vst.msk [vmem:[#allocation3 + $0xc8] sm:$0xff] %vm6683, %v9152
      %9249 = vst.msk [vmem:[#allocation3 + $0xd8] sm:$0xff] %vm5423, %v9154
      %9250 = vst.msk [vmem:[#allocation3 + $0xe0] sm:$0xff] %vm6683, %v9154
      %9251 = vst.msk [vmem:[#allocation3 + $0xf0] sm:$0xff] %vm5423, %v9156
      %9252 = vst.msk [vmem:[#allocation3 + $0xf8] sm:$0xff] %vm6683, %v9156
      %9253 = vst.msk [vmem:[#allocation3 + $0x108] sm:$0xff] %vm5423, %v9158
      %9254 = vst.msk [vmem:[#allocation3 + $0x110] sm:$0xff] %vm6683, %v9158
      %9255 = vst.msk [vmem:[#allocation3 + $0x120] sm:$0xff] %vm5423, %v9160
      %9256 = vst.msk [vmem:[#allocation3 + $0x128] sm:$0xff] %vm6683, %v9160
      %9257 = vst.msk [vmem:[#allocation3 + $0x138] sm:$0xff] %vm5423, %v9162
      %9258 = vst.msk [vmem:[#allocation3 + $0x140] sm:$0xff] %vm6683, %v9162
      %9259 = vst.msk [vmem:[#allocation3 + $0x150] sm:$0xff] %vm5423, %v9164
      %9260 = vst.msk [vmem:[#allocation3 + $0x158] sm:$0xff] %vm6683, %v9164
      %9261 = vst.msk [vmem:[#allocation3 + $0x168] sm:$0xff] %vm5423, %v9166
      %9262 = vst.msk [vmem:[#allocation3 + $0x170] sm:$0xff] %vm6683, %v9166
      %9263 = vst.msk [vmem:[#allocation3 + $0x180] sm:$0xff] %vm5423, %v9168
      %9264 = vst.msk [vmem:[#allocation3 + $0x188] sm:$0xff] %vm6683, %v9168
      %9265 = vst.msk [vmem:[#allocation3 + $0x198] sm:$0xff] %vm5423, %v9170
      %9266 = vst.msk [vmem:[#allocation3 + $0x1a0] sm:$0xff] %vm6683, %v9170
      %9267 = vst.msk [vmem:[#allocation3 + $0x1b0] sm:$0xff] %vm5423, %v9172
      %9268 = vst.msk [vmem:[#allocation3 + $0x1b8] sm:$0xff] %vm6683, %v9172
      %9269 = vst.msk [vmem:[#allocation3 + $0x1c8] sm:$0xff] %vm5423, %v9174
      %9270 = vst.msk [vmem:[#allocation3 + $0x1d0] sm:$0xff] %vm6683, %v9174
      %9271 = vst.msk [vmem:[#allocation3 + $0x1e0] sm:$0xff] %vm5423, %v9176
      %9272 = vst.msk [vmem:[#allocation3 + $0x1e8] sm:$0xff] %vm6683, %v9176
      %9273 = vst.msk [vmem:[#allocation3 + $0x1f8] sm:$0xff] %vm5423, %v9178
      %9274 = vst.msk [vmem:[#allocation3 + $0x200] sm:$0xff] %vm6683, %v9178
      %9275 = vst.msk [vmem:[#allocation3 + $0x210] sm:$0xff] %vm5423, %v9180
      %9276 = vst.msk [vmem:[#allocation3 + $0x218] sm:$0xff] %vm6683, %v9180
      %9277 = vst.msk [vmem:[#allocation3 + $0x228] sm:$0xff] %vm5423, %v9182
      %9278 = vst.msk [vmem:[#allocation3 + $0x230] sm:$0xff] %vm6683, %v9182
      %9279 = vst.msk [vmem:[#allocation3 + $0x240] sm:$0xff] %vm5423, %v9184
      %9280 = vst.msk [vmem:[#allocation3 + $0x248] sm:$0xff] %vm6683, %v9184
      %9281 = vst.msk [vmem:[#allocation3 + $0x258] sm:$0xff] %vm5423, %v9186
      %9282 = vst.msk [vmem:[#allocation3 + $0x260] sm:$0xff] %vm6683, %v9186
      %9283 = vst.msk [vmem:[#allocation3 + $0x270] sm:$0xff] %vm5423, %v9188
      %9284 = vst.msk [vmem:[#allocation3 + $0x278] sm:$0xff] %vm6683, %v9188
      %9285 = vst.msk [vmem:[#allocation3 + $0x288] sm:$0xff] %vm5423, %v9190
      %9286 = vst.msk [vmem:[#allocation3 + $0x290] sm:$0xff] %vm6683, %v9190
      %9287 = vst.msk [vmem:[#allocation3 + $0x2a0] sm:$0xff] %vm5423, %v9192
      %9288 = vst.msk [vmem:[#allocation3 + $0x2a8] sm:$0xff] %vm6683, %v9192
      %9289 = vst.msk [vmem:[#allocation3 + $0x2b8] sm:$0xff] %vm5423, %v9194
      %9290 = vst.msk [vmem:[#allocation3 + $0x2c0] sm:$0xff] %vm6683, %v9194
      %9291 = vst.msk [vmem:[#allocation3 + $0x2d0] sm:$0xff] %vm5423, %v9196
      %9292 = vst.msk [vmem:[#allocation3 + $0x2d8] sm:$0xff] %vm6683, %v9196
      %9293 = vst.msk [vmem:[#allocation3 + $0x2e8] sm:$0xff] %vm5423, %v9198
      %9294 = vst.msk [vmem:[#allocation3 + $0x2f0] sm:$0xff] %vm6683, %v9198
      %v9296 = vrot.slane %v8629, 1
      %v9297 = vrot.slane %v8630, 1
      %v9298 = vsel %vm687, %v9296, %v9297
      %v9299 = vrot.slane %v8631, 1
      %v9300 = vsel %vm687, %v9297, %v9299
      %9301 = vrot.lane.b32.xlu0 %v8722, 32
      %v9302 = vpop.permute.xlu0 %9301
      %9303 = vrot.lane.b32.xlu0 %v8724, 32
      %v9304 = vpop.permute.xlu0 %9303
      %9305 = vrot.lane.b32.xlu0 %v8727, 32
      %v9306 = vpop.permute.xlu0 %9305
      %9307 = vrot.lane.b32.xlu0 %v8729, 32
      %v9308 = vpop.permute.xlu0 %9307
      %9309 = vrot.lane.b32.xlu0 %v8732, 32
      %v9310 = vpop.permute.xlu0 %9309
      %9311 = vrot.lane.b32.xlu0 %v8734, 32
      %v9312 = vpop.permute.xlu0 %9311
      %9313 = vrot.lane.b32.xlu0 %v8737, 32
      %v9314 = vpop.permute.xlu0 %9313
      %9315 = vrot.lane.b32.xlu0 %v8739, 32
      %v9316 = vpop.permute.xlu0 %9315
      %9317 = vrot.lane.b32.xlu0 %v8742, 32
      %v9318 = vpop.permute.xlu0 %9317
      %9319 = vrot.lane.b32.xlu0 %v8744, 32
      %v9320 = vpop.permute.xlu0 %9319
      %9321 = vrot.lane.b32.xlu0 %v8747, 32
      %v9322 = vpop.permute.xlu0 %9321
      %9323 = vrot.lane.b32.xlu0 %v8749, 32
      %v9324 = vpop.permute.xlu0 %9323
      %9325 = vrot.lane.b32.xlu0 %v8752, 32
      %v9326 = vpop.permute.xlu0 %9325
      %9327 = vrot.lane.b32.xlu0 %v8754, 32
      %v9328 = vpop.permute.xlu0 %9327
      %9329 = vrot.lane.b32.xlu0 %v8757, 32
      %v9330 = vpop.permute.xlu0 %9329
      %9331 = vrot.lane.b32.xlu0 %v8759, 32
      %v9332 = vpop.permute.xlu0 %9331
      %9333 = vrot.lane.b32.xlu0 %v8762, 32
      %v9334 = vpop.permute.xlu0 %9333
      %9335 = vrot.lane.b32.xlu0 %v8764, 32
      %v9336 = vpop.permute.xlu0 %9335
      %9337 = vrot.lane.b32.xlu0 %v8767, 32
      %v9338 = vpop.permute.xlu0 %9337
      %9339 = vrot.lane.b32.xlu0 %v8769, 32
      %v9340 = vpop.permute.xlu0 %9339
      %9341 = vrot.lane.b32.xlu0 %v8772, 32
      %v9342 = vpop.permute.xlu0 %9341
      %9343 = vrot.lane.b32.xlu0 %v8774, 32
      %v9344 = vpop.permute.xlu0 %9343
      %9345 = vrot.lane.b32.xlu0 %v8777, 32
      %v9346 = vpop.permute.xlu0 %9345
      %9347 = vrot.lane.b32.xlu0 %v8779, 32
      %v9348 = vpop.permute.xlu0 %9347
      %9349 = vrot.lane.b32.xlu0 %v8782, 32
      %v9350 = vpop.permute.xlu0 %9349
      %9351 = vrot.lane.b32.xlu0 %v8784, 32
      %v9352 = vpop.permute.xlu0 %9351
      %9353 = vrot.lane.b32.xlu0 %v8787, 32
      %v9354 = vpop.permute.xlu0 %9353
      %9355 = vrot.lane.b32.xlu0 %v8789, 32
      %v9356 = vpop.permute.xlu0 %9355
      %9357 = vrot.lane.b32.xlu0 %v8792, 32
      %v9358 = vpop.permute.xlu0 %9357
      %9359 = vrot.lane.b32.xlu0 %v8794, 32
      %v9360 = vpop.permute.xlu0 %9359
      %9361 = vrot.lane.b32.xlu0 %v9298, 32
      %v9362 = vpop.permute.xlu0 %9361
      %9363 = vrot.lane.b32.xlu0 %v9300, 32
      %v9364 = vpop.permute.xlu0 %9363
      %vm9397 = vcmask 589056
      %9398 = vst.msk [vmem:[#allocation3 + $0x8] sm:$0xff] %vm9397, %v9302
      %9399 = vst.msk [vmem:[#allocation3 + $0x20] sm:$0xff] %vm9397, %v9304
      %9400 = vst.msk [vmem:[#allocation3 + $0x38] sm:$0xff] %vm9397, %v9306
      %9401 = vst.msk [vmem:[#allocation3 + $0x50] sm:$0xff] %vm9397, %v9308
      %9402 = vst.msk [vmem:[#allocation3 + $0x68] sm:$0xff] %vm9397, %v9310
      %9403 = vst.msk [vmem:[#allocation3 + $0x80] sm:$0xff] %vm9397, %v9312
      %9404 = vst.msk [vmem:[#allocation3 + $0x98] sm:$0xff] %vm9397, %v9314
      %9405 = vst.msk [vmem:[#allocation3 + $0xb0] sm:$0xff] %vm9397, %v9316
      %9406 = vst.msk [vmem:[#allocation3 + $0xc8] sm:$0xff] %vm9397, %v9318
      %9407 = vst.msk [vmem:[#allocation3 + $0xe0] sm:$0xff] %vm9397, %v9320
      %9408 = vst.msk [vmem:[#allocation3 + $0xf8] sm:$0xff] %vm9397, %v9322
      %9409 = vst.msk [vmem:[#allocation3 + $0x110] sm:$0xff] %vm9397, %v9324
      %9410 = vst.msk [vmem:[#allocation3 + $0x128] sm:$0xff] %vm9397, %v9326
      %9411 = vst.msk [vmem:[#allocation3 + $0x140] sm:$0xff] %vm9397, %v9328
      %9412 = vst.msk [vmem:[#allocation3 + $0x158] sm:$0xff] %vm9397, %v9330
      %9413 = vst.msk [vmem:[#allocation3 + $0x170] sm:$0xff] %vm9397, %v9332
      %9414 = vst.msk [vmem:[#allocation3 + $0x188] sm:$0xff] %vm9397, %v9334
      %9415 = vst.msk [vmem:[#allocation3 + $0x1a0] sm:$0xff] %vm9397, %v9336
      %9416 = vst.msk [vmem:[#allocation3 + $0x1b8] sm:$0xff] %vm9397, %v9338
      %9417 = vst.msk [vmem:[#allocation3 + $0x1d0] sm:$0xff] %vm9397, %v9340
      %9418 = vst.msk [vmem:[#allocation3 + $0x1e8] sm:$0xff] %vm9397, %v9342
      %9419 = vst.msk [vmem:[#allocation3 + $0x200] sm:$0xff] %vm9397, %v9344
      %9420 = vst.msk [vmem:[#allocation3 + $0x218] sm:$0xff] %vm9397, %v9346
      %9421 = vst.msk [vmem:[#allocation3 + $0x230] sm:$0xff] %vm9397, %v9348
      %9422 = vst.msk [vmem:[#allocation3 + $0x248] sm:$0xff] %vm9397, %v9350
      %9423 = vst.msk [vmem:[#allocation3 + $0x260] sm:$0xff] %vm9397, %v9352
      %9424 = vst.msk [vmem:[#allocation3 + $0x278] sm:$0xff] %vm9397, %v9354
      %9425 = vst.msk [vmem:[#allocation3 + $0x290] sm:$0xff] %vm9397, %v9356
      %9426 = vst.msk [vmem:[#allocation3 + $0x2a8] sm:$0xff] %vm9397, %v9358
      %9427 = vst.msk [vmem:[#allocation3 + $0x2c0] sm:$0xff] %vm9397, %v9360
      %9428 = vst.msk [vmem:[#allocation3 + $0x2d8] sm:$0xff] %vm9397, %v9362
      %9429 = vst.msk [vmem:[#allocation3 + $0x2f0] sm:$0xff] %vm9397, %v9364
      %v9430 = vrot.slane %v8629, 2
      %v9431 = vrot.slane %v8630, 2
      %v9432 = vsel %vm897, %v9430, %v9431
      %v9433 = vrot.slane %v8631, 2
      %v9434 = vsel %vm897, %v9431, %v9433
      %9435 = vrot.lane.b32.xlu0 %v8931, 72
      %v9436 = vpop.permute.xlu0 %9435
      %9437 = vrot.lane.b32.xlu0 %v8933, 72
      %v9438 = vpop.permute.xlu0 %9437
      %9439 = vrot.lane.b32.xlu0 %v8936, 72
      %v9440 = vpop.permute.xlu0 %9439
      %9441 = vrot.lane.b32.xlu0 %v8938, 72
      %v9442 = vpop.permute.xlu0 %9441
      %9443 = vrot.lane.b32.xlu0 %v8941, 72
      %v9444 = vpop.permute.xlu0 %9443
      %9445 = vrot.lane.b32.xlu0 %v8943, 72
      %v9446 = vpop.permute.xlu0 %9445
      %9447 = vrot.lane.b32.xlu0 %v8946, 72
      %v9448 = vpop.permute.xlu0 %9447
      %9449 = vrot.lane.b32.xlu0 %v8948, 72
      %v9450 = vpop.permute.xlu0 %9449
      %9451 = vrot.lane.b32.xlu0 %v8951, 72
      %v9452 = vpop.permute.xlu0 %9451
      %9453 = vrot.lane.b32.xlu0 %v8953, 72
      %v9454 = vpop.permute.xlu0 %9453
      %9455 = vrot.lane.b32.xlu0 %v8956, 72
      %v9456 = vpop.permute.xlu0 %9455
      %9457 = vrot.lane.b32.xlu0 %v8958, 72
      %v9458 = vpop.permute.xlu0 %9457
      %9459 = vrot.lane.b32.xlu0 %v8961, 72
      %v9460 = vpop.permute.xlu0 %9459
      %9461 = vrot.lane.b32.xlu0 %v8963, 72
      %v9462 = vpop.permute.xlu0 %9461
      %9463 = vrot.lane.b32.xlu0 %v8966, 72
      %v9464 = vpop.permute.xlu0 %9463
      %9465 = vrot.lane.b32.xlu0 %v8968, 72
      %v9466 = vpop.permute.xlu0 %9465
      %9467 = vrot.lane.b32.xlu0 %v8971, 72
      %v9468 = vpop.permute.xlu0 %9467
      %9469 = vrot.lane.b32.xlu0 %v8973, 72
      %v9470 = vpop.permute.xlu0 %9469
      %9471 = vrot.lane.b32.xlu0 %v8976, 72
      %v9472 = vpop.permute.xlu0 %9471
      %9473 = vrot.lane.b32.xlu0 %v8978, 72
      %v9474 = vpop.permute.xlu0 %9473
      %9475 = vrot.lane.b32.xlu0 %v8981, 72
      %v9476 = vpop.permute.xlu0 %9475
      %9477 = vrot.lane.b32.xlu0 %v8983, 72
      %v9478 = vpop.permute.xlu0 %9477
      %9479 = vrot.lane.b32.xlu0 %v8986, 72
      %v9480 = vpop.permute.xlu0 %9479
      %9481 = vrot.lane.b32.xlu0 %v8988, 72
      %v9482 = vpop.permute.xlu0 %9481
      %9483 = vrot.lane.b32.xlu0 %v8991, 72
      %v9484 = vpop.permute.xlu0 %9483
      %9485 = vrot.lane.b32.xlu0 %v8993, 72
      %v9486 = vpop.permute.xlu0 %9485
      %9487 = vrot.lane.b32.xlu0 %v8996, 72
      %v9488 = vpop.permute.xlu0 %9487
      %9489 = vrot.lane.b32.xlu0 %v8998, 72
      %v9490 = vpop.permute.xlu0 %9489
      %9491 = vrot.lane.b32.xlu0 %v9001, 72
      %v9492 = vpop.permute.xlu0 %9491
      %9493 = vrot.lane.b32.xlu0 %v9003, 72
      %v9494 = vpop.permute.xlu0 %9493
      %9495 = vrot.lane.b32.xlu0 %v9432, 72
      %v9496 = vpop.permute.xlu0 %9495
      %9497 = vrot.lane.b32.xlu0 %v9434, 72
      %v9498 = vpop.permute.xlu0 %9497
      %vm9531 = vcmask 917056
      %9532 = vst.msk [vmem:[#allocation3 + $0x8] sm:$0xff] %vm9531, %v9436
      %9533 = vst.msk [vmem:[#allocation3 + $0x20] sm:$0xff] %vm9531, %v9438
      %9534 = vst.msk [vmem:[#allocation3 + $0x38] sm:$0xff] %vm9531, %v9440
      %9535 = vst.msk [vmem:[#allocation3 + $0x50] sm:$0xff] %vm9531, %v9442
      %9536 = vst.msk [vmem:[#allocation3 + $0x68] sm:$0xff] %vm9531, %v9444
      %9537 = vst.msk [vmem:[#allocation3 + $0x80] sm:$0xff] %vm9531, %v9446
      %9538 = vst.msk [vmem:[#allocation3 + $0x98] sm:$0xff] %vm9531, %v9448
      %9539 = vst.msk [vmem:[#allocation3 + $0xb0] sm:$0xff] %vm9531, %v9450
      %9540 = vst.msk [vmem:[#allocation3 + $0xc8] sm:$0xff] %vm9531, %v9452
      %9541 = vst.msk [vmem:[#allocation3 + $0xe0] sm:$0xff] %vm9531, %v9454
      %9542 = vst.msk [vmem:[#allocation3 + $0xf8] sm:$0xff] %vm9531, %v9456
      %9543 = vst.msk [vmem:[#allocation3 + $0x110] sm:$0xff] %vm9531, %v9458
      %9544 = vst.msk [vmem:[#allocation3 + $0x128] sm:$0xff] %vm9531, %v9460
      %9545 = vst.msk [vmem:[#allocation3 + $0x140] sm:$0xff] %vm9531, %v9462
      %9546 = vst.msk [vmem:[#allocation3 + $0x158] sm:$0xff] %vm9531, %v9464
      %9547 = vst.msk [vmem:[#allocation3 + $0x170] sm:$0xff] %vm9531, %v9466
      %9548 = vst.msk [vmem:[#allocation3 + $0x188] sm:$0xff] %vm9531, %v9468
      %9549 = vst.msk [vmem:[#allocation3 + $0x1a0] sm:$0xff] %vm9531, %v9470
      %9550 = vst.msk [vmem:[#allocation3 + $0x1b8] sm:$0xff] %vm9531, %v9472
      %9551 = vst.msk [vmem:[#allocation3 + $0x1d0] sm:$0xff] %vm9531, %v9474
      %9552 = vst.msk [vmem:[#allocation3 + $0x1e8] sm:$0xff] %vm9531, %v9476
      %9553 = vst.msk [vmem:[#allocation3 + $0x200] sm:$0xff] %vm9531, %v9478
      %9554 = vst.msk [vmem:[#allocation3 + $0x218] sm:$0xff] %vm9531, %v9480
      %9555 = vst.msk [vmem:[#allocation3 + $0x230] sm:$0xff] %vm9531, %v9482
      %9556 = vst.msk [vmem:[#allocation3 + $0x248] sm:$0xff] %vm9531, %v9484
      %9557 = vst.msk [vmem:[#allocation3 + $0x260] sm:$0xff] %vm9531, %v9486
      %9558 = vst.msk [vmem:[#allocation3 + $0x278] sm:$0xff] %vm9531, %v9488
      %9559 = vst.msk [vmem:[#allocation3 + $0x290] sm:$0xff] %vm9531, %v9490
      %9560 = vst.msk [vmem:[#allocation3 + $0x2a8] sm:$0xff] %vm9531, %v9492
      %9561 = vst.msk [vmem:[#allocation3 + $0x2c0] sm:$0xff] %vm9531, %v9494
      %9562 = vst.msk [vmem:[#allocation3 + $0x2d8] sm:$0xff] %vm9531, %v9496
      %9563 = vst.msk [vmem:[#allocation3 + $0x2f0] sm:$0xff] %vm9531, %v9498
      %9566 = vrot.lane.b32.xlu0 %v8587, 112
      %v9567 = vpop.permute.xlu0 %9566
      %9568 = vrot.lane.b32.xlu0 %v8588, 112
      %v9569 = vpop.permute.xlu0 %9568
      %9570 = vrot.lane.b32.xlu0 %v8590, 112
      %v9571 = vpop.permute.xlu0 %9570
      %9572 = vrot.lane.b32.xlu0 %v8591, 112
      %v9573 = vpop.permute.xlu0 %9572
      %9574 = vrot.lane.b32.xlu0 %v8593, 112
      %v9575 = vpop.permute.xlu0 %9574
      %9576 = vrot.lane.b32.xlu0 %v8594, 112
      %v9577 = vpop.permute.xlu0 %9576
      %9578 = vrot.lane.b32.xlu0 %v8596, 112
      %v9579 = vpop.permute.xlu0 %9578
      %9580 = vrot.lane.b32.xlu0 %v8597, 112
      %v9581 = vpop.permute.xlu0 %9580
      %9582 = vrot.lane.b32.xlu0 %v8599, 112
      %v9583 = vpop.permute.xlu0 %9582
      %9584 = vrot.lane.b32.xlu0 %v8600, 112
      %v9585 = vpop.permute.xlu0 %9584
      %9586 = vrot.lane.b32.xlu0 %v8602, 112
      %v9587 = vpop.permute.xlu0 %9586
      %9588 = vrot.lane.b32.xlu0 %v8603, 112
      %v9589 = vpop.permute.xlu0 %9588
      %9590 = vrot.lane.b32.xlu0 %v8605, 112
      %v9591 = vpop.permute.xlu0 %9590
      %9592 = vrot.lane.b32.xlu0 %v8606, 112
      %v9593 = vpop.permute.xlu0 %9592
      %9594 = vrot.lane.b32.xlu0 %v8608, 112
      %v9595 = vpop.permute.xlu0 %9594
      %9596 = vrot.lane.b32.xlu0 %v8609, 112
      %v9597 = vpop.permute.xlu0 %9596
      %9598 = vrot.lane.b32.xlu0 %v8611, 112
      %v9599 = vpop.permute.xlu0 %9598
      %9600 = vrot.lane.b32.xlu0 %v8612, 112
      %v9601 = vpop.permute.xlu0 %9600
      %9602 = vrot.lane.b32.xlu0 %v8614, 112
      %v9603 = vpop.permute.xlu0 %9602
      %9604 = vrot.lane.b32.xlu0 %v8615, 112
      %v9605 = vpop.permute.xlu0 %9604
      %9606 = vrot.lane.b32.xlu0 %v8617, 112
      %v9607 = vpop.permute.xlu0 %9606
      %9608 = vrot.lane.b32.xlu0 %v8618, 112
      %v9609 = vpop.permute.xlu0 %9608
      %9610 = vrot.lane.b32.xlu0 %v8620, 112
      %v9611 = vpop.permute.xlu0 %9610
      %9612 = vrot.lane.b32.xlu0 %v8621, 112
      %v9613 = vpop.permute.xlu0 %9612
      %9614 = vrot.lane.b32.xlu0 %v8623, 112
      %v9615 = vpop.permute.xlu0 %9614
      %9616 = vrot.lane.b32.xlu0 %v8624, 112
      %v9617 = vpop.permute.xlu0 %9616
      %9618 = vrot.lane.b32.xlu0 %v8626, 112
      %v9619 = vpop.permute.xlu0 %9618
      %9620 = vrot.lane.b32.xlu0 %v8627, 112
      %v9621 = vpop.permute.xlu0 %9620
      %9622 = vrot.lane.b32.xlu0 %v8629, 112
      %v9623 = vpop.permute.xlu0 %9622
      %9624 = vrot.lane.b32.xlu0 %v8630, 112
      %v9625 = vpop.permute.xlu0 %9624
      %9626 = vrot.lane.b32.xlu0 %v8632, 112
      %v9627 = vpop.permute.xlu0 %9626
      %9628 = vrot.lane.b32.xlu0 %v8633, 112
      %v9629 = vpop.permute.xlu0 %9628
      %9662 = vst.msk [vmem:[#allocation3 + $0x8] sm:$0xff] %vm3670, %v9567
      %9663 = vst.msk [vmem:[#allocation3 + $0x10] sm:$0xff] %vm4557, %v9567
      %9664 = vst.msk [vmem:[#allocation3 + $0x20] sm:$0xff] %vm3670, %v9569
      %9665 = vst.msk [vmem:[#allocation3 + $0x28] sm:$0xff] %vm4557, %v9569
      %9666 = vst.msk [vmem:[#allocation3 + $0x38] sm:$0xff] %vm3670, %v9571
      %9667 = vst.msk [vmem:[#allocation3 + $0x40] sm:$0xff] %vm4557, %v9571
      %9668 = vst.msk [vmem:[#allocation3 + $0x50] sm:$0xff] %vm3670, %v9573
      %9669 = vst.msk [vmem:[#allocation3 + $0x58] sm:$0xff] %vm4557, %v9573
      %9670 = vst.msk [vmem:[#allocation3 + $0x68] sm:$0xff] %vm3670, %v9575
      %9671 = vst.msk [vmem:[#allocation3 + $0x70] sm:$0xff] %vm4557, %v9575
      %9672 = vst.msk [vmem:[#allocation3 + $0x80] sm:$0xff] %vm3670, %v9577
      %9673 = vst.msk [vmem:[#allocation3 + $0x88] sm:$0xff] %vm4557, %v9577
      %9674 = vst.msk [vmem:[#allocation3 + $0x98] sm:$0xff] %vm3670, %v9579
      %9675 = vst.msk [vmem:[#allocation3 + $0xa0] sm:$0xff] %vm4557, %v9579
      %9676 = vst.msk [vmem:[#allocation3 + $0xb0] sm:$0xff] %vm3670, %v9581
      %9677 = vst.msk [vmem:[#allocation3 + $0xb8] sm:$0xff] %vm4557, %v9581
      %9678 = vst.msk [vmem:[#allocation3 + $0xc8] sm:$0xff] %vm3670, %v9583
      %9679 = vst.msk [vmem:[#allocation3 + $0xd0] sm:$0xff] %vm4557, %v9583
      %9680 = vst.msk [vmem:[#allocation3 + $0xe0] sm:$0xff] %vm3670, %v9585
      %9681 = vst.msk [vmem:[#allocation3 + $0xe8] sm:$0xff] %vm4557, %v9585
      %9682 = vst.msk [vmem:[#allocation3 + $0xf8] sm:$0xff] %vm3670, %v9587
      %9683 = vst.msk [vmem:[#allocation3 + $0x100] sm:$0xff] %vm4557, %v9587
      %9684 = vst.msk [vmem:[#allocation3 + $0x110] sm:$0xff] %vm3670, %v9589
      %9685 = vst.msk [vmem:[#allocation3 + $0x118] sm:$0xff] %vm4557, %v9589
      %9686 = vst.msk [vmem:[#allocation3 + $0x128] sm:$0xff] %vm3670, %v9591
      %9687 = vst.msk [vmem:[#allocation3 + $0x130] sm:$0xff] %vm4557, %v9591
      %9688 = vst.msk [vmem:[#allocation3 + $0x140] sm:$0xff] %vm3670, %v9593
      %9689 = vst.msk [vmem:[#allocation3 + $0x148] sm:$0xff] %vm4557, %v9593
      %9690 = vst.msk [vmem:[#allocation3 + $0x158] sm:$0xff] %vm3670, %v9595
      %9691 = vst.msk [vmem:[#allocation3 + $0x160] sm:$0xff] %vm4557, %v9595
      %9692 = vst.msk [vmem:[#allocation3 + $0x170] sm:$0xff] %vm3670, %v9597
      %9693 = vst.msk [vmem:[#allocation3 + $0x178] sm:$0xff] %vm4557, %v9597
      %9694 = vst.msk [vmem:[#allocation3 + $0x188] sm:$0xff] %vm3670, %v9599
      %9695 = vst.msk [vmem:[#allocation3 + $0x190] sm:$0xff] %vm4557, %v9599
      %9696 = vst.msk [vmem:[#allocation3 + $0x1a0] sm:$0xff] %vm3670, %v9601
      %9697 = vst.msk [vmem:[#allocation3 + $0x1a8] sm:$0xff] %vm4557, %v9601
      %9698 = vst.msk [vmem:[#allocation3 + $0x1b8] sm:$0xff] %vm3670, %v9603
      %9699 = vst.msk [vmem:[#allocation3 + $0x1c0] sm:$0xff] %vm4557, %v9603
      %9700 = vst.msk [vmem:[#allocation3 + $0x1d0] sm:$0xff] %vm3670, %v9605
      %9701 = vst.msk [vmem:[#allocation3 + $0x1d8] sm:$0xff] %vm4557, %v9605
      %9702 = vst.msk [vmem:[#allocation3 + $0x1e8] sm:$0xff] %vm3670, %v9607
      %9703 = vst.msk [vmem:[#allocation3 + $0x1f0] sm:$0xff] %vm4557, %v9607
      %9704 = vst.msk [vmem:[#allocation3 + $0x200] sm:$0xff] %vm3670, %v9609
      %9705 = vst.msk [vmem:[#allocation3 + $0x208] sm:$0xff] %vm4557, %v9609
      %9706 = vst.msk [vmem:[#allocation3 + $0x218] sm:$0xff] %vm3670, %v9611
      %9707 = vst.msk [vmem:[#allocation3 + $0x220] sm:$0xff] %vm4557, %v9611
      %9708 = vst.msk [vmem:[#allocation3 + $0x230] sm:$0xff] %vm3670, %v9613
      %9709 = vst.msk [vmem:[#allocation3 + $0x238] sm:$0xff] %vm4557, %v9613
      %9710 = vst.msk [vmem:[#allocation3 + $0x248] sm:$0xff] %vm3670, %v9615
      %9711 = vst.msk [vmem:[#allocation3 + $0x250] sm:$0xff] %vm4557, %v9615
      %9712 = vst.msk [vmem:[#allocation3 + $0x260] sm:$0xff] %vm3670, %v9617
      %9713 = vst.msk [vmem:[#allocation3 + $0x268] sm:$0xff] %vm4557, %v9617
      %9714 = vst.msk [vmem:[#allocation3 + $0x278] sm:$0xff] %vm3670, %v9619
      %9715 = vst.msk [vmem:[#allocation3 + $0x280] sm:$0xff] %vm4557, %v9619
      %9716 = vst.msk [vmem:[#allocation3 + $0x290] sm:$0xff] %vm3670, %v9621
      %9717 = vst.msk [vmem:[#allocation3 + $0x298] sm:$0xff] %vm4557, %v9621
      %9718 = vst.msk [vmem:[#allocation3 + $0x2a8] sm:$0xff] %vm3670, %v9623
      %9719 = vst.msk [vmem:[#allocation3 + $0x2b0] sm:$0xff] %vm4557, %v9623
      %9720 = vst.msk [vmem:[#allocation3 + $0x2c0] sm:$0xff] %vm3670, %v9625
      %9721 = vst.msk [vmem:[#allocation3 + $0x2c8] sm:$0xff] %vm4557, %v9625
      %9722 = vst.msk [vmem:[#allocation3 + $0x2d8] sm:$0xff] %vm3670, %v9627
      %9723 = vst.msk [vmem:[#allocation3 + $0x2e0] sm:$0xff] %vm4557, %v9627
      %9724 = vst.msk [vmem:[#allocation3 + $0x2f0] sm:$0xff] %vm3670, %v9629
      %9725 = vst.msk [vmem:[#allocation3 + $0x2f8] sm:$0xff] %vm4557, %v9629
      %v9727 = vrot.slane %v8632, 1
      %v9728 = vrot.slane %v8633, 1
      %v9729 = vsel %vm687, %v9727, %v9728
      %v9730 = vrot.slane %v8634, 1
      %v9731 = vsel %vm687, %v9728, %v9730
      %9732 = vrot.lane.b32.xlu0 %v8727, 24
      %v9733 = vpop.permute.xlu0 %9732
      %9734 = vrot.lane.b32.xlu0 %v8729, 24
      %v9735 = vpop.permute.xlu0 %9734
      %9736 = vrot.lane.b32.xlu0 %v8732, 24
      %v9737 = vpop.permute.xlu0 %9736
      %9738 = vrot.lane.b32.xlu0 %v8734, 24
      %v9739 = vpop.permute.xlu0 %9738
      %9740 = vrot.lane.b32.xlu0 %v8737, 24
      %v9741 = vpop.permute.xlu0 %9740
      %9742 = vrot.lane.b32.xlu0 %v8739, 24
      %v9743 = vpop.permute.xlu0 %9742
      %9744 = vrot.lane.b32.xlu0 %v8742, 24
      %v9745 = vpop.permute.xlu0 %9744
      %9746 = vrot.lane.b32.xlu0 %v8744, 24
      %v9747 = vpop.permute.xlu0 %9746
      %9748 = vrot.lane.b32.xlu0 %v8747, 24
      %v9749 = vpop.permute.xlu0 %9748
      %9750 = vrot.lane.b32.xlu0 %v8749, 24
      %v9751 = vpop.permute.xlu0 %9750
      %9752 = vrot.lane.b32.xlu0 %v8752, 24
      %v9753 = vpop.permute.xlu0 %9752
      %9754 = vrot.lane.b32.xlu0 %v8754, 24
      %v9755 = vpop.permute.xlu0 %9754
      %9756 = vrot.lane.b32.xlu0 %v8757, 24
      %v9757 = vpop.permute.xlu0 %9756
      %9758 = vrot.lane.b32.xlu0 %v8759, 24
      %v9759 = vpop.permute.xlu0 %9758
      %9760 = vrot.lane.b32.xlu0 %v8762, 24
      %v9761 = vpop.permute.xlu0 %9760
      %9762 = vrot.lane.b32.xlu0 %v8764, 24
      %v9763 = vpop.permute.xlu0 %9762
      %9764 = vrot.lane.b32.xlu0 %v8767, 24
      %v9765 = vpop.permute.xlu0 %9764
      %9766 = vrot.lane.b32.xlu0 %v8769, 24
      %v9767 = vpop.permute.xlu0 %9766
      %9768 = vrot.lane.b32.xlu0 %v8772, 24
      %v9769 = vpop.permute.xlu0 %9768
      %9770 = vrot.lane.b32.xlu0 %v8774, 24
      %v9771 = vpop.permute.xlu0 %9770
      %9772 = vrot.lane.b32.xlu0 %v8777, 24
      %v9773 = vpop.permute.xlu0 %9772
      %9774 = vrot.lane.b32.xlu0 %v8779, 24
      %v9775 = vpop.permute.xlu0 %9774
      %9776 = vrot.lane.b32.xlu0 %v8782, 24
      %v9777 = vpop.permute.xlu0 %9776
      %9778 = vrot.lane.b32.xlu0 %v8784, 24
      %v9779 = vpop.permute.xlu0 %9778
      %9780 = vrot.lane.b32.xlu0 %v8787, 24
      %v9781 = vpop.permute.xlu0 %9780
      %9782 = vrot.lane.b32.xlu0 %v8789, 24
      %v9783 = vpop.permute.xlu0 %9782
      %9784 = vrot.lane.b32.xlu0 %v8792, 24
      %v9785 = vpop.permute.xlu0 %9784
      %9786 = vrot.lane.b32.xlu0 %v8794, 24
      %v9787 = vpop.permute.xlu0 %9786
      %9788 = vrot.lane.b32.xlu0 %v9298, 24
      %v9789 = vpop.permute.xlu0 %9788
      %9790 = vrot.lane.b32.xlu0 %v9300, 24
      %v9791 = vpop.permute.xlu0 %9790
      %9792 = vrot.lane.b32.xlu0 %v9729, 24
      %v9793 = vpop.permute.xlu0 %9792
      %9794 = vrot.lane.b32.xlu0 %v9731, 24
      %v9795 = vpop.permute.xlu0 %9794
      %vm9828 = vcmask 523456
      %9829 = vst.msk [vmem:[#allocation3 + $0x10] sm:$0xff] %vm9828, %v9733
      %9830 = vst.msk [vmem:[#allocation3 + $0x28] sm:$0xff] %vm9828, %v9735
      %9831 = vst.msk [vmem:[#allocation3 + $0x40] sm:$0xff] %vm9828, %v9737
      %9832 = vst.msk [vmem:[#allocation3 + $0x58] sm:$0xff] %vm9828, %v9739
      %9833 = vst.msk [vmem:[#allocation3 + $0x70] sm:$0xff] %vm9828, %v9741
      %9834 = vst.msk [vmem:[#allocation3 + $0x88] sm:$0xff] %vm9828, %v9743
      %9835 = vst.msk [vmem:[#allocation3 + $0xa0] sm:$0xff] %vm9828, %v9745
      %9836 = vst.msk [vmem:[#allocation3 + $0xb8] sm:$0xff] %vm9828, %v9747
      %9837 = vst.msk [vmem:[#allocation3 + $0xd0] sm:$0xff] %vm9828, %v9749
      %9838 = vst.msk [vmem:[#allocation3 + $0xe8] sm:$0xff] %vm9828, %v9751
      %9839 = vst.msk [vmem:[#allocation3 + $0x100] sm:$0xff] %vm9828, %v9753
      %9840 = vst.msk [vmem:[#allocation3 + $0x118] sm:$0xff] %vm9828, %v9755
      %9841 = vst.msk [vmem:[#allocation3 + $0x130] sm:$0xff] %vm9828, %v9757
      %9842 = vst.msk [vmem:[#allocation3 + $0x148] sm:$0xff] %vm9828, %v9759
      %9843 = vst.msk [vmem:[#allocation3 + $0x160] sm:$0xff] %vm9828, %v9761
      %9844 = vst.msk [vmem:[#allocation3 + $0x178] sm:$0xff] %vm9828, %v9763
      %9845 = vst.msk [vmem:[#allocation3 + $0x190] sm:$0xff] %vm9828, %v9765
      %9846 = vst.msk [vmem:[#allocation3 + $0x1a8] sm:$0xff] %vm9828, %v9767
      %9847 = vst.msk [vmem:[#allocation3 + $0x1c0] sm:$0xff] %vm9828, %v9769
      %9848 = vst.msk [vmem:[#allocation3 + $0x1d8] sm:$0xff] %vm9828, %v9771
      %9849 = vst.msk [vmem:[#allocation3 + $0x1f0] sm:$0xff] %vm9828, %v9773
      %9850 = vst.msk [vmem:[#allocation3 + $0x208] sm:$0xff] %vm9828, %v9775
      %9851 = vst.msk [vmem:[#allocation3 + $0x220] sm:$0xff] %vm9828, %v9777
      %9852 = vst.msk [vmem:[#allocation3 + $0x238] sm:$0xff] %vm9828, %v9779
      %9853 = vst.msk [vmem:[#allocation3 + $0x250] sm:$0xff] %vm9828, %v9781
      %9854 = vst.msk [vmem:[#allocation3 + $0x268] sm:$0xff] %vm9828, %v9783
      %9855 = vst.msk [vmem:[#allocation3 + $0x280] sm:$0xff] %vm9828, %v9785
      %9856 = vst.msk [vmem:[#allocation3 + $0x298] sm:$0xff] %vm9828, %v9787
      %9857 = vst.msk [vmem:[#allocation3 + $0x2b0] sm:$0xff] %vm9828, %v9789
      %9858 = vst.msk [vmem:[#allocation3 + $0x2c8] sm:$0xff] %vm9828, %v9791
      %9859 = vst.msk [vmem:[#allocation3 + $0x2e0] sm:$0xff] %vm9828, %v9793
      %9860 = vst.msk [vmem:[#allocation3 + $0x2f8] sm:$0xff] %vm9828, %v9795
      %v9861 = vrot.slane %v8632, 2
      %v9862 = vrot.slane %v8633, 2
      %v9863 = vsel %vm897, %v9861, %v9862
      %v9864 = vrot.slane %v8634, 2
      %v9865 = vsel %vm897, %v9862, %v9864
      %9866 = vrot.lane.b32.xlu0 %v8936, 64
      %v9867 = vpop.permute.xlu0 %9866
      %9868 = vrot.lane.b32.xlu0 %v8938, 64
      %v9869 = vpop.permute.xlu0 %9868
      %9870 = vrot.lane.b32.xlu0 %v8941, 64
      %v9871 = vpop.permute.xlu0 %9870
      %9872 = vrot.lane.b32.xlu0 %v8943, 64
      %v9873 = vpop.permute.xlu0 %9872
      %9874 = vrot.lane.b32.xlu0 %v8946, 64
      %v9875 = vpop.permute.xlu0 %9874
      %9876 = vrot.lane.b32.xlu0 %v8948, 64
      %v9877 = vpop.permute.xlu0 %9876
      %9878 = vrot.lane.b32.xlu0 %v8951, 64
      %v9879 = vpop.permute.xlu0 %9878
      %9880 = vrot.lane.b32.xlu0 %v8953, 64
      %v9881 = vpop.permute.xlu0 %9880
      %9882 = vrot.lane.b32.xlu0 %v8956, 64
      %v9883 = vpop.permute.xlu0 %9882
      %9884 = vrot.lane.b32.xlu0 %v8958, 64
      %v9885 = vpop.permute.xlu0 %9884
      %9886 = vrot.lane.b32.xlu0 %v8961, 64
      %v9887 = vpop.permute.xlu0 %9886
      %9888 = vrot.lane.b32.xlu0 %v8963, 64
      %v9889 = vpop.permute.xlu0 %9888
      %9890 = vrot.lane.b32.xlu0 %v8966, 64
      %v9891 = vpop.permute.xlu0 %9890
      %9892 = vrot.lane.b32.xlu0 %v8968, 64
      %v9893 = vpop.permute.xlu0 %9892
      %9894 = vrot.lane.b32.xlu0 %v8971, 64
      %v9895 = vpop.permute.xlu0 %9894
      %9896 = vrot.lane.b32.xlu0 %v8973, 64
      %v9897 = vpop.permute.xlu0 %9896
      %9898 = vrot.lane.b32.xlu0 %v8976, 64
      %v9899 = vpop.permute.xlu0 %9898
      %9900 = vrot.lane.b32.xlu0 %v8978, 64
      %v9901 = vpop.permute.xlu0 %9900
      %9902 = vrot.lane.b32.xlu0 %v8981, 64
      %v9903 = vpop.permute.xlu0 %9902
      %9904 = vrot.lane.b32.xlu0 %v8983, 64
      %v9905 = vpop.permute.xlu0 %9904
      %9906 = vrot.lane.b32.xlu0 %v8986, 64
      %v9907 = vpop.permute.xlu0 %9906
      %9908 = vrot.lane.b32.xlu0 %v8988, 64
      %v9909 = vpop.permute.xlu0 %9908
      %9910 = vrot.lane.b32.xlu0 %v8991, 64
      %v9911 = vpop.permute.xlu0 %9910
      %9912 = vrot.lane.b32.xlu0 %v8993, 64
      %v9913 = vpop.permute.xlu0 %9912
      %9914 = vrot.lane.b32.xlu0 %v8996, 64
      %v9915 = vpop.permute.xlu0 %9914
      %9916 = vrot.lane.b32.xlu0 %v8998, 64
      %v9917 = vpop.permute.xlu0 %9916
      %9918 = vrot.lane.b32.xlu0 %v9001, 64
      %v9919 = vpop.permute.xlu0 %9918
      %9920 = vrot.lane.b32.xlu0 %v9003, 64
      %v9921 = vpop.permute.xlu0 %9920
      %9922 = vrot.lane.b32.xlu0 %v9432, 64
      %v9923 = vpop.permute.xlu0 %9922
      %9924 = vrot.lane.b32.xlu0 %v9434, 64
      %v9925 = vpop.permute.xlu0 %9924
      %9926 = vrot.lane.b32.xlu0 %v9863, 64
      %v9927 = vpop.permute.xlu0 %9926
      %9928 = vrot.lane.b32.xlu0 %v9865, 64
      %v9929 = vpop.permute.xlu0 %9928
      %vm9962 = vcmask 851456
      %9963 = vst.msk [vmem:[#allocation3 + $0x10] sm:$0xff] %vm9962, %v9867
      %9964 = vst.msk [vmem:[#allocation3 + $0x28] sm:$0xff] %vm9962, %v9869
      %9965 = vst.msk [vmem:[#allocation3 + $0x40] sm:$0xff] %vm9962, %v9871
      %9966 = vst.msk [vmem:[#allocation3 + $0x58] sm:$0xff] %vm9962, %v9873
      %9967 = vst.msk [vmem:[#allocation3 + $0x70] sm:$0xff] %vm9962, %v9875
      %9968 = vst.msk [vmem:[#allocation3 + $0x88] sm:$0xff] %vm9962, %v9877
      %9969 = vst.msk [vmem:[#allocation3 + $0xa0] sm:$0xff] %vm9962, %v9879
      %9970 = vst.msk [vmem:[#allocation3 + $0xb8] sm:$0xff] %vm9962, %v9881
      %9971 = vst.msk [vmem:[#allocation3 + $0xd0] sm:$0xff] %vm9962, %v9883
      %9972 = vst.msk [vmem:[#allocation3 + $0xe8] sm:$0xff] %vm9962, %v9885
      %9973 = vst.msk [vmem:[#allocation3 + $0x100] sm:$0xff] %vm9962, %v9887
      %9974 = vst.msk [vmem:[#allocation3 + $0x118] sm:$0xff] %vm9962, %v9889
      %9975 = vst.msk [vmem:[#allocation3 + $0x130] sm:$0xff] %vm9962, %v9891
      %9976 = vst.msk [vmem:[#allocation3 + $0x148] sm:$0xff] %vm9962, %v9893
      %9977 = vst.msk [vmem:[#allocation3 + $0x160] sm:$0xff] %vm9962, %v9895
      %9978 = vst.msk [vmem:[#allocation3 + $0x178] sm:$0xff] %vm9962, %v9897
      %9979 = vst.msk [vmem:[#allocation3 + $0x190] sm:$0xff] %vm9962, %v9899
      %9980 = vst.msk [vmem:[#allocation3 + $0x1a8] sm:$0xff] %vm9962, %v9901
      %9981 = vst.msk [vmem:[#allocation3 + $0x1c0] sm:$0xff] %vm9962, %v9903
      %9982 = vst.msk [vmem:[#allocation3 + $0x1d8] sm:$0xff] %vm9962, %v9905
      %9983 = vst.msk [vmem:[#allocation3 + $0x1f0] sm:$0xff] %vm9962, %v9907
      %9984 = vst.msk [vmem:[#allocation3 + $0x208] sm:$0xff] %vm9962, %v9909
      %9985 = vst.msk [vmem:[#allocation3 + $0x220] sm:$0xff] %vm9962, %v9911
      %9986 = vst.msk [vmem:[#allocation3 + $0x238] sm:$0xff] %vm9962, %v9913
      %9987 = vst.msk [vmem:[#allocation3 + $0x250] sm:$0xff] %vm9962, %v9915
      %9988 = vst.msk [vmem:[#allocation3 + $0x268] sm:$0xff] %vm9962, %v9917
      %9989 = vst.msk [vmem:[#allocation3 + $0x280] sm:$0xff] %vm9962, %v9919
      %9990 = vst.msk [vmem:[#allocation3 + $0x298] sm:$0xff] %vm9962, %v9921
      %9991 = vst.msk [vmem:[#allocation3 + $0x2b0] sm:$0xff] %vm9962, %v9923
      %9992 = vst.msk [vmem:[#allocation3 + $0x2c8] sm:$0xff] %vm9962, %v9925
      %9993 = vst.msk [vmem:[#allocation3 + $0x2e0] sm:$0xff] %vm9962, %v9927
      %9994 = vst.msk [vmem:[#allocation3 + $0x2f8] sm:$0xff] %vm9962, %v9929
      %v9995 = vld [vmem:[#allocation3] sm:$0xff]
      %v9996 = vld [vmem:[#allocation3 + $0x8] sm:$0xff]
      %v9997 = vld [vmem:[#allocation3 + $0x10] sm:$0xff]
      %v9998 = vld [vmem:[#allocation3 + $0x18] sm:$0xff]
      %v9999 = vld [vmem:[#allocation3 + $0x20] sm:$0xff]
      %v10000 = vld [vmem:[#allocation3 + $0x28] sm:$0xff]
      %v10001 = vld [vmem:[#allocation3 + $0x30] sm:$0xff]
      %v10002 = vld [vmem:[#allocation3 + $0x38] sm:$0xff]
      %v10003 = vld [vmem:[#allocation3 + $0x40] sm:$0xff]
      %v10004 = vld [vmem:[#allocation3 + $0x48] sm:$0xff]
      %v10005 = vld [vmem:[#allocation3 + $0x50] sm:$0xff]
      %v10006 = vld [vmem:[#allocation3 + $0x58] sm:$0xff]
      %v10007 = vld [vmem:[#allocation3 + $0x60] sm:$0xff]
      %v10008 = vld [vmem:[#allocation3 + $0x68] sm:$0xff]
      %v10009 = vld [vmem:[#allocation3 + $0x70] sm:$0xff]
      %v10010 = vld [vmem:[#allocation3 + $0x78] sm:$0xff]
      %v10011 = vld [vmem:[#allocation3 + $0x80] sm:$0xff]
      %v10012 = vld [vmem:[#allocation3 + $0x88] sm:$0xff]
      %v10013 = vld [vmem:[#allocation3 + $0x90] sm:$0xff]
      %v10014 = vld [vmem:[#allocation3 + $0x98] sm:$0xff]
      %v10015 = vld [vmem:[#allocation3 + $0xa0] sm:$0xff]
      %v10016 = vld [vmem:[#allocation3 + $0xa8] sm:$0xff]
      %v10017 = vld [vmem:[#allocation3 + $0xb0] sm:$0xff]
      %v10018 = vld [vmem:[#allocation3 + $0xb8] sm:$0xff]
      %v10019 = vld [vmem:[#allocation3 + $0xc0] sm:$0xff]
      %v10020 = vld [vmem:[#allocation3 + $0xc8] sm:$0xff]
      %v10021 = vld [vmem:[#allocation3 + $0xd0] sm:$0xff]
      %v10022 = vld [vmem:[#allocation3 + $0xd8] sm:$0xff]
      %v10023 = vld [vmem:[#allocation3 + $0xe0] sm:$0xff]
      %v10024 = vld [vmem:[#allocation3 + $0xe8] sm:$0xff]
      %v10025 = vld [vmem:[#allocation3 + $0xf0] sm:$0xff]
      %v10026 = vld [vmem:[#allocation3 + $0xf8] sm:$0xff]
      %v10027 = vld [vmem:[#allocation3 + $0x100] sm:$0xff]
      %v10028 = vld [vmem:[#allocation3 + $0x108] sm:$0xff]
      %v10029 = vld [vmem:[#allocation3 + $0x110] sm:$0xff]
      %v10030 = vld [vmem:[#allocation3 + $0x118] sm:$0xff]
      %v10031 = vld [vmem:[#allocation3 + $0x120] sm:$0xff]
      %v10032 = vld [vmem:[#allocation3 + $0x128] sm:$0xff]
      %v10033 = vld [vmem:[#allocation3 + $0x130] sm:$0xff]
      %v10034 = vld [vmem:[#allocation3 + $0x138] sm:$0xff]
      %v10035 = vld [vmem:[#allocation3 + $0x140] sm:$0xff]
      %v10036 = vld [vmem:[#allocation3 + $0x148] sm:$0xff]
      %v10037 = vld [vmem:[#allocation3 + $0x150] sm:$0xff]
      %v10038 = vld [vmem:[#allocation3 + $0x158] sm:$0xff]
      %v10039 = vld [vmem:[#allocation3 + $0x160] sm:$0xff]
      %v10040 = vld [vmem:[#allocation3 + $0x168] sm:$0xff]
      %v10041 = vld [vmem:[#allocation3 + $0x170] sm:$0xff]
      %v10042 = vld [vmem:[#allocation3 + $0x178] sm:$0xff]
      %v10043 = vld [vmem:[#allocation3 + $0x180] sm:$0xff]
      %v10044 = vld [vmem:[#allocation3 + $0x188] sm:$0xff]
      %v10045 = vld [vmem:[#allocation3 + $0x190] sm:$0xff]
      %v10046 = vld [vmem:[#allocation3 + $0x198] sm:$0xff]
      %v10047 = vld [vmem:[#allocation3 + $0x1a0] sm:$0xff]
      %v10048 = vld [vmem:[#allocation3 + $0x1a8] sm:$0xff]
      %v10049 = vld [vmem:[#allocation3 + $0x1b0] sm:$0xff]
      %v10050 = vld [vmem:[#allocation3 + $0x1b8] sm:$0xff]
      %v10051 = vld [vmem:[#allocation3 + $0x1c0] sm:$0xff]
      %v10052 = vld [vmem:[#allocation3 + $0x1c8] sm:$0xff]
      %v10053 = vld [vmem:[#allocation3 + $0x1d0] sm:$0xff]
      %v10054 = vld [vmem:[#allocation3 + $0x1d8] sm:$0xff]
      %v10055 = vld [vmem:[#allocation3 + $0x1e0] sm:$0xff]
      %v10056 = vld [vmem:[#allocation3 + $0x1e8] sm:$0xff]
      %v10057 = vld [vmem:[#allocation3 + $0x1f0] sm:$0xff]
      %v10058 = vld [vmem:[#allocation3 + $0x1f8] sm:$0xff]
      %v10059 = vld [vmem:[#allocation3 + $0x200] sm:$0xff]
      %v10060 = vld [vmem:[#allocation3 + $0x208] sm:$0xff]
      %v10061 = vld [vmem:[#allocation3 + $0x210] sm:$0xff]
      %v10062 = vld [vmem:[#allocation3 + $0x218] sm:$0xff]
      %v10063 = vld [vmem:[#allocation3 + $0x220] sm:$0xff]
      %v10064 = vld [vmem:[#allocation3 + $0x228] sm:$0xff]
      %v10065 = vld [vmem:[#allocation3 + $0x230] sm:$0xff]
      %v10066 = vld [vmem:[#allocation3 + $0x238] sm:$0xff]
      %v10067 = vld [vmem:[#allocation3 + $0x240] sm:$0xff]
      %v10068 = vld [vmem:[#allocation3 + $0x248] sm:$0xff]
      %v10069 = vld [vmem:[#allocation3 + $0x250] sm:$0xff]
      %v10070 = vld [vmem:[#allocation3 + $0x258] sm:$0xff]
      %v10071 = vld [vmem:[#allocation3 + $0x260] sm:$0xff]
      %v10072 = vld [vmem:[#allocation3 + $0x268] sm:$0xff]
      %v10073 = vld [vmem:[#allocation3 + $0x270] sm:$0xff]
      %v10074 = vld [vmem:[#allocation3 + $0x278] sm:$0xff]
      %v10075 = vld [vmem:[#allocation3 + $0x280] sm:$0xff]
      %v10076 = vld [vmem:[#allocation3 + $0x288] sm:$0xff]
      %v10077 = vld [vmem:[#allocation3 + $0x290] sm:$0xff]
      %v10078 = vld [vmem:[#allocation3 + $0x298] sm:$0xff]
      %v10079 = vld [vmem:[#allocation3 + $0x2a0] sm:$0xff]
      %v10080 = vld [vmem:[#allocation3 + $0x2a8] sm:$0xff]
      %v10081 = vld [vmem:[#allocation3 + $0x2b0] sm:$0xff]
      %v10082 = vld [vmem:[#allocation3 + $0x2b8] sm:$0xff]
      %v10083 = vld [vmem:[#allocation3 + $0x2c0] sm:$0xff]
      %v10084 = vld [vmem:[#allocation3 + $0x2c8] sm:$0xff]
      %v10085 = vld [vmem:[#allocation3 + $0x2d0] sm:$0xff]
      %v10086 = vld [vmem:[#allocation3 + $0x2d8] sm:$0xff]
      %v10087 = vld [vmem:[#allocation3 + $0x2e0] sm:$0xff]
      %v10088 = vld [vmem:[#allocation3 + $0x2e8] sm:$0xff]
      %v10089 = vld [vmem:[#allocation3 + $0x2f0] sm:$0xff]
      %v10090 = vld [vmem:[#allocation3 + $0x2f8] sm:$0xff]
      %v10091 = vld [vmem:[%s5] sm:$0xff]
      %v10092 = vld [vmem:[%s5 + $0x8] sm:$0xff]
      %v10093 = vld [vmem:[%s5 + $0x10] sm:$0xff]
      %v10094 = vld [vmem:[%s5 + $0x18] sm:$0xff]
      %v10095 = vld [vmem:[%s5 + $0x20] sm:$0xff]
      %v10096 = vld [vmem:[%s5 + $0x28] sm:$0xff]
      %v10097 = vld [vmem:[%s5 + $0x30] sm:$0xff]
      %v10098 = vld [vmem:[%s5 + $0x38] sm:$0xff]
      %v10099 = vld [vmem:[%s5 + $0x40] sm:$0xff]
      %v10100 = vld [vmem:[%s5 + $0x48] sm:$0xff]
      %v10101 = vld [vmem:[%s5 + $0x50] sm:$0xff]
      %v10102 = vld [vmem:[%s5 + $0x58] sm:$0xff]
      %v10103 = vld [vmem:[%s5 + $0x60] sm:$0xff]
      %v10104 = vld [vmem:[%s5 + $0x68] sm:$0xff]
      %v10105 = vld [vmem:[%s5 + $0x70] sm:$0xff]
      %v10106 = vld [vmem:[%s5 + $0x78] sm:$0xff]
      %v10107 = vld [vmem:[%s5 + $0x80] sm:$0xff]
      %v10108 = vld [vmem:[%s5 + $0x88] sm:$0xff]
      %v10109 = vld [vmem:[%s5 + $0x90] sm:$0xff]
      %v10110 = vld [vmem:[%s5 + $0x98] sm:$0xff]
      %v10111 = vld [vmem:[%s5 + $0xa0] sm:$0xff]
      %v10112 = vld [vmem:[%s5 + $0xa8] sm:$0xff]
      %v10113 = vld [vmem:[%s5 + $0xb0] sm:$0xff]
      %v10114 = vld [vmem:[%s5 + $0xb8] sm:$0xff]
      %v10115 = vld [vmem:[%s5 + $0xc0] sm:$0xff]
      %v10116 = vld [vmem:[%s5 + $0xc8] sm:$0xff]
      %v10117 = vld [vmem:[%s5 + $0xd0] sm:$0xff]
      %v10118 = vld [vmem:[%s5 + $0xd8] sm:$0xff]
      %v10119 = vld [vmem:[%s5 + $0xe0] sm:$0xff]
      %v10120 = vld [vmem:[%s5 + $0xe8] sm:$0xff]
      %v10121 = vld [vmem:[%s5 + $0xf0] sm:$0xff]
      %v10122 = vld [vmem:[%s5 + $0xf8] sm:$0xff]
      %v10123 = vld [vmem:[%s5 + $0x100] sm:$0xff]
      %v10124 = vld [vmem:[%s5 + $0x108] sm:$0xff]
      %v10125 = vld [vmem:[%s5 + $0x110] sm:$0xff]
      %v10126 = vld [vmem:[%s5 + $0x118] sm:$0xff]
      %v10127 = vld [vmem:[%s5 + $0x120] sm:$0xff]
      %v10128 = vld [vmem:[%s5 + $0x128] sm:$0xff]
      %v10129 = vld [vmem:[%s5 + $0x130] sm:$0xff]
      %v10130 = vld [vmem:[%s5 + $0x138] sm:$0xff]
      %v10131 = vld [vmem:[%s5 + $0x140] sm:$0xff]
      %v10132 = vld [vmem:[%s5 + $0x148] sm:$0xff]
      %v10133 = vld [vmem:[%s5 + $0x150] sm:$0xff]
      %v10134 = vld [vmem:[%s5 + $0x158] sm:$0xff]
      %v10135 = vld [vmem:[%s5 + $0x160] sm:$0xff]
      %s10136 = scalar_lea.vmem %s6, 4
      %v10137 = vld [vmem:[%s10136] sm:$0x1]
      %v10139 = vperm.slane %v10137, 0
      %vm10141 = vcmask 850944
      %v10143 = vsel %vm10141, %v9997, 0
      %v10146 = vsel %vm10141, %v10000, 0
      %v10149 = vsel %vm10141, %v10003, 0
      %v10152 = vsel %vm10141, %v10006, 0
      %v10155 = vsel %vm10141, %v10009, 0
      %v10158 = vsel %vm10141, %v10012, 0
      %v10161 = vsel %vm10141, %v10015, 0
      %v10164 = vsel %vm10141, %v10018, 0
      %v10167 = vsel %vm10141, %v10021, 0
      %v10170 = vsel %vm10141, %v10024, 0
      %v10173 = vsel %vm10141, %v10027, 0
      %v10176 = vsel %vm10141, %v10030, 0
      %v10179 = vsel %vm10141, %v10033, 0
      %v10182 = vsel %vm10141, %v10036, 0
      %v10185 = vsel %vm10141, %v10039, 0
      %v10188 = vsel %vm10141, %v10042, 0
      %v10191 = vsel %vm10141, %v10045, 0
      %v10194 = vsel %vm10141, %v10048, 0
      %v10197 = vsel %vm10141, %v10051, 0
      %v10200 = vsel %vm10141, %v10054, 0
      %v10203 = vsel %vm10141, %v10057, 0
      %v10206 = vsel %vm10141, %v10060, 0
      %v10209 = vsel %vm10141, %v10063, 0
      %v10212 = vsel %vm10141, %v10066, 0
      %v10215 = vsel %vm10141, %v10069, 0
      %v10218 = vsel %vm10141, %v10072, 0
      %v10221 = vsel %vm10141, %v10075, 0
      %v10224 = vsel %vm10141, %v10078, 0
      %v10227 = vsel %vm10141, %v10081, 0
      %v10230 = vsel %vm10141, %v10084, 0
      %v10233 = vsel %vm10141, %v10087, 0
      %v10236 = vsel %vm10141, %v10090, 0
      %10238 = vmatpush.msra.mxu0 %v10106
      %10239 = vmatpush.msra.mxu0 %v10105
      %10240 = vmatpush.msra.mxu0 %v10104
      %10241 = vmatpush.msra.mxu0 %v10103
      %10242 = vmatpush.msra.mxu0 %v10102
      %10243 = vmatpush.msra.mxu0 %v10101
      %10244 = vmatpush.msra.mxu0 %v10100
      %10245 = vmatpush.msra.mxu0 %v10099
      %10246 = vmatpush.msra.mxu0 %v10098
      %10247 = vmatpush.msra.mxu0 %v10097
      %10248 = vmatpush.msra.mxu0 %v10096
      %10249 = vmatpush.msra.mxu0 %v10095
      %10250 = vmatpush.msra.mxu0 %v10094
      %10251 = vmatpush.msra.mxu0 %v10093
      %10252 = vmatpush.msra.mxu0 %v10092
      %10253 = vmatpush.msra.mxu0 %v10091
      %10254 = vmatmul.f32.gmra.mxu0 %v9995
      %v10255 = vpop.f32.mrf.mxu0
      %v10256 = vadd.f32 %v10139, %v10255
      %10257 = vmatmul.f32.gmra.mxu0 %v9998
      %v10258 = vpop.f32.mrf.mxu0
      %v10259 = vadd.f32 %v10139, %v10258
      %10260 = vmatmul.f32.gmra.mxu0 %v10001
      %v10261 = vpop.f32.mrf.mxu0
      %v10262 = vadd.f32 %v10139, %v10261
      %10263 = vmatmul.f32.gmra.mxu0 %v10004
      %v10264 = vpop.f32.mrf.mxu0
      %v10265 = vadd.f32 %v10139, %v10264
      %10266 = vmatmul.f32.gmra.mxu0 %v10007
      %v10267 = vpop.f32.mrf.mxu0
      %v10268 = vadd.f32 %v10139, %v10267
      %10269 = vmatmul.f32.gmra.mxu0 %v10010
      %v10270 = vpop.f32.mrf.mxu0
      %v10271 = vadd.f32 %v10139, %v10270
      %10272 = vmatmul.f32.gmra.mxu0 %v10013
      %v10273 = vpop.f32.mrf.mxu0
      %v10274 = vadd.f32 %v10139, %v10273
      %10275 = vmatmul.f32.gmra.mxu0 %v10016
      %v10276 = vpop.f32.mrf.mxu0
      %v10277 = vadd.f32 %v10139, %v10276
      %10278 = vmatmul.f32.gmra.mxu0 %v10019
      %v10279 = vpop.f32.mrf.mxu0
      %v10280 = vadd.f32 %v10139, %v10279
      %10281 = vmatmul.f32.gmra.mxu0 %v10022
      %v10282 = vpop.f32.mrf.mxu0
      %v10283 = vadd.f32 %v10139, %v10282
      %10284 = vmatmul.f32.gmra.mxu0 %v10025
      %v10285 = vpop.f32.mrf.mxu0
      %v10286 = vadd.f32 %v10139, %v10285
      %10287 = vmatmul.f32.gmra.mxu0 %v10028
      %v10288 = vpop.f32.mrf.mxu0
      %v10289 = vadd.f32 %v10139, %v10288
      %10290 = vmatmul.f32.gmra.mxu0 %v10031
      %v10291 = vpop.f32.mrf.mxu0
      %v10292 = vadd.f32 %v10139, %v10291
      %10293 = vmatmul.f32.gmra.mxu0 %v10034
      %v10294 = vpop.f32.mrf.mxu0
      %v10295 = vadd.f32 %v10139, %v10294
      %10296 = vmatmul.f32.gmra.mxu0 %v10037
      %v10297 = vpop.f32.mrf.mxu0
      %v10298 = vadd.f32 %v10139, %v10297
      %10299 = vmatmul.f32.gmra.mxu0 %v10040
      %v10300 = vpop.f32.mrf.mxu0
      %v10301 = vadd.f32 %v10139, %v10300
      %10302 = vmatmul.f32.gmra.mxu0 %v10043
      %v10303 = vpop.f32.mrf.mxu0
      %v10304 = vadd.f32 %v10139, %v10303
      %10305 = vmatmul.f32.gmra.mxu0 %v10046
      %v10306 = vpop.f32.mrf.mxu0
      %v10307 = vadd.f32 %v10139, %v10306
      %10308 = vmatmul.f32.gmra.mxu0 %v10049
      %v10309 = vpop.f32.mrf.mxu0
      %v10310 = vadd.f32 %v10139, %v10309
      %10311 = vmatmul.f32.gmra.mxu0 %v10052
      %v10312 = vpop.f32.mrf.mxu0
      %v10313 = vadd.f32 %v10139, %v10312
      %10314 = vmatmul.f32.gmra.mxu0 %v10055
      %v10315 = vpop.f32.mrf.mxu0
      %v10316 = vadd.f32 %v10139, %v10315
      %10317 = vmatmul.f32.gmra.mxu0 %v10058
      %v10318 = vpop.f32.mrf.mxu0
      %v10319 = vadd.f32 %v10139, %v10318
      %10320 = vmatmul.f32.gmra.mxu0 %v10061
      %v10321 = vpop.f32.mrf.mxu0
      %v10322 = vadd.f32 %v10139, %v10321
      %10323 = vmatmul.f32.gmra.mxu0 %v10064
      %v10324 = vpop.f32.mrf.mxu0
      %v10325 = vadd.f32 %v10139, %v10324
      %10326 = vmatmul.f32.gmra.mxu0 %v10067
      %v10327 = vpop.f32.mrf.mxu0
      %v10328 = vadd.f32 %v10139, %v10327
      %10329 = vmatmul.f32.gmra.mxu0 %v10070
      %v10330 = vpop.f32.mrf.mxu0
      %v10331 = vadd.f32 %v10139, %v10330
      %10332 = vmatmul.f32.gmra.mxu0 %v10073
      %v10333 = vpop.f32.mrf.mxu0
      %v10334 = vadd.f32 %v10139, %v10333
      %10335 = vmatmul.f32.gmra.mxu0 %v10076
      %v10336 = vpop.f32.mrf.mxu0
      %v10337 = vadd.f32 %v10139, %v10336
      %10338 = vmatmul.f32.gmra.mxu0 %v10079
      %v10339 = vpop.f32.mrf.mxu0
      %v10340 = vadd.f32 %v10139, %v10339
      %10341 = vmatmul.f32.gmra.mxu0 %v10082
      %v10342 = vpop.f32.mrf.mxu0
      %v10343 = vadd.f32 %v10139, %v10342
      %10344 = vmatmul.f32.gmra.mxu0 %v10085
      %v10345 = vpop.f32.mrf.mxu0
      %v10346 = vadd.f32 %v10139, %v10345
      %10347 = vmatmul.f32.gmra.mxu0 %v10088
      %v10348 = vpop.f32.mrf.mxu0
      %v10349 = vadd.f32 %v10139, %v10348
      %10350 = vdwg.mxu0
      %10351 = vmatpush.msra.mxu0 %v10122
      %10352 = vmatpush.msra.mxu0 %v10121
      %10353 = vmatpush.msra.mxu0 %v10120
      %10354 = vmatpush.msra.mxu0 %v10119
      %10355 = vmatpush.msra.mxu0 %v10118
      %10356 = vmatpush.msra.mxu0 %v10117
      %10357 = vmatpush.msra.mxu0 %v10116
      %10358 = vmatpush.msra.mxu0 %v10115
      %10359 = vmatpush.msra.mxu0 %v10114
      %10360 = vmatpush.msra.mxu0 %v10113
      %10361 = vmatpush.msra.mxu0 %v10112
      %10362 = vmatpush.msra.mxu0 %v10111
      %10363 = vmatpush.msra.mxu0 %v10110
      %10364 = vmatpush.msra.mxu0 %v10109
      %10365 = vmatpush.msra.mxu0 %v10108
      %10366 = vmatpush.msra.mxu0 %v10107
      %10367 = vmatmul.f32.gmra.mxu0 %v9996
      %v10368 = vpop.f32.mrf.mxu0
      %v10369 = vadd.f32 %v10256, %v10368
      %10370 = vmatmul.f32.gmra.mxu0 %v9999
      %v10371 = vpop.f32.mrf.mxu0
      %v10372 = vadd.f32 %v10259, %v10371
      %10373 = vmatmul.f32.gmra.mxu0 %v10002
      %v10374 = vpop.f32.mrf.mxu0
      %v10375 = vadd.f32 %v10262, %v10374
      %10376 = vmatmul.f32.gmra.mxu0 %v10005
      %v10377 = vpop.f32.mrf.mxu0
      %v10378 = vadd.f32 %v10265, %v10377
      %10379 = vmatmul.f32.gmra.mxu0 %v10008
      %v10380 = vpop.f32.mrf.mxu0
      %v10381 = vadd.f32 %v10268, %v10380
      %10382 = vmatmul.f32.gmra.mxu0 %v10011
      %v10383 = vpop.f32.mrf.mxu0
      %v10384 = vadd.f32 %v10271, %v10383
      %10385 = vmatmul.f32.gmra.mxu0 %v10014
      %v10386 = vpop.f32.mrf.mxu0
      %v10387 = vadd.f32 %v10274, %v10386
      %10388 = vmatmul.f32.gmra.mxu0 %v10017
      %v10389 = vpop.f32.mrf.mxu0
      %v10390 = vadd.f32 %v10277, %v10389
      %10391 = vmatmul.f32.gmra.mxu0 %v10020
      %v10392 = vpop.f32.mrf.mxu0
      %v10393 = vadd.f32 %v10280, %v10392
      %10394 = vmatmul.f32.gmra.mxu0 %v10023
      %v10395 = vpop.f32.mrf.mxu0
      %v10396 = vadd.f32 %v10283, %v10395
      %10397 = vmatmul.f32.gmra.mxu0 %v10026
      %v10398 = vpop.f32.mrf.mxu0
      %v10399 = vadd.f32 %v10286, %v10398
      %10400 = vmatmul.f32.gmra.mxu0 %v10029
      %v10401 = vpop.f32.mrf.mxu0
      %v10402 = vadd.f32 %v10289, %v10401
      %10403 = vmatmul.f32.gmra.mxu0 %v10032
      %v10404 = vpop.f32.mrf.mxu0
      %v10405 = vadd.f32 %v10292, %v10404
      %10406 = vmatmul.f32.gmra.mxu0 %v10035
      %v10407 = vpop.f32.mrf.mxu0
      %v10408 = vadd.f32 %v10295, %v10407
      %10409 = vmatmul.f32.gmra.mxu0 %v10038
      %v10410 = vpop.f32.mrf.mxu0
      %v10411 = vadd.f32 %v10298, %v10410
      %10412 = vmatmul.f32.gmra.mxu0 %v10041
      %v10413 = vpop.f32.mrf.mxu0
      %v10414 = vadd.f32 %v10301, %v10413
      %10415 = vmatmul.f32.gmra.mxu0 %v10044
      %v10416 = vpop.f32.mrf.mxu0
      %v10417 = vadd.f32 %v10304, %v10416
      %10418 = vmatmul.f32.gmra.mxu0 %v10047
      %v10419 = vpop.f32.mrf.mxu0
      %v10420 = vadd.f32 %v10307, %v10419
      %10421 = vmatmul.f32.gmra.mxu0 %v10050
      %v10422 = vpop.f32.mrf.mxu0
      %v10423 = vadd.f32 %v10310, %v10422
      %10424 = vmatmul.f32.gmra.mxu0 %v10053
      %v10425 = vpop.f32.mrf.mxu0
      %v10426 = vadd.f32 %v10313, %v10425
      %10427 = vmatmul.f32.gmra.mxu0 %v10056
      %v10428 = vpop.f32.mrf.mxu0
      %v10429 = vadd.f32 %v10316, %v10428
      %10430 = vmatmul.f32.gmra.mxu0 %v10059
      %v10431 = vpop.f32.mrf.mxu0
      %v10432 = vadd.f32 %v10319, %v10431
      %10433 = vmatmul.f32.gmra.mxu0 %v10062
      %v10434 = vpop.f32.mrf.mxu0
      %v10435 = vadd.f32 %v10322, %v10434
      %10436 = vmatmul.f32.gmra.mxu0 %v10065
      %v10437 = vpop.f32.mrf.mxu0
      %v10438 = vadd.f32 %v10325, %v10437
      %10439 = vmatmul.f32.gmra.mxu0 %v10068
      %v10440 = vpop.f32.mrf.mxu0
      %v10441 = vadd.f32 %v10328, %v10440
      %10442 = vmatmul.f32.gmra.mxu0 %v10071
      %v10443 = vpop.f32.mrf.mxu0
      %v10444 = vadd.f32 %v10331, %v10443
      %10445 = vmatmul.f32.gmra.mxu0 %v10074
      %v10446 = vpop.f32.mrf.mxu0
      %v10447 = vadd.f32 %v10334, %v10446
      %10448 = vmatmul.f32.gmra.mxu0 %v10077
      %v10449 = vpop.f32.mrf.mxu0
      %v10450 = vadd.f32 %v10337, %v10449
      %10451 = vmatmul.f32.gmra.mxu0 %v10080
      %v10452 = vpop.f32.mrf.mxu0
      %v10453 = vadd.f32 %v10340, %v10452
      %10454 = vmatmul.f32.gmra.mxu0 %v10083
      %v10455 = vpop.f32.mrf.mxu0
      %v10456 = vadd.f32 %v10343, %v10455
      %10457 = vmatmul.f32.gmra.mxu0 %v10086
      %v10458 = vpop.f32.mrf.mxu0
      %v10459 = vadd.f32 %v10346, %v10458
      %10460 = vmatmul.f32.gmra.mxu0 %v10089
      %v10461 = vpop.f32.mrf.mxu0
      %v10462 = vadd.f32 %v10349, %v10461
      %10463 = vdwg.mxu0
      %10464 = vmatpush.msra.mxu0 0.0
      %10465 = vmatpush.msra.mxu0 0.0
      %10466 = vmatpush.msra.mxu0 0.0
      %10467 = vmatpush.msra.mxu0 %v10135
      %10468 = vmatpush.msra.mxu0 %v10134
      %10469 = vmatpush.msra.mxu0 %v10133
      %10470 = vmatpush.msra.mxu0 %v10132
      %10471 = vmatpush.msra.mxu0 %v10131
      %10472 = vmatpush.msra.mxu0 %v10130
      %10473 = vmatpush.msra.mxu0 %v10129
      %10474 = vmatpush.msra.mxu0 %v10128
      %10475 = vmatpush.msra.mxu0 %v10127
      %10476 = vmatpush.msra.mxu0 %v10126
      %10477 = vmatpush.msra.mxu0 %v10125
      %10478 = vmatpush.msra.mxu0 %v10124
      %10479 = vmatpush.msra.mxu0 %v10123
      %10480 = vmatmul.f32.gmra.mxu0 %v10143
      %v10481 = vpop.f32.mrf.mxu0
      %v10482 = vadd.f32 %v10369, %v10481
      %10483 = vmatmul.f32.gmra.mxu0 %v10146
      %v10484 = vpop.f32.mrf.mxu0
      %v10485 = vadd.f32 %v10372, %v10484
      %10486 = vmatmul.f32.gmra.mxu0 %v10149
      %v10487 = vpop.f32.mrf.mxu0
      %v10488 = vadd.f32 %v10375, %v10487
      %10489 = vmatmul.f32.gmra.mxu0 %v10152
      %v10490 = vpop.f32.mrf.mxu0
      %v10491 = vadd.f32 %v10378, %v10490
      %10492 = vmatmul.f32.gmra.mxu0 %v10155
      %v10493 = vpop.f32.mrf.mxu0
      %v10494 = vadd.f32 %v10381, %v10493
      %10495 = vmatmul.f32.gmra.mxu0 %v10158
      %v10496 = vpop.f32.mrf.mxu0
      %v10497 = vadd.f32 %v10384, %v10496
      %10498 = vmatmul.f32.gmra.mxu0 %v10161
      %v10499 = vpop.f32.mrf.mxu0
      %v10500 = vadd.f32 %v10387, %v10499
      %10501 = vmatmul.f32.gmra.mxu0 %v10164
      %v10502 = vpop.f32.mrf.mxu0
      %v10503 = vadd.f32 %v10390, %v10502
      %10504 = vmatmul.f32.gmra.mxu0 %v10167
      %v10505 = vpop.f32.mrf.mxu0
      %v10506 = vadd.f32 %v10393, %v10505
      %10507 = vmatmul.f32.gmra.mxu0 %v10170
      %v10508 = vpop.f32.mrf.mxu0
      %v10509 = vadd.f32 %v10396, %v10508
      %10510 = vmatmul.f32.gmra.mxu0 %v10173
      %v10511 = vpop.f32.mrf.mxu0
      %v10512 = vadd.f32 %v10399, %v10511
      %10513 = vmatmul.f32.gmra.mxu0 %v10176
      %v10514 = vpop.f32.mrf.mxu0
      %v10515 = vadd.f32 %v10402, %v10514
      %10516 = vmatmul.f32.gmra.mxu0 %v10179
      %v10517 = vpop.f32.mrf.mxu0
      %v10518 = vadd.f32 %v10405, %v10517
      %10519 = vmatmul.f32.gmra.mxu0 %v10182
      %v10520 = vpop.f32.mrf.mxu0
      %v10521 = vadd.f32 %v10408, %v10520
      %10522 = vmatmul.f32.gmra.mxu0 %v10185
      %v10523 = vpop.f32.mrf.mxu0
      %v10524 = vadd.f32 %v10411, %v10523
      %10525 = vmatmul.f32.gmra.mxu0 %v10188
      %v10526 = vpop.f32.mrf.mxu0
      %v10527 = vadd.f32 %v10414, %v10526
      %10528 = vmatmul.f32.gmra.mxu0 %v10191
      %v10529 = vpop.f32.mrf.mxu0
      %v10530 = vadd.f32 %v10417, %v10529
      %10531 = vmatmul.f32.gmra.mxu0 %v10194
      %v10532 = vpop.f32.mrf.mxu0
      %v10533 = vadd.f32 %v10420, %v10532
      %10534 = vmatmul.f32.gmra.mxu0 %v10197
      %v10535 = vpop.f32.mrf.mxu0
      %v10536 = vadd.f32 %v10423, %v10535
      %10537 = vmatmul.f32.gmra.mxu0 %v10200
      %v10538 = vpop.f32.mrf.mxu0
      %v10539 = vadd.f32 %v10426, %v10538
      %10540 = vmatmul.f32.gmra.mxu0 %v10203
      %v10541 = vpop.f32.mrf.mxu0
      %v10542 = vadd.f32 %v10429, %v10541
      %10543 = vmatmul.f32.gmra.mxu0 %v10206
      %v10544 = vpop.f32.mrf.mxu0
      %v10545 = vadd.f32 %v10432, %v10544
      %10546 = vmatmul.f32.gmra.mxu0 %v10209
      %v10547 = vpop.f32.mrf.mxu0
      %v10548 = vadd.f32 %v10435, %v10547
      %10549 = vmatmul.f32.gmra.mxu0 %v10212
      %v10550 = vpop.f32.mrf.mxu0
      %v10551 = vadd.f32 %v10438, %v10550
      %10552 = vmatmul.f32.gmra.mxu0 %v10215
      %v10553 = vpop.f32.mrf.mxu0
      %v10554 = vadd.f32 %v10441, %v10553
      %10555 = vmatmul.f32.gmra.mxu0 %v10218
      %v10556 = vpop.f32.mrf.mxu0
      %v10557 = vadd.f32 %v10444, %v10556
      %10558 = vmatmul.f32.gmra.mxu0 %v10221
      %v10559 = vpop.f32.mrf.mxu0
      %v10560 = vadd.f32 %v10447, %v10559
      %10561 = vmatmul.f32.gmra.mxu0 %v10224
      %v10562 = vpop.f32.mrf.mxu0
      %v10563 = vadd.f32 %v10450, %v10562
      %10564 = vmatmul.f32.gmra.mxu0 %v10227
      %v10565 = vpop.f32.mrf.mxu0
      %v10566 = vadd.f32 %v10453, %v10565
      %10567 = vmatmul.f32.gmra.mxu0 %v10230
      %v10568 = vpop.f32.mrf.mxu0
      %v10569 = vadd.f32 %v10456, %v10568
      %10570 = vmatmul.f32.gmra.mxu0 %v10233
      %v10571 = vpop.f32.mrf.mxu0
      %v10572 = vadd.f32 %v10459, %v10571
      %10573 = vmatmul.f32.gmra.mxu0 %v10236
      %v10574 = vpop.f32.mrf.mxu0
      %v10575 = vadd.f32 %v10462, %v10574
      %10576 = vdwg.mxu0
      %v10577 = vmul.f32 %v10482, 0.2
      %v10578 = vmul.f32 %v10485, 0.2
      %v10579 = vmul.f32 %v10488, 0.2
      %v10580 = vmul.f32 %v10491, 0.2
      %v10581 = vmul.f32 %v10494, 0.2
      %v10582 = vmul.f32 %v10497, 0.2
      %v10583 = vmul.f32 %v10500, 0.2
      %v10584 = vmul.f32 %v10503, 0.2
      %v10585 = vmul.f32 %v10506, 0.2
      %v10586 = vmul.f32 %v10509, 0.2
      %v10587 = vmul.f32 %v10512, 0.2
      %v10588 = vmul.f32 %v10515, 0.2
      %v10589 = vmul.f32 %v10518, 0.2
      %v10590 = vmul.f32 %v10521, 0.2
      %v10591 = vmul.f32 %v10524, 0.2
      %v10592 = vmul.f32 %v10527, 0.2
      %v10593 = vmul.f32 %v10530, 0.2
      %v10594 = vmul.f32 %v10533, 0.2
      %v10595 = vmul.f32 %v10536, 0.2
      %v10596 = vmul.f32 %v10539, 0.2
      %v10597 = vmul.f32 %v10542, 0.2
      %v10598 = vmul.f32 %v10545, 0.2
      %v10599 = vmul.f32 %v10548, 0.2
      %v10600 = vmul.f32 %v10551, 0.2
      %v10601 = vmul.f32 %v10554, 0.2
      %v10602 = vmul.f32 %v10557, 0.2
      %v10603 = vmul.f32 %v10560, 0.2
      %v10604 = vmul.f32 %v10563, 0.2
      %v10605 = vmul.f32 %v10566, 0.2
      %v10606 = vmul.f32 %v10569, 0.2
      %v10607 = vmul.f32 %v10572, 0.2
      %v10608 = vmul.f32 %v10575, 0.2
      %v10609 = vld [vmem:[%s273] sm:$0xff]
      %v10610 = vld [vmem:[%s273 + $0x8] sm:$0xff]
      %v10611 = vld [vmem:[%s273 + $0x10] sm:$0xff]
      %v10612 = vld [vmem:[%s273 + $0x18] sm:$0xff]
      %v10613 = vld [vmem:[%s273 + $0x20] sm:$0xff]
      %v10614 = vld [vmem:[%s273 + $0x28] sm:$0xff]
      %v10615 = vld [vmem:[%s273 + $0x30] sm:$0xff]
      %v10616 = vld [vmem:[%s273 + $0x38] sm:$0xff]
      %v10617 = vld [vmem:[%s273 + $0x40] sm:$0xff]
      %v10618 = vld [vmem:[%s273 + $0x48] sm:$0xff]
      %v10619 = vld [vmem:[%s273 + $0x50] sm:$0xff]
      %v10620 = vld [vmem:[%s273 + $0x58] sm:$0xff]
      %v10621 = vld [vmem:[%s273 + $0x60] sm:$0xff]
      %v10622 = vld [vmem:[%s273 + $0x68] sm:$0xff]
      %v10623 = vld [vmem:[%s273 + $0x70] sm:$0xff]
      %v10624 = vld [vmem:[%s273 + $0x78] sm:$0xff]
      %v10625 = vld [vmem:[%s273 + $0x80] sm:$0xff]
      %v10626 = vld [vmem:[%s273 + $0x88] sm:$0xff]
      %v10627 = vld [vmem:[%s273 + $0x90] sm:$0xff]
      %v10628 = vld [vmem:[%s273 + $0x98] sm:$0xff]
      %v10629 = vld [vmem:[%s273 + $0xa0] sm:$0xff]
      %v10630 = vld [vmem:[%s273 + $0xa8] sm:$0xff]
      %v10631 = vld [vmem:[%s273 + $0xb0] sm:$0xff]
      %v10632 = vld [vmem:[%s273 + $0xb8] sm:$0xff]
      %v10633 = vld [vmem:[%s273 + $0xc0] sm:$0xff]
      %v10634 = vld [vmem:[%s273 + $0xc8] sm:$0xff]
      %v10635 = vld [vmem:[%s273 + $0xd0] sm:$0xff]
      %v10636 = vld [vmem:[%s273 + $0xd8] sm:$0xff]
      %v10637 = vld [vmem:[%s273 + $0xe0] sm:$0xff]
      %v10638 = vld [vmem:[%s273 + $0xe8] sm:$0xff]
      %v10639 = vld [vmem:[%s273 + $0xf0] sm:$0xff]
      %v10640 = vld [vmem:[%s273 + $0xf8] sm:$0xff]
      %v10641 = vadd.f32 %v10577, %v10609
      %v10642 = vadd.f32 %v10578, %v10610
      %v10643 = vadd.f32 %v10579, %v10611
      %v10644 = vadd.f32 %v10580, %v10612
      %v10645 = vadd.f32 %v10581, %v10613
      %v10646 = vadd.f32 %v10582, %v10614
      %v10647 = vadd.f32 %v10583, %v10615
      %v10648 = vadd.f32 %v10584, %v10616
      %v10649 = vadd.f32 %v10585, %v10617
      %v10650 = vadd.f32 %v10586, %v10618
      %v10651 = vadd.f32 %v10587, %v10619
      %v10652 = vadd.f32 %v10588, %v10620
      %v10653 = vadd.f32 %v10589, %v10621
      %v10654 = vadd.f32 %v10590, %v10622
      %v10655 = vadd.f32 %v10591, %v10623
      %v10656 = vadd.f32 %v10592, %v10624
      %v10657 = vadd.f32 %v10593, %v10625
      %v10658 = vadd.f32 %v10594, %v10626
      %v10659 = vadd.f32 %v10595, %v10627
      %v10660 = vadd.f32 %v10596, %v10628
      %v10661 = vadd.f32 %v10597, %v10629
      %v10662 = vadd.f32 %v10598, %v10630
      %v10663 = vadd.f32 %v10599, %v10631
      %v10664 = vadd.f32 %v10600, %v10632
      %v10665 = vadd.f32 %v10601, %v10633
      %v10666 = vadd.f32 %v10602, %v10634
      %v10667 = vadd.f32 %v10603, %v10635
      %v10668 = vadd.f32 %v10604, %v10636
      %v10669 = vadd.f32 %v10605, %v10637
      %v10670 = vadd.f32 %v10606, %v10638
      %v10671 = vadd.f32 %v10607, %v10639
      %v10672 = vadd.f32 %v10608, %v10640
      %10673 = vst.msk [vmem:[%s278] sm:$0xff] %vm358, %v10641
      %10674 = vst.msk [vmem:[%s278 + $0x8] sm:$0xff] %vm358, %v10642
      %10675 = vst.msk [vmem:[%s278 + $0x10] sm:$0xff] %vm358, %v10643
      %10676 = vst.msk [vmem:[%s278 + $0x18] sm:$0xff] %vm358, %v10644
      %10677 = vst.msk [vmem:[%s278 + $0x20] sm:$0xff] %vm358, %v10645
      %10678 = vst.msk [vmem:[%s278 + $0x28] sm:$0xff] %vm358, %v10646
      %10679 = vst.msk [vmem:[%s278 + $0x30] sm:$0xff] %vm358, %v10647
      %10680 = vst.msk [vmem:[%s278 + $0x38] sm:$0xff] %vm358, %v10648
      %10681 = vst.msk [vmem:[%s278 + $0x40] sm:$0xff] %vm358, %v10649
      %10682 = vst.msk [vmem:[%s278 + $0x48] sm:$0xff] %vm358, %v10650
      %10683 = vst.msk [vmem:[%s278 + $0x50] sm:$0xff] %vm358, %v10651
      %10684 = vst.msk [vmem:[%s278 + $0x58] sm:$0xff] %vm358, %v10652
      %10685 = vst.msk [vmem:[%s278 + $0x60] sm:$0xff] %vm358, %v10653
      %10686 = vst.msk [vmem:[%s278 + $0x68] sm:$0xff] %vm358, %v10654
      %10687 = vst.msk [vmem:[%s278 + $0x70] sm:$0xff] %vm358, %v10655
      %10688 = vst.msk [vmem:[%s278 + $0x78] sm:$0xff] %vm358, %v10656
      %10689 = vst.msk [vmem:[%s278 + $0x80] sm:$0xff] %vm358, %v10657
      %10690 = vst.msk [vmem:[%s278 + $0x88] sm:$0xff] %vm358, %v10658
      %10691 = vst.msk [vmem:[%s278 + $0x90] sm:$0xff] %vm358, %v10659
      %10692 = vst.msk [vmem:[%s278 + $0x98] sm:$0xff] %vm358, %v10660
      %10693 = vst.msk [vmem:[%s278 + $0xa0] sm:$0xff] %vm358, %v10661
      %10694 = vst.msk [vmem:[%s278 + $0xa8] sm:$0xff] %vm358, %v10662
      %10695 = vst.msk [vmem:[%s278 + $0xb0] sm:$0xff] %vm358, %v10663
      %10696 = vst.msk [vmem:[%s278 + $0xb8] sm:$0xff] %vm358, %v10664
      %10697 = vst.msk [vmem:[%s278 + $0xc0] sm:$0xff] %vm358, %v10665
      %10698 = vst.msk [vmem:[%s278 + $0xc8] sm:$0xff] %vm358, %v10666
      %10699 = vst.msk [vmem:[%s278 + $0xd0] sm:$0xff] %vm358, %v10667
      %10700 = vst.msk [vmem:[%s278 + $0xd8] sm:$0xff] %vm358, %v10668
      %10701 = vst.msk [vmem:[%s278 + $0xe0] sm:$0xff] %vm358, %v10669
      %10702 = vst.msk [vmem:[%s278 + $0xe8] sm:$0xff] %vm358, %v10670
      %10703 = vst.msk [vmem:[%s278 + $0xf0] sm:$0xff] %vm358, %v10671
      %10704 = vst.msk [vmem:[%s278 + $0xf8] sm:$0xff] %vm358, %v10672
      %p10705 = scmp.lt.s32.totalorder %s18, 1
      %s10706 = scalar_select %p10705, %s18, 1
      %s10707 = smul.addr %s10706, 32
      %s10708 = smul.addr %s10707, 8
      %s10709 = scalar_lea.vmem %s7, %s10708
      // Predicated region
      $region49: #{residual_dense_block.1} parent=47 // pred_check
        %p10710 = pneg %p188
      $region50: #{residual_dense_block.1} parent=47 // pred_check_branch
        %10712 = sbr.rel (%p10710) target = $region52
      $region51: #{residual_dense_block.1} parent=47 // pred_region
        _
      $region52: #{residual_dense_block.1} parent=47 // pred_fallthru
        _
    $region48: #{residual_dense_block.1} parent=5 // pred_fallthru
      _
    %p10713 = scmp.le.s32.totalorder 2, %s13
    // Predicated region
    $region53: #{residual_dense_block.1} parent=5 // pred_check
      %p10714 = pneg %p10713
    $region54: #{residual_dense_block.1} parent=5 // pred_check_branch
      %10716 = sbr.rel (%p10714) target = $region56
    $region55: #{residual_dense_block.1} parent=5 // pred_region
      %s10717 = ssub.s32 %s13, 2
      // Predicated region
      $region57: #{residual_dense_block.1} parent=55 // pred_check
        %p10718 = pneg %p194
      $region58: #{residual_dense_block.1} parent=55 // pred_check_branch
        %10720 = sbr.rel (%p10718) target = $region60
      $region59: #{residual_dense_block.1} parent=55 // pred_region
        %p10721 = scmp.lt.s32.totalorder %s19, 1
        %s10722 = scalar_select %p10721, %s19, 1
        %s10723 = smul.addr %s10722, 32
        %s10724 = smul.addr %s10723, 8
        %s10725 = scalar_lea.vmem %s7, %s10724
      $region60: #{residual_dense_block.1} parent=55 // pred_fallthru
        _
    $region56: #{residual_dense_block.1} parent=5 // pred_fallthru
      _
  $region6: #{residual_dense_block.1} parent=0 // loop_footer
    %s17 = sadd.s32 1, %s13
  $region7: #{residual_dense_block.1} parent=0 // loop_footer_branch
    %12 = sbr.rel target = $region3
  $region8: #{residual_dense_block.1} parent=0 // loop_exit
    _

</llo_original>
